<compile_context>
chip_gen: v7x
topology: tpu7x:2x2x1
jax: 0.10.0
libtpu: 0.0.40
codegen_flags: <defaults>
</compile_context>

<pallas_src>
import functools
import numpy as np
import jax
import jax.numpy as jnp
from jax.experimental import pallas as pl
from jax.experimental.pallas import tpu as pltpu

R_THRESH = 0.001                      # torch code: `if R_ij <= 0.001: zeros`
NEG_BIG = 1e30                        # additive key-mask bias; scores stay f32 in-kernel
HIGH = jax.lax.Precision.HIGHEST      # only the tiny sort-net runs at 'highest'


# --------------------------------------------------------------------------------------
# Pallas kernel: one grid step = (sample b, block of G query buckets), all heads fused.
# For head h / query bucket i it computes
#   gate(b,h,i) * softmax(q_i @ [k_i ; k_j*]^T) @ [v_i ; v_j*]
# where j* = argmax_j R[b,h,i,j] (top-k=1): every other R_ij is <= 0.001 and contributes
# exactly zero in the torch code.  q is pre-scaled by dh**-0.5 on the host.
# --------------------------------------------------------------------------------------
def _sinkhorn_attn_kernel(gates_ref, qi_ref, ki_ref, vi_ref, kj_ref, vj_ref, bias_ref,
                          o_ref, *, heads, dh, nb, g_buckets):
    b_idx = pl.program_id(0)
    i0 = pl.program_id(1) * g_buckets

    for g in range(g_buckets):                     # static unroll over the bucket block
        for h in range(heads):                     # heads is small & static -> unrolled
            sl = slice(h * dh, (h + 1) * dh)
            q = qi_ref[g, :, sl]                   # (BMAX, dh) bf16, pre-scaled by 1/sqrt(dh)
            # concatenated key/value set [x_i ; x_j*] -> one 256-wide QK^T and one
            # 256-deep P@V per head (v6e/v7x MXU shaping), single plain softmax.
            kcat = jnp.concatenate([ki_ref[g, :, sl], kj_ref[g, :, sl]], axis=0)
            vcat = jnp.concatenate([vi_ref[g, :, sl], vj_ref[g, :, sl]], axis=0)

            s = jax.lax.dot_general(q, kcat, (((1,), (1,)), ((), ())),
                                    preferred_element_type=jnp.float32)
            s = s + bias_ref[g, h:h + 1, :]        # 0 on real keys / -1e30 on padded slots
            m = jnp.max(s, axis=-1, keepdims=True)
            p = jnp.exp(s - m)
            denom = jnp.sum(p, axis=-1, keepdims=True)
            num = jax.lax.dot_general(p.astype(jnp.bfloat16), vcat,
                                      (((1,), (0,)), ((), ())),
                                      preferred_element_type=jnp.float32)

            gate = gates_ref[b_idx * (nb * heads) + (i0 + g) * heads + h]   # SMEM scalar
            out_h = num * (gate * pl.reciprocal(denom, approx=True))        # (BMAX, dh)
            # store this head immediately (bounds live ranges); the VMEM->HBM writeback
            # of o_ref stays lane-dense over the fused heads*dh axis.
            o_ref[g, :, sl] = out_h.astype(o_ref.dtype)


def _pick_bucket_group(nb, bmax, hd, heads, budget_bytes=8 << 20):
    """Largest divisor of nb whose double-buffered per-step footprint fits the budget.

    6 bf16 blocks (q, k, v, k_j*, v_j*, out) of (bmax, hd) plus the f32 bias block,
    times 2 for the pipeline's double buffering.  8 MiB stays well inside v7x's 32 MiB
    scoped-VMEM default (64 MiB physical) and is tiny on v5e/v6e (128 MiB)."""
    per_bucket = 6 * bmax * hd * 2 + heads * 2 * bmax * 4
    best = 1
    for g in range(1, nb + 1):
        if nb % g == 0 and 2 * g * per_bucket <= budget_bytes:
            best = g
    return best


# --------------------------------------------------------------------------------------
# SinkhornAttention.forward (bucketing, AttentionSortNet, differentiable_topk k=1,
# top-1 gather, Pallas attention, un-bucketing).  q/k/v are (b, t, heads*dim_head) with
# head h occupying columns [h*dh, (h+1)*dh) -- identical to torch's merge_heads layout,
# so merge_heads / split_heads are no-ops in this layout.
# --------------------------------------------------------------------------------------
def sinkhorn_attention(q, k, v, bucket_size, *, heads, dim_head):
    b, t, hd = q.shape
    dh = dim_head
    nb = len(bucket_size[0])
    bmax_raw = max(max(bs) for bs in bucket_size)
    BMAX = int(np.ceil(bmax_raw / 128) * 128)      # lane/MXU-dense bucket capacity
    scale = dh ** -0.5

    # ---- static (trace-time) bucketing metadata ----------------------------------------
    gather_np = np.zeros((b, nb, BMAX), np.int32)      # bucket slot -> token index
    valid_np = np.zeros((b, nb, BMAX), np.float32)     # 1 on real tokens, 0 on padding
    onehot_np = np.zeros((b, nb, t), np.float32)       # bucket membership (sort-net sums)
    tok_bucket_np = np.zeros((b, t), np.int32)         # token -> bucket (un-bucketing)
    tok_slot_np = np.zeros((b, t), np.int32)           # token -> slot inside its bucket
    for s in range(b):
        assert len(bucket_size[s]) == nb, "all samples must have the same bucket count"
        start = 0
        for i, sz in enumerate(bucket_size[s]):
            assert sz > 0, "zero-sized buckets are not supported"
            gather_np[s, i, :sz] = np.arange(start, start + sz)
            valid_np[s, i, :sz] = 1.0
            onehot_np[s, i, start:start + sz] = 1.0
            tok_bucket_np[s, start:start + sz] = i
            tok_slot_np[s, start:start + sz] = np.arange(sz)
            start += sz
        assert start == t, "sum(bucket_size[s]) must equal the sequence length"

    gidx = jnp.asarray(gather_np)
    seg = jnp.asarray(onehot_np)
    add_bias = jnp.asarray((valid_np - 1.0) * NEG_BIG)         # 0 (valid) / -1e30 (padded)
    bsel = jnp.arange(b)[:, None, None]

    # ---- AttentionSortNet (non_permutative, n_sortcut=0) + differentiable_topk(k=1) ----
    # bucket sums come straight from the un-bucketed f32 q/k via a tiny static one-hot
    # segment-sum, so no f32 bucketized copies are ever materialised.
    qs = jnp.einsum('bit,btd->bid', seg, q, precision=HIGH).reshape(b, nb, heads, dh)
    ks = jnp.einsum('bit,btd->bid', seg, k, precision=HIGH).reshape(b, nb, heads, dh)
    R_raw = jnp.einsum('bihd,bjhd->bhij', qs, ks, precision=HIGH) * scale
    sm = jax.nn.softmax(R_raw, axis=-1)                        # topk(k=1), temperature=1.0
    top_val = jnp.max(sm, axis=-1)                             # (b, heads, nb)
    j_idx = jnp.argmax(sm, axis=-1)                            # (b, heads, nb) top-1 bucket
    gates = jnp.where(top_val > R_THRESH, top_val, 0.0)        # torch: R_ij <= 0.001 -> 0
    gates_flat = gates.transpose(0, 2, 1).reshape(-1)          # index = b*(nb*H) + i*H + h

    # ---- bucketize straight to bf16 (one gather+scale+cast pass each; no valid-mask
    #      multiply -- padded key slots are neutralised by the -1e30 bias and padded
    #      query rows are discarded at un-bucketing) -------------------------------------
    qb = (q[bsel, gidx, :] * scale).astype(jnp.bfloat16)       # scale folded into q
    kb = k[bsel, gidx, :].astype(jnp.bfloat16)
    vb = v[bsel, gidx, :].astype(jnp.bfloat16)

    # ---- per-head gather of the single contributing bucket j*(b,h,i), transpose-free ---
    # TODO(synk): for dim_head >= 128 replace with a heads grid axis + scalar-prefetched
    #             j_idx index_map so k_j*/v_j* are DMA'd straight out of kb/vb.
    j_t = j_idx.transpose(0, 2, 1)                             # (b, nb, heads)
    b4 = jnp.arange(b)[:, None, None, None]
    j4 = j_t[:, :, None, :]
    s4 = jnp.arange(BMAX)[None, None, :, None]
    h4 = jnp.arange(heads)[None, None, None, :]

    def gather_j(zb):                                          # -> (b, nb, BMAX, heads*dh)
        zb_h = zb.reshape(b, nb, BMAX, heads, dh)
        return zb_h[b4, j4, s4, h4, :].reshape(b, nb, BMAX, heads * dh)

    kjb, vjb = gather_j(kb), gather_j(vb)

    # combined additive key bias for the concatenated [k_i ; k_j*] key set (tiny array)
    bias_i = jnp.broadcast_to(add_bias[:, :, None, :], (b, nb, heads, BMAX))
    bias_j = add_bias[bsel, j_t]                               # (b, nb, heads, BMAX)
    bias_cat = jnp.concatenate([bias_i, bias_j], axis=-1)      # (b, nb, heads, 2*BMAX)

    # ---- Pallas call --------------------------------------------------------------------
    G = _pick_bucket_group(nb, BMAX, hd, heads)
    kernel = functools.partial(_sinkhorn_attn_kernel, heads=heads, dh=dh, nb=nb,
                               g_buckets=G)
    tile = pl.BlockSpec((None, G, BMAX, hd), lambda bi, ii: (bi, ii, 0, 0))
    bias_spec = pl.BlockSpec((None, G, heads, 2 * BMAX), lambda bi, ii: (bi, ii, 0, 0))

    outp = pl.pallas_call(
        kernel,
        grid=(b, nb // G),
        in_specs=[
            pl.BlockSpec(memory_space=pltpu.MemorySpace.SMEM),   # gates (flat scalars)
            tile, tile, tile,                                    # q_i, k_i, v_i
            tile, tile,                                          # k_j*, v_j* (gathered)
            bias_spec,                                           # concatenated key bias
        ],
        out_specs=tile,
        out_shape=jax.ShapeDtypeStruct((b, nb, BMAX, hd), jnp.bfloat16),
        compiler_params=pltpu.CompilerParams(
            dimension_semantics=("parallel", "parallel")),
    )(gates_flat, qb, kb, vb, kjb, vjb, bias_cat)

    # ---- un-bucket back to (b, t, heads*dh) with a single gather -------------------------
    tb = jnp.asarray(tok_bucket_np)
    ts = jnp.asarray(tok_slot_np)
    return outp[jnp.arange(b)[:, None], tb, ts, :]             # (b, t, heads*dh)


# --------------------------------------------------------------------------------------
# SinkhornSelfAttention.forward
# --------------------------------------------------------------------------------------
def sinkhorn_self_attention(x, params, bucket_size, *, heads, dim_head):
    q = x @ params['Wq'].T                        # to_q  (no bias); cols [h*dh,(h+1)*dh)=head h
    kv = x @ params['Wkv'].T                      # to_kv (no bias)
    k, v = jnp.split(kv, 2, axis=-1)
    # merge_heads / split_heads are identities in the (b, t, heads*dim_head) layout used
    # throughout.  n_local_attn_heads = 0 -> every head goes through sinkhorn attention.
    # TODO(synk): LocalAttention branch (n_local_attn_heads > 0) not implemented; the class
    #             is undefined in the source and unused with the default configuration.
    out = sinkhorn_attention(q, k, v, bucket_size, heads=heads, dim_head=dim_head)
    return out @ params['Wo'].T + params['bo']    # to_out; dropout(p=0.0) == identity


# --------------------------------------------------------------------------------------
# Pure-JAX reference that mirrors the PyTorch loops literally (for validation).
# --------------------------------------------------------------------------------------
def _reference(x, params, bucket_size, *, heads, dim_head):
    b, t, d = x.shape
    h, dh = heads, dim_head
    q = x @ params['Wq'].T
    kv = x @ params['Wkv'].T
    k, v = jnp.split(kv, 2, axis=-1)

    def mh(z):
        return z.reshape(b, t, h, dh).transpose(0, 2, 1, 3).reshape(b * h, t, dh)

    qf, kf, vf = mh(q), mh(k), mh(v)
    bh = b * h
    nb = len(bucket_size[0])
    scale = dh ** (-0.5)

    def buckets(z, s):
        out, start = [], 0
        for sz in bucket_size[s]:
            out.append(z[start:start + sz])
            start += sz
        return out

    outs = []
    for idx in range(bh):
        s = idx // h
        qbs, kbs, vbs = buckets(qf[idx], s), buckets(kf[idx], s), buckets(vf[idx], s)
        qsum = jnp.stack([blk.sum(0) for blk in qbs])
        ksum = jnp.stack([blk.sum(0) for blk in kbs])
        R_raw = jnp.einsum('ie,je->ij', qsum, ksum, precision=HIGH) * scale
        sm = jax.nn.softmax(R_raw, axis=-1)
        R = jax.nn.one_hot(jnp.argmax(sm, axis=-1), nb, dtype=sm.dtype) * \
            jnp.max(sm, axis=-1, keepdims=True)
        rows = []
        for i in range(nb):
            acc = jnp.zeros_like(qbs[i])
            for j in range(nb):
                kc = jnp.concatenate([kbs[i], kbs[j]], axis=0)
                vc = jnp.concatenate([vbs[i], vbs[j]], axis=0)
                sc = qbs[i] @ kc.T * scale
                w = jax.nn.softmax(sc, axis=-1)
                attn = w @ vc
                rij = R[i, j]
                acc = acc + jnp.where(rij > R_THRESH, attn * rij, jnp.zeros_like(attn))
            rows.append(acc)
        outs.append(jnp.concatenate(rows, axis=0))
    out = jnp.stack(outs).reshape(b, h, t, dh)
    out = out.transpose(0, 2, 1, 3).reshape(b, t, h * dh)
    return out @ params['Wo'].T + params['bo']


if __name__ == "__main__":
    # Small config consistent with the module: dim divisible by heads, sum(bucket_size[s])==t.
    # heads*dim_head = 128 keeps the kernel's fused-head output lane-dense (feedback item 8).
    b, t, dim = 2, 16, 128
    heads, dim_head = 4, 32
    bucket_size = [[8, 8], [4, 12]]     # per-sample (different-length) bucket partitions

    key = jax.random.PRNGKey(0)
    kx, kq, kkv, ko, kbias = jax.random.split(key, 5)
    x = jax.random.normal(kx, (b, t, dim), dtype=jnp.float32)
    params = {
        'Wq':  0.1 * jax.random.normal(kq, (heads * dim_head, dim), jnp.float32),
        'Wkv': 0.1 * jax.random.normal(kkv, (2 * heads * dim_head, dim), jnp.float32),
        'Wo':  0.1 * jax.random.normal(ko, (dim, heads * dim_head), jnp.float32),
        'bo':  0.01 * jax.random.normal(kbias, (dim,), jnp.float32),
    }

    out = sinkhorn_self_attention(x, params, bucket_size, heads=heads, dim_head=dim_head)
    out = jax.block_until_ready(out)
    assert out.shape == (b, t, dim)
    assert bool(jnp.all(jnp.isfinite(out)))

    ref = jax.block_until_ready(
        _reference(x, params, bucket_size, heads=heads, dim_head=dim_head))
    # bf16 MXU inputs + approx reciprocal in the kernel -> slightly looser tolerance.
    np.testing.assert_allclose(np.asarray(out, dtype=np.float32), np.asarray(ref),
                               rtol=5e-2, atol=5e-2)

    print("KERNEL_OK")
</pallas_src>

<mosaic_0001>
module attributes {stable_mosaic.version = 11 : i64} {
  func.func @_sinkhorn_attn_kernel(%arg0: i32, %arg1: i32, %arg2: memref<16xf32, #tpu.memory_space<smem>>, %arg3: memref<1x2x128x128xbf16, #tpu.memory_space<vmem>>, %arg4: memref<1x2x128x128xbf16, #tpu.memory_space<vmem>>, %arg5: memref<1x2x128x128xbf16, #tpu.memory_space<vmem>>, %arg6: memref<1x2x128x128xbf16, #tpu.memory_space<vmem>>, %arg7: memref<1x2x128x128xbf16, #tpu.memory_space<vmem>>, %arg8: memref<1x2x4x256xf32, #tpu.memory_space<vmem>>, %arg9: memref<1x2x128x128xbf16, #tpu.memory_space<vmem>>) attributes {dimension_semantics = [#tpu.dimension_semantics<parallel>, #tpu.dimension_semantics<parallel>], iteration_bounds = array<i64: 2, 1>, scalar_prefetch = 0 : i64, scratch_operands = 0 : i64, tpu.core_type = #tpu.core_type<tc>, window_params = [{transform_indices = @transform_0, window_bounds = array<i64: 16>}, {transform_indices = @transform_1, window_bounds = array<i64: 1, 2, 128, 128>}, {transform_indices = @transform_2, window_bounds = array<i64: 1, 2, 128, 128>}, {transform_indices = @transform_3, window_bounds = array<i64: 1, 2, 128, 128>}, {transform_indices = @transform_4, window_bounds = array<i64: 1, 2, 128, 128>}, {transform_indices = @transform_5, window_bounds = array<i64: 1, 2, 128, 128>}, {transform_indices = @transform_6, window_bounds = array<i64: 1, 2, 4, 256>}, {transform_indices = @transform_7, window_bounds = array<i64: 1, 2, 128, 128>}]} {
    %c2_i32 = arith.constant 2 : i32
    %0 = arith.muli %arg1, %c2_i32 : i32
    %c0 = arith.constant 0 : index
    %c0_0 = arith.constant 0 : index
    %c0_1 = arith.constant 0 : index
    %c0_2 = arith.constant 0 : index
    %1 = vector.load %arg3[%c0, %c0_0, %c0_1, %c0_2] : memref<1x2x128x128xbf16, #tpu.memory_space<vmem>>, vector<1x1x128x32xbf16>
    %2 = vector.shape_cast %1 : vector<1x1x128x32xbf16> to vector<128x32xbf16>
    %c0_3 = arith.constant 0 : index
    %c0_4 = arith.constant 0 : index
    %c0_5 = arith.constant 0 : index
    %c0_6 = arith.constant 0 : index
    %3 = vector.load %arg4[%c0_3, %c0_4, %c0_5, %c0_6] : memref<1x2x128x128xbf16, #tpu.memory_space<vmem>>, vector<1x1x128x32xbf16>
    %4 = vector.shape_cast %3 : vector<1x1x128x32xbf16> to vector<128x32xbf16>
    %c0_7 = arith.constant 0 : index
    %c0_8 = arith.constant 0 : index
    %c0_9 = arith.constant 0 : index
    %c0_10 = arith.constant 0 : index
    %5 = vector.load %arg6[%c0_7, %c0_8, %c0_9, %c0_10] : memref<1x2x128x128xbf16, #tpu.memory_space<vmem>>, vector<1x1x128x32xbf16>
    %6 = vector.shape_cast %5 : vector<1x1x128x32xbf16> to vector<128x32xbf16>
    %7 = tpu.concatenate %4, %6 in 0 : vector<128x32xbf16>, vector<128x32xbf16> -> vector<256x32xbf16>
    %c0_11 = arith.constant 0 : index
    %c0_12 = arith.constant 0 : index
    %c0_13 = arith.constant 0 : index
    %c0_14 = arith.constant 0 : index
    %8 = vector.load %arg5[%c0_11, %c0_12, %c0_13, %c0_14] : memref<1x2x128x128xbf16, #tpu.memory_space<vmem>>, vector<1x1x128x32xbf16>
    %9 = vector.shape_cast %8 : vector<1x1x128x32xbf16> to vector<128x32xbf16>
    %c0_15 = arith.constant 0 : index
    %c0_16 = arith.constant 0 : index
    %c0_17 = arith.constant 0 : index
    %c0_18 = arith.constant 0 : index
    %10 = vector.load %arg7[%c0_15, %c0_16, %c0_17, %c0_18] : memref<1x2x128x128xbf16, #tpu.memory_space<vmem>>, vector<1x1x128x32xbf16>
    %11 = vector.shape_cast %10 : vector<1x1x128x32xbf16> to vector<128x32xbf16>
    %12 = tpu.concatenate %9, %11 in 0 : vector<128x32xbf16>, vector<128x32xbf16> -> vector<256x32xbf16>
    %cst = arith.constant dense<0.000000e+00> : vector<128x256xf32>
    %13 = tpu.matmul %2, %7, %cst {dimension_numbers = #tpu.dot_dimension_numbers<[1], [1], [0], [0], [0, 0, 1, 0], [], []>} : vector<128x32xbf16>, vector<256x32xbf16>, vector<128x256xf32> -> vector<128x256xf32>
    %c0_19 = arith.constant 0 : index
    %c0_20 = arith.constant 0 : index
    %c0_21 = arith.constant 0 : index
    %c0_22 = arith.constant 0 : index
    %14 = vector.load %arg8[%c0_19, %c0_20, %c0_21, %c0_22] : memref<1x2x4x256xf32, #tpu.memory_space<vmem>>, vector<1x1x1x256xf32>
    %15 = vector.shape_cast %14 : vector<1x1x1x256xf32> to vector<1x256xf32>
    %16 = vector.broadcast %15 : vector<1x256xf32> to vector<128x256xf32>
    %17 = arith.addf %13, %16 : vector<128x256xf32>
    %cst_23 = arith.constant dense<0xFF800000> : vector<128xf32>
    %18 = vector.multi_reduction <maximumf>, %17, %cst_23 [1] : vector<128x256xf32> to vector<128xf32>
    %19 = vector.shape_cast %18 : vector<128xf32> to vector<128x1xf32>
    %20 = vector.broadcast %19 : vector<128x1xf32> to vector<128x256xf32>
    %21 = arith.subf %17, %20 : vector<128x256xf32>
    %22 = math.exp %21 : vector<128x256xf32>
    %cst_24 = arith.constant dense<0.000000e+00> : vector<128xf32>
    %23 = vector.multi_reduction <add>, %22, %cst_24 [1] : vector<128x256xf32> to vector<128xf32>
    %24 = vector.shape_cast %23 : vector<128xf32> to vector<128x1xf32>
    %25 = arith.truncf %22 : vector<128x256xf32> to vector<128x256xbf16>
    %cst_25 = arith.constant dense<0.000000e+00> : vector<128x32xf32>
    %26 = tpu.matmul %25, %12, %cst_25 {dimension_numbers = #tpu.dot_dimension_numbers<[1], [0], [0], [1], [0, 0, 1, 1], [], []>} : vector<128x256xbf16>, vector<256x32xbf16>, vector<128x32xf32> -> vector<128x32xf32>
    %c8_i32 = arith.constant 8 : i32
    %27 = arith.muli %arg0, %c8_i32 : i32
    %c0_i32 = arith.constant 0 : i32
    %28 = arith.addi %0, %c0_i32 : i32
    %c4_i32 = arith.constant 4 : i32
    %29 = arith.muli %28, %c4_i32 : i32
    %30 = arith.addi %27, %29 : i32
    %c0_i32_26 = arith.constant 0 : i32
    %31 = arith.addi %30, %c0_i32_26 : i32
    %32 = arith.index_cast %31 : i32 to index
    %33 = memref.load %arg2[%32] : memref<16xf32, #tpu.memory_space<smem>>
    %34 = tpu.reciprocal %24 {approx = true} : vector<128x1xf32> -> vector<128x1xf32>
    %35 = vector.broadcast %33 : f32 to vector<128x1xf32>
    %36 = arith.mulf %35, %34 : vector<128x1xf32>
    %37 = vector.broadcast %36 : vector<128x1xf32> to vector<128x32xf32>
    %38 = arith.mulf %26, %37 : vector<128x32xf32>
    %39 = arith.truncf %38 : vector<128x32xf32> to vector<128x32xbf16>
    %c0_27 = arith.constant 0 : index
    %c0_28 = arith.constant 0 : index
    %c0_29 = arith.constant 0 : index
    %c0_30 = arith.constant 0 : index
    %40 = vector.load %arg9[%c0_27, %c0_28, %c0_29, %c0_30] : memref<1x2x128x128xbf16, #tpu.memory_space<vmem>>, vector<1x1x128x32xbf16>
    %41 = vector.shape_cast %40 : vector<1x1x128x32xbf16> to vector<128x32xbf16>
    %42 = vector.shape_cast %39 : vector<128x32xbf16> to vector<1x1x128x32xbf16>
    tpu.vector_store %arg9[%c0_27, %c0_28, %c0_29, %c0_30], %42 {strides = array<i32>} : memref<1x2x128x128xbf16, #tpu.memory_space<vmem>>, vector<1x1x128x32xbf16>,
    %c0_31 = arith.constant 0 : index
    %c0_32 = arith.constant 0 : index
    %c0_33 = arith.constant 0 : index
    %c32 = arith.constant 32 : index
    %43 = vector.load %arg3[%c0_31, %c0_32, %c0_33, %c32] : memref<1x2x128x128xbf16, #tpu.memory_space<vmem>>, vector<1x1x128x32xbf16>
    %44 = vector.shape_cast %43 : vector<1x1x128x32xbf16> to vector<128x32xbf16>
    %c0_34 = arith.constant 0 : index
    %c0_35 = arith.constant 0 : index
    %c0_36 = arith.constant 0 : index
    %c32_37 = arith.constant 32 : index
    %45 = vector.load %arg4[%c0_34, %c0_35, %c0_36, %c32_37] : memref<1x2x128x128xbf16, #tpu.memory_space<vmem>>, vector<1x1x128x32xbf16>
    %46 = vector.shape_cast %45 : vector<1x1x128x32xbf16> to vector<128x32xbf16>
    %c0_38 = arith.constant 0 : index
    %c0_39 = arith.constant 0 : index
    %c0_40 = arith.constant 0 : index
    %c32_41 = arith.constant 32 : index
    %47 = vector.load %arg6[%c0_38, %c0_39, %c0_40, %c32_41] : memref<1x2x128x128xbf16, #tpu.memory_space<vmem>>, vector<1x1x128x32xbf16>
    %48 = vector.shape_cast %47 : vector<1x1x128x32xbf16> to vector<128x32xbf16>
    %49 = tpu.concatenate %46, %48 in 0 : vector<128x32xbf16>, vector<128x32xbf16> -> vector<256x32xbf16>
    %c0_42 = arith.constant 0 : index
    %c0_43 = arith.constant 0 : index
    %c0_44 = arith.constant 0 : index
    %c32_45 = arith.constant 32 : index
    %50 = vector.load %arg5[%c0_42, %c0_43, %c0_44, %c32_45] : memref<1x2x128x128xbf16, #tpu.memory_space<vmem>>, vector<1x1x128x32xbf16>
    %51 = vector.shape_cast %50 : vector<1x1x128x32xbf16> to vector<128x32xbf16>
    %c0_46 = arith.constant 0 : index
    %c0_47 = arith.constant 0 : index
    %c0_48 = arith.constant 0 : index
    %c32_49 = arith.constant 32 : index
    %52 = vector.load %arg7[%c0_46, %c0_47, %c0_48, %c32_49] : memref<1x2x128x128xbf16, #tpu.memory_space<vmem>>, vector<1x1x128x32xbf16>
    %53 = vector.shape_cast %52 : vector<1x1x128x32xbf16> to vector<128x32xbf16>
    %54 = tpu.concatenate %51, %53 in 0 : vector<128x32xbf16>, vector<128x32xbf16> -> vector<256x32xbf16>
    %cst_50 = arith.constant dense<0.000000e+00> : vector<128x256xf32>
    %55 = tpu.matmul %44, %49, %cst_50 {dimension_numbers = #tpu.dot_dimension_numbers<[1], [1], [0], [0], [0, 0, 1, 0], [], []>} : vector<128x32xbf16>, vector<256x32xbf16>, vector<128x256xf32> -> vector<128x256xf32>
    %c0_51 = arith.constant 0 : index
    %c0_52 = arith.constant 0 : index
    %c1 = arith.constant 1 : index
    %c0_53 = arith.constant 0 : index
    %56 = vector.load %arg8[%c0_51, %c0_52, %c1, %c0_53] : memref<1x2x4x256xf32, #tpu.memory_space<vmem>>, vector<1x1x1x256xf32>
    %57 = vector.shape_cast %56 : vector<1x1x1x256xf32> to vector<1x256xf32>
    %58 = vector.broadcast %57 : vector<1x256xf32> to vector<128x256xf32>
    %59 = arith.addf %55, %58 : vector<128x256xf32>
    %cst_54 = arith.constant dense<0xFF800000> : vector<128xf32>
    %60 = vector.multi_reduction <maximumf>, %59, %cst_54 [1] : vector<128x256xf32> to vector<128xf32>
    %61 = vector.shape_cast %60 : vector<128xf32> to vector<128x1xf32>
    %62 = vector.broadcast %61 : vector<128x1xf32> to vector<128x256xf32>
    %63 = arith.subf %59, %62 : vector<128x256xf32>
    %64 = math.exp %63 : vector<128x256xf32>
    %cst_55 = arith.constant dense<0.000000e+00> : vector<128xf32>
    %65 = vector.multi_reduction <add>, %64, %cst_55 [1] : vector<128x256xf32> to vector<128xf32>
    %66 = vector.shape_cast %65 : vector<128xf32> to vector<128x1xf32>
    %67 = arith.truncf %64 : vector<128x256xf32> to vector<128x256xbf16>
    %cst_56 = arith.constant dense<0.000000e+00> : vector<128x32xf32>
    %68 = tpu.matmul %67, %54, %cst_56 {dimension_numbers = #tpu.dot_dimension_numbers<[1], [0], [0], [1], [0, 0, 1, 1], [], []>} : vector<128x256xbf16>, vector<256x32xbf16>, vector<128x32xf32> -> vector<128x32xf32>
    %c8_i32_57 = arith.constant 8 : i32
    %69 = arith.muli %arg0, %c8_i32_57 : i32
    %c0_i32_58 = arith.constant 0 : i32
    %70 = arith.addi %0, %c0_i32_58 : i32
    %c4_i32_59 = arith.constant 4 : i32
    %71 = arith.muli %70, %c4_i32_59 : i32
    %72 = arith.addi %69, %71 : i32
    %c1_i32 = arith.constant 1 : i32
    %73 = arith.addi %72, %c1_i32 : i32
    %74 = arith.index_cast %73 : i32 to index
    %75 = memref.load %arg2[%74] : memref<16xf32, #tpu.memory_space<smem>>
    %76 = tpu.reciprocal %66 {approx = true} : vector<128x1xf32> -> vector<128x1xf32>
    %77 = vector.broadcast %75 : f32 to vector<128x1xf32>
    %78 = arith.mulf %77, %76 : vector<128x1xf32>
    %79 = vector.broadcast %78 : vector<128x1xf32> to vector<128x32xf32>
    %80 = arith.mulf %68, %79 : vector<128x32xf32>
    %81 = arith.truncf %80 : vector<128x32xf32> to vector<128x32xbf16>
    %c0_60 = arith.constant 0 : index
    %c0_61 = arith.constant 0 : index
    %c0_62 = arith.constant 0 : index
    %c32_63 = arith.constant 32 : index
    %82 = vector.load %arg9[%c0_60, %c0_61, %c0_62, %c32_63] : memref<1x2x128x128xbf16, #tpu.memory_space<vmem>>, vector<1x1x128x32xbf16>
    %83 = vector.shape_cast %82 : vector<1x1x128x32xbf16> to vector<128x32xbf16>
    %84 = vector.shape_cast %81 : vector<128x32xbf16> to vector<1x1x128x32xbf16>
    tpu.vector_store %arg9[%c0_60, %c0_61, %c0_62, %c32_63], %84 {strides = array<i32>} : memref<1x2x128x128xbf16, #tpu.memory_space<vmem>>, vector<1x1x128x32xbf16>,
    %c0_64 = arith.constant 0 : index
    %c0_65 = arith.constant 0 : index
    %c0_66 = arith.constant 0 : index
    %c64 = arith.constant 64 : index
    %85 = vector.load %arg3[%c0_64, %c0_65, %c0_66, %c64] : memref<1x2x128x128xbf16, #tpu.memory_space<vmem>>, vector<1x1x128x32xbf16>
    %86 = vector.shape_cast %85 : vector<1x1x128x32xbf16> to vector<128x32xbf16>
    %c0_67 = arith.constant 0 : index
    %c0_68 = arith.constant 0 : index
    %c0_69 = arith.constant 0 : index
    %c64_70 = arith.constant 64 : index
    %87 = vector.load %arg4[%c0_67, %c0_68, %c0_69, %c64_70] : memref<1x2x128x128xbf16, #tpu.memory_space<vmem>>, vector<1x1x128x32xbf16>
    %88 = vector.shape_cast %87 : vector<1x1x128x32xbf16> to vector<128x32xbf16>
    %c0_71 = arith.constant 0 : index
    %c0_72 = arith.constant 0 : index
    %c0_73 = arith.constant 0 : index
    %c64_74 = arith.constant 64 : index
    %89 = vector.load %arg6[%c0_71, %c0_72, %c0_73, %c64_74] : memref<1x2x128x128xbf16, #tpu.memory_space<vmem>>, vector<1x1x128x32xbf16>
    %90 = vector.shape_cast %89 : vector<1x1x128x32xbf16> to vector<128x32xbf16>
    %91 = tpu.concatenate %88, %90 in 0 : vector<128x32xbf16>, vector<128x32xbf16> -> vector<256x32xbf16>
    %c0_75 = arith.constant 0 : index
    %c0_76 = arith.constant 0 : index
    %c0_77 = arith.constant 0 : index
    %c64_78 = arith.constant 64 : index
    %92 = vector.load %arg5[%c0_75, %c0_76, %c0_77, %c64_78] : memref<1x2x128x128xbf16, #tpu.memory_space<vmem>>, vector<1x1x128x32xbf16>
    %93 = vector.shape_cast %92 : vector<1x1x128x32xbf16> to vector<128x32xbf16>
    %c0_79 = arith.constant 0 : index
    %c0_80 = arith.constant 0 : index
    %c0_81 = arith.constant 0 : index
    %c64_82 = arith.constant 64 : index
    %94 = vector.load %arg7[%c0_79, %c0_80, %c0_81, %c64_82] : memref<1x2x128x128xbf16, #tpu.memory_space<vmem>>, vector<1x1x128x32xbf16>
    %95 = vector.shape_cast %94 : vector<1x1x128x32xbf16> to vector<128x32xbf16>
    %96 = tpu.concatenate %93, %95 in 0 : vector<128x32xbf16>, vector<128x32xbf16> -> vector<256x32xbf16>
    %cst_83 = arith.constant dense<0.000000e+00> : vector<128x256xf32>
    %97 = tpu.matmul %86, %91, %cst_83 {dimension_numbers = #tpu.dot_dimension_numbers<[1], [1], [0], [0], [0, 0, 1, 0], [], []>} : vector<128x32xbf16>, vector<256x32xbf16>, vector<128x256xf32> -> vector<128x256xf32>
    %c0_84 = arith.constant 0 : index
    %c0_85 = arith.constant 0 : index
    %c2 = arith.constant 2 : index
    %c0_86 = arith.constant 0 : index
    %98 = vector.load %arg8[%c0_84, %c0_85, %c2, %c0_86] : memref<1x2x4x256xf32, #tpu.memory_space<vmem>>, vector<1x1x1x256xf32>
    %99 = vector.shape_cast %98 : vector<1x1x1x256xf32> to vector<1x256xf32>
    %100 = vector.broadcast %99 : vector<1x256xf32> to vector<128x256xf32>
    %101 = arith.addf %97, %100 : vector<128x256xf32>
    %cst_87 = arith.constant dense<0xFF800000> : vector<128xf32>
    %102 = vector.multi_reduction <maximumf>, %101, %cst_87 [1] : vector<128x256xf32> to vector<128xf32>
    %103 = vector.shape_cast %102 : vector<128xf32> to vector<128x1xf32>
    %104 = vector.broadcast %103 : vector<128x1xf32> to vector<128x256xf32>
    %105 = arith.subf %101, %104 : vector<128x256xf32>
    %106 = math.exp %105 : vector<128x256xf32>
    %cst_88 = arith.constant dense<0.000000e+00> : vector<128xf32>
    %107 = vector.multi_reduction <add>, %106, %cst_88 [1] : vector<128x256xf32> to vector<128xf32>
    %108 = vector.shape_cast %107 : vector<128xf32> to vector<128x1xf32>
    %109 = arith.truncf %106 : vector<128x256xf32> to vector<128x256xbf16>
    %cst_89 = arith.constant dense<0.000000e+00> : vector<128x32xf32>
    %110 = tpu.matmul %109, %96, %cst_89 {dimension_numbers = #tpu.dot_dimension_numbers<[1], [0], [0], [1], [0, 0, 1, 1], [], []>} : vector<128x256xbf16>, vector<256x32xbf16>, vector<128x32xf32> -> vector<128x32xf32>
    %c8_i32_90 = arith.constant 8 : i32
    %111 = arith.muli %arg0, %c8_i32_90 : i32
    %c0_i32_91 = arith.constant 0 : i32
    %112 = arith.addi %0, %c0_i32_91 : i32
    %c4_i32_92 = arith.constant 4 : i32
    %113 = arith.muli %112, %c4_i32_92 : i32
    %114 = arith.addi %111, %113 : i32
    %c2_i32_93 = arith.constant 2 : i32
    %115 = arith.addi %114, %c2_i32_93 : i32
    %116 = arith.index_cast %115 : i32 to index
    %117 = memref.load %arg2[%116] : memref<16xf32, #tpu.memory_space<smem>>
    %118 = tpu.reciprocal %108 {approx = true} : vector<128x1xf32> -> vector<128x1xf32>
    %119 = vector.broadcast %117 : f32 to vector<128x1xf32>
    %120 = arith.mulf %119, %118 : vector<128x1xf32>
    %121 = vector.broadcast %120 : vector<128x1xf32> to vector<128x32xf32>
    %122 = arith.mulf %110, %121 : vector<128x32xf32>
    %123 = arith.truncf %122 : vector<128x32xf32> to vector<128x32xbf16>
    %c0_94 = arith.constant 0 : index
    %c0_95 = arith.constant 0 : index
    %c0_96 = arith.constant 0 : index
    %c64_97 = arith.constant 64 : index
    %124 = vector.load %arg9[%c0_94, %c0_95, %c0_96, %c64_97] : memref<1x2x128x128xbf16, #tpu.memory_space<vmem>>, vector<1x1x128x32xbf16>
    %125 = vector.shape_cast %124 : vector<1x1x128x32xbf16> to vector<128x32xbf16>
    %126 = vector.shape_cast %123 : vector<128x32xbf16> to vector<1x1x128x32xbf16>
    tpu.vector_store %arg9[%c0_94, %c0_95, %c0_96, %c64_97], %126 {strides = array<i32>} : memref<1x2x128x128xbf16, #tpu.memory_space<vmem>>, vector<1x1x128x32xbf16>,
    %c0_98 = arith.constant 0 : index
    %c0_99 = arith.constant 0 : index
    %c0_100 = arith.constant 0 : index
    %c96 = arith.constant 96 : index
    %127 = vector.load %arg3[%c0_98, %c0_99, %c0_100, %c96] : memref<1x2x128x128xbf16, #tpu.memory_space<vmem>>, vector<1x1x128x32xbf16>
    %128 = vector.shape_cast %127 : vector<1x1x128x32xbf16> to vector<128x32xbf16>
    %c0_101 = arith.constant 0 : index
    %c0_102 = arith.constant 0 : index
    %c0_103 = arith.constant 0 : index
    %c96_104 = arith.constant 96 : index
    %129 = vector.load %arg4[%c0_101, %c0_102, %c0_103, %c96_104] : memref<1x2x128x128xbf16, #tpu.memory_space<vmem>>, vector<1x1x128x32xbf16>
    %130 = vector.shape_cast %129 : vector<1x1x128x32xbf16> to vector<128x32xbf16>
    %c0_105 = arith.constant 0 : index
    %c0_106 = arith.constant 0 : index
    %c0_107 = arith.constant 0 : index
    %c96_108 = arith.constant 96 : index
    %131 = vector.load %arg6[%c0_105, %c0_106, %c0_107, %c96_108] : memref<1x2x128x128xbf16, #tpu.memory_space<vmem>>, vector<1x1x128x32xbf16>
    %132 = vector.shape_cast %131 : vector<1x1x128x32xbf16> to vector<128x32xbf16>
    %133 = tpu.concatenate %130, %132 in 0 : vector<128x32xbf16>, vector<128x32xbf16> -> vector<256x32xbf16>
    %c0_109 = arith.constant 0 : index
    %c0_110 = arith.constant 0 : index
    %c0_111 = arith.constant 0 : index
    %c96_112 = arith.constant 96 : index
    %134 = vector.load %arg5[%c0_109, %c0_110, %c0_111, %c96_112] : memref<1x2x128x128xbf16, #tpu.memory_space<vmem>>, vector<1x1x128x32xbf16>
    %135 = vector.shape_cast %134 : vector<1x1x128x32xbf16> to vector<128x32xbf16>
    %c0_113 = arith.constant 0 : index
    %c0_114 = arith.constant 0 : index
    %c0_115 = arith.constant 0 : index
    %c96_116 = arith.constant 96 : index
    %136 = vector.load %arg7[%c0_113, %c0_114, %c0_115, %c96_116] : memref<1x2x128x128xbf16, #tpu.memory_space<vmem>>, vector<1x1x128x32xbf16>
    %137 = vector.shape_cast %136 : vector<1x1x128x32xbf16> to vector<128x32xbf16>
    %138 = tpu.concatenate %135, %137 in 0 : vector<128x32xbf16>, vector<128x32xbf16> -> vector<256x32xbf16>
    %cst_117 = arith.constant dense<0.000000e+00> : vector<128x256xf32>
    %139 = tpu.matmul %128, %133, %cst_117 {dimension_numbers = #tpu.dot_dimension_numbers<[1], [1], [0], [0], [0, 0, 1, 0], [], []>} : vector<128x32xbf16>, vector<256x32xbf16>, vector<128x256xf32> -> vector<128x256xf32>
    %c0_118 = arith.constant 0 : index
    %c0_119 = arith.constant 0 : index
    %c3 = arith.constant 3 : index
    %c0_120 = arith.constant 0 : index
    %140 = vector.load %arg8[%c0_118, %c0_119, %c3, %c0_120] : memref<1x2x4x256xf32, #tpu.memory_space<vmem>>, vector<1x1x1x256xf32>
    %141 = vector.shape_cast %140 : vector<1x1x1x256xf32> to vector<1x256xf32>
    %142 = vector.broadcast %141 : vector<1x256xf32> to vector<128x256xf32>
    %143 = arith.addf %139, %142 : vector<128x256xf32>
    %cst_121 = arith.constant dense<0xFF800000> : vector<128xf32>
    %144 = vector.multi_reduction <maximumf>, %143, %cst_121 [1] : vector<128x256xf32> to vector<128xf32>
    %145 = vector.shape_cast %144 : vector<128xf32> to vector<128x1xf32>
    %146 = vector.broadcast %145 : vector<128x1xf32> to vector<128x256xf32>
    %147 = arith.subf %143, %146 : vector<128x256xf32>
    %148 = math.exp %147 : vector<128x256xf32>
    %cst_122 = arith.constant dense<0.000000e+00> : vector<128xf32>
    %149 = vector.multi_reduction <add>, %148, %cst_122 [1] : vector<128x256xf32> to vector<128xf32>
    %150 = vector.shape_cast %149 : vector<128xf32> to vector<128x1xf32>
    %151 = arith.truncf %148 : vector<128x256xf32> to vector<128x256xbf16>
    %cst_123 = arith.constant dense<0.000000e+00> : vector<128x32xf32>
    %152 = tpu.matmul %151, %138, %cst_123 {dimension_numbers = #tpu.dot_dimension_numbers<[1], [0], [0], [1], [0, 0, 1, 1], [], []>} : vector<128x256xbf16>, vector<256x32xbf16>, vector<128x32xf32> -> vector<128x32xf32>
    %c8_i32_124 = arith.constant 8 : i32
    %153 = arith.muli %arg0, %c8_i32_124 : i32
    %c0_i32_125 = arith.constant 0 : i32
    %154 = arith.addi %0, %c0_i32_125 : i32
    %c4_i32_126 = arith.constant 4 : i32
    %155 = arith.muli %154, %c4_i32_126 : i32
    %156 = arith.addi %153, %155 : i32
    %c3_i32 = arith.constant 3 : i32
    %157 = arith.addi %156, %c3_i32 : i32
    %158 = arith.index_cast %157 : i32 to index
    %159 = memref.load %arg2[%158] : memref<16xf32, #tpu.memory_space<smem>>
    %160 = tpu.reciprocal %150 {approx = true} : vector<128x1xf32> -> vector<128x1xf32>
    %161 = vector.broadcast %159 : f32 to vector<128x1xf32>
    %162 = arith.mulf %161, %160 : vector<128x1xf32>
    %163 = vector.broadcast %162 : vector<128x1xf32> to vector<128x32xf32>
    %164 = arith.mulf %152, %163 : vector<128x32xf32>
    %165 = arith.truncf %164 : vector<128x32xf32> to vector<128x32xbf16>
    %c0_127 = arith.constant 0 : index
    %c0_128 = arith.constant 0 : index
    %c0_129 = arith.constant 0 : index
    %c96_130 = arith.constant 96 : index
    %166 = vector.load %arg9[%c0_127, %c0_128, %c0_129, %c96_130] : memref<1x2x128x128xbf16, #tpu.memory_space<vmem>>, vector<1x1x128x32xbf16>
    %167 = vector.shape_cast %166 : vector<1x1x128x32xbf16> to vector<128x32xbf16>
    %168 = vector.shape_cast %165 : vector<128x32xbf16> to vector<1x1x128x32xbf16>
    tpu.vector_store %arg9[%c0_127, %c0_128, %c0_129, %c96_130], %168 {strides = array<i32>} : memref<1x2x128x128xbf16, #tpu.memory_space<vmem>>, vector<1x1x128x32xbf16>,
    %c0_131 = arith.constant 0 : index
    %c1_132 = arith.constant 1 : index
    %c0_133 = arith.constant 0 : index
    %c0_134 = arith.constant 0 : index
    %169 = vector.load %arg3[%c0_131, %c1_132, %c0_133, %c0_134] : memref<1x2x128x128xbf16, #tpu.memory_space<vmem>>, vector<1x1x128x32xbf16>
    %170 = vector.shape_cast %169 : vector<1x1x128x32xbf16> to vector<128x32xbf16>
    %c0_135 = arith.constant 0 : index
    %c1_136 = arith.constant 1 : index
    %c0_137 = arith.constant 0 : index
    %c0_138 = arith.constant 0 : index
    %171 = vector.load %arg4[%c0_135, %c1_136, %c0_137, %c0_138] : memref<1x2x128x128xbf16, #tpu.memory_space<vmem>>, vector<1x1x128x32xbf16>
    %172 = vector.shape_cast %171 : vector<1x1x128x32xbf16> to vector<128x32xbf16>
    %c0_139 = arith.constant 0 : index
    %c1_140 = arith.constant 1 : index
    %c0_141 = arith.constant 0 : index
    %c0_142 = arith.constant 0 : index
    %173 = vector.load %arg6[%c0_139, %c1_140, %c0_141, %c0_142] : memref<1x2x128x128xbf16, #tpu.memory_space<vmem>>, vector<1x1x128x32xbf16>
    %174 = vector.shape_cast %173 : vector<1x1x128x32xbf16> to vector<128x32xbf16>
    %175 = tpu.concatenate %172, %174 in 0 : vector<128x32xbf16>, vector<128x32xbf16> -> vector<256x32xbf16>
    %c0_143 = arith.constant 0 : index
    %c1_144 = arith.constant 1 : index
    %c0_145 = arith.constant 0 : index
    %c0_146 = arith.constant 0 : index
    %176 = vector.load %arg5[%c0_143, %c1_144, %c0_145, %c0_146] : memref<1x2x128x128xbf16, #tpu.memory_space<vmem>>, vector<1x1x128x32xbf16>
    %177 = vector.shape_cast %176 : vector<1x1x128x32xbf16> to vector<128x32xbf16>
    %c0_147 = arith.constant 0 : index
    %c1_148 = arith.constant 1 : index
    %c0_149 = arith.constant 0 : index
    %c0_150 = arith.constant 0 : index
    %178 = vector.load %arg7[%c0_147, %c1_148, %c0_149, %c0_150] : memref<1x2x128x128xbf16, #tpu.memory_space<vmem>>, vector<1x1x128x32xbf16>
    %179 = vector.shape_cast %178 : vector<1x1x128x32xbf16> to vector<128x32xbf16>
    %180 = tpu.concatenate %177, %179 in 0 : vector<128x32xbf16>, vector<128x32xbf16> -> vector<256x32xbf16>
    %cst_151 = arith.constant dense<0.000000e+00> : vector<128x256xf32>
    %181 = tpu.matmul %170, %175, %cst_151 {dimension_numbers = #tpu.dot_dimension_numbers<[1], [1], [0], [0], [0, 0, 1, 0], [], []>} : vector<128x32xbf16>, vector<256x32xbf16>, vector<128x256xf32> -> vector<128x256xf32>
    %c0_152 = arith.constant 0 : index
    %c1_153 = arith.constant 1 : index
    %c0_154 = arith.constant 0 : index
    %c0_155 = arith.constant 0 : index
    %182 = vector.load %arg8[%c0_152, %c1_153, %c0_154, %c0_155] : memref<1x2x4x256xf32, #tpu.memory_space<vmem>>, vector<1x1x1x256xf32>
    %183 = vector.shape_cast %182 : vector<1x1x1x256xf32> to vector<1x256xf32>
    %184 = vector.broadcast %183 : vector<1x256xf32> to vector<128x256xf32>
    %185 = arith.addf %181, %184 : vector<128x256xf32>
    %cst_156 = arith.constant dense<0xFF800000> : vector<128xf32>
    %186 = vector.multi_reduction <maximumf>, %185, %cst_156 [1] : vector<128x256xf32> to vector<128xf32>
    %187 = vector.shape_cast %186 : vector<128xf32> to vector<128x1xf32>
    %188 = vector.broadcast %187 : vector<128x1xf32> to vector<128x256xf32>
    %189 = arith.subf %185, %188 : vector<128x256xf32>
    %190 = math.exp %189 : vector<128x256xf32>
    %cst_157 = arith.constant dense<0.000000e+00> : vector<128xf32>
    %191 = vector.multi_reduction <add>, %190, %cst_157 [1] : vector<128x256xf32> to vector<128xf32>
    %192 = vector.shape_cast %191 : vector<128xf32> to vector<128x1xf32>
    %193 = arith.truncf %190 : vector<128x256xf32> to vector<128x256xbf16>
    %cst_158 = arith.constant dense<0.000000e+00> : vector<128x32xf32>
    %194 = tpu.matmul %193, %180, %cst_158 {dimension_numbers = #tpu.dot_dimension_numbers<[1], [0], [0], [1], [0, 0, 1, 1], [], []>} : vector<128x256xbf16>, vector<256x32xbf16>, vector<128x32xf32> -> vector<128x32xf32>
    %c8_i32_159 = arith.constant 8 : i32
    %195 = arith.muli %arg0, %c8_i32_159 : i32
    %c1_i32_160 = arith.constant 1 : i32
    %196 = arith.addi %0, %c1_i32_160 : i32
    %c4_i32_161 = arith.constant 4 : i32
    %197 = arith.muli %196, %c4_i32_161 : i32
    %198 = arith.addi %195, %197 : i32
    %c0_i32_162 = arith.constant 0 : i32
    %199 = arith.addi %198, %c0_i32_162 : i32
    %200 = arith.index_cast %199 : i32 to index
    %201 = memref.load %arg2[%200] : memref<16xf32, #tpu.memory_space<smem>>
    %202 = tpu.reciprocal %192 {approx = true} : vector<128x1xf32> -> vector<128x1xf32>
    %203 = vector.broadcast %201 : f32 to vector<128x1xf32>
    %204 = arith.mulf %203, %202 : vector<128x1xf32>
    %205 = vector.broadcast %204 : vector<128x1xf32> to vector<128x32xf32>
    %206 = arith.mulf %194, %205 : vector<128x32xf32>
    %207 = arith.truncf %206 : vector<128x32xf32> to vector<128x32xbf16>
    %c0_163 = arith.constant 0 : index
    %c1_164 = arith.constant 1 : index
    %c0_165 = arith.constant 0 : index
    %c0_166 = arith.constant 0 : index
    %208 = vector.load %arg9[%c0_163, %c1_164, %c0_165, %c0_166] : memref<1x2x128x128xbf16, #tpu.memory_space<vmem>>, vector<1x1x128x32xbf16>
    %209 = vector.shape_cast %208 : vector<1x1x128x32xbf16> to vector<128x32xbf16>
    %210 = vector.shape_cast %207 : vector<128x32xbf16> to vector<1x1x128x32xbf16>
    tpu.vector_store %arg9[%c0_163, %c1_164, %c0_165, %c0_166], %210 {strides = array<i32>} : memref<1x2x128x128xbf16, #tpu.memory_space<vmem>>, vector<1x1x128x32xbf16>,
    %c0_167 = arith.constant 0 : index
    %c1_168 = arith.constant 1 : index
    %c0_169 = arith.constant 0 : index
    %c32_170 = arith.constant 32 : index
    %211 = vector.load %arg3[%c0_167, %c1_168, %c0_169, %c32_170] : memref<1x2x128x128xbf16, #tpu.memory_space<vmem>>, vector<1x1x128x32xbf16>
    %212 = vector.shape_cast %211 : vector<1x1x128x32xbf16> to vector<128x32xbf16>
    %c0_171 = arith.constant 0 : index
    %c1_172 = arith.constant 1 : index
    %c0_173 = arith.constant 0 : index
    %c32_174 = arith.constant 32 : index
    %213 = vector.load %arg4[%c0_171, %c1_172, %c0_173, %c32_174] : memref<1x2x128x128xbf16, #tpu.memory_space<vmem>>, vector<1x1x128x32xbf16>
    %214 = vector.shape_cast %213 : vector<1x1x128x32xbf16> to vector<128x32xbf16>
    %c0_175 = arith.constant 0 : index
    %c1_176 = arith.constant 1 : index
    %c0_177 = arith.constant 0 : index
    %c32_178 = arith.constant 32 : index
    %215 = vector.load %arg6[%c0_175, %c1_176, %c0_177, %c32_178] : memref<1x2x128x128xbf16, #tpu.memory_space<vmem>>, vector<1x1x128x32xbf16>
    %216 = vector.shape_cast %215 : vector<1x1x128x32xbf16> to vector<128x32xbf16>
    %217 = tpu.concatenate %214, %216 in 0 : vector<128x32xbf16>, vector<128x32xbf16> -> vector<256x32xbf16>
    %c0_179 = arith.constant 0 : index
    %c1_180 = arith.constant 1 : index
    %c0_181 = arith.constant 0 : index
    %c32_182 = arith.constant 32 : index
    %218 = vector.load %arg5[%c0_179, %c1_180, %c0_181, %c32_182] : memref<1x2x128x128xbf16, #tpu.memory_space<vmem>>, vector<1x1x128x32xbf16>
    %219 = vector.shape_cast %218 : vector<1x1x128x32xbf16> to vector<128x32xbf16>
    %c0_183 = arith.constant 0 : index
    %c1_184 = arith.constant 1 : index
    %c0_185 = arith.constant 0 : index
    %c32_186 = arith.constant 32 : index
    %220 = vector.load %arg7[%c0_183, %c1_184, %c0_185, %c32_186] : memref<1x2x128x128xbf16, #tpu.memory_space<vmem>>, vector<1x1x128x32xbf16>
    %221 = vector.shape_cast %220 : vector<1x1x128x32xbf16> to vector<128x32xbf16>
    %222 = tpu.concatenate %219, %221 in 0 : vector<128x32xbf16>, vector<128x32xbf16> -> vector<256x32xbf16>
    %cst_187 = arith.constant dense<0.000000e+00> : vector<128x256xf32>
    %223 = tpu.matmul %212, %217, %cst_187 {dimension_numbers = #tpu.dot_dimension_numbers<[1], [1], [0], [0], [0, 0, 1, 0], [], []>} : vector<128x32xbf16>, vector<256x32xbf16>, vector<128x256xf32> -> vector<128x256xf32>
    %c0_188 = arith.constant 0 : index
    %c1_189 = arith.constant 1 : index
    %c1_190 = arith.constant 1 : index
    %c0_191 = arith.constant 0 : index
    %224 = vector.load %arg8[%c0_188, %c1_189, %c1_190, %c0_191] : memref<1x2x4x256xf32, #tpu.memory_space<vmem>>, vector<1x1x1x256xf32>
    %225 = vector.shape_cast %224 : vector<1x1x1x256xf32> to vector<1x256xf32>
    %226 = vector.broadcast %225 : vector<1x256xf32> to vector<128x256xf32>
    %227 = arith.addf %223, %226 : vector<128x256xf32>
    %cst_192 = arith.constant dense<0xFF800000> : vector<128xf32>
    %228 = vector.multi_reduction <maximumf>, %227, %cst_192 [1] : vector<128x256xf32> to vector<128xf32>
    %229 = vector.shape_cast %228 : vector<128xf32> to vector<128x1xf32>
    %230 = vector.broadcast %229 : vector<128x1xf32> to vector<128x256xf32>
    %231 = arith.subf %227, %230 : vector<128x256xf32>
    %232 = math.exp %231 : vector<128x256xf32>
    %cst_193 = arith.constant dense<0.000000e+00> : vector<128xf32>
    %233 = vector.multi_reduction <add>, %232, %cst_193 [1] : vector<128x256xf32> to vector<128xf32>
    %234 = vector.shape_cast %233 : vector<128xf32> to vector<128x1xf32>
    %235 = arith.truncf %232 : vector<128x256xf32> to vector<128x256xbf16>
    %cst_194 = arith.constant dense<0.000000e+00> : vector<128x32xf32>
    %236 = tpu.matmul %235, %222, %cst_194 {dimension_numbers = #tpu.dot_dimension_numbers<[1], [0], [0], [1], [0, 0, 1, 1], [], []>} : vector<128x256xbf16>, vector<256x32xbf16>, vector<128x32xf32> -> vector<128x32xf32>
    %c8_i32_195 = arith.constant 8 : i32
    %237 = arith.muli %arg0, %c8_i32_195 : i32
    %c1_i32_196 = arith.constant 1 : i32
    %238 = arith.addi %0, %c1_i32_196 : i32
    %c4_i32_197 = arith.constant 4 : i32
    %239 = arith.muli %238, %c4_i32_197 : i32
    %240 = arith.addi %237, %239 : i32
    %c1_i32_198 = arith.constant 1 : i32
    %241 = arith.addi %240, %c1_i32_198 : i32
    %242 = arith.index_cast %241 : i32 to index
    %243 = memref.load %arg2[%242] : memref<16xf32, #tpu.memory_space<smem>>
    %244 = tpu.reciprocal %234 {approx = true} : vector<128x1xf32> -> vector<128x1xf32>
    %245 = vector.broadcast %243 : f32 to vector<128x1xf32>
    %246 = arith.mulf %245, %244 : vector<128x1xf32>
    %247 = vector.broadcast %246 : vector<128x1xf32> to vector<128x32xf32>
    %248 = arith.mulf %236, %247 : vector<128x32xf32>
    %249 = arith.truncf %248 : vector<128x32xf32> to vector<128x32xbf16>
    %c0_199 = arith.constant 0 : index
    %c1_200 = arith.constant 1 : index
    %c0_201 = arith.constant 0 : index
    %c32_202 = arith.constant 32 : index
    %250 = vector.load %arg9[%c0_199, %c1_200, %c0_201, %c32_202] : memref<1x2x128x128xbf16, #tpu.memory_space<vmem>>, vector<1x1x128x32xbf16>
    %251 = vector.shape_cast %250 : vector<1x1x128x32xbf16> to vector<128x32xbf16>
    %252 = vector.shape_cast %249 : vector<128x32xbf16> to vector<1x1x128x32xbf16>
    tpu.vector_store %arg9[%c0_199, %c1_200, %c0_201, %c32_202], %252 {strides = array<i32>} : memref<1x2x128x128xbf16, #tpu.memory_space<vmem>>, vector<1x1x128x32xbf16>,
    %c0_203 = arith.constant 0 : index
    %c1_204 = arith.constant 1 : index
    %c0_205 = arith.constant 0 : index
    %c64_206 = arith.constant 64 : index
    %253 = vector.load %arg3[%c0_203, %c1_204, %c0_205, %c64_206] : memref<1x2x128x128xbf16, #tpu.memory_space<vmem>>, vector<1x1x128x32xbf16>
    %254 = vector.shape_cast %253 : vector<1x1x128x32xbf16> to vector<128x32xbf16>
    %c0_207 = arith.constant 0 : index
    %c1_208 = arith.constant 1 : index
    %c0_209 = arith.constant 0 : index
    %c64_210 = arith.constant 64 : index
    %255 = vector.load %arg4[%c0_207, %c1_208, %c0_209, %c64_210] : memref<1x2x128x128xbf16, #tpu.memory_space<vmem>>, vector<1x1x128x32xbf16>
    %256 = vector.shape_cast %255 : vector<1x1x128x32xbf16> to vector<128x32xbf16>
    %c0_211 = arith.constant 0 : index
    %c1_212 = arith.constant 1 : index
    %c0_213 = arith.constant 0 : index
    %c64_214 = arith.constant 64 : index
    %257 = vector.load %arg6[%c0_211, %c1_212, %c0_213, %c64_214] : memref<1x2x128x128xbf16, #tpu.memory_space<vmem>>, vector<1x1x128x32xbf16>
    %258 = vector.shape_cast %257 : vector<1x1x128x32xbf16> to vector<128x32xbf16>
    %259 = tpu.concatenate %256, %258 in 0 : vector<128x32xbf16>, vector<128x32xbf16> -> vector<256x32xbf16>
    %c0_215 = arith.constant 0 : index
    %c1_216 = arith.constant 1 : index
    %c0_217 = arith.constant 0 : index
    %c64_218 = arith.constant 64 : index
    %260 = vector.load %arg5[%c0_215, %c1_216, %c0_217, %c64_218] : memref<1x2x128x128xbf16, #tpu.memory_space<vmem>>, vector<1x1x128x32xbf16>
    %261 = vector.shape_cast %260 : vector<1x1x128x32xbf16> to vector<128x32xbf16>
    %c0_219 = arith.constant 0 : index
    %c1_220 = arith.constant 1 : index
    %c0_221 = arith.constant 0 : index
    %c64_222 = arith.constant 64 : index
    %262 = vector.load %arg7[%c0_219, %c1_220, %c0_221, %c64_222] : memref<1x2x128x128xbf16, #tpu.memory_space<vmem>>, vector<1x1x128x32xbf16>
    %263 = vector.shape_cast %262 : vector<1x1x128x32xbf16> to vector<128x32xbf16>
    %264 = tpu.concatenate %261, %263 in 0 : vector<128x32xbf16>, vector<128x32xbf16> -> vector<256x32xbf16>
    %cst_223 = arith.constant dense<0.000000e+00> : vector<128x256xf32>
    %265 = tpu.matmul %254, %259, %cst_223 {dimension_numbers = #tpu.dot_dimension_numbers<[1], [1], [0], [0], [0, 0, 1, 0], [], []>} : vector<128x32xbf16>, vector<256x32xbf16>, vector<128x256xf32> -> vector<128x256xf32>
    %c0_224 = arith.constant 0 : index
    %c1_225 = arith.constant 1 : index
    %c2_226 = arith.constant 2 : index
    %c0_227 = arith.constant 0 : index
    %266 = vector.load %arg8[%c0_224, %c1_225, %c2_226, %c0_227] : memref<1x2x4x256xf32, #tpu.memory_space<vmem>>, vector<1x1x1x256xf32>
    %267 = vector.shape_cast %266 : vector<1x1x1x256xf32> to vector<1x256xf32>
    %268 = vector.broadcast %267 : vector<1x256xf32> to vector<128x256xf32>
    %269 = arith.addf %265, %268 : vector<128x256xf32>
    %cst_228 = arith.constant dense<0xFF800000> : vector<128xf32>
    %270 = vector.multi_reduction <maximumf>, %269, %cst_228 [1] : vector<128x256xf32> to vector<128xf32>
    %271 = vector.shape_cast %270 : vector<128xf32> to vector<128x1xf32>
    %272 = vector.broadcast %271 : vector<128x1xf32> to vector<128x256xf32>
    %273 = arith.subf %269, %272 : vector<128x256xf32>
    %274 = math.exp %273 : vector<128x256xf32>
    %cst_229 = arith.constant dense<0.000000e+00> : vector<128xf32>
    %275 = vector.multi_reduction <add>, %274, %cst_229 [1] : vector<128x256xf32> to vector<128xf32>
    %276 = vector.shape_cast %275 : vector<128xf32> to vector<128x1xf32>
    %277 = arith.truncf %274 : vector<128x256xf32> to vector<128x256xbf16>
    %cst_230 = arith.constant dense<0.000000e+00> : vector<128x32xf32>
    %278 = tpu.matmul %277, %264, %cst_230 {dimension_numbers = #tpu.dot_dimension_numbers<[1], [0], [0], [1], [0, 0, 1, 1], [], []>} : vector<128x256xbf16>, vector<256x32xbf16>, vector<128x32xf32> -> vector<128x32xf32>
    %c8_i32_231 = arith.constant 8 : i32
    %279 = arith.muli %arg0, %c8_i32_231 : i32
    %c1_i32_232 = arith.constant 1 : i32
    %280 = arith.addi %0, %c1_i32_232 : i32
    %c4_i32_233 = arith.constant 4 : i32
    %281 = arith.muli %280, %c4_i32_233 : i32
    %282 = arith.addi %279, %281 : i32
    %c2_i32_234 = arith.constant 2 : i32
    %283 = arith.addi %282, %c2_i32_234 : i32
    %284 = arith.index_cast %283 : i32 to index
    %285 = memref.load %arg2[%284] : memref<16xf32, #tpu.memory_space<smem>>
    %286 = tpu.reciprocal %276 {approx = true} : vector<128x1xf32> -> vector<128x1xf32>
    %287 = vector.broadcast %285 : f32 to vector<128x1xf32>
    %288 = arith.mulf %287, %286 : vector<128x1xf32>
    %289 = vector.broadcast %288 : vector<128x1xf32> to vector<128x32xf32>
    %290 = arith.mulf %278, %289 : vector<128x32xf32>
    %291 = arith.truncf %290 : vector<128x32xf32> to vector<128x32xbf16>
    %c0_235 = arith.constant 0 : index
    %c1_236 = arith.constant 1 : index
    %c0_237 = arith.constant 0 : index
    %c64_238 = arith.constant 64 : index
    %292 = vector.load %arg9[%c0_235, %c1_236, %c0_237, %c64_238] : memref<1x2x128x128xbf16, #tpu.memory_space<vmem>>, vector<1x1x128x32xbf16>
    %293 = vector.shape_cast %292 : vector<1x1x128x32xbf16> to vector<128x32xbf16>
    %294 = vector.shape_cast %291 : vector<128x32xbf16> to vector<1x1x128x32xbf16>
    tpu.vector_store %arg9[%c0_235, %c1_236, %c0_237, %c64_238], %294 {strides = array<i32>} : memref<1x2x128x128xbf16, #tpu.memory_space<vmem>>, vector<1x1x128x32xbf16>,
    %c0_239 = arith.constant 0 : index
    %c1_240 = arith.constant 1 : index
    %c0_241 = arith.constant 0 : index
    %c96_242 = arith.constant 96 : index
    %295 = vector.load %arg3[%c0_239, %c1_240, %c0_241, %c96_242] : memref<1x2x128x128xbf16, #tpu.memory_space<vmem>>, vector<1x1x128x32xbf16>
    %296 = vector.shape_cast %295 : vector<1x1x128x32xbf16> to vector<128x32xbf16>
    %c0_243 = arith.constant 0 : index
    %c1_244 = arith.constant 1 : index
    %c0_245 = arith.constant 0 : index
    %c96_246 = arith.constant 96 : index
    %297 = vector.load %arg4[%c0_243, %c1_244, %c0_245, %c96_246] : memref<1x2x128x128xbf16, #tpu.memory_space<vmem>>, vector<1x1x128x32xbf16>
    %298 = vector.shape_cast %297 : vector<1x1x128x32xbf16> to vector<128x32xbf16>
    %c0_247 = arith.constant 0 : index
    %c1_248 = arith.constant 1 : index
    %c0_249 = arith.constant 0 : index
    %c96_250 = arith.constant 96 : index
    %299 = vector.load %arg6[%c0_247, %c1_248, %c0_249, %c96_250] : memref<1x2x128x128xbf16, #tpu.memory_space<vmem>>, vector<1x1x128x32xbf16>
    %300 = vector.shape_cast %299 : vector<1x1x128x32xbf16> to vector<128x32xbf16>
    %301 = tpu.concatenate %298, %300 in 0 : vector<128x32xbf16>, vector<128x32xbf16> -> vector<256x32xbf16>
    %c0_251 = arith.constant 0 : index
    %c1_252 = arith.constant 1 : index
    %c0_253 = arith.constant 0 : index
    %c96_254 = arith.constant 96 : index
    %302 = vector.load %arg5[%c0_251, %c1_252, %c0_253, %c96_254] : memref<1x2x128x128xbf16, #tpu.memory_space<vmem>>, vector<1x1x128x32xbf16>
    %303 = vector.shape_cast %302 : vector<1x1x128x32xbf16> to vector<128x32xbf16>
    %c0_255 = arith.constant 0 : index
    %c1_256 = arith.constant 1 : index
    %c0_257 = arith.constant 0 : index
    %c96_258 = arith.constant 96 : index
    %304 = vector.load %arg7[%c0_255, %c1_256, %c0_257, %c96_258] : memref<1x2x128x128xbf16, #tpu.memory_space<vmem>>, vector<1x1x128x32xbf16>
    %305 = vector.shape_cast %304 : vector<1x1x128x32xbf16> to vector<128x32xbf16>
    %306 = tpu.concatenate %303, %305 in 0 : vector<128x32xbf16>, vector<128x32xbf16> -> vector<256x32xbf16>
    %cst_259 = arith.constant dense<0.000000e+00> : vector<128x256xf32>
    %307 = tpu.matmul %296, %301, %cst_259 {dimension_numbers = #tpu.dot_dimension_numbers<[1], [1], [0], [0], [0, 0, 1, 0], [], []>} : vector<128x32xbf16>, vector<256x32xbf16>, vector<128x256xf32> -> vector<128x256xf32>
    %c0_260 = arith.constant 0 : index
    %c1_261 = arith.constant 1 : index
    %c3_262 = arith.constant 3 : index
    %c0_263 = arith.constant 0 : index
    %308 = vector.load %arg8[%c0_260, %c1_261, %c3_262, %c0_263] : memref<1x2x4x256xf32, #tpu.memory_space<vmem>>, vector<1x1x1x256xf32>
    %309 = vector.shape_cast %308 : vector<1x1x1x256xf32> to vector<1x256xf32>
    %310 = vector.broadcast %309 : vector<1x256xf32> to vector<128x256xf32>
    %311 = arith.addf %307, %310 : vector<128x256xf32>
    %cst_264 = arith.constant dense<0xFF800000> : vector<128xf32>
    %312 = vector.multi_reduction <maximumf>, %311, %cst_264 [1] : vector<128x256xf32> to vector<128xf32>
    %313 = vector.shape_cast %312 : vector<128xf32> to vector<128x1xf32>
    %314 = vector.broadcast %313 : vector<128x1xf32> to vector<128x256xf32>
    %315 = arith.subf %311, %314 : vector<128x256xf32>
    %316 = math.exp %315 : vector<128x256xf32>
    %cst_265 = arith.constant dense<0.000000e+00> : vector<128xf32>
    %317 = vector.multi_reduction <add>, %316, %cst_265 [1] : vector<128x256xf32> to vector<128xf32>
    %318 = vector.shape_cast %317 : vector<128xf32> to vector<128x1xf32>
    %319 = arith.truncf %316 : vector<128x256xf32> to vector<128x256xbf16>
    %cst_266 = arith.constant dense<0.000000e+00> : vector<128x32xf32>
    %320 = tpu.matmul %319, %306, %cst_266 {dimension_numbers = #tpu.dot_dimension_numbers<[1], [0], [0], [1], [0, 0, 1, 1], [], []>} : vector<128x256xbf16>, vector<256x32xbf16>, vector<128x32xf32> -> vector<128x32xf32>
    %c8_i32_267 = arith.constant 8 : i32
    %321 = arith.muli %arg0, %c8_i32_267 : i32
    %c1_i32_268 = arith.constant 1 : i32
    %322 = arith.addi %0, %c1_i32_268 : i32
    %c4_i32_269 = arith.constant 4 : i32
    %323 = arith.muli %322, %c4_i32_269 : i32
    %324 = arith.addi %321, %323 : i32
    %c3_i32_270 = arith.constant 3 : i32
    %325 = arith.addi %324, %c3_i32_270 : i32
    %326 = arith.index_cast %325 : i32 to index
    %327 = memref.load %arg2[%326] : memref<16xf32, #tpu.memory_space<smem>>
    %328 = tpu.reciprocal %318 {approx = true} : vector<128x1xf32> -> vector<128x1xf32>
    %329 = vector.broadcast %327 : f32 to vector<128x1xf32>
    %330 = arith.mulf %329, %328 : vector<128x1xf32>
    %331 = vector.broadcast %330 : vector<128x1xf32> to vector<128x32xf32>
    %332 = arith.mulf %320, %331 : vector<128x32xf32>
    %333 = arith.truncf %332 : vector<128x32xf32> to vector<128x32xbf16>
    %c0_271 = arith.constant 0 : index
    %c1_272 = arith.constant 1 : index
    %c0_273 = arith.constant 0 : index
    %c96_274 = arith.constant 96 : index
    %334 = vector.load %arg9[%c0_271, %c1_272, %c0_273, %c96_274] : memref<1x2x128x128xbf16, #tpu.memory_space<vmem>>, vector<1x1x128x32xbf16>
    %335 = vector.shape_cast %334 : vector<1x1x128x32xbf16> to vector<128x32xbf16>
    %336 = vector.shape_cast %333 : vector<128x32xbf16> to vector<1x1x128x32xbf16>
    tpu.vector_store %arg9[%c0_271, %c1_272, %c0_273, %c96_274], %336 {strides = array<i32>} : memref<1x2x128x128xbf16, #tpu.memory_space<vmem>>, vector<1x1x128x32xbf16>,
    return
  }
  func.func @transform_0(%arg0: i32, %arg1: i32) -> i32 {
    %c0_i32 = arith.constant 0 : i32
    %c0_i32_0 = arith.constant 0 : i32
    return %c0_i32 : i32
  }
  func.func @transform_1(%arg0: i32, %arg1: i32) -> (i32, i32, i32, i32) {
    %c0_i32 = arith.constant 0 : i32
    %c0_i32_0 = arith.constant 0 : i32
    %c0_i32_1 = arith.constant 0 : i32
    return %arg0, %arg1, %c0_i32, %c0_i32_0 : i32, i32, i32, i32
  }
  func.func @transform_2(%arg0: i32, %arg1: i32) -> (i32, i32, i32, i32) {
    %c0_i32 = arith.constant 0 : i32
    %c0_i32_0 = arith.constant 0 : i32
    %c0_i32_1 = arith.constant 0 : i32
    return %arg0, %arg1, %c0_i32, %c0_i32_0 : i32, i32, i32, i32
  }
  func.func @transform_3(%arg0: i32, %arg1: i32) -> (i32, i32, i32, i32) {
    %c0_i32 = arith.constant 0 : i32
    %c0_i32_0 = arith.constant 0 : i32
    %c0_i32_1 = arith.constant 0 : i32
    return %arg0, %arg1, %c0_i32, %c0_i32_0 : i32, i32, i32, i32
  }
  func.func @transform_4(%arg0: i32, %arg1: i32) -> (i32, i32, i32, i32) {
    %c0_i32 = arith.constant 0 : i32
    %c0_i32_0 = arith.constant 0 : i32
    %c0_i32_1 = arith.constant 0 : i32
    return %arg0, %arg1, %c0_i32, %c0_i32_0 : i32, i32, i32, i32
  }
  func.func @transform_5(%arg0: i32, %arg1: i32) -> (i32, i32, i32, i32) {
    %c0_i32 = arith.constant 0 : i32
    %c0_i32_0 = arith.constant 0 : i32
    %c0_i32_1 = arith.constant 0 : i32
    return %arg0, %arg1, %c0_i32, %c0_i32_0 : i32, i32, i32, i32
  }
  func.func @transform_6(%arg0: i32, %arg1: i32) -> (i32, i32, i32, i32) {
    %c0_i32 = arith.constant 0 : i32
    %c0_i32_0 = arith.constant 0 : i32
    %c0_i32_1 = arith.constant 0 : i32
    return %arg0, %arg1, %c0_i32, %c0_i32_0 : i32, i32, i32, i32
  }
  func.func @transform_7(%arg0: i32, %arg1: i32) -> (i32, i32, i32, i32) {
    %c0_i32 = arith.constant 0 : i32
    %c0_i32_0 = arith.constant 0 : i32
    %c0_i32_1 = arith.constant 0 : i32
    return %arg0, %arg1, %c0_i32, %c0_i32_0 : i32, i32, i32, i32
  }
}

</mosaic_0001>

<llo_original>
// kernel: tpu_custom_call.1
$region0: #{tpu_custom_call.1}
  #allocation0 [shape = 'u32[]', space=smem, size = 0x4, offset = 0x4, fixed_abs, tag = 'smem constant byte address 0x4 - core index']
  #allocation1 [shape = 'u32[144,128]{1,0:T(1,128)}', space=vmem, size = 0x12000, scoped, tag = 'internal scratch']
  %s0 = inlined_call_operand.hbm [shape: f32[16], index: 0, kind: input, shape index: {}]
  %s1 = inlined_call_operand.hbm [shape: bf16[2,2,128,128], index: 1, kind: input, shape index: {}]
  %s2 = inlined_call_operand.hbm [shape: bf16[2,2,128,128], index: 2, kind: input, shape index: {}]
  %s3 = inlined_call_operand.hbm [shape: bf16[2,2,128,128], index: 3, kind: input, shape index: {}]
  %s4 = inlined_call_operand.hbm [shape: bf16[2,2,128,128], index: 4, kind: input, shape index: {}]
  %s5 = inlined_call_operand.hbm [shape: bf16[2,2,128,128], index: 5, kind: input, shape index: {}]
  %s6 = inlined_call_operand.hbm [shape: f32[2,2,4,256], index: 6, kind: input, shape index: {}]
  %s7 = inlined_call_operand.hbm [shape: bf16[2,2,128,128], index: 7, kind: output, shape index: {}]
  %s8 = sld [smem:[#allocation0]]
  $region89: #{tpu_custom_call.1} parent=0
    _
  %s10 = ssub.s32 1, %s8
  %s11 = scalar_select 0, %s10, %s8
  $region1: #{tpu_custom_call.1} parent=0
    #allocation2 [shape = 'u8[512]{0}', space=smem, size = 0x200, scoped, tag = 'input window, operand 0, single buffered']
    #allocation3 [shape = 's32[2]{0}', space=sflag, size = 0x8, scoped, tag = 'scoped memory for tpu_custom_call.1']
    #allocation4 [shape = 's32[2]{0}', space=sflag, size = 0x8, scoped, tag = 'scoped memory for tpu_custom_call.1']
    #allocation5 [shape = 's32[2]{0}', space=sflag, size = 0x8, scoped, tag = 'scoped memory for tpu_custom_call.1']
    #allocation6 [shape = 'u8[131072]{0}', space=vmem, size = 0x20000, scoped, tag = 'input window, operand 1']
    #allocation7 [shape = 'u8[131072]{0}', space=vmem, size = 0x20000, scoped, tag = 'input window, operand 2']
    #allocation8 [shape = 's32[2]{0}', space=sflag, size = 0x8, scoped, tag = 'scoped memory for tpu_custom_call.1']
    #allocation9 [shape = 'u8[131072]{0}', space=vmem, size = 0x20000, scoped, tag = 'input window, operand 3']
    #allocation10 [shape = 'u8[131072]{0}', space=vmem, size = 0x20000, scoped, tag = 'input window, operand 4']
    #allocation11 [shape = 's32[2]{0}', space=sflag, size = 0x8, scoped, tag = 'scoped memory for tpu_custom_call.1']
    #allocation12 [shape = 'u8[131072]{0}', space=vmem, size = 0x20000, scoped, tag = 'input window, operand 5']
    #allocation13 [shape = 'u8[16384]{0}', space=vmem, size = 0x4000, scoped, tag = 'input window, operand 6']
    #allocation14 [shape = 's32[2]{0}', space=sflag, size = 0x8, scoped, tag = 'scoped memory for tpu_custom_call.1']
    #allocation15 [shape = 'u8[131072]{0}', space=vmem, size = 0x20000, scoped, tag = 'output window, operand 0']
    %12 = vsyncpa [#allocation5], 0
    %13 = vsyncpa [#allocation3], 0
    %s14 = scalar_lea.sflag [#allocation3], 1
    %15 = vsyncpa %s14, 0
    %16 = vsyncpa [#allocation8], 0
    %s17 = scalar_lea.sflag [#allocation8], 1
    %18 = vsyncpa %s17, 0
    %19 = vsyncpa [#allocation11], 0
    %s20 = scalar_lea.sflag [#allocation11], 1
    %21 = vsyncpa %s20, 0
    %22 = vsyncpa [#allocation14], 0
    %s23 = scalar_lea.sflag [#allocation14], 1
    %24 = vsyncpa %s23, 0
    %25 = vsyncpa [#allocation4], 0
    %s26 = scalar_lea.sflag [#allocation4], 1
    %27 = vsyncpa %s26, 0
    loop: start=0, step=1, limit=4
    $region2: #{tpu_custom_call.1} parent=1 // loop_pre_header
      _
    $region3: #{tpu_custom_call.1} parent=1 // loop_header
      %s29 = sphi 0, %s33
      %p30 = scmp.ge.s32.totalorder %s29, 4
      %s36 = sphi 0, %s48
      %s37 = sphi 0, %s44
      %s38 = sphi 0, %s36
      %s39 = sphi 0, %s37
      %s40 = sphi 0, %s38
      %s41 = sphi 0, %s39
      %s49 = sphi 0, %s49
      %s51 = sphi 0, %s49
      %s52 = sphi 0, %s51
      %s66 = sphi 0, %s52
      %s74 = sphi 0, %s76
      %s77 = sphi 0, %s74
      %s78 = sphi 0, %s77
      %s94 = sphi 0, %s78
      %s102 = sphi 0, %s104
      %s105 = sphi 0, %s102
      %s106 = sphi 0, %s105
      %s122 = sphi 0, %s106
      %s130 = sphi 0, %s132
      %s133 = sphi 0, %s130
      %s134 = sphi 0, %s133
      %s150 = sphi 0, %s134
      %s158 = sphi 0, %s160
      %s161 = sphi 0, %s158
      %s162 = sphi 0, %s161
      %s178 = sphi 0, %s162
      %s186 = sphi 0, %s188
      %s189 = sphi 0, %s186
      %s190 = sphi 0, %s189
      %s206 = sphi 0, %s190
      %s214 = sphi 0, %s216
      %s217 = sphi 0, %s214
      %s218 = sphi 0, %s217
      %s234 = sphi 0, %s218
      %s242 = sphi 0, %s244
      %s245 = sphi 0, %s242
      %s246 = sphi 0, %s245
      %s262 = sphi 0, %s246
    $region4: #{tpu_custom_call.1} parent=1 // loop_header_branch
      %32 = sbr.rel (%p30) target = $region8
    $region5: #{tpu_custom_call.1} parent=1 // loop_body
      %s34 = ssub.s32 %s29, 1
      %s35 = ssub.s32 %s29, 2
      %s42 = sadd.s32 1, %s37
      %p43 = scmp.ge.s32.totalorder %s42, 1
      %s44 = scalar_select %p43, 0, %s42
      %s45 = sadd.s32 1, %s36
      %s46 = scalar_select %p43, %s45, %s36
      %p47 = scmp.ge.s32.totalorder %s46, 2
      %s48 = scalar_select %p47, 0, %s46
      %s50 = sadd.s32 %s49, 1
      %p53 = scmp.eq.s32.totalorder %s29, 1
      %p54 = scmp.ne.s32.totalorder %s49, %s51
      %p55 = scmp.eq.s32.totalorder %s29, 0
      %p56 = por %p54, %p55
      %p57 = scmp.ne.s32.totalorder %s49, %s51
      %p58 = scmp.eq.s32.totalorder %s34, 1
      %p59 = por %p57, %p58
      %p60 = scmp.ne.s32.totalorder %s51, %s52
      %p61 = scmp.eq.s32.totalorder %s34, 0
      %p62 = por %p60, %p61
      %p63 = scmp.ne.s32.totalorder %s51, %s52
      %p64 = scmp.eq.s32.totalorder %s35, 1
      %p65 = por %p63, %p64
      %p67 = scmp.ne.s32.totalorder %s52, %s66
      %p68 = scmp.eq.s32.totalorder %s35, 0
      %p69 = por %p67, %p68
      %s70 = ssub.s32 %s36, %s48
      %s71 = ssub.s32 %s37, %s44
      %s72 = sor.u32 %s70, %s71
      %p73 = scmp.eq.s32.totalorder %s72, 0
      %s75 = sadd.s32 %s74, 1
      %s76 = scalar_select %p73, %s74, %s75
      %p79 = pneg %p73
      %p80 = scmp.eq.s32.totalorder %s29, 1
      %p81 = por %p79, %p80
      %p82 = scmp.ne.s32.totalorder %s74, %s77
      %p83 = scmp.eq.s32.totalorder %s29, 0
      %p84 = por %p82, %p83
      %p85 = scmp.ne.s32.totalorder %s74, %s77
      %p86 = scmp.eq.s32.totalorder %s34, 1
      %p87 = por %p85, %p86
      %p88 = scmp.ne.s32.totalorder %s77, %s78
      %p89 = scmp.eq.s32.totalorder %s34, 0
      %p90 = por %p88, %p89
      %p91 = scmp.ne.s32.totalorder %s77, %s78
      %p92 = scmp.eq.s32.totalorder %s35, 1
      %p93 = por %p91, %p92
      %p95 = scmp.ne.s32.totalorder %s78, %s94
      %p96 = scmp.eq.s32.totalorder %s35, 0
      %p97 = por %p95, %p96
      %s98 = ssub.s32 %s36, %s48
      %s99 = ssub.s32 %s37, %s44
      %s100 = sor.u32 %s98, %s99
      %p101 = scmp.eq.s32.totalorder %s100, 0
      %s103 = sadd.s32 %s102, 1
      %s104 = scalar_select %p101, %s102, %s103
      %p107 = pneg %p101
      %p108 = scmp.eq.s32.totalorder %s29, 1
      %p109 = por %p107, %p108
      %p110 = scmp.ne.s32.totalorder %s102, %s105
      %p111 = scmp.eq.s32.totalorder %s29, 0
      %p112 = por %p110, %p111
      %p113 = scmp.ne.s32.totalorder %s102, %s105
      %p114 = scmp.eq.s32.totalorder %s34, 1
      %p115 = por %p113, %p114
      %p116 = scmp.ne.s32.totalorder %s105, %s106
      %p117 = scmp.eq.s32.totalorder %s34, 0
      %p118 = por %p116, %p117
      %p119 = scmp.ne.s32.totalorder %s105, %s106
      %p120 = scmp.eq.s32.totalorder %s35, 1
      %p121 = por %p119, %p120
      %p123 = scmp.ne.s32.totalorder %s106, %s122
      %p124 = scmp.eq.s32.totalorder %s35, 0
      %p125 = por %p123, %p124
      %s126 = ssub.s32 %s36, %s48
      %s127 = ssub.s32 %s37, %s44
      %s128 = sor.u32 %s126, %s127
      %p129 = scmp.eq.s32.totalorder %s128, 0
      %s131 = sadd.s32 %s130, 1
      %s132 = scalar_select %p129, %s130, %s131
      %p135 = pneg %p129
      %p136 = scmp.eq.s32.totalorder %s29, 1
      %p137 = por %p135, %p136
      %p138 = scmp.ne.s32.totalorder %s130, %s133
      %p139 = scmp.eq.s32.totalorder %s29, 0
      %p140 = por %p138, %p139
      %p141 = scmp.ne.s32.totalorder %s130, %s133
      %p142 = scmp.eq.s32.totalorder %s34, 1
      %p143 = por %p141, %p142
      %p144 = scmp.ne.s32.totalorder %s133, %s134
      %p145 = scmp.eq.s32.totalorder %s34, 0
      %p146 = por %p144, %p145
      %p147 = scmp.ne.s32.totalorder %s133, %s134
      %p148 = scmp.eq.s32.totalorder %s35, 1
      %p149 = por %p147, %p148
      %p151 = scmp.ne.s32.totalorder %s134, %s150
      %p152 = scmp.eq.s32.totalorder %s35, 0
      %p153 = por %p151, %p152
      %s154 = ssub.s32 %s36, %s48
      %s155 = ssub.s32 %s37, %s44
      %s156 = sor.u32 %s154, %s155
      %p157 = scmp.eq.s32.totalorder %s156, 0
      %s159 = sadd.s32 %s158, 1
      %s160 = scalar_select %p157, %s158, %s159
      %p163 = pneg %p157
      %p164 = scmp.eq.s32.totalorder %s29, 1
      %p165 = por %p163, %p164
      %p166 = scmp.ne.s32.totalorder %s158, %s161
      %p167 = scmp.eq.s32.totalorder %s29, 0
      %p168 = por %p166, %p167
      %p169 = scmp.ne.s32.totalorder %s158, %s161
      %p170 = scmp.eq.s32.totalorder %s34, 1
      %p171 = por %p169, %p170
      %p172 = scmp.ne.s32.totalorder %s161, %s162
      %p173 = scmp.eq.s32.totalorder %s34, 0
      %p174 = por %p172, %p173
      %p175 = scmp.ne.s32.totalorder %s161, %s162
      %p176 = scmp.eq.s32.totalorder %s35, 1
      %p177 = por %p175, %p176
      %p179 = scmp.ne.s32.totalorder %s162, %s178
      %p180 = scmp.eq.s32.totalorder %s35, 0
      %p181 = por %p179, %p180
      %s182 = ssub.s32 %s36, %s48
      %s183 = ssub.s32 %s37, %s44
      %s184 = sor.u32 %s182, %s183
      %p185 = scmp.eq.s32.totalorder %s184, 0
      %s187 = sadd.s32 %s186, 1
      %s188 = scalar_select %p185, %s186, %s187
      %p191 = pneg %p185
      %p192 = scmp.eq.s32.totalorder %s29, 1
      %p193 = por %p191, %p192
      %p194 = scmp.ne.s32.totalorder %s186, %s189
      %p195 = scmp.eq.s32.totalorder %s29, 0
      %p196 = por %p194, %p195
      %p197 = scmp.ne.s32.totalorder %s186, %s189
      %p198 = scmp.eq.s32.totalorder %s34, 1
      %p199 = por %p197, %p198
      %p200 = scmp.ne.s32.totalorder %s189, %s190
      %p201 = scmp.eq.s32.totalorder %s34, 0
      %p202 = por %p200, %p201
      %p203 = scmp.ne.s32.totalorder %s189, %s190
      %p204 = scmp.eq.s32.totalorder %s35, 1
      %p205 = por %p203, %p204
      %p207 = scmp.ne.s32.totalorder %s190, %s206
      %p208 = scmp.eq.s32.totalorder %s35, 0
      %p209 = por %p207, %p208
      %s210 = ssub.s32 %s36, %s48
      %s211 = ssub.s32 %s37, %s44
      %s212 = sor.u32 %s210, %s211
      %p213 = scmp.eq.s32.totalorder %s212, 0
      %s215 = sadd.s32 %s214, 1
      %s216 = scalar_select %p213, %s214, %s215
      %p219 = pneg %p213
      %p220 = scmp.eq.s32.totalorder %s29, 1
      %p221 = por %p219, %p220
      %p222 = scmp.ne.s32.totalorder %s214, %s217
      %p223 = scmp.eq.s32.totalorder %s29, 0
      %p224 = por %p222, %p223
      %p225 = scmp.ne.s32.totalorder %s214, %s217
      %p226 = scmp.eq.s32.totalorder %s34, 1
      %p227 = por %p225, %p226
      %p228 = scmp.ne.s32.totalorder %s217, %s218
      %p229 = scmp.eq.s32.totalorder %s34, 0
      %p230 = por %p228, %p229
      %p231 = scmp.ne.s32.totalorder %s217, %s218
      %p232 = scmp.eq.s32.totalorder %s35, 1
      %p233 = por %p231, %p232
      %p235 = scmp.ne.s32.totalorder %s218, %s234
      %p236 = scmp.eq.s32.totalorder %s35, 0
      %p237 = por %p235, %p236
      %s238 = ssub.s32 %s36, %s48
      %s239 = ssub.s32 %s37, %s44
      %s240 = sor.u32 %s238, %s239
      %p241 = scmp.eq.s32.totalorder %s240, 0
      %s243 = sadd.s32 %s242, 1
      %s244 = scalar_select %p241, %s242, %s243
      %p247 = pneg %p241
      %p248 = scmp.eq.s32.totalorder %s29, 1
      %p249 = por %p247, %p248
      %p250 = scmp.ne.s32.totalorder %s242, %s245
      %p251 = scmp.eq.s32.totalorder %s29, 0
      %p252 = por %p250, %p251
      %p253 = scmp.ne.s32.totalorder %s242, %s245
      %p254 = scmp.eq.s32.totalorder %s34, 1
      %p255 = por %p253, %p254
      %p256 = scmp.ne.s32.totalorder %s245, %s246
      %p257 = scmp.eq.s32.totalorder %s34, 0
      %p258 = por %p256, %p257
      %p259 = scmp.ne.s32.totalorder %s245, %s246
      %p260 = scmp.eq.s32.totalorder %s35, 1
      %p261 = por %p259, %p260
      %p263 = scmp.ne.s32.totalorder %s246, %s262
      %p264 = scmp.eq.s32.totalorder %s35, 0
      %p265 = por %p263, %p264
      %p266 = scmp.le.s32.totalorder 1, %s29
      %p267 = scmp.lt.s32.totalorder %s29, 3
      %p268 = pnand %p266, %p267
      %p269 = pneg %p268
      // Predicated region
      $region9: #{tpu_custom_call.1} parent=5 // pred_check
        _
      $region10: #{tpu_custom_call.1} parent=5 // pred_check_branch
        %271 = sbr.rel (%p268) target = $region12
      $region11: #{tpu_custom_call.1} parent=5 // pred_region
        %s272 = ssub.s32 %s29, 1
        // Predicated region
        $region13: #{tpu_custom_call.1} parent=11 // pred_check
          %p273 = pneg %p62
        $region14: #{tpu_custom_call.1} parent=11 // pred_check_branch
          %275 = sbr.rel (%p273) target = $region16
        $region15: #{tpu_custom_call.1} parent=11 // pred_region
          %s277 = ssub.s32 16, 16
          %278 = vsyncadd [#allocation5], %s277
          %281 = dma.hbm_to_smem %s0, 16, [#allocation2], [#allocation5]
        $region16: #{tpu_custom_call.1} parent=11 // pred_fallthru
          _
      $region12: #{tpu_custom_call.1} parent=5 // pred_fallthru
        _
      %p282 = scmp.lt.s32.totalorder %s29, 2
      // Predicated region
      $region17: #{tpu_custom_call.1} parent=5 // pred_check
        %p283 = pneg %p282
      $region18: #{tpu_custom_call.1} parent=5 // pred_check_branch
        %285 = sbr.rel (%p283) target = $region20
      $region19: #{tpu_custom_call.1} parent=5 // pred_region
        // Predicated region
        $region21: #{tpu_custom_call.1} parent=19 // pred_check
          %p286 = pneg %p84
        $region22: #{tpu_custom_call.1} parent=19 // pred_check_branch
          %288 = sbr.rel (%p286) target = $region24
        $region23: #{tpu_custom_call.1} parent=19 // pred_region
          %s289 = sand.u32 %s74, 1
          %s290 = scalar_lea.sflag [#allocation3], %s289
          %s291 = sand.u32 %s74, 1
          %s292 = smul.addr %s291, 128
          %s293 = scalar_lea.vmem [#allocation6], %s292
          %s294 = smul.u32 2, %s37
          %s296 = ssub.s32 2048, 2048
          %297 = vsyncadd %s290, %s296
          %s298 = smul.addr %s294, 16
          %s299 = smul.addr %s36, 32
          %s300 = sadd.s32 %s298, %s299
          %s301 = smul.addr %s300, 64
          %s302 = scalar_lea.hbm %s1, %s301
          %s303 = sshll.u32 %s293, 4
          %s304 = int_to_ptr.vmem [resolvable:$true] %s303
          %309 = dma.hbm_to_vmem [thread:$0]  %s302, 2048, %s304, %s290, 64, 64, 4
        $region24: #{tpu_custom_call.1} parent=19 // pred_fallthru
          _
        // Predicated region
        $region25: #{tpu_custom_call.1} parent=19 // pred_check
          %p310 = pneg %p112
        $region26: #{tpu_custom_call.1} parent=19 // pred_check_branch
          %312 = sbr.rel (%p310) target = $region28
        $region27: #{tpu_custom_call.1} parent=19 // pred_region
          %s313 = sand.u32 %s29, 1
          %s314 = scalar_lea.sflag [#allocation8], %s313
          %s315 = sand.u32 %s102, 1
          %s316 = smul.addr %s315, 128
          %s317 = scalar_lea.vmem [#allocation7], %s316
          %s318 = smul.u32 2, %s37
          %s320 = ssub.s32 2048, 2048
          %321 = vsyncadd %s314, %s320
          %s322 = smul.addr %s318, 16
          %s323 = smul.addr %s36, 32
          %s324 = sadd.s32 %s322, %s323
          %s325 = smul.addr %s324, 64
          %s326 = scalar_lea.hbm %s2, %s325
          %s327 = sshll.u32 %s317, 4
          %s328 = int_to_ptr.vmem [resolvable:$true] %s327
          %333 = dma.hbm_to_vmem [thread:$0]  %s326, 2048, %s328, %s314, 64, 64, 4
        $region28: #{tpu_custom_call.1} parent=19 // pred_fallthru
          _
        // Predicated region
        $region29: #{tpu_custom_call.1} parent=19 // pred_check
          %p334 = pneg %p140
        $region30: #{tpu_custom_call.1} parent=19 // pred_check_branch
          %336 = sbr.rel (%p334) target = $region32
        $region31: #{tpu_custom_call.1} parent=19 // pred_region
          %s337 = sand.u32 %s29, 1
          %s338 = scalar_lea.sflag [#allocation8], %s337
          %s339 = sand.u32 %s130, 1
          %s340 = smul.addr %s339, 128
          %s341 = scalar_lea.vmem [#allocation9], %s340
          %s342 = smul.u32 2, %s37
          %s344 = ssub.s32 2048, 2048
          %345 = vsyncadd %s338, %s344
          %s346 = smul.addr %s342, 16
          %s347 = smul.addr %s36, 32
          %s348 = sadd.s32 %s346, %s347
          %s349 = smul.addr %s348, 64
          %s350 = scalar_lea.hbm %s3, %s349
          %s351 = sshll.u32 %s341, 4
          %s352 = int_to_ptr.vmem [resolvable:$true] %s351
          %357 = dma.hbm_to_vmem [thread:$0]  %s350, 2048, %s352, %s338, 64, 64, 4
        $region32: #{tpu_custom_call.1} parent=19 // pred_fallthru
          _
        // Predicated region
        $region33: #{tpu_custom_call.1} parent=19 // pred_check
          %p358 = pneg %p168
        $region34: #{tpu_custom_call.1} parent=19 // pred_check_branch
          %360 = sbr.rel (%p358) target = $region36
        $region35: #{tpu_custom_call.1} parent=19 // pred_region
          %s361 = sand.u32 %s29, 1
          %s362 = scalar_lea.sflag [#allocation11], %s361
          %s363 = sand.u32 %s158, 1
          %s364 = smul.addr %s363, 128
          %s365 = scalar_lea.vmem [#allocation10], %s364
          %s366 = smul.u32 2, %s37
          %s368 = ssub.s32 2048, 2048
          %369 = vsyncadd %s362, %s368
          %s370 = smul.addr %s366, 16
          %s371 = smul.addr %s36, 32
          %s372 = sadd.s32 %s370, %s371
          %s373 = smul.addr %s372, 64
          %s374 = scalar_lea.hbm %s4, %s373
          %s375 = sshll.u32 %s365, 4
          %s376 = int_to_ptr.vmem [resolvable:$true] %s375
          %381 = dma.hbm_to_vmem [thread:$0]  %s374, 2048, %s376, %s362, 64, 64, 4
        $region36: #{tpu_custom_call.1} parent=19 // pred_fallthru
          _
        // Predicated region
        $region37: #{tpu_custom_call.1} parent=19 // pred_check
          %p382 = pneg %p196
        $region38: #{tpu_custom_call.1} parent=19 // pred_check_branch
          %384 = sbr.rel (%p382) target = $region40
        $region39: #{tpu_custom_call.1} parent=19 // pred_region
          %s385 = sand.u32 %s29, 1
          %s386 = scalar_lea.sflag [#allocation11], %s385
          %s387 = sand.u32 %s186, 1
          %s388 = smul.addr %s387, 128
          %s389 = scalar_lea.vmem [#allocation12], %s388
          %s390 = smul.u32 2, %s37
          %s392 = ssub.s32 2048, 2048
          %393 = vsyncadd %s386, %s392
          %s394 = smul.addr %s390, 16
          %s395 = smul.addr %s36, 32
          %s396 = sadd.s32 %s394, %s395
          %s397 = smul.addr %s396, 64
          %s398 = scalar_lea.hbm %s5, %s397
          %s399 = sshll.u32 %s389, 4
          %s400 = int_to_ptr.vmem [resolvable:$true] %s399
          %405 = dma.hbm_to_vmem [thread:$0]  %s398, 2048, %s400, %s386, 64, 64, 4
        $region40: #{tpu_custom_call.1} parent=19 // pred_fallthru
          _
        // Predicated region
        $region41: #{tpu_custom_call.1} parent=19 // pred_check
          %p406 = pneg %p224
        $region42: #{tpu_custom_call.1} parent=19 // pred_check_branch
          %408 = sbr.rel (%p406) target = $region44
        $region43: #{tpu_custom_call.1} parent=19 // pred_region
          %s409 = sand.u32 %s214, 1
          %s410 = scalar_lea.sflag [#allocation14], %s409
          %s411 = sand.u32 %s214, 1
          %s412 = smul.addr %s411, 16
          %s413 = scalar_lea.vmem [#allocation13], %s412
          %s414 = smul.u32 2, %s37
          %s416 = ssub.s32 256, 256
          %417 = vsyncadd %s410, %s416
          %s418 = smul.addr %s414, 2
          %s419 = smul.addr %s36, 4
          %s420 = sadd.s32 %s418, %s419
          %s421 = smul.addr %s420, 64
          %s422 = scalar_lea.hbm %s6, %s421
          %s423 = sshll.u32 %s413, 4
          %s424 = int_to_ptr.vmem [resolvable:$true] %s423
          %429 = dma.hbm_to_vmem [thread:$0]  %s422, 256, %s424, %s410, 128, 128, 8
        $region44: #{tpu_custom_call.1} parent=19 // pred_fallthru
          _
      $region20: #{tpu_custom_call.1} parent=5 // pred_fallthru
        _
      %p430 = scmp.le.s32.totalorder 1, %s29
      %p431 = scmp.lt.s32.totalorder %s29, 3
      %p432 = pnand %p430, %p431
      %p433 = pneg %p432
      // Predicated region
      $region45: #{tpu_custom_call.1} parent=5 // pred_check
        _
      $region46: #{tpu_custom_call.1} parent=5 // pred_check_branch
        %435 = sbr.rel (%p432) target = $region48
      $region47: #{tpu_custom_call.1} parent=5 // pred_region
        %s436 = ssub.s32 %s29, 1
        // Predicated region
        $region49: #{tpu_custom_call.1} parent=47 // pred_check
          %p437 = pneg %p62
        $region50: #{tpu_custom_call.1} parent=47 // pred_check_branch
          %439 = sbr.rel (%p437) target = $region52
        $region51: #{tpu_custom_call.1} parent=47 // pred_region
          %440 = dma.done [#allocation5], 16
        $region52: #{tpu_custom_call.1} parent=47 // pred_fallthru
          _
        %s441 = sand.u32 %s77, 1
        %s442 = scalar_lea.sflag [#allocation3], %s441
        %s443 = sand.u32 %s77, 1
        %s444 = smul.addr %s443, 128
        %s445 = scalar_lea.vmem [#allocation6], %s444
        // Predicated region
        $region53: #{tpu_custom_call.1} parent=47 // pred_check
          %p446 = pneg %p90
        $region54: #{tpu_custom_call.1} parent=47 // pred_check_branch
          %448 = sbr.rel (%p446) target = $region56
        $region55: #{tpu_custom_call.1} parent=47 // pred_region
          %449 = dma.done %s442, 2048
        $region56: #{tpu_custom_call.1} parent=47 // pred_fallthru
          _
        %s450 = sand.u32 %s34, 1
        %s451 = scalar_lea.sflag [#allocation8], %s450
        %s452 = sand.u32 %s105, 1
        %s453 = smul.addr %s452, 128
        %s454 = scalar_lea.vmem [#allocation7], %s453
        // Predicated region
        $region57: #{tpu_custom_call.1} parent=47 // pred_check
          %p455 = pneg %p118
        $region58: #{tpu_custom_call.1} parent=47 // pred_check_branch
          %457 = sbr.rel (%p455) target = $region60
        $region59: #{tpu_custom_call.1} parent=47 // pred_region
          %458 = dma.done %s451, 2048
        $region60: #{tpu_custom_call.1} parent=47 // pred_fallthru
          _
        %s459 = sand.u32 %s34, 1
        %s460 = scalar_lea.sflag [#allocation8], %s459
        %s461 = sand.u32 %s133, 1
        %s462 = smul.addr %s461, 128
        %s463 = scalar_lea.vmem [#allocation9], %s462
        // Predicated region
        $region61: #{tpu_custom_call.1} parent=47 // pred_check
          %p464 = pneg %p146
        $region62: #{tpu_custom_call.1} parent=47 // pred_check_branch
          %466 = sbr.rel (%p464) target = $region64
        $region63: #{tpu_custom_call.1} parent=47 // pred_region
          %467 = dma.done %s460, 2048
        $region64: #{tpu_custom_call.1} parent=47 // pred_fallthru
          _
        %s468 = sand.u32 %s34, 1
        %s469 = scalar_lea.sflag [#allocation11], %s468
        %s470 = sand.u32 %s161, 1
        %s471 = smul.addr %s470, 128
        %s472 = scalar_lea.vmem [#allocation10], %s471
        // Predicated region
        $region65: #{tpu_custom_call.1} parent=47 // pred_check
          %p473 = pneg %p174
        $region66: #{tpu_custom_call.1} parent=47 // pred_check_branch
          %475 = sbr.rel (%p473) target = $region68
        $region67: #{tpu_custom_call.1} parent=47 // pred_region
          %476 = dma.done %s469, 2048
        $region68: #{tpu_custom_call.1} parent=47 // pred_fallthru
          _
        %s477 = sand.u32 %s34, 1
        %s478 = scalar_lea.sflag [#allocation11], %s477
        %s479 = sand.u32 %s189, 1
        %s480 = smul.addr %s479, 128
        %s481 = scalar_lea.vmem [#allocation12], %s480
        // Predicated region
        $region69: #{tpu_custom_call.1} parent=47 // pred_check
          %p482 = pneg %p202
        $region70: #{tpu_custom_call.1} parent=47 // pred_check_branch
          %484 = sbr.rel (%p482) target = $region72
        $region71: #{tpu_custom_call.1} parent=47 // pred_region
          %485 = dma.done %s478, 2048
        $region72: #{tpu_custom_call.1} parent=47 // pred_fallthru
          _
        %s486 = sand.u32 %s217, 1
        %s487 = scalar_lea.sflag [#allocation14], %s486
        %s488 = sand.u32 %s217, 1
        %s489 = smul.addr %s488, 16
        %s490 = scalar_lea.vmem [#allocation13], %s489
        // Predicated region
        $region73: #{tpu_custom_call.1} parent=47 // pred_check
          %p491 = pneg %p230
        $region74: #{tpu_custom_call.1} parent=47 // pred_check_branch
          %493 = sbr.rel (%p491) target = $region76
        $region75: #{tpu_custom_call.1} parent=47 // pred_region
          %494 = dma.done %s487, 256
        $region76: #{tpu_custom_call.1} parent=47 // pred_fallthru
          _
        %495 = sfence
        %p496 = pneg %p62
        %p497 = pneg %p59
        %s498 = sand.u32 %s77, 1
        %s499 = scalar_lea.sflag [#allocation3], %s498
        %s500 = sand.u32 %s77, 1
        %s501 = smul.addr %s500, 128
        %s502 = scalar_lea.vmem [#allocation6], %s501
        %p503 = pneg %p90
        %p504 = pneg %p87
        %s505 = sand.u32 %s34, 1
        %s506 = scalar_lea.sflag [#allocation8], %s505
        %s507 = sand.u32 %s105, 1
        %s508 = smul.addr %s507, 128
        %s509 = scalar_lea.vmem [#allocation7], %s508
        %p510 = pneg %p118
        %p511 = pneg %p115
        %s512 = sand.u32 %s34, 1
        %s513 = scalar_lea.sflag [#allocation8], %s512
        %s514 = sand.u32 %s133, 1
        %s515 = smul.addr %s514, 128
        %s516 = scalar_lea.vmem [#allocation9], %s515
        %p517 = pneg %p146
        %p518 = pneg %p143
        %s519 = sand.u32 %s34, 1
        %s520 = scalar_lea.sflag [#allocation11], %s519
        %s521 = sand.u32 %s161, 1
        %s522 = smul.addr %s521, 128
        %s523 = scalar_lea.vmem [#allocation10], %s522
        %p524 = pneg %p174
        %p525 = pneg %p171
        %s526 = sand.u32 %s34, 1
        %s527 = scalar_lea.sflag [#allocation11], %s526
        %s528 = sand.u32 %s189, 1
        %s529 = smul.addr %s528, 128
        %s530 = scalar_lea.vmem [#allocation12], %s529
        %p531 = pneg %p202
        %p532 = pneg %p199
        %s533 = sand.u32 %s217, 1
        %s534 = scalar_lea.sflag [#allocation14], %s533
        %s535 = sand.u32 %s217, 1
        %s536 = smul.addr %s535, 16
        %s537 = scalar_lea.vmem [#allocation13], %s536
        %p538 = pneg %p230
        %p539 = pneg %p227
        %p540 = pneg %p258
        %p541 = pneg %p255
        %s542 = sand.u32 %s245, 1
        %s543 = scalar_lea.sflag [#allocation4], %s542
        %s544 = sand.u32 %s245, 1
        %s545 = smul.addr %s544, 128
        %s546 = scalar_lea.vmem [#allocation15], %s545
        %s547 = smul.u32 2, %s39
        %s548 = smul.u32 2, %s39
        %s549 = smul.u32 2, %s39
        %s550 = smul.u32 2, %s39
        %s551 = smul.u32 2, %s39
        %s552 = smul.u32 2, %s39
        %s553 = smul.u32 2, %s39
        %s555 = smul.u32 %s39, 2
        %v556 = vld [vmem:[%s445] sm:$0xf]
        %v557 = vld [vmem:[%s445 + $0x4] sm:$0xf]
        %v558 = vld [vmem:[%s445 + $0x8] sm:$0xf]
        %v559 = vld [vmem:[%s445 + $0xc] sm:$0xf]
        %v560 = vld [vmem:[%s445 + $0x10] sm:$0xf]
        %v561 = vld [vmem:[%s445 + $0x14] sm:$0xf]
        %v562 = vld [vmem:[%s445 + $0x18] sm:$0xf]
        %v563 = vld [vmem:[%s445 + $0x1c] sm:$0xf]
        %v564 = vld [vmem:[%s445 + $0x20] sm:$0xf]
        %v565 = vld [vmem:[%s445 + $0x24] sm:$0xf]
        %v566 = vld [vmem:[%s445 + $0x28] sm:$0xf]
        %v567 = vld [vmem:[%s445 + $0x2c] sm:$0xf]
        %v568 = vld [vmem:[%s445 + $0x30] sm:$0xf]
        %v569 = vld [vmem:[%s445 + $0x34] sm:$0xf]
        %v570 = vld [vmem:[%s445 + $0x38] sm:$0xf]
        %v571 = vld [vmem:[%s445 + $0x3c] sm:$0xf]
        %v572 = vld [vmem:[%s454] sm:$0xf]
        %v573 = vld [vmem:[%s454 + $0x4] sm:$0xf]
        %v574 = vld [vmem:[%s454 + $0x8] sm:$0xf]
        %v575 = vld [vmem:[%s454 + $0xc] sm:$0xf]
        %v576 = vld [vmem:[%s454 + $0x10] sm:$0xf]
        %v577 = vld [vmem:[%s454 + $0x14] sm:$0xf]
        %v578 = vld [vmem:[%s454 + $0x18] sm:$0xf]
        %v579 = vld [vmem:[%s454 + $0x1c] sm:$0xf]
        %v580 = vld [vmem:[%s454 + $0x20] sm:$0xf]
        %v581 = vld [vmem:[%s454 + $0x24] sm:$0xf]
        %v582 = vld [vmem:[%s454 + $0x28] sm:$0xf]
        %v583 = vld [vmem:[%s454 + $0x2c] sm:$0xf]
        %v584 = vld [vmem:[%s454 + $0x30] sm:$0xf]
        %v585 = vld [vmem:[%s454 + $0x34] sm:$0xf]
        %v586 = vld [vmem:[%s454 + $0x38] sm:$0xf]
        %v587 = vld [vmem:[%s454 + $0x3c] sm:$0xf]
        %v588 = vld [vmem:[%s472] sm:$0xf]
        %v589 = vld [vmem:[%s472 + $0x4] sm:$0xf]
        %v590 = vld [vmem:[%s472 + $0x8] sm:$0xf]
        %v591 = vld [vmem:[%s472 + $0xc] sm:$0xf]
        %v592 = vld [vmem:[%s472 + $0x10] sm:$0xf]
        %v593 = vld [vmem:[%s472 + $0x14] sm:$0xf]
        %v594 = vld [vmem:[%s472 + $0x18] sm:$0xf]
        %v595 = vld [vmem:[%s472 + $0x1c] sm:$0xf]
        %v596 = vld [vmem:[%s472 + $0x20] sm:$0xf]
        %v597 = vld [vmem:[%s472 + $0x24] sm:$0xf]
        %v598 = vld [vmem:[%s472 + $0x28] sm:$0xf]
        %v599 = vld [vmem:[%s472 + $0x2c] sm:$0xf]
        %v600 = vld [vmem:[%s472 + $0x30] sm:$0xf]
        %v601 = vld [vmem:[%s472 + $0x34] sm:$0xf]
        %v602 = vld [vmem:[%s472 + $0x38] sm:$0xf]
        %v603 = vld [vmem:[%s472 + $0x3c] sm:$0xf]
        %v620 = vunpack.c.l.b16 %v572
        %v621 = vunpack.c.l.b16 %v573
        %v622 = vunpack.c.l.b16 %v574
        %v623 = vunpack.c.l.b16 %v575
        %v624 = vunpack.c.l.b16 %v576
        %v625 = vunpack.c.l.b16 %v577
        %v626 = vunpack.c.l.b16 %v578
        %v627 = vunpack.c.l.b16 %v579
        %v628 = vunpack.c.l.b16 %v580
        %v629 = vunpack.c.l.b16 %v581
        %v630 = vunpack.c.l.b16 %v582
        %v631 = vunpack.c.l.b16 %v583
        %v632 = vunpack.c.l.b16 %v584
        %v633 = vunpack.c.l.b16 %v585
        %v634 = vunpack.c.l.b16 %v586
        %v635 = vunpack.c.l.b16 %v587
        %v636 = vpack.c.b16 %v621, %v620
        %v637 = vpack.c.b16 %v623, %v622
        %v638 = vpack.c.b16 %v625, %v624
        %v639 = vpack.c.b16 %v627, %v626
        %v640 = vpack.c.b16 %v629, %v628
        %v641 = vpack.c.b16 %v631, %v630
        %v642 = vpack.c.b16 %v633, %v632
        %v643 = vpack.c.b16 %v635, %v634
        %v660 = vunpack.c.l.b16 %v588
        %v661 = vunpack.c.l.b16 %v589
        %v662 = vunpack.c.l.b16 %v590
        %v663 = vunpack.c.l.b16 %v591
        %v664 = vunpack.c.l.b16 %v592
        %v665 = vunpack.c.l.b16 %v593
        %v666 = vunpack.c.l.b16 %v594
        %v667 = vunpack.c.l.b16 %v595
        %v668 = vunpack.c.l.b16 %v596
        %v669 = vunpack.c.l.b16 %v597
        %v670 = vunpack.c.l.b16 %v598
        %v671 = vunpack.c.l.b16 %v599
        %v672 = vunpack.c.l.b16 %v600
        %v673 = vunpack.c.l.b16 %v601
        %v674 = vunpack.c.l.b16 %v602
        %v675 = vunpack.c.l.b16 %v603
        %v676 = vpack.c.b16 %v661, %v660
        %v677 = vpack.c.b16 %v663, %v662
        %v678 = vpack.c.b16 %v665, %v664
        %v679 = vpack.c.b16 %v667, %v666
        %v680 = vpack.c.b16 %v669, %v668
        %v681 = vpack.c.b16 %v671, %v670
        %v682 = vpack.c.b16 %v673, %v672
        %v683 = vpack.c.b16 %v675, %v674
        %v684 = vld [vmem:[%s463] sm:$0xf]
        %v685 = vld [vmem:[%s463 + $0x4] sm:$0xf]
        %v686 = vld [vmem:[%s463 + $0x8] sm:$0xf]
        %v687 = vld [vmem:[%s463 + $0xc] sm:$0xf]
        %v688 = vld [vmem:[%s463 + $0x10] sm:$0xf]
        %v689 = vld [vmem:[%s463 + $0x14] sm:$0xf]
        %v690 = vld [vmem:[%s463 + $0x18] sm:$0xf]
        %v691 = vld [vmem:[%s463 + $0x1c] sm:$0xf]
        %v692 = vld [vmem:[%s463 + $0x20] sm:$0xf]
        %v693 = vld [vmem:[%s463 + $0x24] sm:$0xf]
        %v694 = vld [vmem:[%s463 + $0x28] sm:$0xf]
        %v695 = vld [vmem:[%s463 + $0x2c] sm:$0xf]
        %v696 = vld [vmem:[%s463 + $0x30] sm:$0xf]
        %v697 = vld [vmem:[%s463 + $0x34] sm:$0xf]
        %v698 = vld [vmem:[%s463 + $0x38] sm:$0xf]
        %v699 = vld [vmem:[%s463 + $0x3c] sm:$0xf]
        %v700 = vld [vmem:[%s481] sm:$0xf]
        %v701 = vld [vmem:[%s481 + $0x4] sm:$0xf]
        %v702 = vld [vmem:[%s481 + $0x8] sm:$0xf]
        %v703 = vld [vmem:[%s481 + $0xc] sm:$0xf]
        %v704 = vld [vmem:[%s481 + $0x10] sm:$0xf]
        %v705 = vld [vmem:[%s481 + $0x14] sm:$0xf]
        %v706 = vld [vmem:[%s481 + $0x18] sm:$0xf]
        %v707 = vld [vmem:[%s481 + $0x1c] sm:$0xf]
        %v708 = vld [vmem:[%s481 + $0x20] sm:$0xf]
        %v709 = vld [vmem:[%s481 + $0x24] sm:$0xf]
        %v710 = vld [vmem:[%s481 + $0x28] sm:$0xf]
        %v711 = vld [vmem:[%s481 + $0x2c] sm:$0xf]
        %v712 = vld [vmem:[%s481 + $0x30] sm:$0xf]
        %v713 = vld [vmem:[%s481 + $0x34] sm:$0xf]
        %v714 = vld [vmem:[%s481 + $0x38] sm:$0xf]
        %v715 = vld [vmem:[%s481 + $0x3c] sm:$0xf]
        %v732 = vunpack.c.l.b16 %v684
        %v733 = vunpack.c.l.b16 %v685
        %v734 = vunpack.c.l.b16 %v686
        %v735 = vunpack.c.l.b16 %v687
        %v736 = vunpack.c.l.b16 %v688
        %v737 = vunpack.c.l.b16 %v689
        %v738 = vunpack.c.l.b16 %v690
        %v739 = vunpack.c.l.b16 %v691
        %v740 = vunpack.c.l.b16 %v692
        %v741 = vunpack.c.l.b16 %v693
        %v742 = vunpack.c.l.b16 %v694
        %v743 = vunpack.c.l.b16 %v695
        %v744 = vunpack.c.l.b16 %v696
        %v745 = vunpack.c.l.b16 %v697
        %v746 = vunpack.c.l.b16 %v698
        %v747 = vunpack.c.l.b16 %v699
        %v748 = vpack.c.b16 %v733, %v732
        %v749 = vpack.c.b16 %v735, %v734
        %v750 = vpack.c.b16 %v737, %v736
        %v751 = vpack.c.b16 %v739, %v738
        %v752 = vpack.c.b16 %v741, %v740
        %v753 = vpack.c.b16 %v743, %v742
        %v754 = vpack.c.b16 %v745, %v744
        %v755 = vpack.c.b16 %v747, %v746
        %v780 = vunpack.c.l.b16 %v700
        %v781 = vunpack.c.l.b16 %v701
        %v782 = vunpack.c.l.b16 %v702
        %v783 = vunpack.c.l.b16 %v703
        %v784 = vunpack.c.l.b16 %v704
        %v785 = vunpack.c.l.b16 %v705
        %v786 = vunpack.c.l.b16 %v706
        %v787 = vunpack.c.l.b16 %v707
        %v788 = vunpack.c.l.b16 %v708
        %v789 = vunpack.c.l.b16 %v709
        %v790 = vunpack.c.l.b16 %v710
        %v791 = vunpack.c.l.b16 %v711
        %v792 = vunpack.c.l.b16 %v712
        %v793 = vunpack.c.l.b16 %v713
        %v794 = vunpack.c.l.b16 %v714
        %v795 = vunpack.c.l.b16 %v715
        %v796 = vpack.c.b16 %v781, %v780
        %v797 = vpack.c.b16 %v783, %v782
        %v798 = vpack.c.b16 %v785, %v784
        %v799 = vpack.c.b16 %v787, %v786
        %v800 = vpack.c.b16 %v789, %v788
        %v801 = vpack.c.b16 %v791, %v790
        %v802 = vpack.c.b16 %v793, %v792
        %v803 = vpack.c.b16 %v795, %v794
        %v812 = vld [vmem:[%s490] ss:$4 sm:$0x3]
        %v814 = vlaneseq
        %v815 = vshrl.u32 %v814, 7
        %v816 = vsub.s32 0, %v815
        %v817 = vrot.slane %v812, %v816
        %v818 = vlaneseq
        %v819 = vshrl.u32 %v818, 7
        %v820 = vsub.s32 1, %v819
        %v821 = vrot.slane %v812, %v820
        %v840 = vunpack.c.l.b16 %v556
        %v841 = vunpack.c.l.b16 %v557
        %v842 = vunpack.c.l.b16 %v558
        %v843 = vunpack.c.l.b16 %v559
        %v844 = vunpack.c.l.b16 %v560
        %v845 = vunpack.c.l.b16 %v561
        %v846 = vunpack.c.l.b16 %v562
        %v847 = vunpack.c.l.b16 %v563
        %v848 = vunpack.c.l.b16 %v564
        %v849 = vunpack.c.l.b16 %v565
        %v850 = vunpack.c.l.b16 %v566
        %v851 = vunpack.c.l.b16 %v567
        %v852 = vunpack.c.l.b16 %v568
        %v853 = vunpack.c.l.b16 %v569
        %v854 = vunpack.c.l.b16 %v570
        %v855 = vunpack.c.l.b16 %v571
        %v856 = vpack.c.b16 %v841, %v840
        %v857 = vpack.c.b16 %v843, %v842
        %v858 = vpack.c.b16 %v845, %v844
        %v859 = vpack.c.b16 %v847, %v846
        %v860 = vpack.c.b16 %v849, %v848
        %v861 = vpack.c.b16 %v851, %v850
        %v862 = vpack.c.b16 %v853, %v852
        %v863 = vpack.c.b16 %v855, %v854
        %vm864 = vcmask 261120
        %v866 = vsel %vm864, %v856, 0
        %v869 = vsel %vm864, %v857, 0
        %v872 = vsel %vm864, %v858, 0
        %v875 = vsel %vm864, %v859, 0
        %v878 = vsel %vm864, %v860, 0
        %v881 = vsel %vm864, %v861, 0
        %v884 = vsel %vm864, %v862, 0
        %v887 = vsel %vm864, %v863, 0
        %v890 = vsel %vm864, %v636, 0
        %v893 = vsel %vm864, %v637, 0
        %v896 = vsel %vm864, %v638, 0
        %v899 = vsel %vm864, %v639, 0
        %v902 = vsel %vm864, %v640, 0
        %v905 = vsel %vm864, %v641, 0
        %v908 = vsel %vm864, %v642, 0
        %v911 = vsel %vm864, %v643, 0
        %v914 = vsel %vm864, %v676, 0
        %v917 = vsel %vm864, %v677, 0
        %v920 = vsel %vm864, %v678, 0
        %v923 = vsel %vm864, %v679, 0
        %v926 = vsel %vm864, %v680, 0
        %v929 = vsel %vm864, %v681, 0
        %v932 = vsel %vm864, %v682, 0
        %v935 = vsel %vm864, %v683, 0
        %937 = vmatprep.subr.bf16.mxu0 0
        %938 = vmatpush1.bf16.xpose.msra.mxu0 %v890
        %939 = vmatprep.subr.bf16.mxu0 0
        %940 = vmatpush1.bf16.xpose.msra.mxu0 %v893
        %941 = vmatprep.subr.bf16.mxu0 0
        %942 = vmatpush1.bf16.xpose.msra.mxu0 %v896
        %943 = vmatprep.subr.bf16.mxu0 0
        %944 = vmatpush1.bf16.xpose.msra.mxu0 %v899
        %945 = vmatprep.subr.bf16.mxu0 0
        %946 = vmatpush1.bf16.xpose.msra.mxu0 %v902
        %947 = vmatprep.subr.bf16.mxu0 0
        %948 = vmatpush1.bf16.xpose.msra.mxu0 %v905
        %949 = vmatprep.subr.bf16.mxu0 0
        %950 = vmatpush1.bf16.xpose.msra.mxu0 %v908
        %951 = vmatprep.subr.bf16.mxu0 0
        %952 = vmatpush1.bf16.xpose.msra.mxu0 %v911
        %953 = vmatprep.subr.bf16.mxu0 0
        %954 = vmatpush1.bf16.xpose.msra.mxu0 %v914
        %955 = vmatprep.subr.bf16.mxu0 0
        %956 = vmatpush1.bf16.xpose.msra.mxu0 %v917
        %957 = vmatprep.subr.bf16.mxu0 0
        %958 = vmatpush1.bf16.xpose.msra.mxu0 %v920
        %959 = vmatprep.subr.bf16.mxu0 0
        %960 = vmatpush1.bf16.xpose.msra.mxu0 %v923
        %961 = vmatprep.subr.bf16.mxu0 0
        %962 = vmatpush1.bf16.xpose.msra.mxu0 %v926
        %963 = vmatprep.subr.bf16.mxu0 0
        %964 = vmatpush1.bf16.xpose.msra.mxu0 %v929
        %965 = vmatprep.subr.bf16.mxu0 0
        %966 = vmatpush1.bf16.xpose.msra.mxu0 %v932
        %967 = vmatprep.subr.bf16.mxu0 0
        %968 = vmatpush1.bf16.xpose.msra.mxu0 %v935
        %969 = vmatprep.mubr.bf16.mxu0 0
        %970 = vmatmul.mubr.bf16.gmra.mrb[0].mxu0 %v866
        %v971 = vpop.f32.mrb[0].mxu0
        %v972 = vadd.f32 %v817, %v971
        %v973 = vpop.f32.mrb[0].mxu0
        %v974 = vadd.f32 %v821, %v973
        %v975 = vpop.f32.mrb[0].mxu0
        %v976 = vadd.f32 %v817, %v975
        %v977 = vpop.f32.mrb[0].mxu0
        %v978 = vadd.f32 %v821, %v977
        %979 = vmatprep.mubr.bf16.mxu0 0
        %980 = vmatmul.mubr.bf16.gmra.mrb[0].mxu0 %v869
        %v981 = vpop.f32.mrb[0].mxu0
        %v982 = vadd.f32 %v817, %v981
        %v983 = vpop.f32.mrb[0].mxu0
        %v984 = vadd.f32 %v821, %v983
        %v985 = vpop.f32.mrb[0].mxu0
        %v986 = vadd.f32 %v817, %v985
        %v987 = vpop.f32.mrb[0].mxu0
        %v988 = vadd.f32 %v821, %v987
        %989 = vmatprep.mubr.bf16.mxu0 0
        %990 = vmatmul.mubr.bf16.gmra.mrb[0].mxu0 %v872
        %v991 = vpop.f32.mrb[0].mxu0
        %v992 = vadd.f32 %v817, %v991
        %v993 = vpop.f32.mrb[0].mxu0
        %v994 = vadd.f32 %v821, %v993
        %v995 = vpop.f32.mrb[0].mxu0
        %v996 = vadd.f32 %v817, %v995
        %v997 = vpop.f32.mrb[0].mxu0
        %v998 = vadd.f32 %v821, %v997
        %999 = vmatprep.mubr.bf16.mxu0 0
        %1000 = vmatmul.mubr.bf16.gmra.mrb[0].mxu0 %v875
        %v1001 = vpop.f32.mrb[0].mxu0
        %v1002 = vadd.f32 %v817, %v1001
        %v1003 = vpop.f32.mrb[0].mxu0
        %v1004 = vadd.f32 %v821, %v1003
        %v1005 = vpop.f32.mrb[0].mxu0
        %v1006 = vadd.f32 %v817, %v1005
        %v1007 = vpop.f32.mrb[0].mxu0
        %v1008 = vadd.f32 %v821, %v1007
        %1009 = vmatprep.mubr.bf16.mxu0 0
        %1010 = vmatmul.mubr.bf16.gmra.mrb[0].mxu0 %v878
        %v1011 = vpop.f32.mrb[0].mxu0
        %v1012 = vadd.f32 %v817, %v1011
        %v1013 = vpop.f32.mrb[0].mxu0
        %v1014 = vadd.f32 %v821, %v1013
        %v1015 = vpop.f32.mrb[0].mxu0
        %v1016 = vadd.f32 %v817, %v1015
        %v1017 = vpop.f32.mrb[0].mxu0
        %v1018 = vadd.f32 %v821, %v1017
        %1019 = vmatprep.mubr.bf16.mxu0 0
        %1020 = vmatmul.mubr.bf16.gmra.mrb[0].mxu0 %v881
        %v1021 = vpop.f32.mrb[0].mxu0
        %v1022 = vadd.f32 %v817, %v1021
        %v1023 = vpop.f32.mrb[0].mxu0
        %v1024 = vadd.f32 %v821, %v1023
        %v1025 = vpop.f32.mrb[0].mxu0
        %v1026 = vadd.f32 %v817, %v1025
        %v1027 = vpop.f32.mrb[0].mxu0
        %v1028 = vadd.f32 %v821, %v1027
        %1029 = vmatprep.mubr.bf16.mxu0 0
        %1030 = vmatmul.mubr.bf16.gmra.mrb[0].mxu0 %v884
        %v1031 = vpop.f32.mrb[0].mxu0
        %v1032 = vadd.f32 %v817, %v1031
        %v1033 = vpop.f32.mrb[0].mxu0
        %v1034 = vadd.f32 %v821, %v1033
        %v1035 = vpop.f32.mrb[0].mxu0
        %v1036 = vadd.f32 %v817, %v1035
        %v1037 = vpop.f32.mrb[0].mxu0
        %v1038 = vadd.f32 %v821, %v1037
        %1039 = vmatprep.mubr.bf16.mxu0 0
        %1040 = vmatmul.mubr.bf16.gmra.mrb[0].mxu0 %v887
        %v1041 = vpop.f32.mrb[0].mxu0
        %v1042 = vadd.f32 %v817, %v1041
        %v1043 = vpop.f32.mrb[0].mxu0
        %v1044 = vadd.f32 %v821, %v1043
        %v1045 = vpop.f32.mrb[0].mxu0
        %v1046 = vadd.f32 %v817, %v1045
        %v1047 = vpop.f32.mrb[0].mxu0
        %v1048 = vadd.f32 %v821, %v1047
        %1049 = vdwg.mxu0
        %v1050 = vmax.f32 %v972, %v974
        %1051 = vmax.xlane.f32.xlu0 %v1050
        %v1052 = vpop.xlane.xlu0 %1051
        %v1053 = vmax.f32 %v976, %v978
        %1054 = vmax.xlane.f32.xlu0 %v1053
        %v1055 = vpop.xlane.xlu0 %1054
        %v1056 = vmax.f32 %v982, %v984
        %1057 = vmax.xlane.f32.xlu0 %v1056
        %v1058 = vpop.xlane.xlu0 %1057
        %v1059 = vmax.f32 %v986, %v988
        %1060 = vmax.xlane.f32.xlu0 %v1059
        %v1061 = vpop.xlane.xlu0 %1060
        %v1062 = vmax.f32 %v992, %v994
        %1063 = vmax.xlane.f32.xlu0 %v1062
        %v1064 = vpop.xlane.xlu0 %1063
        %v1065 = vmax.f32 %v996, %v998
        %1066 = vmax.xlane.f32.xlu0 %v1065
        %v1067 = vpop.xlane.xlu0 %1066
        %v1068 = vmax.f32 %v1002, %v1004
        %1069 = vmax.xlane.f32.xlu0 %v1068
        %v1070 = vpop.xlane.xlu0 %1069
        %v1071 = vmax.f32 %v1006, %v1008
        %1072 = vmax.xlane.f32.xlu0 %v1071
        %v1073 = vpop.xlane.xlu0 %1072
        %v1074 = vmax.f32 %v1012, %v1014
        %1075 = vmax.xlane.f32.xlu0 %v1074
        %v1076 = vpop.xlane.xlu0 %1075
        %v1077 = vmax.f32 %v1016, %v1018
        %1078 = vmax.xlane.f32.xlu0 %v1077
        %v1079 = vpop.xlane.xlu0 %1078
        %v1080 = vmax.f32 %v1022, %v1024
        %1081 = vmax.xlane.f32.xlu0 %v1080
        %v1082 = vpop.xlane.xlu0 %1081
        %v1083 = vmax.f32 %v1026, %v1028
        %1084 = vmax.xlane.f32.xlu0 %v1083
        %v1085 = vpop.xlane.xlu0 %1084
        %v1086 = vmax.f32 %v1032, %v1034
        %1087 = vmax.xlane.f32.xlu0 %v1086
        %v1088 = vpop.xlane.xlu0 %1087
        %v1089 = vmax.f32 %v1036, %v1038
        %1090 = vmax.xlane.f32.xlu0 %v1089
        %v1091 = vpop.xlane.xlu0 %1090
        %v1092 = vmax.f32 %v1042, %v1044
        %1093 = vmax.xlane.f32.xlu0 %v1092
        %v1094 = vpop.xlane.xlu0 %1093
        %v1095 = vmax.f32 %v1046, %v1048
        %1096 = vmax.xlane.f32.xlu0 %v1095
        %v1097 = vpop.xlane.xlu0 %1096
        %v1098 = vsub.f32 %v972, %v1052
        %v1099 = vsub.f32 %v974, %v1052
        %v1100 = vsub.f32 %v976, %v1055
        %v1101 = vsub.f32 %v978, %v1055
        %v1102 = vsub.f32 %v982, %v1058
        %v1103 = vsub.f32 %v984, %v1058
        %v1104 = vsub.f32 %v986, %v1061
        %v1105 = vsub.f32 %v988, %v1061
        %v1106 = vsub.f32 %v992, %v1064
        %v1107 = vsub.f32 %v994, %v1064
        %v1108 = vsub.f32 %v996, %v1067
        %v1109 = vsub.f32 %v998, %v1067
        %v1110 = vsub.f32 %v1002, %v1070
        %v1111 = vsub.f32 %v1004, %v1070
        %v1112 = vsub.f32 %v1006, %v1073
        %v1113 = vsub.f32 %v1008, %v1073
        %v1114 = vsub.f32 %v1012, %v1076
        %v1115 = vsub.f32 %v1014, %v1076
        %v1116 = vsub.f32 %v1016, %v1079
        %v1117 = vsub.f32 %v1018, %v1079
        %v1118 = vsub.f32 %v1022, %v1082
        %v1119 = vsub.f32 %v1024, %v1082
        %v1120 = vsub.f32 %v1026, %v1085
        %v1121 = vsub.f32 %v1028, %v1085
        %v1122 = vsub.f32 %v1032, %v1088
        %v1123 = vsub.f32 %v1034, %v1088
        %v1124 = vsub.f32 %v1036, %v1091
        %v1125 = vsub.f32 %v1038, %v1091
        %v1126 = vsub.f32 %v1042, %v1094
        %v1127 = vsub.f32 %v1044, %v1094
        %v1128 = vsub.f32 %v1046, %v1097
        %v1129 = vsub.f32 %v1048, %v1097
        %v1130 = vmul.f32 %v1098, 1.442695
        %v1131 = vpow.pop %v1130
        %v1132 = vmul.f32 %v1099, 1.442695
        %v1133 = vpow.pop %v1132
        %v1134 = vmul.f32 %v1100, 1.442695
        %v1135 = vpow.pop %v1134
        %v1136 = vmul.f32 %v1101, 1.442695
        %v1137 = vpow.pop %v1136
        %v1138 = vmul.f32 %v1102, 1.442695
        %v1139 = vpow.pop %v1138
        %v1140 = vmul.f32 %v1103, 1.442695
        %v1141 = vpow.pop %v1140
        %v1142 = vmul.f32 %v1104, 1.442695
        %v1143 = vpow.pop %v1142
        %v1144 = vmul.f32 %v1105, 1.442695
        %v1145 = vpow.pop %v1144
        %v1146 = vmul.f32 %v1106, 1.442695
        %v1147 = vpow.pop %v1146
        %v1148 = vmul.f32 %v1107, 1.442695
        %v1149 = vpow.pop %v1148
        %v1150 = vmul.f32 %v1108, 1.442695
        %v1151 = vpow.pop %v1150
        %v1152 = vmul.f32 %v1109, 1.442695
        %v1153 = vpow.pop %v1152
        %v1154 = vmul.f32 %v1110, 1.442695
        %v1155 = vpow.pop %v1154
        %v1156 = vmul.f32 %v1111, 1.442695
        %v1157 = vpow.pop %v1156
        %v1158 = vmul.f32 %v1112, 1.442695
        %v1159 = vpow.pop %v1158
        %v1160 = vmul.f32 %v1113, 1.442695
        %v1161 = vpow.pop %v1160
        %v1162 = vmul.f32 %v1114, 1.442695
        %v1163 = vpow.pop %v1162
        %v1164 = vmul.f32 %v1115, 1.442695
        %v1165 = vpow.pop %v1164
        %v1166 = vmul.f32 %v1116, 1.442695
        %v1167 = vpow.pop %v1166
        %v1168 = vmul.f32 %v1117, 1.442695
        %v1169 = vpow.pop %v1168
        %v1170 = vmul.f32 %v1118, 1.442695
        %v1171 = vpow.pop %v1170
        %v1172 = vmul.f32 %v1119, 1.442695
        %v1173 = vpow.pop %v1172
        %v1174 = vmul.f32 %v1120, 1.442695
        %v1175 = vpow.pop %v1174
        %v1176 = vmul.f32 %v1121, 1.442695
        %v1177 = vpow.pop %v1176
        %v1178 = vmul.f32 %v1122, 1.442695
        %v1179 = vpow.pop %v1178
        %v1180 = vmul.f32 %v1123, 1.442695
        %v1181 = vpow.pop %v1180
        %v1182 = vmul.f32 %v1124, 1.442695
        %v1183 = vpow.pop %v1182
        %v1184 = vmul.f32 %v1125, 1.442695
        %v1185 = vpow.pop %v1184
        %v1186 = vmul.f32 %v1126, 1.442695
        %v1187 = vpow.pop %v1186
        %v1188 = vmul.f32 %v1127, 1.442695
        %v1189 = vpow.pop %v1188
        %v1190 = vmul.f32 %v1128, 1.442695
        %v1191 = vpow.pop %v1190
        %v1192 = vmul.f32 %v1129, 1.442695
        %v1193 = vpow.pop %v1192
        %v1194 = vadd.f32 %v1131, %v1133
        %1195 = vadd.xlane.f32.xlu0 %v1194
        %v1196 = vpop.xlane.xlu0 %1195
        %v1197 = vadd.f32 %v1135, %v1137
        %1198 = vadd.xlane.f32.xlu0 %v1197
        %v1199 = vpop.xlane.xlu0 %1198
        %v1200 = vadd.f32 %v1139, %v1141
        %1201 = vadd.xlane.f32.xlu0 %v1200
        %v1202 = vpop.xlane.xlu0 %1201
        %v1203 = vadd.f32 %v1143, %v1145
        %1204 = vadd.xlane.f32.xlu0 %v1203
        %v1205 = vpop.xlane.xlu0 %1204
        %v1206 = vadd.f32 %v1147, %v1149
        %1207 = vadd.xlane.f32.xlu0 %v1206
        %v1208 = vpop.xlane.xlu0 %1207
        %v1209 = vadd.f32 %v1151, %v1153
        %1210 = vadd.xlane.f32.xlu0 %v1209
        %v1211 = vpop.xlane.xlu0 %1210
        %v1212 = vadd.f32 %v1155, %v1157
        %1213 = vadd.xlane.f32.xlu0 %v1212
        %v1214 = vpop.xlane.xlu0 %1213
        %v1215 = vadd.f32 %v1159, %v1161
        %1216 = vadd.xlane.f32.xlu0 %v1215
        %v1217 = vpop.xlane.xlu0 %1216
        %v1218 = vadd.f32 %v1163, %v1165
        %1219 = vadd.xlane.f32.xlu0 %v1218
        %v1220 = vpop.xlane.xlu0 %1219
        %v1221 = vadd.f32 %v1167, %v1169
        %1222 = vadd.xlane.f32.xlu0 %v1221
        %v1223 = vpop.xlane.xlu0 %1222
        %v1224 = vadd.f32 %v1171, %v1173
        %1225 = vadd.xlane.f32.xlu0 %v1224
        %v1226 = vpop.xlane.xlu0 %1225
        %v1227 = vadd.f32 %v1175, %v1177
        %1228 = vadd.xlane.f32.xlu0 %v1227
        %v1229 = vpop.xlane.xlu0 %1228
        %v1230 = vadd.f32 %v1179, %v1181
        %1231 = vadd.xlane.f32.xlu0 %v1230
        %v1232 = vpop.xlane.xlu0 %1231
        %v1233 = vadd.f32 %v1183, %v1185
        %1234 = vadd.xlane.f32.xlu0 %v1233
        %v1235 = vpop.xlane.xlu0 %1234
        %v1236 = vadd.f32 %v1187, %v1189
        %1237 = vadd.xlane.f32.xlu0 %v1236
        %v1238 = vpop.xlane.xlu0 %1237
        %v1239 = vadd.f32 %v1191, %v1193
        %1240 = vadd.xlane.f32.xlu0 %v1239
        %v1241 = vpop.xlane.xlu0 %1240
        %v1242 = vpack.c.bf16 %v1135, %v1131
        %v1243 = vpack.c.bf16 %v1137, %v1133
        %v1244 = vpack.c.bf16 %v1143, %v1139
        %v1245 = vpack.c.bf16 %v1145, %v1141
        %v1246 = vpack.c.bf16 %v1151, %v1147
        %v1247 = vpack.c.bf16 %v1153, %v1149
        %v1248 = vpack.c.bf16 %v1159, %v1155
        %v1249 = vpack.c.bf16 %v1161, %v1157
        %v1250 = vpack.c.bf16 %v1167, %v1163
        %v1251 = vpack.c.bf16 %v1169, %v1165
        %v1252 = vpack.c.bf16 %v1175, %v1171
        %v1253 = vpack.c.bf16 %v1177, %v1173
        %v1254 = vpack.c.bf16 %v1183, %v1179
        %v1255 = vpack.c.bf16 %v1185, %v1181
        %v1256 = vpack.c.bf16 %v1191, %v1187
        %v1257 = vpack.c.bf16 %v1193, %v1189
        %1258 = vmatprep.subr.bf16.mxu0 0
        %1259 = vmatpush1.bf16.msra.mxu0 %v748
        %1260 = vmatprep.subr.bf16.mxu0 0
        %1261 = vmatpush1.bf16.msra.mxu0 %v749
        %1262 = vmatprep.subr.bf16.mxu0 0
        %1263 = vmatpush1.bf16.msra.mxu0 %v750
        %1264 = vmatprep.subr.bf16.mxu0 0
        %1265 = vmatpush1.bf16.msra.mxu0 %v751
        %1266 = vmatprep.subr.bf16.mxu0 0
        %1267 = vmatpush1.bf16.msra.mxu0 %v752
        %1268 = vmatprep.subr.bf16.mxu0 0
        %1269 = vmatpush1.bf16.msra.mxu0 %v753
        %1270 = vmatprep.subr.bf16.mxu0 0
        %1271 = vmatpush1.bf16.msra.mxu0 %v754
        %1272 = vmatprep.subr.bf16.mxu0 0
        %1273 = vmatpush1.bf16.msra.mxu0 %v755
        %1274 = vmatprep.subr.bf16.mxu0 0
        %1275 = vmatpush1.bf16.msra.mxu0 %v796
        %1276 = vmatprep.subr.bf16.mxu0 0
        %1277 = vmatpush1.bf16.msra.mxu0 %v797
        %1278 = vmatprep.subr.bf16.mxu0 0
        %1279 = vmatpush1.bf16.msra.mxu0 %v798
        %1280 = vmatprep.subr.bf16.mxu0 0
        %1281 = vmatpush1.bf16.msra.mxu0 %v799
        %1282 = vmatprep.subr.bf16.mxu0 0
        %1283 = vmatpush1.bf16.msra.mxu0 %v800
        %1284 = vmatprep.subr.bf16.mxu0 0
        %1285 = vmatpush1.bf16.msra.mxu0 %v801
        %1286 = vmatprep.subr.bf16.mxu0 0
        %1287 = vmatpush1.bf16.msra.mxu0 %v802
        %1288 = vmatprep.subr.bf16.mxu0 0
        %1289 = vmatpush1.bf16.msra.mxu0 %v803
        %1290 = vmatprep.mubr.bf16.mxu0 %v1243
        %1291 = vmatmul.mubr.bf16.gmra.mrb[0].mxu0 %v1242
        %v1292 = vpop.f32.mrb[0].mxu0
        %v1293 = vadd.f32 0.0, %v1292
        %v1294 = vpop.f32.mrb[0].mxu0
        %v1295 = vpop.f32.mrb[0].mxu0
        %v1296 = vadd.f32 0.0, %v1295
        %v1297 = vpop.f32.mrb[0].mxu0
        %1298 = vmatprep.mubr.bf16.mxu0 %v1245
        %1299 = vmatmul.mubr.bf16.gmra.mrb[0].mxu0 %v1244
        %v1300 = vpop.f32.mrb[0].mxu0
        %v1301 = vadd.f32 0.0, %v1300
        %v1302 = vpop.f32.mrb[0].mxu0
        %v1303 = vpop.f32.mrb[0].mxu0
        %v1304 = vadd.f32 0.0, %v1303
        %v1305 = vpop.f32.mrb[0].mxu0
        %1306 = vmatprep.mubr.bf16.mxu0 %v1247
        %1307 = vmatmul.mubr.bf16.gmra.mrb[0].mxu0 %v1246
        %v1308 = vpop.f32.mrb[0].mxu0
        %v1309 = vadd.f32 0.0, %v1308
        %v1310 = vpop.f32.mrb[0].mxu0
        %v1311 = vpop.f32.mrb[0].mxu0
        %v1312 = vadd.f32 0.0, %v1311
        %v1313 = vpop.f32.mrb[0].mxu0
        %1314 = vmatprep.mubr.bf16.mxu0 %v1249
        %1315 = vmatmul.mubr.bf16.gmra.mrb[0].mxu0 %v1248
        %v1316 = vpop.f32.mrb[0].mxu0
        %v1317 = vadd.f32 0.0, %v1316
        %v1318 = vpop.f32.mrb[0].mxu0
        %v1319 = vpop.f32.mrb[0].mxu0
        %v1320 = vadd.f32 0.0, %v1319
        %v1321 = vpop.f32.mrb[0].mxu0
        %1322 = vmatprep.mubr.bf16.mxu0 %v1251
        %1323 = vmatmul.mubr.bf16.gmra.mrb[0].mxu0 %v1250
        %v1324 = vpop.f32.mrb[0].mxu0
        %v1325 = vadd.f32 0.0, %v1324
        %v1326 = vpop.f32.mrb[0].mxu0
        %v1327 = vpop.f32.mrb[0].mxu0
        %v1328 = vadd.f32 0.0, %v1327
        %v1329 = vpop.f32.mrb[0].mxu0
        %1330 = vmatprep.mubr.bf16.mxu0 %v1253
        %1331 = vmatmul.mubr.bf16.gmra.mrb[0].mxu0 %v1252
        %v1332 = vpop.f32.mrb[0].mxu0
        %v1333 = vadd.f32 0.0, %v1332
        %v1334 = vpop.f32.mrb[0].mxu0
        %v1335 = vpop.f32.mrb[0].mxu0
        %v1336 = vadd.f32 0.0, %v1335
        %v1337 = vpop.f32.mrb[0].mxu0
        %1338 = vmatprep.mubr.bf16.mxu0 %v1255
        %1339 = vmatmul.mubr.bf16.gmra.mrb[0].mxu0 %v1254
        %v1340 = vpop.f32.mrb[0].mxu0
        %v1341 = vadd.f32 0.0, %v1340
        %v1342 = vpop.f32.mrb[0].mxu0
        %v1343 = vpop.f32.mrb[0].mxu0
        %v1344 = vadd.f32 0.0, %v1343
        %v1345 = vpop.f32.mrb[0].mxu0
        %1346 = vmatprep.mubr.bf16.mxu0 %v1257
        %1347 = vmatmul.mubr.bf16.gmra.mrb[0].mxu0 %v1256
        %v1348 = vpop.f32.mrb[0].mxu0
        %v1349 = vadd.f32 0.0, %v1348
        %v1350 = vpop.f32.mrb[0].mxu0
        %v1351 = vpop.f32.mrb[0].mxu0
        %v1352 = vadd.f32 0.0, %v1351
        %v1353 = vpop.f32.mrb[0].mxu0
        %1354 = vdwg.mxu0
        %s1355 = smul.u32 %s38, 8
        %s1356 = smul.u32 %s39, 8
        %s1357 = sadd.s32 %s1355, %s1356
        %s1358 = sld [smem:[#allocation2 + %s1357]]
        %v1359 = vrcp.pop %v1196
        %v1360 = vrcp.pop %v1199
        %v1361 = vrcp.pop %v1202
        %v1362 = vrcp.pop %v1205
        %v1363 = vrcp.pop %v1208
        %v1364 = vrcp.pop %v1211
        %v1365 = vrcp.pop %v1214
        %v1366 = vrcp.pop %v1217
        %v1367 = vrcp.pop %v1220
        %v1368 = vrcp.pop %v1223
        %v1369 = vrcp.pop %v1226
        %v1370 = vrcp.pop %v1229
        %v1371 = vrcp.pop %v1232
        %v1372 = vrcp.pop %v1235
        %v1373 = vrcp.pop %v1238
        %v1374 = vrcp.pop %v1241
        %v1375 = vstv %s1358
        %v1376 = vmul.f32 %v1375, %v1359
        %v1377 = vmul.f32 %v1375, %v1360
        %v1378 = vmul.f32 %v1375, %v1361
        %v1379 = vmul.f32 %v1375, %v1362
        %v1380 = vmul.f32 %v1375, %v1363
        %v1381 = vmul.f32 %v1375, %v1364
        %v1382 = vmul.f32 %v1375, %v1365
        %v1383 = vmul.f32 %v1375, %v1366
        %v1384 = vmul.f32 %v1375, %v1367
        %v1385 = vmul.f32 %v1375, %v1368
        %v1386 = vmul.f32 %v1375, %v1369
        %v1387 = vmul.f32 %v1375, %v1370
        %v1388 = vmul.f32 %v1375, %v1371
        %v1389 = vmul.f32 %v1375, %v1372
        %v1390 = vmul.f32 %v1375, %v1373
        %v1391 = vmul.f32 %v1375, %v1374
        %v1392 = vmul.f32 %v1293, %v1376
        %v1393 = vmul.f32 %v1296, %v1377
        %v1394 = vmul.f32 %v1301, %v1378
        %v1395 = vmul.f32 %v1304, %v1379
        %v1396 = vmul.f32 %v1309, %v1380
        %v1397 = vmul.f32 %v1312, %v1381
        %v1398 = vmul.f32 %v1317, %v1382
        %v1399 = vmul.f32 %v1320, %v1383
        %v1400 = vmul.f32 %v1325, %v1384
        %v1401 = vmul.f32 %v1328, %v1385
        %v1402 = vmul.f32 %v1333, %v1386
        %v1403 = vmul.f32 %v1336, %v1387
        %v1404 = vmul.f32 %v1341, %v1388
        %v1405 = vmul.f32 %v1344, %v1389
        %v1406 = vmul.f32 %v1349, %v1390
        %v1407 = vmul.f32 %v1352, %v1391
        %v1408 = vpack.c.bf16 %v1393, %v1392
        %v1409 = vpack.c.bf16 %v1395, %v1394
        %v1410 = vpack.c.bf16 %v1397, %v1396
        %v1411 = vpack.c.bf16 %v1399, %v1398
        %v1412 = vpack.c.bf16 %v1401, %v1400
        %v1413 = vpack.c.bf16 %v1403, %v1402
        %v1414 = vpack.c.bf16 %v1405, %v1404
        %v1415 = vpack.c.bf16 %v1407, %v1406
        %v1424 = vunpack.c.l.b16 %v1408
        %v1425 = vunpack.c.h.b16 %v1408
        %v1426 = vunpack.c.l.b16 %v1409
        %v1427 = vunpack.c.h.b16 %v1409
        %v1428 = vunpack.c.l.b16 %v1410
        %v1429 = vunpack.c.h.b16 %v1410
        %v1430 = vunpack.c.l.b16 %v1411
        %v1431 = vunpack.c.h.b16 %v1411
        %v1432 = vunpack.c.l.b16 %v1412
        %v1433 = vunpack.c.h.b16 %v1412
        %v1434 = vunpack.c.l.b16 %v1413
        %v1435 = vunpack.c.h.b16 %v1413
        %v1436 = vunpack.c.l.b16 %v1414
        %v1437 = vunpack.c.h.b16 %v1414
        %v1438 = vunpack.c.l.b16 %v1415
        %v1439 = vunpack.c.h.b16 %v1415
        %v1440 = vpack.c.b16 %v1424, %v1424
        %v1441 = vpack.c.b16 %v1425, %v1425
        %v1442 = vpack.c.b16 %v1426, %v1426
        %v1443 = vpack.c.b16 %v1427, %v1427
        %v1444 = vpack.c.b16 %v1428, %v1428
        %v1445 = vpack.c.b16 %v1429, %v1429
        %v1446 = vpack.c.b16 %v1430, %v1430
        %v1447 = vpack.c.b16 %v1431, %v1431
        %v1448 = vpack.c.b16 %v1432, %v1432
        %v1449 = vpack.c.b16 %v1433, %v1433
        %v1450 = vpack.c.b16 %v1434, %v1434
        %v1451 = vpack.c.b16 %v1435, %v1435
        %v1452 = vpack.c.b16 %v1436, %v1436
        %v1453 = vpack.c.b16 %v1437, %v1437
        %v1454 = vpack.c.b16 %v1438, %v1438
        %v1455 = vpack.c.b16 %v1439, %v1439
        %vm1472 = vcmask 257024
        %1473 = vst.msk [vmem:[%s546] sm:$0xf] %vm1472, %v1440
        %1474 = vst.msk [vmem:[%s546 + $0x4] sm:$0xf] %vm1472, %v1441
        %1475 = vst.msk [vmem:[%s546 + $0x8] sm:$0xf] %vm1472, %v1442
        %1476 = vst.msk [vmem:[%s546 + $0xc] sm:$0xf] %vm1472, %v1443
        %1477 = vst.msk [vmem:[%s546 + $0x10] sm:$0xf] %vm1472, %v1444
        %1478 = vst.msk [vmem:[%s546 + $0x14] sm:$0xf] %vm1472, %v1445
        %1479 = vst.msk [vmem:[%s546 + $0x18] sm:$0xf] %vm1472, %v1446
        %1480 = vst.msk [vmem:[%s546 + $0x1c] sm:$0xf] %vm1472, %v1447
        %1481 = vst.msk [vmem:[%s546 + $0x20] sm:$0xf] %vm1472, %v1448
        %1482 = vst.msk [vmem:[%s546 + $0x24] sm:$0xf] %vm1472, %v1449
        %1483 = vst.msk [vmem:[%s546 + $0x28] sm:$0xf] %vm1472, %v1450
        %1484 = vst.msk [vmem:[%s546 + $0x2c] sm:$0xf] %vm1472, %v1451
        %1485 = vst.msk [vmem:[%s546 + $0x30] sm:$0xf] %vm1472, %v1452
        %1486 = vst.msk [vmem:[%s546 + $0x34] sm:$0xf] %vm1472, %v1453
        %1487 = vst.msk [vmem:[%s546 + $0x38] sm:$0xf] %vm1472, %v1454
        %1488 = vst.msk [vmem:[%s546 + $0x3c] sm:$0xf] %vm1472, %v1455
        %v1489 = vld [vmem:[%s445] sm:$0xf]
        %v1490 = vld [vmem:[%s445 + $0x4] sm:$0xf]
        %v1491 = vld [vmem:[%s445 + $0x8] sm:$0xf]
        %v1492 = vld [vmem:[%s445 + $0xc] sm:$0xf]
        %v1493 = vld [vmem:[%s445 + $0x10] sm:$0xf]
        %v1494 = vld [vmem:[%s445 + $0x14] sm:$0xf]
        %v1495 = vld [vmem:[%s445 + $0x18] sm:$0xf]
        %v1496 = vld [vmem:[%s445 + $0x1c] sm:$0xf]
        %v1497 = vld [vmem:[%s445 + $0x20] sm:$0xf]
        %v1498 = vld [vmem:[%s445 + $0x24] sm:$0xf]
        %v1499 = vld [vmem:[%s445 + $0x28] sm:$0xf]
        %v1500 = vld [vmem:[%s445 + $0x2c] sm:$0xf]
        %v1501 = vld [vmem:[%s445 + $0x30] sm:$0xf]
        %v1502 = vld [vmem:[%s445 + $0x34] sm:$0xf]
        %v1503 = vld [vmem:[%s445 + $0x38] sm:$0xf]
        %v1504 = vld [vmem:[%s445 + $0x3c] sm:$0xf]
        %v1505 = vld [vmem:[%s454] sm:$0xf]
        %v1506 = vld [vmem:[%s454 + $0x4] sm:$0xf]
        %v1507 = vld [vmem:[%s454 + $0x8] sm:$0xf]
        %v1508 = vld [vmem:[%s454 + $0xc] sm:$0xf]
        %v1509 = vld [vmem:[%s454 + $0x10] sm:$0xf]
        %v1510 = vld [vmem:[%s454 + $0x14] sm:$0xf]
        %v1511 = vld [vmem:[%s454 + $0x18] sm:$0xf]
        %v1512 = vld [vmem:[%s454 + $0x1c] sm:$0xf]
        %v1513 = vld [vmem:[%s454 + $0x20] sm:$0xf]
        %v1514 = vld [vmem:[%s454 + $0x24] sm:$0xf]
        %v1515 = vld [vmem:[%s454 + $0x28] sm:$0xf]
        %v1516 = vld [vmem:[%s454 + $0x2c] sm:$0xf]
        %v1517 = vld [vmem:[%s454 + $0x30] sm:$0xf]
        %v1518 = vld [vmem:[%s454 + $0x34] sm:$0xf]
        %v1519 = vld [vmem:[%s454 + $0x38] sm:$0xf]
        %v1520 = vld [vmem:[%s454 + $0x3c] sm:$0xf]
        %v1521 = vld [vmem:[%s472] sm:$0xf]
        %v1522 = vld [vmem:[%s472 + $0x4] sm:$0xf]
        %v1523 = vld [vmem:[%s472 + $0x8] sm:$0xf]
        %v1524 = vld [vmem:[%s472 + $0xc] sm:$0xf]
        %v1525 = vld [vmem:[%s472 + $0x10] sm:$0xf]
        %v1526 = vld [vmem:[%s472 + $0x14] sm:$0xf]
        %v1527 = vld [vmem:[%s472 + $0x18] sm:$0xf]
        %v1528 = vld [vmem:[%s472 + $0x1c] sm:$0xf]
        %v1529 = vld [vmem:[%s472 + $0x20] sm:$0xf]
        %v1530 = vld [vmem:[%s472 + $0x24] sm:$0xf]
        %v1531 = vld [vmem:[%s472 + $0x28] sm:$0xf]
        %v1532 = vld [vmem:[%s472 + $0x2c] sm:$0xf]
        %v1533 = vld [vmem:[%s472 + $0x30] sm:$0xf]
        %v1534 = vld [vmem:[%s472 + $0x34] sm:$0xf]
        %v1535 = vld [vmem:[%s472 + $0x38] sm:$0xf]
        %v1536 = vld [vmem:[%s472 + $0x3c] sm:$0xf]
        %v1553 = vunpack.c.l.b16 %v1505
        %v1554 = vunpack.c.l.b16 %v1506
        %v1555 = vunpack.c.l.b16 %v1507
        %v1556 = vunpack.c.l.b16 %v1508
        %v1557 = vunpack.c.l.b16 %v1509
        %v1558 = vunpack.c.l.b16 %v1510
        %v1559 = vunpack.c.l.b16 %v1511
        %v1560 = vunpack.c.l.b16 %v1512
        %v1561 = vunpack.c.l.b16 %v1513
        %v1562 = vunpack.c.l.b16 %v1514
        %v1563 = vunpack.c.l.b16 %v1515
        %v1564 = vunpack.c.l.b16 %v1516
        %v1565 = vunpack.c.l.b16 %v1517
        %v1566 = vunpack.c.l.b16 %v1518
        %v1567 = vunpack.c.l.b16 %v1519
        %v1568 = vunpack.c.l.b16 %v1520
        %v1569 = vpack.c.b16 %v1554, %v1553
        %v1570 = vpack.c.b16 %v1556, %v1555
        %v1571 = vpack.c.b16 %v1558, %v1557
        %v1572 = vpack.c.b16 %v1560, %v1559
        %v1573 = vpack.c.b16 %v1562, %v1561
        %v1574 = vpack.c.b16 %v1564, %v1563
        %v1575 = vpack.c.b16 %v1566, %v1565
        %v1576 = vpack.c.b16 %v1568, %v1567
        %v1593 = vunpack.c.l.b16 %v1521
        %v1594 = vunpack.c.l.b16 %v1522
        %v1595 = vunpack.c.l.b16 %v1523
        %v1596 = vunpack.c.l.b16 %v1524
        %v1597 = vunpack.c.l.b16 %v1525
        %v1598 = vunpack.c.l.b16 %v1526
        %v1599 = vunpack.c.l.b16 %v1527
        %v1600 = vunpack.c.l.b16 %v1528
        %v1601 = vunpack.c.l.b16 %v1529
        %v1602 = vunpack.c.l.b16 %v1530
        %v1603 = vunpack.c.l.b16 %v1531
        %v1604 = vunpack.c.l.b16 %v1532
        %v1605 = vunpack.c.l.b16 %v1533
        %v1606 = vunpack.c.l.b16 %v1534
        %v1607 = vunpack.c.l.b16 %v1535
        %v1608 = vunpack.c.l.b16 %v1536
        %v1609 = vpack.c.b16 %v1594, %v1593
        %v1610 = vpack.c.b16 %v1596, %v1595
        %v1611 = vpack.c.b16 %v1598, %v1597
        %v1612 = vpack.c.b16 %v1600, %v1599
        %v1613 = vpack.c.b16 %v1602, %v1601
        %v1614 = vpack.c.b16 %v1604, %v1603
        %v1615 = vpack.c.b16 %v1606, %v1605
        %v1616 = vpack.c.b16 %v1608, %v1607
        %v1617 = vld [vmem:[%s463] sm:$0xf]
        %v1618 = vld [vmem:[%s463 + $0x4] sm:$0xf]
        %v1619 = vld [vmem:[%s463 + $0x8] sm:$0xf]
        %v1620 = vld [vmem:[%s463 + $0xc] sm:$0xf]
        %v1621 = vld [vmem:[%s463 + $0x10] sm:$0xf]
        %v1622 = vld [vmem:[%s463 + $0x14] sm:$0xf]
        %v1623 = vld [vmem:[%s463 + $0x18] sm:$0xf]
        %v1624 = vld [vmem:[%s463 + $0x1c] sm:$0xf]
        %v1625 = vld [vmem:[%s463 + $0x20] sm:$0xf]
        %v1626 = vld [vmem:[%s463 + $0x24] sm:$0xf]
        %v1627 = vld [vmem:[%s463 + $0x28] sm:$0xf]
        %v1628 = vld [vmem:[%s463 + $0x2c] sm:$0xf]
        %v1629 = vld [vmem:[%s463 + $0x30] sm:$0xf]
        %v1630 = vld [vmem:[%s463 + $0x34] sm:$0xf]
        %v1631 = vld [vmem:[%s463 + $0x38] sm:$0xf]
        %v1632 = vld [vmem:[%s463 + $0x3c] sm:$0xf]
        %v1633 = vld [vmem:[%s481] sm:$0xf]
        %v1634 = vld [vmem:[%s481 + $0x4] sm:$0xf]
        %v1635 = vld [vmem:[%s481 + $0x8] sm:$0xf]
        %v1636 = vld [vmem:[%s481 + $0xc] sm:$0xf]
        %v1637 = vld [vmem:[%s481 + $0x10] sm:$0xf]
        %v1638 = vld [vmem:[%s481 + $0x14] sm:$0xf]
        %v1639 = vld [vmem:[%s481 + $0x18] sm:$0xf]
        %v1640 = vld [vmem:[%s481 + $0x1c] sm:$0xf]
        %v1641 = vld [vmem:[%s481 + $0x20] sm:$0xf]
        %v1642 = vld [vmem:[%s481 + $0x24] sm:$0xf]
        %v1643 = vld [vmem:[%s481 + $0x28] sm:$0xf]
        %v1644 = vld [vmem:[%s481 + $0x2c] sm:$0xf]
        %v1645 = vld [vmem:[%s481 + $0x30] sm:$0xf]
        %v1646 = vld [vmem:[%s481 + $0x34] sm:$0xf]
        %v1647 = vld [vmem:[%s481 + $0x38] sm:$0xf]
        %v1648 = vld [vmem:[%s481 + $0x3c] sm:$0xf]
        %v1665 = vunpack.c.l.b16 %v1617
        %v1666 = vunpack.c.l.b16 %v1618
        %v1667 = vunpack.c.l.b16 %v1619
        %v1668 = vunpack.c.l.b16 %v1620
        %v1669 = vunpack.c.l.b16 %v1621
        %v1670 = vunpack.c.l.b16 %v1622
        %v1671 = vunpack.c.l.b16 %v1623
        %v1672 = vunpack.c.l.b16 %v1624
        %v1673 = vunpack.c.l.b16 %v1625
        %v1674 = vunpack.c.l.b16 %v1626
        %v1675 = vunpack.c.l.b16 %v1627
        %v1676 = vunpack.c.l.b16 %v1628
        %v1677 = vunpack.c.l.b16 %v1629
        %v1678 = vunpack.c.l.b16 %v1630
        %v1679 = vunpack.c.l.b16 %v1631
        %v1680 = vunpack.c.l.b16 %v1632
        %v1681 = vpack.c.b16 %v1666, %v1665
        %v1682 = vpack.c.b16 %v1668, %v1667
        %v1683 = vpack.c.b16 %v1670, %v1669
        %v1684 = vpack.c.b16 %v1672, %v1671
        %v1685 = vpack.c.b16 %v1674, %v1673
        %v1686 = vpack.c.b16 %v1676, %v1675
        %v1687 = vpack.c.b16 %v1678, %v1677
        %v1688 = vpack.c.b16 %v1680, %v1679
        %v1705 = vunpack.c.l.b16 %v1633
        %v1706 = vunpack.c.l.b16 %v1634
        %v1707 = vunpack.c.l.b16 %v1635
        %v1708 = vunpack.c.l.b16 %v1636
        %v1709 = vunpack.c.l.b16 %v1637
        %v1710 = vunpack.c.l.b16 %v1638
        %v1711 = vunpack.c.l.b16 %v1639
        %v1712 = vunpack.c.l.b16 %v1640
        %v1713 = vunpack.c.l.b16 %v1641
        %v1714 = vunpack.c.l.b16 %v1642
        %v1715 = vunpack.c.l.b16 %v1643
        %v1716 = vunpack.c.l.b16 %v1644
        %v1717 = vunpack.c.l.b16 %v1645
        %v1718 = vunpack.c.l.b16 %v1646
        %v1719 = vunpack.c.l.b16 %v1647
        %v1720 = vunpack.c.l.b16 %v1648
        %v1721 = vpack.c.b16 %v1706, %v1705
        %v1722 = vpack.c.b16 %v1708, %v1707
        %v1723 = vpack.c.b16 %v1710, %v1709
        %v1724 = vpack.c.b16 %v1712, %v1711
        %v1725 = vpack.c.b16 %v1714, %v1713
        %v1726 = vpack.c.b16 %v1716, %v1715
        %v1727 = vpack.c.b16 %v1718, %v1717
        %v1728 = vpack.c.b16 %v1720, %v1719
        %s1729 = scalar_lea.vmem %s490, 1 [#allocation13]
        %v1730 = vld [vmem:[%s1729] ss:$4 sm:$0x3]
        %v1732 = vlaneseq
        %v1733 = vshrl.u32 %v1732, 7
        %v1734 = vsub.s32 0, %v1733
        %v1735 = vrot.slane %v1730, %v1734
        %v1736 = vlaneseq
        %v1737 = vshrl.u32 %v1736, 7
        %v1738 = vsub.s32 1, %v1737
        %v1739 = vrot.slane %v1730, %v1738
        %v1758 = vunpack.c.l.b16 %v1489
        %v1759 = vunpack.c.l.b16 %v1490
        %v1760 = vunpack.c.l.b16 %v1491
        %v1761 = vunpack.c.l.b16 %v1492
        %v1762 = vunpack.c.l.b16 %v1493
        %v1763 = vunpack.c.l.b16 %v1494
        %v1764 = vunpack.c.l.b16 %v1495
        %v1765 = vunpack.c.l.b16 %v1496
        %v1766 = vunpack.c.l.b16 %v1497
        %v1767 = vunpack.c.l.b16 %v1498
        %v1768 = vunpack.c.l.b16 %v1499
        %v1769 = vunpack.c.l.b16 %v1500
        %v1770 = vunpack.c.l.b16 %v1501
        %v1771 = vunpack.c.l.b16 %v1502
        %v1772 = vunpack.c.l.b16 %v1503
        %v1773 = vunpack.c.l.b16 %v1504
        %v1774 = vpack.c.b16 %v1759, %v1758
        %v1775 = vpack.c.b16 %v1761, %v1760
        %v1776 = vpack.c.b16 %v1763, %v1762
        %v1777 = vpack.c.b16 %v1765, %v1764
        %v1778 = vpack.c.b16 %v1767, %v1766
        %v1779 = vpack.c.b16 %v1769, %v1768
        %v1780 = vpack.c.b16 %v1771, %v1770
        %v1781 = vpack.c.b16 %v1773, %v1772
        %1782 = vrot.lane.b32.xlu0 %v1774, 96
        %v1783 = vpop.permute.xlu0 %1782
        %1784 = vrot.lane.b32.xlu0 %v1775, 96
        %v1785 = vpop.permute.xlu0 %1784
        %1786 = vrot.lane.b32.xlu0 %v1776, 96
        %v1787 = vpop.permute.xlu0 %1786
        %1788 = vrot.lane.b32.xlu0 %v1777, 96
        %v1789 = vpop.permute.xlu0 %1788
        %1790 = vrot.lane.b32.xlu0 %v1778, 96
        %v1791 = vpop.permute.xlu0 %1790
        %1792 = vrot.lane.b32.xlu0 %v1779, 96
        %v1793 = vpop.permute.xlu0 %1792
        %1794 = vrot.lane.b32.xlu0 %v1780, 96
        %v1795 = vpop.permute.xlu0 %1794
        %1796 = vrot.lane.b32.xlu0 %v1781, 96
        %v1797 = vpop.permute.xlu0 %1796
        %1798 = vrot.lane.b32.xlu0 %v1569, 96
        %v1799 = vpop.permute.xlu0 %1798
        %1800 = vrot.lane.b32.xlu0 %v1570, 96
        %v1801 = vpop.permute.xlu0 %1800
        %1802 = vrot.lane.b32.xlu0 %v1571, 96
        %v1803 = vpop.permute.xlu0 %1802
        %1804 = vrot.lane.b32.xlu0 %v1572, 96
        %v1805 = vpop.permute.xlu0 %1804
        %1806 = vrot.lane.b32.xlu0 %v1573, 96
        %v1807 = vpop.permute.xlu0 %1806
        %1808 = vrot.lane.b32.xlu0 %v1574, 96
        %v1809 = vpop.permute.xlu0 %1808
        %1810 = vrot.lane.b32.xlu0 %v1575, 96
        %v1811 = vpop.permute.xlu0 %1810
        %1812 = vrot.lane.b32.xlu0 %v1576, 96
        %v1813 = vpop.permute.xlu0 %1812
        %1814 = vrot.lane.b32.xlu0 %v1609, 96
        %v1815 = vpop.permute.xlu0 %1814
        %1816 = vrot.lane.b32.xlu0 %v1610, 96
        %v1817 = vpop.permute.xlu0 %1816
        %1818 = vrot.lane.b32.xlu0 %v1611, 96
        %v1819 = vpop.permute.xlu0 %1818
        %1820 = vrot.lane.b32.xlu0 %v1612, 96
        %v1821 = vpop.permute.xlu0 %1820
        %1822 = vrot.lane.b32.xlu0 %v1613, 96
        %v1823 = vpop.permute.xlu0 %1822
        %1824 = vrot.lane.b32.xlu0 %v1614, 96
        %v1825 = vpop.permute.xlu0 %1824
        %1826 = vrot.lane.b32.xlu0 %v1615, 96
        %v1827 = vpop.permute.xlu0 %1826
        %1828 = vrot.lane.b32.xlu0 %v1616, 96
        %v1829 = vpop.permute.xlu0 %1828
        %v1831 = vsel %vm864, %v1783, 0
        %v1834 = vsel %vm864, %v1785, 0
        %v1837 = vsel %vm864, %v1787, 0
        %v1840 = vsel %vm864, %v1789, 0
        %v1843 = vsel %vm864, %v1791, 0
        %v1846 = vsel %vm864, %v1793, 0
        %v1849 = vsel %vm864, %v1795, 0
        %v1852 = vsel %vm864, %v1797, 0
        %v1855 = vsel %vm864, %v1799, 0
        %v1858 = vsel %vm864, %v1801, 0
        %v1861 = vsel %vm864, %v1803, 0
        %v1864 = vsel %vm864, %v1805, 0
        %v1867 = vsel %vm864, %v1807, 0
        %v1870 = vsel %vm864, %v1809, 0
        %v1873 = vsel %vm864, %v1811, 0
        %v1876 = vsel %vm864, %v1813, 0
        %v1879 = vsel %vm864, %v1815, 0
        %v1882 = vsel %vm864, %v1817, 0
        %v1885 = vsel %vm864, %v1819, 0
        %v1888 = vsel %vm864, %v1821, 0
        %v1891 = vsel %vm864, %v1823, 0
        %v1894 = vsel %vm864, %v1825, 0
        %v1897 = vsel %vm864, %v1827, 0
        %v1900 = vsel %vm864, %v1829, 0
        %1902 = vmatprep.subr.bf16.mxu0 0
        %1903 = vmatpush1.bf16.xpose.msra.mxu0 %v1855
        %1904 = vmatprep.subr.bf16.mxu0 0
        %1905 = vmatpush1.bf16.xpose.msra.mxu0 %v1858
        %1906 = vmatprep.subr.bf16.mxu0 0
        %1907 = vmatpush1.bf16.xpose.msra.mxu0 %v1861
        %1908 = vmatprep.subr.bf16.mxu0 0
        %1909 = vmatpush1.bf16.xpose.msra.mxu0 %v1864
        %1910 = vmatprep.subr.bf16.mxu0 0
        %1911 = vmatpush1.bf16.xpose.msra.mxu0 %v1867
        %1912 = vmatprep.subr.bf16.mxu0 0
        %1913 = vmatpush1.bf16.xpose.msra.mxu0 %v1870
        %1914 = vmatprep.subr.bf16.mxu0 0
        %1915 = vmatpush1.bf16.xpose.msra.mxu0 %v1873
        %1916 = vmatprep.subr.bf16.mxu0 0
        %1917 = vmatpush1.bf16.xpose.msra.mxu0 %v1876
        %1918 = vmatprep.subr.bf16.mxu0 0
        %1919 = vmatpush1.bf16.xpose.msra.mxu0 %v1879
        %1920 = vmatprep.subr.bf16.mxu0 0
        %1921 = vmatpush1.bf16.xpose.msra.mxu0 %v1882
        %1922 = vmatprep.subr.bf16.mxu0 0
        %1923 = vmatpush1.bf16.xpose.msra.mxu0 %v1885
        %1924 = vmatprep.subr.bf16.mxu0 0
        %1925 = vmatpush1.bf16.xpose.msra.mxu0 %v1888
        %1926 = vmatprep.subr.bf16.mxu0 0
        %1927 = vmatpush1.bf16.xpose.msra.mxu0 %v1891
        %1928 = vmatprep.subr.bf16.mxu0 0
        %1929 = vmatpush1.bf16.xpose.msra.mxu0 %v1894
        %1930 = vmatprep.subr.bf16.mxu0 0
        %1931 = vmatpush1.bf16.xpose.msra.mxu0 %v1897
        %1932 = vmatprep.subr.bf16.mxu0 0
        %1933 = vmatpush1.bf16.xpose.msra.mxu0 %v1900
        %1934 = vmatprep.mubr.bf16.mxu0 0
        %1935 = vmatmul.mubr.bf16.gmra.mrb[0].mxu0 %v1831
        %v1936 = vpop.f32.mrb[0].mxu0
        %v1937 = vadd.f32 %v1735, %v1936
        %v1938 = vpop.f32.mrb[0].mxu0
        %v1939 = vadd.f32 %v1739, %v1938
        %v1940 = vpop.f32.mrb[0].mxu0
        %v1941 = vadd.f32 %v1735, %v1940
        %v1942 = vpop.f32.mrb[0].mxu0
        %v1943 = vadd.f32 %v1739, %v1942
        %1944 = vmatprep.mubr.bf16.mxu0 0
        %1945 = vmatmul.mubr.bf16.gmra.mrb[0].mxu0 %v1834
        %v1946 = vpop.f32.mrb[0].mxu0
        %v1947 = vadd.f32 %v1735, %v1946
        %v1948 = vpop.f32.mrb[0].mxu0
        %v1949 = vadd.f32 %v1739, %v1948
        %v1950 = vpop.f32.mrb[0].mxu0
        %v1951 = vadd.f32 %v1735, %v1950
        %v1952 = vpop.f32.mrb[0].mxu0
        %v1953 = vadd.f32 %v1739, %v1952
        %1954 = vmatprep.mubr.bf16.mxu0 0
        %1955 = vmatmul.mubr.bf16.gmra.mrb[0].mxu0 %v1837
        %v1956 = vpop.f32.mrb[0].mxu0
        %v1957 = vadd.f32 %v1735, %v1956
        %v1958 = vpop.f32.mrb[0].mxu0
        %v1959 = vadd.f32 %v1739, %v1958
        %v1960 = vpop.f32.mrb[0].mxu0
        %v1961 = vadd.f32 %v1735, %v1960
        %v1962 = vpop.f32.mrb[0].mxu0
        %v1963 = vadd.f32 %v1739, %v1962
        %1964 = vmatprep.mubr.bf16.mxu0 0
        %1965 = vmatmul.mubr.bf16.gmra.mrb[0].mxu0 %v1840
        %v1966 = vpop.f32.mrb[0].mxu0
        %v1967 = vadd.f32 %v1735, %v1966
        %v1968 = vpop.f32.mrb[0].mxu0
        %v1969 = vadd.f32 %v1739, %v1968
        %v1970 = vpop.f32.mrb[0].mxu0
        %v1971 = vadd.f32 %v1735, %v1970
        %v1972 = vpop.f32.mrb[0].mxu0
        %v1973 = vadd.f32 %v1739, %v1972
        %1974 = vmatprep.mubr.bf16.mxu0 0
        %1975 = vmatmul.mubr.bf16.gmra.mrb[0].mxu0 %v1843
        %v1976 = vpop.f32.mrb[0].mxu0
        %v1977 = vadd.f32 %v1735, %v1976
        %v1978 = vpop.f32.mrb[0].mxu0
        %v1979 = vadd.f32 %v1739, %v1978
        %v1980 = vpop.f32.mrb[0].mxu0
        %v1981 = vadd.f32 %v1735, %v1980
        %v1982 = vpop.f32.mrb[0].mxu0
        %v1983 = vadd.f32 %v1739, %v1982
        %1984 = vmatprep.mubr.bf16.mxu0 0
        %1985 = vmatmul.mubr.bf16.gmra.mrb[0].mxu0 %v1846
        %v1986 = vpop.f32.mrb[0].mxu0
        %v1987 = vadd.f32 %v1735, %v1986
        %v1988 = vpop.f32.mrb[0].mxu0
        %v1989 = vadd.f32 %v1739, %v1988
        %v1990 = vpop.f32.mrb[0].mxu0
        %v1991 = vadd.f32 %v1735, %v1990
        %v1992 = vpop.f32.mrb[0].mxu0
        %v1993 = vadd.f32 %v1739, %v1992
        %1994 = vmatprep.mubr.bf16.mxu0 0
        %1995 = vmatmul.mubr.bf16.gmra.mrb[0].mxu0 %v1849
        %v1996 = vpop.f32.mrb[0].mxu0
        %v1997 = vadd.f32 %v1735, %v1996
        %v1998 = vpop.f32.mrb[0].mxu0
        %v1999 = vadd.f32 %v1739, %v1998
        %v2000 = vpop.f32.mrb[0].mxu0
        %v2001 = vadd.f32 %v1735, %v2000
        %v2002 = vpop.f32.mrb[0].mxu0
        %v2003 = vadd.f32 %v1739, %v2002
        %2004 = vmatprep.mubr.bf16.mxu0 0
        %2005 = vmatmul.mubr.bf16.gmra.mrb[0].mxu0 %v1852
        %v2006 = vpop.f32.mrb[0].mxu0
        %v2007 = vadd.f32 %v1735, %v2006
        %v2008 = vpop.f32.mrb[0].mxu0
        %v2009 = vadd.f32 %v1739, %v2008
        %v2010 = vpop.f32.mrb[0].mxu0
        %v2011 = vadd.f32 %v1735, %v2010
        %v2012 = vpop.f32.mrb[0].mxu0
        %v2013 = vadd.f32 %v1739, %v2012
        %2014 = vdwg.mxu0
        %v2015 = vmax.f32 %v1937, %v1939
        %2016 = vmax.xlane.f32.xlu0 %v2015
        %v2017 = vpop.xlane.xlu0 %2016
        %v2018 = vmax.f32 %v1941, %v1943
        %2019 = vmax.xlane.f32.xlu0 %v2018
        %v2020 = vpop.xlane.xlu0 %2019
        %v2021 = vmax.f32 %v1947, %v1949
        %2022 = vmax.xlane.f32.xlu0 %v2021
        %v2023 = vpop.xlane.xlu0 %2022
        %v2024 = vmax.f32 %v1951, %v1953
        %2025 = vmax.xlane.f32.xlu0 %v2024
        %v2026 = vpop.xlane.xlu0 %2025
        %v2027 = vmax.f32 %v1957, %v1959
        %2028 = vmax.xlane.f32.xlu0 %v2027
        %v2029 = vpop.xlane.xlu0 %2028
        %v2030 = vmax.f32 %v1961, %v1963
        %2031 = vmax.xlane.f32.xlu0 %v2030
        %v2032 = vpop.xlane.xlu0 %2031
        %v2033 = vmax.f32 %v1967, %v1969
        %2034 = vmax.xlane.f32.xlu0 %v2033
        %v2035 = vpop.xlane.xlu0 %2034
        %v2036 = vmax.f32 %v1971, %v1973
        %2037 = vmax.xlane.f32.xlu0 %v2036
        %v2038 = vpop.xlane.xlu0 %2037
        %v2039 = vmax.f32 %v1977, %v1979
        %2040 = vmax.xlane.f32.xlu0 %v2039
        %v2041 = vpop.xlane.xlu0 %2040
        %v2042 = vmax.f32 %v1981, %v1983
        %2043 = vmax.xlane.f32.xlu0 %v2042
        %v2044 = vpop.xlane.xlu0 %2043
        %v2045 = vmax.f32 %v1987, %v1989
        %2046 = vmax.xlane.f32.xlu0 %v2045
        %v2047 = vpop.xlane.xlu0 %2046
        %v2048 = vmax.f32 %v1991, %v1993
        %2049 = vmax.xlane.f32.xlu0 %v2048
        %v2050 = vpop.xlane.xlu0 %2049
        %v2051 = vmax.f32 %v1997, %v1999
        %2052 = vmax.xlane.f32.xlu0 %v2051
        %v2053 = vpop.xlane.xlu0 %2052
        %v2054 = vmax.f32 %v2001, %v2003
        %2055 = vmax.xlane.f32.xlu0 %v2054
        %v2056 = vpop.xlane.xlu0 %2055
        %v2057 = vmax.f32 %v2007, %v2009
        %2058 = vmax.xlane.f32.xlu0 %v2057
        %v2059 = vpop.xlane.xlu0 %2058
        %v2060 = vmax.f32 %v2011, %v2013
        %2061 = vmax.xlane.f32.xlu0 %v2060
        %v2062 = vpop.xlane.xlu0 %2061
        %v2063 = vsub.f32 %v1937, %v2017
        %v2064 = vsub.f32 %v1939, %v2017
        %v2065 = vsub.f32 %v1941, %v2020
        %v2066 = vsub.f32 %v1943, %v2020
        %v2067 = vsub.f32 %v1947, %v2023
        %v2068 = vsub.f32 %v1949, %v2023
        %v2069 = vsub.f32 %v1951, %v2026
        %v2070 = vsub.f32 %v1953, %v2026
        %v2071 = vsub.f32 %v1957, %v2029
        %v2072 = vsub.f32 %v1959, %v2029
        %v2073 = vsub.f32 %v1961, %v2032
        %v2074 = vsub.f32 %v1963, %v2032
        %v2075 = vsub.f32 %v1967, %v2035
        %v2076 = vsub.f32 %v1969, %v2035
        %v2077 = vsub.f32 %v1971, %v2038
        %v2078 = vsub.f32 %v1973, %v2038
        %v2079 = vsub.f32 %v1977, %v2041
        %v2080 = vsub.f32 %v1979, %v2041
        %v2081 = vsub.f32 %v1981, %v2044
        %v2082 = vsub.f32 %v1983, %v2044
        %v2083 = vsub.f32 %v1987, %v2047
        %v2084 = vsub.f32 %v1989, %v2047
        %v2085 = vsub.f32 %v1991, %v2050
        %v2086 = vsub.f32 %v1993, %v2050
        %v2087 = vsub.f32 %v1997, %v2053
        %v2088 = vsub.f32 %v1999, %v2053
        %v2089 = vsub.f32 %v2001, %v2056
        %v2090 = vsub.f32 %v2003, %v2056
        %v2091 = vsub.f32 %v2007, %v2059
        %v2092 = vsub.f32 %v2009, %v2059
        %v2093 = vsub.f32 %v2011, %v2062
        %v2094 = vsub.f32 %v2013, %v2062
        %v2095 = vmul.f32 %v2063, 1.442695
        %v2096 = vpow.pop %v2095
        %v2097 = vmul.f32 %v2064, 1.442695
        %v2098 = vpow.pop %v2097
        %v2099 = vmul.f32 %v2065, 1.442695
        %v2100 = vpow.pop %v2099
        %v2101 = vmul.f32 %v2066, 1.442695
        %v2102 = vpow.pop %v2101
        %v2103 = vmul.f32 %v2067, 1.442695
        %v2104 = vpow.pop %v2103
        %v2105 = vmul.f32 %v2068, 1.442695
        %v2106 = vpow.pop %v2105
        %v2107 = vmul.f32 %v2069, 1.442695
        %v2108 = vpow.pop %v2107
        %v2109 = vmul.f32 %v2070, 1.442695
        %v2110 = vpow.pop %v2109
        %v2111 = vmul.f32 %v2071, 1.442695
        %v2112 = vpow.pop %v2111
        %v2113 = vmul.f32 %v2072, 1.442695
        %v2114 = vpow.pop %v2113
        %v2115 = vmul.f32 %v2073, 1.442695
        %v2116 = vpow.pop %v2115
        %v2117 = vmul.f32 %v2074, 1.442695
        %v2118 = vpow.pop %v2117
        %v2119 = vmul.f32 %v2075, 1.442695
        %v2120 = vpow.pop %v2119
        %v2121 = vmul.f32 %v2076, 1.442695
        %v2122 = vpow.pop %v2121
        %v2123 = vmul.f32 %v2077, 1.442695
        %v2124 = vpow.pop %v2123
        %v2125 = vmul.f32 %v2078, 1.442695
        %v2126 = vpow.pop %v2125
        %v2127 = vmul.f32 %v2079, 1.442695
        %v2128 = vpow.pop %v2127
        %v2129 = vmul.f32 %v2080, 1.442695
        %v2130 = vpow.pop %v2129
        %v2131 = vmul.f32 %v2081, 1.442695
        %v2132 = vpow.pop %v2131
        %v2133 = vmul.f32 %v2082, 1.442695
        %v2134 = vpow.pop %v2133
        %v2135 = vmul.f32 %v2083, 1.442695
        %v2136 = vpow.pop %v2135
        %v2137 = vmul.f32 %v2084, 1.442695
        %v2138 = vpow.pop %v2137
        %v2139 = vmul.f32 %v2085, 1.442695
        %v2140 = vpow.pop %v2139
        %v2141 = vmul.f32 %v2086, 1.442695
        %v2142 = vpow.pop %v2141
        %v2143 = vmul.f32 %v2087, 1.442695
        %v2144 = vpow.pop %v2143
        %v2145 = vmul.f32 %v2088, 1.442695
        %v2146 = vpow.pop %v2145
        %v2147 = vmul.f32 %v2089, 1.442695
        %v2148 = vpow.pop %v2147
        %v2149 = vmul.f32 %v2090, 1.442695
        %v2150 = vpow.pop %v2149
        %v2151 = vmul.f32 %v2091, 1.442695
        %v2152 = vpow.pop %v2151
        %v2153 = vmul.f32 %v2092, 1.442695
        %v2154 = vpow.pop %v2153
        %v2155 = vmul.f32 %v2093, 1.442695
        %v2156 = vpow.pop %v2155
        %v2157 = vmul.f32 %v2094, 1.442695
        %v2158 = vpow.pop %v2157
        %v2159 = vadd.f32 %v2096, %v2098
        %2160 = vadd.xlane.f32.xlu0 %v2159
        %v2161 = vpop.xlane.xlu0 %2160
        %v2162 = vadd.f32 %v2100, %v2102
        %2163 = vadd.xlane.f32.xlu0 %v2162
        %v2164 = vpop.xlane.xlu0 %2163
        %v2165 = vadd.f32 %v2104, %v2106
        %2166 = vadd.xlane.f32.xlu0 %v2165
        %v2167 = vpop.xlane.xlu0 %2166
        %v2168 = vadd.f32 %v2108, %v2110
        %2169 = vadd.xlane.f32.xlu0 %v2168
        %v2170 = vpop.xlane.xlu0 %2169
        %v2171 = vadd.f32 %v2112, %v2114
        %2172 = vadd.xlane.f32.xlu0 %v2171
        %v2173 = vpop.xlane.xlu0 %2172
        %v2174 = vadd.f32 %v2116, %v2118
        %2175 = vadd.xlane.f32.xlu0 %v2174
        %v2176 = vpop.xlane.xlu0 %2175
        %v2177 = vadd.f32 %v2120, %v2122
        %2178 = vadd.xlane.f32.xlu0 %v2177
        %v2179 = vpop.xlane.xlu0 %2178
        %v2180 = vadd.f32 %v2124, %v2126
        %2181 = vadd.xlane.f32.xlu0 %v2180
        %v2182 = vpop.xlane.xlu0 %2181
        %v2183 = vadd.f32 %v2128, %v2130
        %2184 = vadd.xlane.f32.xlu0 %v2183
        %v2185 = vpop.xlane.xlu0 %2184
        %v2186 = vadd.f32 %v2132, %v2134
        %2187 = vadd.xlane.f32.xlu0 %v2186
        %v2188 = vpop.xlane.xlu0 %2187
        %v2189 = vadd.f32 %v2136, %v2138
        %2190 = vadd.xlane.f32.xlu0 %v2189
        %v2191 = vpop.xlane.xlu0 %2190
        %v2192 = vadd.f32 %v2140, %v2142
        %2193 = vadd.xlane.f32.xlu0 %v2192
        %v2194 = vpop.xlane.xlu0 %2193
        %v2195 = vadd.f32 %v2144, %v2146
        %2196 = vadd.xlane.f32.xlu0 %v2195
        %v2197 = vpop.xlane.xlu0 %2196
        %v2198 = vadd.f32 %v2148, %v2150
        %2199 = vadd.xlane.f32.xlu0 %v2198
        %v2200 = vpop.xlane.xlu0 %2199
        %v2201 = vadd.f32 %v2152, %v2154
        %2202 = vadd.xlane.f32.xlu0 %v2201
        %v2203 = vpop.xlane.xlu0 %2202
        %v2204 = vadd.f32 %v2156, %v2158
        %2205 = vadd.xlane.f32.xlu0 %v2204
        %v2206 = vpop.xlane.xlu0 %2205
        %v2207 = vpack.c.bf16 %v2100, %v2096
        %v2208 = vpack.c.bf16 %v2102, %v2098
        %v2209 = vpack.c.bf16 %v2108, %v2104
        %v2210 = vpack.c.bf16 %v2110, %v2106
        %v2211 = vpack.c.bf16 %v2116, %v2112
        %v2212 = vpack.c.bf16 %v2118, %v2114
        %v2213 = vpack.c.bf16 %v2124, %v2120
        %v2214 = vpack.c.bf16 %v2126, %v2122
        %v2215 = vpack.c.bf16 %v2132, %v2128
        %v2216 = vpack.c.bf16 %v2134, %v2130
        %v2217 = vpack.c.bf16 %v2140, %v2136
        %v2218 = vpack.c.bf16 %v2142, %v2138
        %v2219 = vpack.c.bf16 %v2148, %v2144
        %v2220 = vpack.c.bf16 %v2150, %v2146
        %v2221 = vpack.c.bf16 %v2156, %v2152
        %v2222 = vpack.c.bf16 %v2158, %v2154
        %2223 = vrot.lane.b32.xlu0 %v1681, 96
        %v2224 = vpop.permute.xlu0 %2223
        %2225 = vrot.lane.b32.xlu0 %v1682, 96
        %v2226 = vpop.permute.xlu0 %2225
        %2227 = vrot.lane.b32.xlu0 %v1683, 96
        %v2228 = vpop.permute.xlu0 %2227
        %2229 = vrot.lane.b32.xlu0 %v1684, 96
        %v2230 = vpop.permute.xlu0 %2229
        %2231 = vrot.lane.b32.xlu0 %v1685, 96
        %v2232 = vpop.permute.xlu0 %2231
        %2233 = vrot.lane.b32.xlu0 %v1686, 96
        %v2234 = vpop.permute.xlu0 %2233
        %2235 = vrot.lane.b32.xlu0 %v1687, 96
        %v2236 = vpop.permute.xlu0 %2235
        %2237 = vrot.lane.b32.xlu0 %v1688, 96
        %v2238 = vpop.permute.xlu0 %2237
        %2239 = vrot.lane.b32.xlu0 %v1721, 96
        %v2240 = vpop.permute.xlu0 %2239
        %2241 = vrot.lane.b32.xlu0 %v1722, 96
        %v2242 = vpop.permute.xlu0 %2241
        %2243 = vrot.lane.b32.xlu0 %v1723, 96
        %v2244 = vpop.permute.xlu0 %2243
        %2245 = vrot.lane.b32.xlu0 %v1724, 96
        %v2246 = vpop.permute.xlu0 %2245
        %2247 = vrot.lane.b32.xlu0 %v1725, 96
        %v2248 = vpop.permute.xlu0 %2247
        %2249 = vrot.lane.b32.xlu0 %v1726, 96
        %v2250 = vpop.permute.xlu0 %2249
        %2251 = vrot.lane.b32.xlu0 %v1727, 96
        %v2252 = vpop.permute.xlu0 %2251
        %2253 = vrot.lane.b32.xlu0 %v1728, 96
        %v2254 = vpop.permute.xlu0 %2253
        %2271 = vmatprep.subr.bf16.mxu0 0
        %2272 = vmatpush1.bf16.msra.mxu0 %v2224
        %2273 = vmatprep.subr.bf16.mxu0 0
        %2274 = vmatpush1.bf16.msra.mxu0 %v2226
        %2275 = vmatprep.subr.bf16.mxu0 0
        %2276 = vmatpush1.bf16.msra.mxu0 %v2228
        %2277 = vmatprep.subr.bf16.mxu0 0
        %2278 = vmatpush1.bf16.msra.mxu0 %v2230
        %2279 = vmatprep.subr.bf16.mxu0 0
        %2280 = vmatpush1.bf16.msra.mxu0 %v2232
        %2281 = vmatprep.subr.bf16.mxu0 0
        %2282 = vmatpush1.bf16.msra.mxu0 %v2234
        %2283 = vmatprep.subr.bf16.mxu0 0
        %2284 = vmatpush1.bf16.msra.mxu0 %v2236
        %2285 = vmatprep.subr.bf16.mxu0 0
        %2286 = vmatpush1.bf16.msra.mxu0 %v2238
        %2287 = vmatprep.subr.bf16.mxu0 0
        %2288 = vmatpush1.bf16.msra.mxu0 %v2240
        %2289 = vmatprep.subr.bf16.mxu0 0
        %2290 = vmatpush1.bf16.msra.mxu0 %v2242
        %2291 = vmatprep.subr.bf16.mxu0 0
        %2292 = vmatpush1.bf16.msra.mxu0 %v2244
        %2293 = vmatprep.subr.bf16.mxu0 0
        %2294 = vmatpush1.bf16.msra.mxu0 %v2246
        %2295 = vmatprep.subr.bf16.mxu0 0
        %2296 = vmatpush1.bf16.msra.mxu0 %v2248
        %2297 = vmatprep.subr.bf16.mxu0 0
        %2298 = vmatpush1.bf16.msra.mxu0 %v2250
        %2299 = vmatprep.subr.bf16.mxu0 0
        %2300 = vmatpush1.bf16.msra.mxu0 %v2252
        %2301 = vmatprep.subr.bf16.mxu0 0
        %2302 = vmatpush1.bf16.msra.mxu0 %v2254
        %2303 = vmatprep.mubr.bf16.mxu0 %v2208
        %2304 = vmatmul.mubr.bf16.gmra.mrb[0].mxu0 %v2207
        %v2305 = vpop.f32.mrb[0].mxu0
        %v2306 = vadd.f32 0.0, %v2305
        %v2307 = vpop.f32.mrb[0].mxu0
        %v2308 = vpop.f32.mrb[0].mxu0
        %v2309 = vadd.f32 0.0, %v2308
        %v2310 = vpop.f32.mrb[0].mxu0
        %2311 = vmatprep.mubr.bf16.mxu0 %v2210
        %2312 = vmatmul.mubr.bf16.gmra.mrb[0].mxu0 %v2209
        %v2313 = vpop.f32.mrb[0].mxu0
        %v2314 = vadd.f32 0.0, %v2313
        %v2315 = vpop.f32.mrb[0].mxu0
        %v2316 = vpop.f32.mrb[0].mxu0
        %v2317 = vadd.f32 0.0, %v2316
        %v2318 = vpop.f32.mrb[0].mxu0
        %2319 = vmatprep.mubr.bf16.mxu0 %v2212
        %2320 = vmatmul.mubr.bf16.gmra.mrb[0].mxu0 %v2211
        %v2321 = vpop.f32.mrb[0].mxu0
        %v2322 = vadd.f32 0.0, %v2321
        %v2323 = vpop.f32.mrb[0].mxu0
        %v2324 = vpop.f32.mrb[0].mxu0
        %v2325 = vadd.f32 0.0, %v2324
        %v2326 = vpop.f32.mrb[0].mxu0
        %2327 = vmatprep.mubr.bf16.mxu0 %v2214
        %2328 = vmatmul.mubr.bf16.gmra.mrb[0].mxu0 %v2213
        %v2329 = vpop.f32.mrb[0].mxu0
        %v2330 = vadd.f32 0.0, %v2329
        %v2331 = vpop.f32.mrb[0].mxu0
        %v2332 = vpop.f32.mrb[0].mxu0
        %v2333 = vadd.f32 0.0, %v2332
        %v2334 = vpop.f32.mrb[0].mxu0
        %2335 = vmatprep.mubr.bf16.mxu0 %v2216
        %2336 = vmatmul.mubr.bf16.gmra.mrb[0].mxu0 %v2215
        %v2337 = vpop.f32.mrb[0].mxu0
        %v2338 = vadd.f32 0.0, %v2337
        %v2339 = vpop.f32.mrb[0].mxu0
        %v2340 = vpop.f32.mrb[0].mxu0
        %v2341 = vadd.f32 0.0, %v2340
        %v2342 = vpop.f32.mrb[0].mxu0
        %2343 = vmatprep.mubr.bf16.mxu0 %v2218
        %2344 = vmatmul.mubr.bf16.gmra.mrb[0].mxu0 %v2217
        %v2345 = vpop.f32.mrb[0].mxu0
        %v2346 = vadd.f32 0.0, %v2345
        %v2347 = vpop.f32.mrb[0].mxu0
        %v2348 = vpop.f32.mrb[0].mxu0
        %v2349 = vadd.f32 0.0, %v2348
        %v2350 = vpop.f32.mrb[0].mxu0
        %2351 = vmatprep.mubr.bf16.mxu0 %v2220
        %2352 = vmatmul.mubr.bf16.gmra.mrb[0].mxu0 %v2219
        %v2353 = vpop.f32.mrb[0].mxu0
        %v2354 = vadd.f32 0.0, %v2353
        %v2355 = vpop.f32.mrb[0].mxu0
        %v2356 = vpop.f32.mrb[0].mxu0
        %v2357 = vadd.f32 0.0, %v2356
        %v2358 = vpop.f32.mrb[0].mxu0
        %2359 = vmatprep.mubr.bf16.mxu0 %v2222
        %2360 = vmatmul.mubr.bf16.gmra.mrb[0].mxu0 %v2221
        %v2361 = vpop.f32.mrb[0].mxu0
        %v2362 = vadd.f32 0.0, %v2361
        %v2363 = vpop.f32.mrb[0].mxu0
        %v2364 = vpop.f32.mrb[0].mxu0
        %v2365 = vadd.f32 0.0, %v2364
        %v2366 = vpop.f32.mrb[0].mxu0
        %2367 = vdwg.mxu0
        %s2368 = sadd.s32 %s1357, 1
        %s2369 = sld [smem:[#allocation2 + %s2368]]
        %v2370 = vrcp.pop %v2161
        %v2371 = vrcp.pop %v2164
        %v2372 = vrcp.pop %v2167
        %v2373 = vrcp.pop %v2170
        %v2374 = vrcp.pop %v2173
        %v2375 = vrcp.pop %v2176
        %v2376 = vrcp.pop %v2179
        %v2377 = vrcp.pop %v2182
        %v2378 = vrcp.pop %v2185
        %v2379 = vrcp.pop %v2188
        %v2380 = vrcp.pop %v2191
        %v2381 = vrcp.pop %v2194
        %v2382 = vrcp.pop %v2197
        %v2383 = vrcp.pop %v2200
        %v2384 = vrcp.pop %v2203
        %v2385 = vrcp.pop %v2206
        %v2386 = vstv %s2369
        %v2387 = vmul.f32 %v2386, %v2370
        %v2388 = vmul.f32 %v2386, %v2371
        %v2389 = vmul.f32 %v2386, %v2372
        %v2390 = vmul.f32 %v2386, %v2373
        %v2391 = vmul.f32 %v2386, %v2374
        %v2392 = vmul.f32 %v2386, %v2375
        %v2393 = vmul.f32 %v2386, %v2376
        %v2394 = vmul.f32 %v2386, %v2377
        %v2395 = vmul.f32 %v2386, %v2378
        %v2396 = vmul.f32 %v2386, %v2379
        %v2397 = vmul.f32 %v2386, %v2380
        %v2398 = vmul.f32 %v2386, %v2381
        %v2399 = vmul.f32 %v2386, %v2382
        %v2400 = vmul.f32 %v2386, %v2383
        %v2401 = vmul.f32 %v2386, %v2384
        %v2402 = vmul.f32 %v2386, %v2385
        %v2403 = vmul.f32 %v2306, %v2387
        %v2404 = vmul.f32 %v2309, %v2388
        %v2405 = vmul.f32 %v2314, %v2389
        %v2406 = vmul.f32 %v2317, %v2390
        %v2407 = vmul.f32 %v2322, %v2391
        %v2408 = vmul.f32 %v2325, %v2392
        %v2409 = vmul.f32 %v2330, %v2393
        %v2410 = vmul.f32 %v2333, %v2394
        %v2411 = vmul.f32 %v2338, %v2395
        %v2412 = vmul.f32 %v2341, %v2396
        %v2413 = vmul.f32 %v2346, %v2397
        %v2414 = vmul.f32 %v2349, %v2398
        %v2415 = vmul.f32 %v2354, %v2399
        %v2416 = vmul.f32 %v2357, %v2400
        %v2417 = vmul.f32 %v2362, %v2401
        %v2418 = vmul.f32 %v2365, %v2402
        %v2419 = vpack.c.bf16 %v2404, %v2403
        %v2420 = vpack.c.bf16 %v2406, %v2405
        %v2421 = vpack.c.bf16 %v2408, %v2407
        %v2422 = vpack.c.bf16 %v2410, %v2409
        %v2423 = vpack.c.bf16 %v2412, %v2411
        %v2424 = vpack.c.bf16 %v2414, %v2413
        %v2425 = vpack.c.bf16 %v2416, %v2415
        %v2426 = vpack.c.bf16 %v2418, %v2417
        %v2435 = vunpack.c.l.b16 %v2419
        %v2436 = vunpack.c.h.b16 %v2419
        %v2437 = vunpack.c.l.b16 %v2420
        %v2438 = vunpack.c.h.b16 %v2420
        %v2439 = vunpack.c.l.b16 %v2421
        %v2440 = vunpack.c.h.b16 %v2421
        %v2441 = vunpack.c.l.b16 %v2422
        %v2442 = vunpack.c.h.b16 %v2422
        %v2443 = vunpack.c.l.b16 %v2423
        %v2444 = vunpack.c.h.b16 %v2423
        %v2445 = vunpack.c.l.b16 %v2424
        %v2446 = vunpack.c.h.b16 %v2424
        %v2447 = vunpack.c.l.b16 %v2425
        %v2448 = vunpack.c.h.b16 %v2425
        %v2449 = vunpack.c.l.b16 %v2426
        %v2450 = vunpack.c.h.b16 %v2426
        %v2451 = vpack.c.b16 %v2435, %v2435
        %v2452 = vpack.c.b16 %v2436, %v2436
        %v2453 = vpack.c.b16 %v2437, %v2437
        %v2454 = vpack.c.b16 %v2438, %v2438
        %v2455 = vpack.c.b16 %v2439, %v2439
        %v2456 = vpack.c.b16 %v2440, %v2440
        %v2457 = vpack.c.b16 %v2441, %v2441
        %v2458 = vpack.c.b16 %v2442, %v2442
        %v2459 = vpack.c.b16 %v2443, %v2443
        %v2460 = vpack.c.b16 %v2444, %v2444
        %v2461 = vpack.c.b16 %v2445, %v2445
        %v2462 = vpack.c.b16 %v2446, %v2446
        %v2463 = vpack.c.b16 %v2447, %v2447
        %v2464 = vpack.c.b16 %v2448, %v2448
        %v2465 = vpack.c.b16 %v2449, %v2449
        %v2466 = vpack.c.b16 %v2450, %v2450
        %2467 = vrot.lane.b32.xlu0 %v2451, 32
        %v2468 = vpop.permute.xlu0 %2467
        %2469 = vrot.lane.b32.xlu0 %v2452, 32
        %v2470 = vpop.permute.xlu0 %2469
        %2471 = vrot.lane.b32.xlu0 %v2453, 32
        %v2472 = vpop.permute.xlu0 %2471
        %2473 = vrot.lane.b32.xlu0 %v2454, 32
        %v2474 = vpop.permute.xlu0 %2473
        %2475 = vrot.lane.b32.xlu0 %v2455, 32
        %v2476 = vpop.permute.xlu0 %2475
        %2477 = vrot.lane.b32.xlu0 %v2456, 32
        %v2478 = vpop.permute.xlu0 %2477
        %2479 = vrot.lane.b32.xlu0 %v2457, 32
        %v2480 = vpop.permute.xlu0 %2479
        %2481 = vrot.lane.b32.xlu0 %v2458, 32
        %v2482 = vpop.permute.xlu0 %2481
        %2483 = vrot.lane.b32.xlu0 %v2459, 32
        %v2484 = vpop.permute.xlu0 %2483
        %2485 = vrot.lane.b32.xlu0 %v2460, 32
        %v2486 = vpop.permute.xlu0 %2485
        %2487 = vrot.lane.b32.xlu0 %v2461, 32
        %v2488 = vpop.permute.xlu0 %2487
        %2489 = vrot.lane.b32.xlu0 %v2462, 32
        %v2490 = vpop.permute.xlu0 %2489
        %2491 = vrot.lane.b32.xlu0 %v2463, 32
        %v2492 = vpop.permute.xlu0 %2491
        %2493 = vrot.lane.b32.xlu0 %v2464, 32
        %v2494 = vpop.permute.xlu0 %2493
        %2495 = vrot.lane.b32.xlu0 %v2465, 32
        %v2496 = vpop.permute.xlu0 %2495
        %2497 = vrot.lane.b32.xlu0 %v2466, 32
        %v2498 = vpop.permute.xlu0 %2497
        %vm2515 = vcmask 519424
        %2516 = vst.msk [vmem:[%s546] sm:$0xf] %vm2515, %v2468
        %2517 = vst.msk [vmem:[%s546 + $0x4] sm:$0xf] %vm2515, %v2470
        %2518 = vst.msk [vmem:[%s546 + $0x8] sm:$0xf] %vm2515, %v2472
        %2519 = vst.msk [vmem:[%s546 + $0xc] sm:$0xf] %vm2515, %v2474
        %2520 = vst.msk [vmem:[%s546 + $0x10] sm:$0xf] %vm2515, %v2476
        %2521 = vst.msk [vmem:[%s546 + $0x14] sm:$0xf] %vm2515, %v2478
        %2522 = vst.msk [vmem:[%s546 + $0x18] sm:$0xf] %vm2515, %v2480
        %2523 = vst.msk [vmem:[%s546 + $0x1c] sm:$0xf] %vm2515, %v2482
        %2524 = vst.msk [vmem:[%s546 + $0x20] sm:$0xf] %vm2515, %v2484
        %2525 = vst.msk [vmem:[%s546 + $0x24] sm:$0xf] %vm2515, %v2486
        %2526 = vst.msk [vmem:[%s546 + $0x28] sm:$0xf] %vm2515, %v2488
        %2527 = vst.msk [vmem:[%s546 + $0x2c] sm:$0xf] %vm2515, %v2490
        %2528 = vst.msk [vmem:[%s546 + $0x30] sm:$0xf] %vm2515, %v2492
        %2529 = vst.msk [vmem:[%s546 + $0x34] sm:$0xf] %vm2515, %v2494
        %2530 = vst.msk [vmem:[%s546 + $0x38] sm:$0xf] %vm2515, %v2496
        %2531 = vst.msk [vmem:[%s546 + $0x3c] sm:$0xf] %vm2515, %v2498
        %v2532 = vld [vmem:[%s445] sm:$0xf]
        %v2533 = vld [vmem:[%s445 + $0x4] sm:$0xf]
        %v2534 = vld [vmem:[%s445 + $0x8] sm:$0xf]
        %v2535 = vld [vmem:[%s445 + $0xc] sm:$0xf]
        %v2536 = vld [vmem:[%s445 + $0x10] sm:$0xf]
        %v2537 = vld [vmem:[%s445 + $0x14] sm:$0xf]
        %v2538 = vld [vmem:[%s445 + $0x18] sm:$0xf]
        %v2539 = vld [vmem:[%s445 + $0x1c] sm:$0xf]
        %v2540 = vld [vmem:[%s445 + $0x20] sm:$0xf]
        %v2541 = vld [vmem:[%s445 + $0x24] sm:$0xf]
        %v2542 = vld [vmem:[%s445 + $0x28] sm:$0xf]
        %v2543 = vld [vmem:[%s445 + $0x2c] sm:$0xf]
        %v2544 = vld [vmem:[%s445 + $0x30] sm:$0xf]
        %v2545 = vld [vmem:[%s445 + $0x34] sm:$0xf]
        %v2546 = vld [vmem:[%s445 + $0x38] sm:$0xf]
        %v2547 = vld [vmem:[%s445 + $0x3c] sm:$0xf]
        %v2548 = vld [vmem:[%s454] sm:$0xf]
        %v2549 = vld [vmem:[%s454 + $0x4] sm:$0xf]
        %v2550 = vld [vmem:[%s454 + $0x8] sm:$0xf]
        %v2551 = vld [vmem:[%s454 + $0xc] sm:$0xf]
        %v2552 = vld [vmem:[%s454 + $0x10] sm:$0xf]
        %v2553 = vld [vmem:[%s454 + $0x14] sm:$0xf]
        %v2554 = vld [vmem:[%s454 + $0x18] sm:$0xf]
        %v2555 = vld [vmem:[%s454 + $0x1c] sm:$0xf]
        %v2556 = vld [vmem:[%s454 + $0x20] sm:$0xf]
        %v2557 = vld [vmem:[%s454 + $0x24] sm:$0xf]
        %v2558 = vld [vmem:[%s454 + $0x28] sm:$0xf]
        %v2559 = vld [vmem:[%s454 + $0x2c] sm:$0xf]
        %v2560 = vld [vmem:[%s454 + $0x30] sm:$0xf]
        %v2561 = vld [vmem:[%s454 + $0x34] sm:$0xf]
        %v2562 = vld [vmem:[%s454 + $0x38] sm:$0xf]
        %v2563 = vld [vmem:[%s454 + $0x3c] sm:$0xf]
        %v2564 = vld [vmem:[%s472] sm:$0xf]
        %v2565 = vld [vmem:[%s472 + $0x4] sm:$0xf]
        %v2566 = vld [vmem:[%s472 + $0x8] sm:$0xf]
        %v2567 = vld [vmem:[%s472 + $0xc] sm:$0xf]
        %v2568 = vld [vmem:[%s472 + $0x10] sm:$0xf]
        %v2569 = vld [vmem:[%s472 + $0x14] sm:$0xf]
        %v2570 = vld [vmem:[%s472 + $0x18] sm:$0xf]
        %v2571 = vld [vmem:[%s472 + $0x1c] sm:$0xf]
        %v2572 = vld [vmem:[%s472 + $0x20] sm:$0xf]
        %v2573 = vld [vmem:[%s472 + $0x24] sm:$0xf]
        %v2574 = vld [vmem:[%s472 + $0x28] sm:$0xf]
        %v2575 = vld [vmem:[%s472 + $0x2c] sm:$0xf]
        %v2576 = vld [vmem:[%s472 + $0x30] sm:$0xf]
        %v2577 = vld [vmem:[%s472 + $0x34] sm:$0xf]
        %v2578 = vld [vmem:[%s472 + $0x38] sm:$0xf]
        %v2579 = vld [vmem:[%s472 + $0x3c] sm:$0xf]
        %v2596 = vunpack.c.l.b16 %v2548
        %v2597 = vunpack.c.l.b16 %v2549
        %v2598 = vunpack.c.l.b16 %v2550
        %v2599 = vunpack.c.l.b16 %v2551
        %v2600 = vunpack.c.l.b16 %v2552
        %v2601 = vunpack.c.l.b16 %v2553
        %v2602 = vunpack.c.l.b16 %v2554
        %v2603 = vunpack.c.l.b16 %v2555
        %v2604 = vunpack.c.l.b16 %v2556
        %v2605 = vunpack.c.l.b16 %v2557
        %v2606 = vunpack.c.l.b16 %v2558
        %v2607 = vunpack.c.l.b16 %v2559
        %v2608 = vunpack.c.l.b16 %v2560
        %v2609 = vunpack.c.l.b16 %v2561
        %v2610 = vunpack.c.l.b16 %v2562
        %v2611 = vunpack.c.l.b16 %v2563
        %v2612 = vpack.c.b16 %v2597, %v2596
        %v2613 = vpack.c.b16 %v2599, %v2598
        %v2614 = vpack.c.b16 %v2601, %v2600
        %v2615 = vpack.c.b16 %v2603, %v2602
        %v2616 = vpack.c.b16 %v2605, %v2604
        %v2617 = vpack.c.b16 %v2607, %v2606
        %v2618 = vpack.c.b16 %v2609, %v2608
        %v2619 = vpack.c.b16 %v2611, %v2610
        %v2636 = vunpack.c.l.b16 %v2564
        %v2637 = vunpack.c.l.b16 %v2565
        %v2638 = vunpack.c.l.b16 %v2566
        %v2639 = vunpack.c.l.b16 %v2567
        %v2640 = vunpack.c.l.b16 %v2568
        %v2641 = vunpack.c.l.b16 %v2569
        %v2642 = vunpack.c.l.b16 %v2570
        %v2643 = vunpack.c.l.b16 %v2571
        %v2644 = vunpack.c.l.b16 %v2572
        %v2645 = vunpack.c.l.b16 %v2573
        %v2646 = vunpack.c.l.b16 %v2574
        %v2647 = vunpack.c.l.b16 %v2575
        %v2648 = vunpack.c.l.b16 %v2576
        %v2649 = vunpack.c.l.b16 %v2577
        %v2650 = vunpack.c.l.b16 %v2578
        %v2651 = vunpack.c.l.b16 %v2579
        %v2652 = vpack.c.b16 %v2637, %v2636
        %v2653 = vpack.c.b16 %v2639, %v2638
        %v2654 = vpack.c.b16 %v2641, %v2640
        %v2655 = vpack.c.b16 %v2643, %v2642
        %v2656 = vpack.c.b16 %v2645, %v2644
        %v2657 = vpack.c.b16 %v2647, %v2646
        %v2658 = vpack.c.b16 %v2649, %v2648
        %v2659 = vpack.c.b16 %v2651, %v2650
        %v2660 = vld [vmem:[%s463] sm:$0xf]
        %v2661 = vld [vmem:[%s463 + $0x4] sm:$0xf]
        %v2662 = vld [vmem:[%s463 + $0x8] sm:$0xf]
        %v2663 = vld [vmem:[%s463 + $0xc] sm:$0xf]
        %v2664 = vld [vmem:[%s463 + $0x10] sm:$0xf]
        %v2665 = vld [vmem:[%s463 + $0x14] sm:$0xf]
        %v2666 = vld [vmem:[%s463 + $0x18] sm:$0xf]
        %v2667 = vld [vmem:[%s463 + $0x1c] sm:$0xf]
        %v2668 = vld [vmem:[%s463 + $0x20] sm:$0xf]
        %v2669 = vld [vmem:[%s463 + $0x24] sm:$0xf]
        %v2670 = vld [vmem:[%s463 + $0x28] sm:$0xf]
        %v2671 = vld [vmem:[%s463 + $0x2c] sm:$0xf]
        %v2672 = vld [vmem:[%s463 + $0x30] sm:$0xf]
        %v2673 = vld [vmem:[%s463 + $0x34] sm:$0xf]
        %v2674 = vld [vmem:[%s463 + $0x38] sm:$0xf]
        %v2675 = vld [vmem:[%s463 + $0x3c] sm:$0xf]
        %v2676 = vld [vmem:[%s481] sm:$0xf]
        %v2677 = vld [vmem:[%s481 + $0x4] sm:$0xf]
        %v2678 = vld [vmem:[%s481 + $0x8] sm:$0xf]
        %v2679 = vld [vmem:[%s481 + $0xc] sm:$0xf]
        %v2680 = vld [vmem:[%s481 + $0x10] sm:$0xf]
        %v2681 = vld [vmem:[%s481 + $0x14] sm:$0xf]
        %v2682 = vld [vmem:[%s481 + $0x18] sm:$0xf]
        %v2683 = vld [vmem:[%s481 + $0x1c] sm:$0xf]
        %v2684 = vld [vmem:[%s481 + $0x20] sm:$0xf]
        %v2685 = vld [vmem:[%s481 + $0x24] sm:$0xf]
        %v2686 = vld [vmem:[%s481 + $0x28] sm:$0xf]
        %v2687 = vld [vmem:[%s481 + $0x2c] sm:$0xf]
        %v2688 = vld [vmem:[%s481 + $0x30] sm:$0xf]
        %v2689 = vld [vmem:[%s481 + $0x34] sm:$0xf]
        %v2690 = vld [vmem:[%s481 + $0x38] sm:$0xf]
        %v2691 = vld [vmem:[%s481 + $0x3c] sm:$0xf]
        %v2708 = vunpack.c.l.b16 %v2660
        %v2709 = vunpack.c.l.b16 %v2661
        %v2710 = vunpack.c.l.b16 %v2662
        %v2711 = vunpack.c.l.b16 %v2663
        %v2712 = vunpack.c.l.b16 %v2664
        %v2713 = vunpack.c.l.b16 %v2665
        %v2714 = vunpack.c.l.b16 %v2666
        %v2715 = vunpack.c.l.b16 %v2667
        %v2716 = vunpack.c.l.b16 %v2668
        %v2717 = vunpack.c.l.b16 %v2669
        %v2718 = vunpack.c.l.b16 %v2670
        %v2719 = vunpack.c.l.b16 %v2671
        %v2720 = vunpack.c.l.b16 %v2672
        %v2721 = vunpack.c.l.b16 %v2673
        %v2722 = vunpack.c.l.b16 %v2674
        %v2723 = vunpack.c.l.b16 %v2675
        %v2724 = vpack.c.b16 %v2709, %v2708
        %v2725 = vpack.c.b16 %v2711, %v2710
        %v2726 = vpack.c.b16 %v2713, %v2712
        %v2727 = vpack.c.b16 %v2715, %v2714
        %v2728 = vpack.c.b16 %v2717, %v2716
        %v2729 = vpack.c.b16 %v2719, %v2718
        %v2730 = vpack.c.b16 %v2721, %v2720
        %v2731 = vpack.c.b16 %v2723, %v2722
        %v2748 = vunpack.c.l.b16 %v2676
        %v2749 = vunpack.c.l.b16 %v2677
        %v2750 = vunpack.c.l.b16 %v2678
        %v2751 = vunpack.c.l.b16 %v2679
        %v2752 = vunpack.c.l.b16 %v2680
        %v2753 = vunpack.c.l.b16 %v2681
        %v2754 = vunpack.c.l.b16 %v2682
        %v2755 = vunpack.c.l.b16 %v2683
        %v2756 = vunpack.c.l.b16 %v2684
        %v2757 = vunpack.c.l.b16 %v2685
        %v2758 = vunpack.c.l.b16 %v2686
        %v2759 = vunpack.c.l.b16 %v2687
        %v2760 = vunpack.c.l.b16 %v2688
        %v2761 = vunpack.c.l.b16 %v2689
        %v2762 = vunpack.c.l.b16 %v2690
        %v2763 = vunpack.c.l.b16 %v2691
        %v2764 = vpack.c.b16 %v2749, %v2748
        %v2765 = vpack.c.b16 %v2751, %v2750
        %v2766 = vpack.c.b16 %v2753, %v2752
        %v2767 = vpack.c.b16 %v2755, %v2754
        %v2768 = vpack.c.b16 %v2757, %v2756
        %v2769 = vpack.c.b16 %v2759, %v2758
        %v2770 = vpack.c.b16 %v2761, %v2760
        %v2771 = vpack.c.b16 %v2763, %v2762
        %s2772 = scalar_lea.vmem %s490, 2 [#allocation13]
        %v2773 = vld [vmem:[%s2772] ss:$4 sm:$0x3]
        %v2775 = vlaneseq
        %v2776 = vshrl.u32 %v2775, 7
        %v2777 = vsub.s32 0, %v2776
        %v2778 = vrot.slane %v2773, %v2777
        %v2779 = vlaneseq
        %v2780 = vshrl.u32 %v2779, 7
        %v2781 = vsub.s32 1, %v2780
        %v2782 = vrot.slane %v2773, %v2781
        %v2801 = vunpack.c.l.b16 %v2532
        %v2802 = vunpack.c.l.b16 %v2533
        %v2803 = vunpack.c.l.b16 %v2534
        %v2804 = vunpack.c.l.b16 %v2535
        %v2805 = vunpack.c.l.b16 %v2536
        %v2806 = vunpack.c.l.b16 %v2537
        %v2807 = vunpack.c.l.b16 %v2538
        %v2808 = vunpack.c.l.b16 %v2539
        %v2809 = vunpack.c.l.b16 %v2540
        %v2810 = vunpack.c.l.b16 %v2541
        %v2811 = vunpack.c.l.b16 %v2542
        %v2812 = vunpack.c.l.b16 %v2543
        %v2813 = vunpack.c.l.b16 %v2544
        %v2814 = vunpack.c.l.b16 %v2545
        %v2815 = vunpack.c.l.b16 %v2546
        %v2816 = vunpack.c.l.b16 %v2547
        %v2817 = vpack.c.b16 %v2802, %v2801
        %v2818 = vpack.c.b16 %v2804, %v2803
        %v2819 = vpack.c.b16 %v2806, %v2805
        %v2820 = vpack.c.b16 %v2808, %v2807
        %v2821 = vpack.c.b16 %v2810, %v2809
        %v2822 = vpack.c.b16 %v2812, %v2811
        %v2823 = vpack.c.b16 %v2814, %v2813
        %v2824 = vpack.c.b16 %v2816, %v2815
        %2825 = vrot.lane.b32.xlu0 %v2817, 64
        %v2826 = vpop.permute.xlu0 %2825
        %2827 = vrot.lane.b32.xlu0 %v2818, 64
        %v2828 = vpop.permute.xlu0 %2827
        %2829 = vrot.lane.b32.xlu0 %v2819, 64
        %v2830 = vpop.permute.xlu0 %2829
        %2831 = vrot.lane.b32.xlu0 %v2820, 64
        %v2832 = vpop.permute.xlu0 %2831
        %2833 = vrot.lane.b32.xlu0 %v2821, 64
        %v2834 = vpop.permute.xlu0 %2833
        %2835 = vrot.lane.b32.xlu0 %v2822, 64
        %v2836 = vpop.permute.xlu0 %2835
        %2837 = vrot.lane.b32.xlu0 %v2823, 64
        %v2838 = vpop.permute.xlu0 %2837
        %2839 = vrot.lane.b32.xlu0 %v2824, 64
        %v2840 = vpop.permute.xlu0 %2839
        %2841 = vrot.lane.b32.xlu0 %v2612, 64
        %v2842 = vpop.permute.xlu0 %2841
        %2843 = vrot.lane.b32.xlu0 %v2613, 64
        %v2844 = vpop.permute.xlu0 %2843
        %2845 = vrot.lane.b32.xlu0 %v2614, 64
        %v2846 = vpop.permute.xlu0 %2845
        %2847 = vrot.lane.b32.xlu0 %v2615, 64
        %v2848 = vpop.permute.xlu0 %2847
        %2849 = vrot.lane.b32.xlu0 %v2616, 64
        %v2850 = vpop.permute.xlu0 %2849
        %2851 = vrot.lane.b32.xlu0 %v2617, 64
        %v2852 = vpop.permute.xlu0 %2851
        %2853 = vrot.lane.b32.xlu0 %v2618, 64
        %v2854 = vpop.permute.xlu0 %2853
        %2855 = vrot.lane.b32.xlu0 %v2619, 64
        %v2856 = vpop.permute.xlu0 %2855
        %2857 = vrot.lane.b32.xlu0 %v2652, 64
        %v2858 = vpop.permute.xlu0 %2857
        %2859 = vrot.lane.b32.xlu0 %v2653, 64
        %v2860 = vpop.permute.xlu0 %2859
        %2861 = vrot.lane.b32.xlu0 %v2654, 64
        %v2862 = vpop.permute.xlu0 %2861
        %2863 = vrot.lane.b32.xlu0 %v2655, 64
        %v2864 = vpop.permute.xlu0 %2863
        %2865 = vrot.lane.b32.xlu0 %v2656, 64
        %v2866 = vpop.permute.xlu0 %2865
        %2867 = vrot.lane.b32.xlu0 %v2657, 64
        %v2868 = vpop.permute.xlu0 %2867
        %2869 = vrot.lane.b32.xlu0 %v2658, 64
        %v2870 = vpop.permute.xlu0 %2869
        %2871 = vrot.lane.b32.xlu0 %v2659, 64
        %v2872 = vpop.permute.xlu0 %2871
        %v2874 = vsel %vm864, %v2826, 0
        %v2877 = vsel %vm864, %v2828, 0
        %v2880 = vsel %vm864, %v2830, 0
        %v2883 = vsel %vm864, %v2832, 0
        %v2886 = vsel %vm864, %v2834, 0
        %v2889 = vsel %vm864, %v2836, 0
        %v2892 = vsel %vm864, %v2838, 0
        %v2895 = vsel %vm864, %v2840, 0
        %v2898 = vsel %vm864, %v2842, 0
        %v2901 = vsel %vm864, %v2844, 0
        %v2904 = vsel %vm864, %v2846, 0
        %v2907 = vsel %vm864, %v2848, 0
        %v2910 = vsel %vm864, %v2850, 0
        %v2913 = vsel %vm864, %v2852, 0
        %v2916 = vsel %vm864, %v2854, 0
        %v2919 = vsel %vm864, %v2856, 0
        %v2922 = vsel %vm864, %v2858, 0
        %v2925 = vsel %vm864, %v2860, 0
        %v2928 = vsel %vm864, %v2862, 0
        %v2931 = vsel %vm864, %v2864, 0
        %v2934 = vsel %vm864, %v2866, 0
        %v2937 = vsel %vm864, %v2868, 0
        %v2940 = vsel %vm864, %v2870, 0
        %v2943 = vsel %vm864, %v2872, 0
        %2945 = vmatprep.subr.bf16.mxu0 0
        %2946 = vmatpush1.bf16.xpose.msra.mxu0 %v2898
        %2947 = vmatprep.subr.bf16.mxu0 0
        %2948 = vmatpush1.bf16.xpose.msra.mxu0 %v2901
        %2949 = vmatprep.subr.bf16.mxu0 0
        %2950 = vmatpush1.bf16.xpose.msra.mxu0 %v2904
        %2951 = vmatprep.subr.bf16.mxu0 0
        %2952 = vmatpush1.bf16.xpose.msra.mxu0 %v2907
        %2953 = vmatprep.subr.bf16.mxu0 0
        %2954 = vmatpush1.bf16.xpose.msra.mxu0 %v2910
        %2955 = vmatprep.subr.bf16.mxu0 0
        %2956 = vmatpush1.bf16.xpose.msra.mxu0 %v2913
        %2957 = vmatprep.subr.bf16.mxu0 0
        %2958 = vmatpush1.bf16.xpose.msra.mxu0 %v2916
        %2959 = vmatprep.subr.bf16.mxu0 0
        %2960 = vmatpush1.bf16.xpose.msra.mxu0 %v2919
        %2961 = vmatprep.subr.bf16.mxu0 0
        %2962 = vmatpush1.bf16.xpose.msra.mxu0 %v2922
        %2963 = vmatprep.subr.bf16.mxu0 0
        %2964 = vmatpush1.bf16.xpose.msra.mxu0 %v2925
        %2965 = vmatprep.subr.bf16.mxu0 0
        %2966 = vmatpush1.bf16.xpose.msra.mxu0 %v2928
        %2967 = vmatprep.subr.bf16.mxu0 0
        %2968 = vmatpush1.bf16.xpose.msra.mxu0 %v2931
        %2969 = vmatprep.subr.bf16.mxu0 0
        %2970 = vmatpush1.bf16.xpose.msra.mxu0 %v2934
        %2971 = vmatprep.subr.bf16.mxu0 0
        %2972 = vmatpush1.bf16.xpose.msra.mxu0 %v2937
        %2973 = vmatprep.subr.bf16.mxu0 0
        %2974 = vmatpush1.bf16.xpose.msra.mxu0 %v2940
        %2975 = vmatprep.subr.bf16.mxu0 0
        %2976 = vmatpush1.bf16.xpose.msra.mxu0 %v2943
        %2977 = vmatprep.mubr.bf16.mxu0 0
        %2978 = vmatmul.mubr.bf16.gmra.mrb[0].mxu0 %v2874
        %v2979 = vpop.f32.mrb[0].mxu0
        %v2980 = vadd.f32 %v2778, %v2979
        %v2981 = vpop.f32.mrb[0].mxu0
        %v2982 = vadd.f32 %v2782, %v2981
        %v2983 = vpop.f32.mrb[0].mxu0
        %v2984 = vadd.f32 %v2778, %v2983
        %v2985 = vpop.f32.mrb[0].mxu0
        %v2986 = vadd.f32 %v2782, %v2985
        %2987 = vmatprep.mubr.bf16.mxu0 0
        %2988 = vmatmul.mubr.bf16.gmra.mrb[0].mxu0 %v2877
        %v2989 = vpop.f32.mrb[0].mxu0
        %v2990 = vadd.f32 %v2778, %v2989
        %v2991 = vpop.f32.mrb[0].mxu0
        %v2992 = vadd.f32 %v2782, %v2991
        %v2993 = vpop.f32.mrb[0].mxu0
        %v2994 = vadd.f32 %v2778, %v2993
        %v2995 = vpop.f32.mrb[0].mxu0
        %v2996 = vadd.f32 %v2782, %v2995
        %2997 = vmatprep.mubr.bf16.mxu0 0
        %2998 = vmatmul.mubr.bf16.gmra.mrb[0].mxu0 %v2880
        %v2999 = vpop.f32.mrb[0].mxu0
        %v3000 = vadd.f32 %v2778, %v2999
        %v3001 = vpop.f32.mrb[0].mxu0
        %v3002 = vadd.f32 %v2782, %v3001
        %v3003 = vpop.f32.mrb[0].mxu0
        %v3004 = vadd.f32 %v2778, %v3003
        %v3005 = vpop.f32.mrb[0].mxu0
        %v3006 = vadd.f32 %v2782, %v3005
        %3007 = vmatprep.mubr.bf16.mxu0 0
        %3008 = vmatmul.mubr.bf16.gmra.mrb[0].mxu0 %v2883
        %v3009 = vpop.f32.mrb[0].mxu0
        %v3010 = vadd.f32 %v2778, %v3009
        %v3011 = vpop.f32.mrb[0].mxu0
        %v3012 = vadd.f32 %v2782, %v3011
        %v3013 = vpop.f32.mrb[0].mxu0
        %v3014 = vadd.f32 %v2778, %v3013
        %v3015 = vpop.f32.mrb[0].mxu0
        %v3016 = vadd.f32 %v2782, %v3015
        %3017 = vmatprep.mubr.bf16.mxu0 0
        %3018 = vmatmul.mubr.bf16.gmra.mrb[0].mxu0 %v2886
        %v3019 = vpop.f32.mrb[0].mxu0
        %v3020 = vadd.f32 %v2778, %v3019
        %v3021 = vpop.f32.mrb[0].mxu0
        %v3022 = vadd.f32 %v2782, %v3021
        %v3023 = vpop.f32.mrb[0].mxu0
        %v3024 = vadd.f32 %v2778, %v3023
        %v3025 = vpop.f32.mrb[0].mxu0
        %v3026 = vadd.f32 %v2782, %v3025
        %3027 = vmatprep.mubr.bf16.mxu0 0
        %3028 = vmatmul.mubr.bf16.gmra.mrb[0].mxu0 %v2889
        %v3029 = vpop.f32.mrb[0].mxu0
        %v3030 = vadd.f32 %v2778, %v3029
        %v3031 = vpop.f32.mrb[0].mxu0
        %v3032 = vadd.f32 %v2782, %v3031
        %v3033 = vpop.f32.mrb[0].mxu0
        %v3034 = vadd.f32 %v2778, %v3033
        %v3035 = vpop.f32.mrb[0].mxu0
        %v3036 = vadd.f32 %v2782, %v3035
        %3037 = vmatprep.mubr.bf16.mxu0 0
        %3038 = vmatmul.mubr.bf16.gmra.mrb[0].mxu0 %v2892
        %v3039 = vpop.f32.mrb[0].mxu0
        %v3040 = vadd.f32 %v2778, %v3039
        %v3041 = vpop.f32.mrb[0].mxu0
        %v3042 = vadd.f32 %v2782, %v3041
        %v3043 = vpop.f32.mrb[0].mxu0
        %v3044 = vadd.f32 %v2778, %v3043
        %v3045 = vpop.f32.mrb[0].mxu0
        %v3046 = vadd.f32 %v2782, %v3045
        %3047 = vmatprep.mubr.bf16.mxu0 0
        %3048 = vmatmul.mubr.bf16.gmra.mrb[0].mxu0 %v2895
        %v3049 = vpop.f32.mrb[0].mxu0
        %v3050 = vadd.f32 %v2778, %v3049
        %v3051 = vpop.f32.mrb[0].mxu0
        %v3052 = vadd.f32 %v2782, %v3051
        %v3053 = vpop.f32.mrb[0].mxu0
        %v3054 = vadd.f32 %v2778, %v3053
        %v3055 = vpop.f32.mrb[0].mxu0
        %v3056 = vadd.f32 %v2782, %v3055
        %3057 = vdwg.mxu0
        %v3058 = vmax.f32 %v2980, %v2982
        %3059 = vmax.xlane.f32.xlu0 %v3058
        %v3060 = vpop.xlane.xlu0 %3059
        %v3061 = vmax.f32 %v2984, %v2986
        %3062 = vmax.xlane.f32.xlu0 %v3061
        %v3063 = vpop.xlane.xlu0 %3062
        %v3064 = vmax.f32 %v2990, %v2992
        %3065 = vmax.xlane.f32.xlu0 %v3064
        %v3066 = vpop.xlane.xlu0 %3065
        %v3067 = vmax.f32 %v2994, %v2996
        %3068 = vmax.xlane.f32.xlu0 %v3067
        %v3069 = vpop.xlane.xlu0 %3068
        %v3070 = vmax.f32 %v3000, %v3002
        %3071 = vmax.xlane.f32.xlu0 %v3070
        %v3072 = vpop.xlane.xlu0 %3071
        %v3073 = vmax.f32 %v3004, %v3006
        %3074 = vmax.xlane.f32.xlu0 %v3073
        %v3075 = vpop.xlane.xlu0 %3074
        %v3076 = vmax.f32 %v3010, %v3012
        %3077 = vmax.xlane.f32.xlu0 %v3076
        %v3078 = vpop.xlane.xlu0 %3077
        %v3079 = vmax.f32 %v3014, %v3016
        %3080 = vmax.xlane.f32.xlu0 %v3079
        %v3081 = vpop.xlane.xlu0 %3080
        %v3082 = vmax.f32 %v3020, %v3022
        %3083 = vmax.xlane.f32.xlu0 %v3082
        %v3084 = vpop.xlane.xlu0 %3083
        %v3085 = vmax.f32 %v3024, %v3026
        %3086 = vmax.xlane.f32.xlu0 %v3085
        %v3087 = vpop.xlane.xlu0 %3086
        %v3088 = vmax.f32 %v3030, %v3032
        %3089 = vmax.xlane.f32.xlu0 %v3088
        %v3090 = vpop.xlane.xlu0 %3089
        %v3091 = vmax.f32 %v3034, %v3036
        %3092 = vmax.xlane.f32.xlu0 %v3091
        %v3093 = vpop.xlane.xlu0 %3092
        %v3094 = vmax.f32 %v3040, %v3042
        %3095 = vmax.xlane.f32.xlu0 %v3094
        %v3096 = vpop.xlane.xlu0 %3095
        %v3097 = vmax.f32 %v3044, %v3046
        %3098 = vmax.xlane.f32.xlu0 %v3097
        %v3099 = vpop.xlane.xlu0 %3098
        %v3100 = vmax.f32 %v3050, %v3052
        %3101 = vmax.xlane.f32.xlu0 %v3100
        %v3102 = vpop.xlane.xlu0 %3101
        %v3103 = vmax.f32 %v3054, %v3056
        %3104 = vmax.xlane.f32.xlu0 %v3103
        %v3105 = vpop.xlane.xlu0 %3104
        %v3106 = vsub.f32 %v2980, %v3060
        %v3107 = vsub.f32 %v2982, %v3060
        %v3108 = vsub.f32 %v2984, %v3063
        %v3109 = vsub.f32 %v2986, %v3063
        %v3110 = vsub.f32 %v2990, %v3066
        %v3111 = vsub.f32 %v2992, %v3066
        %v3112 = vsub.f32 %v2994, %v3069
        %v3113 = vsub.f32 %v2996, %v3069
        %v3114 = vsub.f32 %v3000, %v3072
        %v3115 = vsub.f32 %v3002, %v3072
        %v3116 = vsub.f32 %v3004, %v3075
        %v3117 = vsub.f32 %v3006, %v3075
        %v3118 = vsub.f32 %v3010, %v3078
        %v3119 = vsub.f32 %v3012, %v3078
        %v3120 = vsub.f32 %v3014, %v3081
        %v3121 = vsub.f32 %v3016, %v3081
        %v3122 = vsub.f32 %v3020, %v3084
        %v3123 = vsub.f32 %v3022, %v3084
        %v3124 = vsub.f32 %v3024, %v3087
        %v3125 = vsub.f32 %v3026, %v3087
        %v3126 = vsub.f32 %v3030, %v3090
        %v3127 = vsub.f32 %v3032, %v3090
        %v3128 = vsub.f32 %v3034, %v3093
        %v3129 = vsub.f32 %v3036, %v3093
        %v3130 = vsub.f32 %v3040, %v3096
        %v3131 = vsub.f32 %v3042, %v3096
        %v3132 = vsub.f32 %v3044, %v3099
        %v3133 = vsub.f32 %v3046, %v3099
        %v3134 = vsub.f32 %v3050, %v3102
        %v3135 = vsub.f32 %v3052, %v3102
        %v3136 = vsub.f32 %v3054, %v3105
        %v3137 = vsub.f32 %v3056, %v3105
        %v3138 = vmul.f32 %v3106, 1.442695
        %v3139 = vpow.pop %v3138
        %v3140 = vmul.f32 %v3107, 1.442695
        %v3141 = vpow.pop %v3140
        %v3142 = vmul.f32 %v3108, 1.442695
        %v3143 = vpow.pop %v3142
        %v3144 = vmul.f32 %v3109, 1.442695
        %v3145 = vpow.pop %v3144
        %v3146 = vmul.f32 %v3110, 1.442695
        %v3147 = vpow.pop %v3146
        %v3148 = vmul.f32 %v3111, 1.442695
        %v3149 = vpow.pop %v3148
        %v3150 = vmul.f32 %v3112, 1.442695
        %v3151 = vpow.pop %v3150
        %v3152 = vmul.f32 %v3113, 1.442695
        %v3153 = vpow.pop %v3152
        %v3154 = vmul.f32 %v3114, 1.442695
        %v3155 = vpow.pop %v3154
        %v3156 = vmul.f32 %v3115, 1.442695
        %v3157 = vpow.pop %v3156
        %v3158 = vmul.f32 %v3116, 1.442695
        %v3159 = vpow.pop %v3158
        %v3160 = vmul.f32 %v3117, 1.442695
        %v3161 = vpow.pop %v3160
        %v3162 = vmul.f32 %v3118, 1.442695
        %v3163 = vpow.pop %v3162
        %v3164 = vmul.f32 %v3119, 1.442695
        %v3165 = vpow.pop %v3164
        %v3166 = vmul.f32 %v3120, 1.442695
        %v3167 = vpow.pop %v3166
        %v3168 = vmul.f32 %v3121, 1.442695
        %v3169 = vpow.pop %v3168
        %v3170 = vmul.f32 %v3122, 1.442695
        %v3171 = vpow.pop %v3170
        %v3172 = vmul.f32 %v3123, 1.442695
        %v3173 = vpow.pop %v3172
        %v3174 = vmul.f32 %v3124, 1.442695
        %v3175 = vpow.pop %v3174
        %v3176 = vmul.f32 %v3125, 1.442695
        %v3177 = vpow.pop %v3176
        %v3178 = vmul.f32 %v3126, 1.442695
        %v3179 = vpow.pop %v3178
        %v3180 = vmul.f32 %v3127, 1.442695
        %v3181 = vpow.pop %v3180
        %v3182 = vmul.f32 %v3128, 1.442695
        %v3183 = vpow.pop %v3182
        %v3184 = vmul.f32 %v3129, 1.442695
        %v3185 = vpow.pop %v3184
        %v3186 = vmul.f32 %v3130, 1.442695
        %v3187 = vpow.pop %v3186
        %v3188 = vmul.f32 %v3131, 1.442695
        %v3189 = vpow.pop %v3188
        %v3190 = vmul.f32 %v3132, 1.442695
        %v3191 = vpow.pop %v3190
        %v3192 = vmul.f32 %v3133, 1.442695
        %v3193 = vpow.pop %v3192
        %v3194 = vmul.f32 %v3134, 1.442695
        %v3195 = vpow.pop %v3194
        %v3196 = vmul.f32 %v3135, 1.442695
        %v3197 = vpow.pop %v3196
        %v3198 = vmul.f32 %v3136, 1.442695
        %v3199 = vpow.pop %v3198
        %v3200 = vmul.f32 %v3137, 1.442695
        %v3201 = vpow.pop %v3200
        %v3202 = vadd.f32 %v3139, %v3141
        %3203 = vadd.xlane.f32.xlu0 %v3202
        %v3204 = vpop.xlane.xlu0 %3203
        %v3205 = vadd.f32 %v3143, %v3145
        %3206 = vadd.xlane.f32.xlu0 %v3205
        %v3207 = vpop.xlane.xlu0 %3206
        %v3208 = vadd.f32 %v3147, %v3149
        %3209 = vadd.xlane.f32.xlu0 %v3208
        %v3210 = vpop.xlane.xlu0 %3209
        %v3211 = vadd.f32 %v3151, %v3153
        %3212 = vadd.xlane.f32.xlu0 %v3211
        %v3213 = vpop.xlane.xlu0 %3212
        %v3214 = vadd.f32 %v3155, %v3157
        %3215 = vadd.xlane.f32.xlu0 %v3214
        %v3216 = vpop.xlane.xlu0 %3215
        %v3217 = vadd.f32 %v3159, %v3161
        %3218 = vadd.xlane.f32.xlu0 %v3217
        %v3219 = vpop.xlane.xlu0 %3218
        %v3220 = vadd.f32 %v3163, %v3165
        %3221 = vadd.xlane.f32.xlu0 %v3220
        %v3222 = vpop.xlane.xlu0 %3221
        %v3223 = vadd.f32 %v3167, %v3169
        %3224 = vadd.xlane.f32.xlu0 %v3223
        %v3225 = vpop.xlane.xlu0 %3224
        %v3226 = vadd.f32 %v3171, %v3173
        %3227 = vadd.xlane.f32.xlu0 %v3226
        %v3228 = vpop.xlane.xlu0 %3227
        %v3229 = vadd.f32 %v3175, %v3177
        %3230 = vadd.xlane.f32.xlu0 %v3229
        %v3231 = vpop.xlane.xlu0 %3230
        %v3232 = vadd.f32 %v3179, %v3181
        %3233 = vadd.xlane.f32.xlu0 %v3232
        %v3234 = vpop.xlane.xlu0 %3233
        %v3235 = vadd.f32 %v3183, %v3185
        %3236 = vadd.xlane.f32.xlu0 %v3235
        %v3237 = vpop.xlane.xlu0 %3236
        %v3238 = vadd.f32 %v3187, %v3189
        %3239 = vadd.xlane.f32.xlu0 %v3238
        %v3240 = vpop.xlane.xlu0 %3239
        %v3241 = vadd.f32 %v3191, %v3193
        %3242 = vadd.xlane.f32.xlu0 %v3241
        %v3243 = vpop.xlane.xlu0 %3242
        %v3244 = vadd.f32 %v3195, %v3197
        %3245 = vadd.xlane.f32.xlu0 %v3244
        %v3246 = vpop.xlane.xlu0 %3245
        %v3247 = vadd.f32 %v3199, %v3201
        %3248 = vadd.xlane.f32.xlu0 %v3247
        %v3249 = vpop.xlane.xlu0 %3248
        %v3250 = vpack.c.bf16 %v3143, %v3139
        %v3251 = vpack.c.bf16 %v3145, %v3141
        %v3252 = vpack.c.bf16 %v3151, %v3147
        %v3253 = vpack.c.bf16 %v3153, %v3149
        %v3254 = vpack.c.bf16 %v3159, %v3155
        %v3255 = vpack.c.bf16 %v3161, %v3157
        %v3256 = vpack.c.bf16 %v3167, %v3163
        %v3257 = vpack.c.bf16 %v3169, %v3165
        %v3258 = vpack.c.bf16 %v3175, %v3171
        %v3259 = vpack.c.bf16 %v3177, %v3173
        %v3260 = vpack.c.bf16 %v3183, %v3179
        %v3261 = vpack.c.bf16 %v3185, %v3181
        %v3262 = vpack.c.bf16 %v3191, %v3187
        %v3263 = vpack.c.bf16 %v3193, %v3189
        %v3264 = vpack.c.bf16 %v3199, %v3195
        %v3265 = vpack.c.bf16 %v3201, %v3197
        %3266 = vrot.lane.b32.xlu0 %v2724, 64
        %v3267 = vpop.permute.xlu0 %3266
        %3268 = vrot.lane.b32.xlu0 %v2725, 64
        %v3269 = vpop.permute.xlu0 %3268
        %3270 = vrot.lane.b32.xlu0 %v2726, 64
        %v3271 = vpop.permute.xlu0 %3270
        %3272 = vrot.lane.b32.xlu0 %v2727, 64
        %v3273 = vpop.permute.xlu0 %3272
        %3274 = vrot.lane.b32.xlu0 %v2728, 64
        %v3275 = vpop.permute.xlu0 %3274
        %3276 = vrot.lane.b32.xlu0 %v2729, 64
        %v3277 = vpop.permute.xlu0 %3276
        %3278 = vrot.lane.b32.xlu0 %v2730, 64
        %v3279 = vpop.permute.xlu0 %3278
        %3280 = vrot.lane.b32.xlu0 %v2731, 64
        %v3281 = vpop.permute.xlu0 %3280
        %3282 = vrot.lane.b32.xlu0 %v2764, 64
        %v3283 = vpop.permute.xlu0 %3282
        %3284 = vrot.lane.b32.xlu0 %v2765, 64
        %v3285 = vpop.permute.xlu0 %3284
        %3286 = vrot.lane.b32.xlu0 %v2766, 64
        %v3287 = vpop.permute.xlu0 %3286
        %3288 = vrot.lane.b32.xlu0 %v2767, 64
        %v3289 = vpop.permute.xlu0 %3288
        %3290 = vrot.lane.b32.xlu0 %v2768, 64
        %v3291 = vpop.permute.xlu0 %3290
        %3292 = vrot.lane.b32.xlu0 %v2769, 64
        %v3293 = vpop.permute.xlu0 %3292
        %3294 = vrot.lane.b32.xlu0 %v2770, 64
        %v3295 = vpop.permute.xlu0 %3294
        %3296 = vrot.lane.b32.xlu0 %v2771, 64
        %v3297 = vpop.permute.xlu0 %3296
        %3314 = vmatprep.subr.bf16.mxu0 0
        %3315 = vmatpush1.bf16.msra.mxu0 %v3267
        %3316 = vmatprep.subr.bf16.mxu0 0
        %3317 = vmatpush1.bf16.msra.mxu0 %v3269
        %3318 = vmatprep.subr.bf16.mxu0 0
        %3319 = vmatpush1.bf16.msra.mxu0 %v3271
        %3320 = vmatprep.subr.bf16.mxu0 0
        %3321 = vmatpush1.bf16.msra.mxu0 %v3273
        %3322 = vmatprep.subr.bf16.mxu0 0
        %3323 = vmatpush1.bf16.msra.mxu0 %v3275
        %3324 = vmatprep.subr.bf16.mxu0 0
        %3325 = vmatpush1.bf16.msra.mxu0 %v3277
        %3326 = vmatprep.subr.bf16.mxu0 0
        %3327 = vmatpush1.bf16.msra.mxu0 %v3279
        %3328 = vmatprep.subr.bf16.mxu0 0
        %3329 = vmatpush1.bf16.msra.mxu0 %v3281
        %3330 = vmatprep.subr.bf16.mxu0 0
        %3331 = vmatpush1.bf16.msra.mxu0 %v3283
        %3332 = vmatprep.subr.bf16.mxu0 0
        %3333 = vmatpush1.bf16.msra.mxu0 %v3285
        %3334 = vmatprep.subr.bf16.mxu0 0
        %3335 = vmatpush1.bf16.msra.mxu0 %v3287
        %3336 = vmatprep.subr.bf16.mxu0 0
        %3337 = vmatpush1.bf16.msra.mxu0 %v3289
        %3338 = vmatprep.subr.bf16.mxu0 0
        %3339 = vmatpush1.bf16.msra.mxu0 %v3291
        %3340 = vmatprep.subr.bf16.mxu0 0
        %3341 = vmatpush1.bf16.msra.mxu0 %v3293
        %3342 = vmatprep.subr.bf16.mxu0 0
        %3343 = vmatpush1.bf16.msra.mxu0 %v3295
        %3344 = vmatprep.subr.bf16.mxu0 0
        %3345 = vmatpush1.bf16.msra.mxu0 %v3297
        %3346 = vmatprep.mubr.bf16.mxu0 %v3251
        %3347 = vmatmul.mubr.bf16.gmra.mrb[0].mxu0 %v3250
        %v3348 = vpop.f32.mrb[0].mxu0
        %v3349 = vadd.f32 0.0, %v3348
        %v3350 = vpop.f32.mrb[0].mxu0
        %v3351 = vpop.f32.mrb[0].mxu0
        %v3352 = vadd.f32 0.0, %v3351
        %v3353 = vpop.f32.mrb[0].mxu0
        %3354 = vmatprep.mubr.bf16.mxu0 %v3253
        %3355 = vmatmul.mubr.bf16.gmra.mrb[0].mxu0 %v3252
        %v3356 = vpop.f32.mrb[0].mxu0
        %v3357 = vadd.f32 0.0, %v3356
        %v3358 = vpop.f32.mrb[0].mxu0
        %v3359 = vpop.f32.mrb[0].mxu0
        %v3360 = vadd.f32 0.0, %v3359
        %v3361 = vpop.f32.mrb[0].mxu0
        %3362 = vmatprep.mubr.bf16.mxu0 %v3255
        %3363 = vmatmul.mubr.bf16.gmra.mrb[0].mxu0 %v3254
        %v3364 = vpop.f32.mrb[0].mxu0
        %v3365 = vadd.f32 0.0, %v3364
        %v3366 = vpop.f32.mrb[0].mxu0
        %v3367 = vpop.f32.mrb[0].mxu0
        %v3368 = vadd.f32 0.0, %v3367
        %v3369 = vpop.f32.mrb[0].mxu0
        %3370 = vmatprep.mubr.bf16.mxu0 %v3257
        %3371 = vmatmul.mubr.bf16.gmra.mrb[0].mxu0 %v3256
        %v3372 = vpop.f32.mrb[0].mxu0
        %v3373 = vadd.f32 0.0, %v3372
        %v3374 = vpop.f32.mrb[0].mxu0
        %v3375 = vpop.f32.mrb[0].mxu0
        %v3376 = vadd.f32 0.0, %v3375
        %v3377 = vpop.f32.mrb[0].mxu0
        %3378 = vmatprep.mubr.bf16.mxu0 %v3259
        %3379 = vmatmul.mubr.bf16.gmra.mrb[0].mxu0 %v3258
        %v3380 = vpop.f32.mrb[0].mxu0
        %v3381 = vadd.f32 0.0, %v3380
        %v3382 = vpop.f32.mrb[0].mxu0
        %v3383 = vpop.f32.mrb[0].mxu0
        %v3384 = vadd.f32 0.0, %v3383
        %v3385 = vpop.f32.mrb[0].mxu0
        %3386 = vmatprep.mubr.bf16.mxu0 %v3261
        %3387 = vmatmul.mubr.bf16.gmra.mrb[0].mxu0 %v3260
        %v3388 = vpop.f32.mrb[0].mxu0
        %v3389 = vadd.f32 0.0, %v3388
        %v3390 = vpop.f32.mrb[0].mxu0
        %v3391 = vpop.f32.mrb[0].mxu0
        %v3392 = vadd.f32 0.0, %v3391
        %v3393 = vpop.f32.mrb[0].mxu0
        %3394 = vmatprep.mubr.bf16.mxu0 %v3263
        %3395 = vmatmul.mubr.bf16.gmra.mrb[0].mxu0 %v3262
        %v3396 = vpop.f32.mrb[0].mxu0
        %v3397 = vadd.f32 0.0, %v3396
        %v3398 = vpop.f32.mrb[0].mxu0
        %v3399 = vpop.f32.mrb[0].mxu0
        %v3400 = vadd.f32 0.0, %v3399
        %v3401 = vpop.f32.mrb[0].mxu0
        %3402 = vmatprep.mubr.bf16.mxu0 %v3265
        %3403 = vmatmul.mubr.bf16.gmra.mrb[0].mxu0 %v3264
        %v3404 = vpop.f32.mrb[0].mxu0
        %v3405 = vadd.f32 0.0, %v3404
        %v3406 = vpop.f32.mrb[0].mxu0
        %v3407 = vpop.f32.mrb[0].mxu0
        %v3408 = vadd.f32 0.0, %v3407
        %v3409 = vpop.f32.mrb[0].mxu0
        %3410 = vdwg.mxu0
        %s3411 = sadd.s32 %s1357, 2
        %s3412 = sld [smem:[#allocation2 + %s3411]]
        %v3413 = vrcp.pop %v3204
        %v3414 = vrcp.pop %v3207
        %v3415 = vrcp.pop %v3210
        %v3416 = vrcp.pop %v3213
        %v3417 = vrcp.pop %v3216
        %v3418 = vrcp.pop %v3219
        %v3419 = vrcp.pop %v3222
        %v3420 = vrcp.pop %v3225
        %v3421 = vrcp.pop %v3228
        %v3422 = vrcp.pop %v3231
        %v3423 = vrcp.pop %v3234
        %v3424 = vrcp.pop %v3237
        %v3425 = vrcp.pop %v3240
        %v3426 = vrcp.pop %v3243
        %v3427 = vrcp.pop %v3246
        %v3428 = vrcp.pop %v3249
        %v3429 = vstv %s3412
        %v3430 = vmul.f32 %v3429, %v3413
        %v3431 = vmul.f32 %v3429, %v3414
        %v3432 = vmul.f32 %v3429, %v3415
        %v3433 = vmul.f32 %v3429, %v3416
        %v3434 = vmul.f32 %v3429, %v3417
        %v3435 = vmul.f32 %v3429, %v3418
        %v3436 = vmul.f32 %v3429, %v3419
        %v3437 = vmul.f32 %v3429, %v3420
        %v3438 = vmul.f32 %v3429, %v3421
        %v3439 = vmul.f32 %v3429, %v3422
        %v3440 = vmul.f32 %v3429, %v3423
        %v3441 = vmul.f32 %v3429, %v3424
        %v3442 = vmul.f32 %v3429, %v3425
        %v3443 = vmul.f32 %v3429, %v3426
        %v3444 = vmul.f32 %v3429, %v3427
        %v3445 = vmul.f32 %v3429, %v3428
        %v3446 = vmul.f32 %v3349, %v3430
        %v3447 = vmul.f32 %v3352, %v3431
        %v3448 = vmul.f32 %v3357, %v3432
        %v3449 = vmul.f32 %v3360, %v3433
        %v3450 = vmul.f32 %v3365, %v3434
        %v3451 = vmul.f32 %v3368, %v3435
        %v3452 = vmul.f32 %v3373, %v3436
        %v3453 = vmul.f32 %v3376, %v3437
        %v3454 = vmul.f32 %v3381, %v3438
        %v3455 = vmul.f32 %v3384, %v3439
        %v3456 = vmul.f32 %v3389, %v3440
        %v3457 = vmul.f32 %v3392, %v3441
        %v3458 = vmul.f32 %v3397, %v3442
        %v3459 = vmul.f32 %v3400, %v3443
        %v3460 = vmul.f32 %v3405, %v3444
        %v3461 = vmul.f32 %v3408, %v3445
        %v3462 = vpack.c.bf16 %v3447, %v3446
        %v3463 = vpack.c.bf16 %v3449, %v3448
        %v3464 = vpack.c.bf16 %v3451, %v3450
        %v3465 = vpack.c.bf16 %v3453, %v3452
        %v3466 = vpack.c.bf16 %v3455, %v3454
        %v3467 = vpack.c.bf16 %v3457, %v3456
        %v3468 = vpack.c.bf16 %v3459, %v3458
        %v3469 = vpack.c.bf16 %v3461, %v3460
        %v3478 = vunpack.c.l.b16 %v3462
        %v3479 = vunpack.c.h.b16 %v3462
        %v3480 = vunpack.c.l.b16 %v3463
        %v3481 = vunpack.c.h.b16 %v3463
        %v3482 = vunpack.c.l.b16 %v3464
        %v3483 = vunpack.c.h.b16 %v3464
        %v3484 = vunpack.c.l.b16 %v3465
        %v3485 = vunpack.c.h.b16 %v3465
        %v3486 = vunpack.c.l.b16 %v3466
        %v3487 = vunpack.c.h.b16 %v3466
        %v3488 = vunpack.c.l.b16 %v3467
        %v3489 = vunpack.c.h.b16 %v3467
        %v3490 = vunpack.c.l.b16 %v3468
        %v3491 = vunpack.c.h.b16 %v3468
        %v3492 = vunpack.c.l.b16 %v3469
        %v3493 = vunpack.c.h.b16 %v3469
        %v3494 = vpack.c.b16 %v3478, %v3478
        %v3495 = vpack.c.b16 %v3479, %v3479
        %v3496 = vpack.c.b16 %v3480, %v3480
        %v3497 = vpack.c.b16 %v3481, %v3481
        %v3498 = vpack.c.b16 %v3482, %v3482
        %v3499 = vpack.c.b16 %v3483, %v3483
        %v3500 = vpack.c.b16 %v3484, %v3484
        %v3501 = vpack.c.b16 %v3485, %v3485
        %v3502 = vpack.c.b16 %v3486, %v3486
        %v3503 = vpack.c.b16 %v3487, %v3487
        %v3504 = vpack.c.b16 %v3488, %v3488
        %v3505 = vpack.c.b16 %v3489, %v3489
        %v3506 = vpack.c.b16 %v3490, %v3490
        %v3507 = vpack.c.b16 %v3491, %v3491
        %v3508 = vpack.c.b16 %v3492, %v3492
        %v3509 = vpack.c.b16 %v3493, %v3493
        %3510 = vrot.lane.b32.xlu0 %v3494, 64
        %v3511 = vpop.permute.xlu0 %3510
        %3512 = vrot.lane.b32.xlu0 %v3495, 64
        %v3513 = vpop.permute.xlu0 %3512
        %3514 = vrot.lane.b32.xlu0 %v3496, 64
        %v3515 = vpop.permute.xlu0 %3514
        %3516 = vrot.lane.b32.xlu0 %v3497, 64
        %v3517 = vpop.permute.xlu0 %3516
        %3518 = vrot.lane.b32.xlu0 %v3498, 64
        %v3519 = vpop.permute.xlu0 %3518
        %3520 = vrot.lane.b32.xlu0 %v3499, 64
        %v3521 = vpop.permute.xlu0 %3520
        %3522 = vrot.lane.b32.xlu0 %v3500, 64
        %v3523 = vpop.permute.xlu0 %3522
        %3524 = vrot.lane.b32.xlu0 %v3501, 64
        %v3525 = vpop.permute.xlu0 %3524
        %3526 = vrot.lane.b32.xlu0 %v3502, 64
        %v3527 = vpop.permute.xlu0 %3526
        %3528 = vrot.lane.b32.xlu0 %v3503, 64
        %v3529 = vpop.permute.xlu0 %3528
        %3530 = vrot.lane.b32.xlu0 %v3504, 64
        %v3531 = vpop.permute.xlu0 %3530
        %3532 = vrot.lane.b32.xlu0 %v3505, 64
        %v3533 = vpop.permute.xlu0 %3532
        %3534 = vrot.lane.b32.xlu0 %v3506, 64
        %v3535 = vpop.permute.xlu0 %3534
        %3536 = vrot.lane.b32.xlu0 %v3507, 64
        %v3537 = vpop.permute.xlu0 %3536
        %3538 = vrot.lane.b32.xlu0 %v3508, 64
        %v3539 = vpop.permute.xlu0 %3538
        %3540 = vrot.lane.b32.xlu0 %v3509, 64
        %v3541 = vpop.permute.xlu0 %3540
        %vm3558 = vcmask 781824
        %3559 = vst.msk [vmem:[%s546] sm:$0xf] %vm3558, %v3511
        %3560 = vst.msk [vmem:[%s546 + $0x4] sm:$0xf] %vm3558, %v3513
        %3561 = vst.msk [vmem:[%s546 + $0x8] sm:$0xf] %vm3558, %v3515
        %3562 = vst.msk [vmem:[%s546 + $0xc] sm:$0xf] %vm3558, %v3517
        %3563 = vst.msk [vmem:[%s546 + $0x10] sm:$0xf] %vm3558, %v3519
        %3564 = vst.msk [vmem:[%s546 + $0x14] sm:$0xf] %vm3558, %v3521
        %3565 = vst.msk [vmem:[%s546 + $0x18] sm:$0xf] %vm3558, %v3523
        %3566 = vst.msk [vmem:[%s546 + $0x1c] sm:$0xf] %vm3558, %v3525
        %3567 = vst.msk [vmem:[%s546 + $0x20] sm:$0xf] %vm3558, %v3527
        %3568 = vst.msk [vmem:[%s546 + $0x24] sm:$0xf] %vm3558, %v3529
        %3569 = vst.msk [vmem:[%s546 + $0x28] sm:$0xf] %vm3558, %v3531
        %3570 = vst.msk [vmem:[%s546 + $0x2c] sm:$0xf] %vm3558, %v3533
        %3571 = vst.msk [vmem:[%s546 + $0x30] sm:$0xf] %vm3558, %v3535
        %3572 = vst.msk [vmem:[%s546 + $0x34] sm:$0xf] %vm3558, %v3537
        %3573 = vst.msk [vmem:[%s546 + $0x38] sm:$0xf] %vm3558, %v3539
        %3574 = vst.msk [vmem:[%s546 + $0x3c] sm:$0xf] %vm3558, %v3541
        %v3575 = vld [vmem:[%s445] sm:$0xf]
        %v3576 = vld [vmem:[%s445 + $0x4] sm:$0xf]
        %v3577 = vld [vmem:[%s445 + $0x8] sm:$0xf]
        %v3578 = vld [vmem:[%s445 + $0xc] sm:$0xf]
        %v3579 = vld [vmem:[%s445 + $0x10] sm:$0xf]
        %v3580 = vld [vmem:[%s445 + $0x14] sm:$0xf]
        %v3581 = vld [vmem:[%s445 + $0x18] sm:$0xf]
        %v3582 = vld [vmem:[%s445 + $0x1c] sm:$0xf]
        %v3583 = vld [vmem:[%s445 + $0x20] sm:$0xf]
        %v3584 = vld [vmem:[%s445 + $0x24] sm:$0xf]
        %v3585 = vld [vmem:[%s445 + $0x28] sm:$0xf]
        %v3586 = vld [vmem:[%s445 + $0x2c] sm:$0xf]
        %v3587 = vld [vmem:[%s445 + $0x30] sm:$0xf]
        %v3588 = vld [vmem:[%s445 + $0x34] sm:$0xf]
        %v3589 = vld [vmem:[%s445 + $0x38] sm:$0xf]
        %v3590 = vld [vmem:[%s445 + $0x3c] sm:$0xf]
        %v3591 = vld [vmem:[%s454] sm:$0xf]
        %v3592 = vld [vmem:[%s454 + $0x4] sm:$0xf]
        %v3593 = vld [vmem:[%s454 + $0x8] sm:$0xf]
        %v3594 = vld [vmem:[%s454 + $0xc] sm:$0xf]
        %v3595 = vld [vmem:[%s454 + $0x10] sm:$0xf]
        %v3596 = vld [vmem:[%s454 + $0x14] sm:$0xf]
        %v3597 = vld [vmem:[%s454 + $0x18] sm:$0xf]
        %v3598 = vld [vmem:[%s454 + $0x1c] sm:$0xf]
        %v3599 = vld [vmem:[%s454 + $0x20] sm:$0xf]
        %v3600 = vld [vmem:[%s454 + $0x24] sm:$0xf]
        %v3601 = vld [vmem:[%s454 + $0x28] sm:$0xf]
        %v3602 = vld [vmem:[%s454 + $0x2c] sm:$0xf]
        %v3603 = vld [vmem:[%s454 + $0x30] sm:$0xf]
        %v3604 = vld [vmem:[%s454 + $0x34] sm:$0xf]
        %v3605 = vld [vmem:[%s454 + $0x38] sm:$0xf]
        %v3606 = vld [vmem:[%s454 + $0x3c] sm:$0xf]
        %v3607 = vld [vmem:[%s472] sm:$0xf]
        %v3608 = vld [vmem:[%s472 + $0x4] sm:$0xf]
        %v3609 = vld [vmem:[%s472 + $0x8] sm:$0xf]
        %v3610 = vld [vmem:[%s472 + $0xc] sm:$0xf]
        %v3611 = vld [vmem:[%s472 + $0x10] sm:$0xf]
        %v3612 = vld [vmem:[%s472 + $0x14] sm:$0xf]
        %v3613 = vld [vmem:[%s472 + $0x18] sm:$0xf]
        %v3614 = vld [vmem:[%s472 + $0x1c] sm:$0xf]
        %v3615 = vld [vmem:[%s472 + $0x20] sm:$0xf]
        %v3616 = vld [vmem:[%s472 + $0x24] sm:$0xf]
        %v3617 = vld [vmem:[%s472 + $0x28] sm:$0xf]
        %v3618 = vld [vmem:[%s472 + $0x2c] sm:$0xf]
        %v3619 = vld [vmem:[%s472 + $0x30] sm:$0xf]
        %v3620 = vld [vmem:[%s472 + $0x34] sm:$0xf]
        %v3621 = vld [vmem:[%s472 + $0x38] sm:$0xf]
        %v3622 = vld [vmem:[%s472 + $0x3c] sm:$0xf]
        %v3639 = vunpack.c.l.b16 %v3591
        %v3640 = vunpack.c.l.b16 %v3592
        %v3641 = vunpack.c.l.b16 %v3593
        %v3642 = vunpack.c.l.b16 %v3594
        %v3643 = vunpack.c.l.b16 %v3595
        %v3644 = vunpack.c.l.b16 %v3596
        %v3645 = vunpack.c.l.b16 %v3597
        %v3646 = vunpack.c.l.b16 %v3598
        %v3647 = vunpack.c.l.b16 %v3599
        %v3648 = vunpack.c.l.b16 %v3600
        %v3649 = vunpack.c.l.b16 %v3601
        %v3650 = vunpack.c.l.b16 %v3602
        %v3651 = vunpack.c.l.b16 %v3603
        %v3652 = vunpack.c.l.b16 %v3604
        %v3653 = vunpack.c.l.b16 %v3605
        %v3654 = vunpack.c.l.b16 %v3606
        %v3655 = vpack.c.b16 %v3640, %v3639
        %v3656 = vpack.c.b16 %v3642, %v3641
        %v3657 = vpack.c.b16 %v3644, %v3643
        %v3658 = vpack.c.b16 %v3646, %v3645
        %v3659 = vpack.c.b16 %v3648, %v3647
        %v3660 = vpack.c.b16 %v3650, %v3649
        %v3661 = vpack.c.b16 %v3652, %v3651
        %v3662 = vpack.c.b16 %v3654, %v3653
        %v3679 = vunpack.c.l.b16 %v3607
        %v3680 = vunpack.c.l.b16 %v3608
        %v3681 = vunpack.c.l.b16 %v3609
        %v3682 = vunpack.c.l.b16 %v3610
        %v3683 = vunpack.c.l.b16 %v3611
        %v3684 = vunpack.c.l.b16 %v3612
        %v3685 = vunpack.c.l.b16 %v3613
        %v3686 = vunpack.c.l.b16 %v3614
        %v3687 = vunpack.c.l.b16 %v3615
        %v3688 = vunpack.c.l.b16 %v3616
        %v3689 = vunpack.c.l.b16 %v3617
        %v3690 = vunpack.c.l.b16 %v3618
        %v3691 = vunpack.c.l.b16 %v3619
        %v3692 = vunpack.c.l.b16 %v3620
        %v3693 = vunpack.c.l.b16 %v3621
        %v3694 = vunpack.c.l.b16 %v3622
        %v3695 = vpack.c.b16 %v3680, %v3679
        %v3696 = vpack.c.b16 %v3682, %v3681
        %v3697 = vpack.c.b16 %v3684, %v3683
        %v3698 = vpack.c.b16 %v3686, %v3685
        %v3699 = vpack.c.b16 %v3688, %v3687
        %v3700 = vpack.c.b16 %v3690, %v3689
        %v3701 = vpack.c.b16 %v3692, %v3691
        %v3702 = vpack.c.b16 %v3694, %v3693
        %v3703 = vld [vmem:[%s463] sm:$0xf]
        %v3704 = vld [vmem:[%s463 + $0x4] sm:$0xf]
        %v3705 = vld [vmem:[%s463 + $0x8] sm:$0xf]
        %v3706 = vld [vmem:[%s463 + $0xc] sm:$0xf]
        %v3707 = vld [vmem:[%s463 + $0x10] sm:$0xf]
        %v3708 = vld [vmem:[%s463 + $0x14] sm:$0xf]
        %v3709 = vld [vmem:[%s463 + $0x18] sm:$0xf]
        %v3710 = vld [vmem:[%s463 + $0x1c] sm:$0xf]
        %v3711 = vld [vmem:[%s463 + $0x20] sm:$0xf]
        %v3712 = vld [vmem:[%s463 + $0x24] sm:$0xf]
        %v3713 = vld [vmem:[%s463 + $0x28] sm:$0xf]
        %v3714 = vld [vmem:[%s463 + $0x2c] sm:$0xf]
        %v3715 = vld [vmem:[%s463 + $0x30] sm:$0xf]
        %v3716 = vld [vmem:[%s463 + $0x34] sm:$0xf]
        %v3717 = vld [vmem:[%s463 + $0x38] sm:$0xf]
        %v3718 = vld [vmem:[%s463 + $0x3c] sm:$0xf]
        %v3719 = vld [vmem:[%s481] sm:$0xf]
        %v3720 = vld [vmem:[%s481 + $0x4] sm:$0xf]
        %v3721 = vld [vmem:[%s481 + $0x8] sm:$0xf]
        %v3722 = vld [vmem:[%s481 + $0xc] sm:$0xf]
        %v3723 = vld [vmem:[%s481 + $0x10] sm:$0xf]
        %v3724 = vld [vmem:[%s481 + $0x14] sm:$0xf]
        %v3725 = vld [vmem:[%s481 + $0x18] sm:$0xf]
        %v3726 = vld [vmem:[%s481 + $0x1c] sm:$0xf]
        %v3727 = vld [vmem:[%s481 + $0x20] sm:$0xf]
        %v3728 = vld [vmem:[%s481 + $0x24] sm:$0xf]
        %v3729 = vld [vmem:[%s481 + $0x28] sm:$0xf]
        %v3730 = vld [vmem:[%s481 + $0x2c] sm:$0xf]
        %v3731 = vld [vmem:[%s481 + $0x30] sm:$0xf]
        %v3732 = vld [vmem:[%s481 + $0x34] sm:$0xf]
        %v3733 = vld [vmem:[%s481 + $0x38] sm:$0xf]
        %v3734 = vld [vmem:[%s481 + $0x3c] sm:$0xf]
        %v3751 = vunpack.c.l.b16 %v3703
        %v3752 = vunpack.c.l.b16 %v3704
        %v3753 = vunpack.c.l.b16 %v3705
        %v3754 = vunpack.c.l.b16 %v3706
        %v3755 = vunpack.c.l.b16 %v3707
        %v3756 = vunpack.c.l.b16 %v3708
        %v3757 = vunpack.c.l.b16 %v3709
        %v3758 = vunpack.c.l.b16 %v3710
        %v3759 = vunpack.c.l.b16 %v3711
        %v3760 = vunpack.c.l.b16 %v3712
        %v3761 = vunpack.c.l.b16 %v3713
        %v3762 = vunpack.c.l.b16 %v3714
        %v3763 = vunpack.c.l.b16 %v3715
        %v3764 = vunpack.c.l.b16 %v3716
        %v3765 = vunpack.c.l.b16 %v3717
        %v3766 = vunpack.c.l.b16 %v3718
        %v3767 = vpack.c.b16 %v3752, %v3751
        %v3768 = vpack.c.b16 %v3754, %v3753
        %v3769 = vpack.c.b16 %v3756, %v3755
        %v3770 = vpack.c.b16 %v3758, %v3757
        %v3771 = vpack.c.b16 %v3760, %v3759
        %v3772 = vpack.c.b16 %v3762, %v3761
        %v3773 = vpack.c.b16 %v3764, %v3763
        %v3774 = vpack.c.b16 %v3766, %v3765
        %v3791 = vunpack.c.l.b16 %v3719
        %v3792 = vunpack.c.l.b16 %v3720
        %v3793 = vunpack.c.l.b16 %v3721
        %v3794 = vunpack.c.l.b16 %v3722
        %v3795 = vunpack.c.l.b16 %v3723
        %v3796 = vunpack.c.l.b16 %v3724
        %v3797 = vunpack.c.l.b16 %v3725
        %v3798 = vunpack.c.l.b16 %v3726
        %v3799 = vunpack.c.l.b16 %v3727
        %v3800 = vunpack.c.l.b16 %v3728
        %v3801 = vunpack.c.l.b16 %v3729
        %v3802 = vunpack.c.l.b16 %v3730
        %v3803 = vunpack.c.l.b16 %v3731
        %v3804 = vunpack.c.l.b16 %v3732
        %v3805 = vunpack.c.l.b16 %v3733
        %v3806 = vunpack.c.l.b16 %v3734
        %v3807 = vpack.c.b16 %v3792, %v3791
        %v3808 = vpack.c.b16 %v3794, %v3793
        %v3809 = vpack.c.b16 %v3796, %v3795
        %v3810 = vpack.c.b16 %v3798, %v3797
        %v3811 = vpack.c.b16 %v3800, %v3799
        %v3812 = vpack.c.b16 %v3802, %v3801
        %v3813 = vpack.c.b16 %v3804, %v3803
        %v3814 = vpack.c.b16 %v3806, %v3805
        %s3815 = scalar_lea.vmem %s490, 3 [#allocation13]
        %v3816 = vld [vmem:[%s3815] ss:$4 sm:$0x3]
        %v3818 = vlaneseq
        %v3819 = vshrl.u32 %v3818, 7
        %v3820 = vsub.s32 0, %v3819
        %v3821 = vrot.slane %v3816, %v3820
        %v3822 = vlaneseq
        %v3823 = vshrl.u32 %v3822, 7
        %v3824 = vsub.s32 1, %v3823
        %v3825 = vrot.slane %v3816, %v3824
        %v3844 = vunpack.c.l.b16 %v3575
        %v3845 = vunpack.c.l.b16 %v3576
        %v3846 = vunpack.c.l.b16 %v3577
        %v3847 = vunpack.c.l.b16 %v3578
        %v3848 = vunpack.c.l.b16 %v3579
        %v3849 = vunpack.c.l.b16 %v3580
        %v3850 = vunpack.c.l.b16 %v3581
        %v3851 = vunpack.c.l.b16 %v3582
        %v3852 = vunpack.c.l.b16 %v3583
        %v3853 = vunpack.c.l.b16 %v3584
        %v3854 = vunpack.c.l.b16 %v3585
        %v3855 = vunpack.c.l.b16 %v3586
        %v3856 = vunpack.c.l.b16 %v3587
        %v3857 = vunpack.c.l.b16 %v3588
        %v3858 = vunpack.c.l.b16 %v3589
        %v3859 = vunpack.c.l.b16 %v3590
        %v3860 = vpack.c.b16 %v3845, %v3844
        %v3861 = vpack.c.b16 %v3847, %v3846
        %v3862 = vpack.c.b16 %v3849, %v3848
        %v3863 = vpack.c.b16 %v3851, %v3850
        %v3864 = vpack.c.b16 %v3853, %v3852
        %v3865 = vpack.c.b16 %v3855, %v3854
        %v3866 = vpack.c.b16 %v3857, %v3856
        %v3867 = vpack.c.b16 %v3859, %v3858
        %3868 = vrot.lane.b32.xlu0 %v3860, 32
        %v3869 = vpop.permute.xlu0 %3868
        %3870 = vrot.lane.b32.xlu0 %v3861, 32
        %v3871 = vpop.permute.xlu0 %3870
        %3872 = vrot.lane.b32.xlu0 %v3862, 32
        %v3873 = vpop.permute.xlu0 %3872
        %3874 = vrot.lane.b32.xlu0 %v3863, 32
        %v3875 = vpop.permute.xlu0 %3874
        %3876 = vrot.lane.b32.xlu0 %v3864, 32
        %v3877 = vpop.permute.xlu0 %3876
        %3878 = vrot.lane.b32.xlu0 %v3865, 32
        %v3879 = vpop.permute.xlu0 %3878
        %3880 = vrot.lane.b32.xlu0 %v3866, 32
        %v3881 = vpop.permute.xlu0 %3880
        %3882 = vrot.lane.b32.xlu0 %v3867, 32
        %v3883 = vpop.permute.xlu0 %3882
        %3884 = vrot.lane.b32.xlu0 %v3655, 32
        %v3885 = vpop.permute.xlu0 %3884
        %3886 = vrot.lane.b32.xlu0 %v3656, 32
        %v3887 = vpop.permute.xlu0 %3886
        %3888 = vrot.lane.b32.xlu0 %v3657, 32
        %v3889 = vpop.permute.xlu0 %3888
        %3890 = vrot.lane.b32.xlu0 %v3658, 32
        %v3891 = vpop.permute.xlu0 %3890
        %3892 = vrot.lane.b32.xlu0 %v3659, 32
        %v3893 = vpop.permute.xlu0 %3892
        %3894 = vrot.lane.b32.xlu0 %v3660, 32
        %v3895 = vpop.permute.xlu0 %3894
        %3896 = vrot.lane.b32.xlu0 %v3661, 32
        %v3897 = vpop.permute.xlu0 %3896
        %3898 = vrot.lane.b32.xlu0 %v3662, 32
        %v3899 = vpop.permute.xlu0 %3898
        %3900 = vrot.lane.b32.xlu0 %v3695, 32
        %v3901 = vpop.permute.xlu0 %3900
        %3902 = vrot.lane.b32.xlu0 %v3696, 32
        %v3903 = vpop.permute.xlu0 %3902
        %3904 = vrot.lane.b32.xlu0 %v3697, 32
        %v3905 = vpop.permute.xlu0 %3904
        %3906 = vrot.lane.b32.xlu0 %v3698, 32
        %v3907 = vpop.permute.xlu0 %3906
        %3908 = vrot.lane.b32.xlu0 %v3699, 32
        %v3909 = vpop.permute.xlu0 %3908
        %3910 = vrot.lane.b32.xlu0 %v3700, 32
        %v3911 = vpop.permute.xlu0 %3910
        %3912 = vrot.lane.b32.xlu0 %v3701, 32
        %v3913 = vpop.permute.xlu0 %3912
        %3914 = vrot.lane.b32.xlu0 %v3702, 32
        %v3915 = vpop.permute.xlu0 %3914
        %v3917 = vsel %vm864, %v3869, 0
        %v3920 = vsel %vm864, %v3871, 0
        %v3923 = vsel %vm864, %v3873, 0
        %v3926 = vsel %vm864, %v3875, 0
        %v3929 = vsel %vm864, %v3877, 0
        %v3932 = vsel %vm864, %v3879, 0
        %v3935 = vsel %vm864, %v3881, 0
        %v3938 = vsel %vm864, %v3883, 0
        %v3941 = vsel %vm864, %v3885, 0
        %v3944 = vsel %vm864, %v3887, 0
        %v3947 = vsel %vm864, %v3889, 0
        %v3950 = vsel %vm864, %v3891, 0
        %v3953 = vsel %vm864, %v3893, 0
        %v3956 = vsel %vm864, %v3895, 0
        %v3959 = vsel %vm864, %v3897, 0
        %v3962 = vsel %vm864, %v3899, 0
        %v3965 = vsel %vm864, %v3901, 0
        %v3968 = vsel %vm864, %v3903, 0
        %v3971 = vsel %vm864, %v3905, 0
        %v3974 = vsel %vm864, %v3907, 0
        %v3977 = vsel %vm864, %v3909, 0
        %v3980 = vsel %vm864, %v3911, 0
        %v3983 = vsel %vm864, %v3913, 0
        %v3986 = vsel %vm864, %v3915, 0
        %3988 = vmatprep.subr.bf16.mxu0 0
        %3989 = vmatpush1.bf16.xpose.msra.mxu0 %v3941
        %3990 = vmatprep.subr.bf16.mxu0 0
        %3991 = vmatpush1.bf16.xpose.msra.mxu0 %v3944
        %3992 = vmatprep.subr.bf16.mxu0 0
        %3993 = vmatpush1.bf16.xpose.msra.mxu0 %v3947
        %3994 = vmatprep.subr.bf16.mxu0 0
        %3995 = vmatpush1.bf16.xpose.msra.mxu0 %v3950
        %3996 = vmatprep.subr.bf16.mxu0 0
        %3997 = vmatpush1.bf16.xpose.msra.mxu0 %v3953
        %3998 = vmatprep.subr.bf16.mxu0 0
        %3999 = vmatpush1.bf16.xpose.msra.mxu0 %v3956
        %4000 = vmatprep.subr.bf16.mxu0 0
        %4001 = vmatpush1.bf16.xpose.msra.mxu0 %v3959
        %4002 = vmatprep.subr.bf16.mxu0 0
        %4003 = vmatpush1.bf16.xpose.msra.mxu0 %v3962
        %4004 = vmatprep.subr.bf16.mxu0 0
        %4005 = vmatpush1.bf16.xpose.msra.mxu0 %v3965
        %4006 = vmatprep.subr.bf16.mxu0 0
        %4007 = vmatpush1.bf16.xpose.msra.mxu0 %v3968
        %4008 = vmatprep.subr.bf16.mxu0 0
        %4009 = vmatpush1.bf16.xpose.msra.mxu0 %v3971
        %4010 = vmatprep.subr.bf16.mxu0 0
        %4011 = vmatpush1.bf16.xpose.msra.mxu0 %v3974
        %4012 = vmatprep.subr.bf16.mxu0 0
        %4013 = vmatpush1.bf16.xpose.msra.mxu0 %v3977
        %4014 = vmatprep.subr.bf16.mxu0 0
        %4015 = vmatpush1.bf16.xpose.msra.mxu0 %v3980
        %4016 = vmatprep.subr.bf16.mxu0 0
        %4017 = vmatpush1.bf16.xpose.msra.mxu0 %v3983
        %4018 = vmatprep.subr.bf16.mxu0 0
        %4019 = vmatpush1.bf16.xpose.msra.mxu0 %v3986
        %4020 = vmatprep.mubr.bf16.mxu0 0
        %4021 = vmatmul.mubr.bf16.gmra.mrb[0].mxu0 %v3917
        %v4022 = vpop.f32.mrb[0].mxu0
        %v4023 = vadd.f32 %v3821, %v4022
        %v4024 = vpop.f32.mrb[0].mxu0
        %v4025 = vadd.f32 %v3825, %v4024
        %v4026 = vpop.f32.mrb[0].mxu0
        %v4027 = vadd.f32 %v3821, %v4026
        %v4028 = vpop.f32.mrb[0].mxu0
        %v4029 = vadd.f32 %v3825, %v4028
        %4030 = vmatprep.mubr.bf16.mxu0 0
        %4031 = vmatmul.mubr.bf16.gmra.mrb[0].mxu0 %v3920
        %v4032 = vpop.f32.mrb[0].mxu0
        %v4033 = vadd.f32 %v3821, %v4032
        %v4034 = vpop.f32.mrb[0].mxu0
        %v4035 = vadd.f32 %v3825, %v4034
        %v4036 = vpop.f32.mrb[0].mxu0
        %v4037 = vadd.f32 %v3821, %v4036
        %v4038 = vpop.f32.mrb[0].mxu0
        %v4039 = vadd.f32 %v3825, %v4038
        %4040 = vmatprep.mubr.bf16.mxu0 0
        %4041 = vmatmul.mubr.bf16.gmra.mrb[0].mxu0 %v3923
        %v4042 = vpop.f32.mrb[0].mxu0
        %v4043 = vadd.f32 %v3821, %v4042
        %v4044 = vpop.f32.mrb[0].mxu0
        %v4045 = vadd.f32 %v3825, %v4044
        %v4046 = vpop.f32.mrb[0].mxu0
        %v4047 = vadd.f32 %v3821, %v4046
        %v4048 = vpop.f32.mrb[0].mxu0
        %v4049 = vadd.f32 %v3825, %v4048
        %4050 = vmatprep.mubr.bf16.mxu0 0
        %4051 = vmatmul.mubr.bf16.gmra.mrb[0].mxu0 %v3926
        %v4052 = vpop.f32.mrb[0].mxu0
        %v4053 = vadd.f32 %v3821, %v4052
        %v4054 = vpop.f32.mrb[0].mxu0
        %v4055 = vadd.f32 %v3825, %v4054
        %v4056 = vpop.f32.mrb[0].mxu0
        %v4057 = vadd.f32 %v3821, %v4056
        %v4058 = vpop.f32.mrb[0].mxu0
        %v4059 = vadd.f32 %v3825, %v4058
        %4060 = vmatprep.mubr.bf16.mxu0 0
        %4061 = vmatmul.mubr.bf16.gmra.mrb[0].mxu0 %v3929
        %v4062 = vpop.f32.mrb[0].mxu0
        %v4063 = vadd.f32 %v3821, %v4062
        %v4064 = vpop.f32.mrb[0].mxu0
        %v4065 = vadd.f32 %v3825, %v4064
        %v4066 = vpop.f32.mrb[0].mxu0
        %v4067 = vadd.f32 %v3821, %v4066
        %v4068 = vpop.f32.mrb[0].mxu0
        %v4069 = vadd.f32 %v3825, %v4068
        %4070 = vmatprep.mubr.bf16.mxu0 0
        %4071 = vmatmul.mubr.bf16.gmra.mrb[0].mxu0 %v3932
        %v4072 = vpop.f32.mrb[0].mxu0
        %v4073 = vadd.f32 %v3821, %v4072
        %v4074 = vpop.f32.mrb[0].mxu0
        %v4075 = vadd.f32 %v3825, %v4074
        %v4076 = vpop.f32.mrb[0].mxu0
        %v4077 = vadd.f32 %v3821, %v4076
        %v4078 = vpop.f32.mrb[0].mxu0
        %v4079 = vadd.f32 %v3825, %v4078
        %4080 = vmatprep.mubr.bf16.mxu0 0
        %4081 = vmatmul.mubr.bf16.gmra.mrb[0].mxu0 %v3935
        %v4082 = vpop.f32.mrb[0].mxu0
        %v4083 = vadd.f32 %v3821, %v4082
        %v4084 = vpop.f32.mrb[0].mxu0
        %v4085 = vadd.f32 %v3825, %v4084
        %v4086 = vpop.f32.mrb[0].mxu0
        %v4087 = vadd.f32 %v3821, %v4086
        %v4088 = vpop.f32.mrb[0].mxu0
        %v4089 = vadd.f32 %v3825, %v4088
        %4090 = vmatprep.mubr.bf16.mxu0 0
        %4091 = vmatmul.mubr.bf16.gmra.mrb[0].mxu0 %v3938
        %v4092 = vpop.f32.mrb[0].mxu0
        %v4093 = vadd.f32 %v3821, %v4092
        %v4094 = vpop.f32.mrb[0].mxu0
        %v4095 = vadd.f32 %v3825, %v4094
        %v4096 = vpop.f32.mrb[0].mxu0
        %v4097 = vadd.f32 %v3821, %v4096
        %v4098 = vpop.f32.mrb[0].mxu0
        %v4099 = vadd.f32 %v3825, %v4098
        %4100 = vdwg.mxu0
        %v4101 = vmax.f32 %v4023, %v4025
        %4102 = vmax.xlane.f32.xlu0 %v4101
        %v4103 = vpop.xlane.xlu0 %4102
        %v4104 = vmax.f32 %v4027, %v4029
        %4105 = vmax.xlane.f32.xlu0 %v4104
        %v4106 = vpop.xlane.xlu0 %4105
        %v4107 = vmax.f32 %v4033, %v4035
        %4108 = vmax.xlane.f32.xlu0 %v4107
        %v4109 = vpop.xlane.xlu0 %4108
        %v4110 = vmax.f32 %v4037, %v4039
        %4111 = vmax.xlane.f32.xlu0 %v4110
        %v4112 = vpop.xlane.xlu0 %4111
        %v4113 = vmax.f32 %v4043, %v4045
        %4114 = vmax.xlane.f32.xlu0 %v4113
        %v4115 = vpop.xlane.xlu0 %4114
        %v4116 = vmax.f32 %v4047, %v4049
        %4117 = vmax.xlane.f32.xlu0 %v4116
        %v4118 = vpop.xlane.xlu0 %4117
        %v4119 = vmax.f32 %v4053, %v4055
        %4120 = vmax.xlane.f32.xlu0 %v4119
        %v4121 = vpop.xlane.xlu0 %4120
        %v4122 = vmax.f32 %v4057, %v4059
        %4123 = vmax.xlane.f32.xlu0 %v4122
        %v4124 = vpop.xlane.xlu0 %4123
        %v4125 = vmax.f32 %v4063, %v4065
        %4126 = vmax.xlane.f32.xlu0 %v4125
        %v4127 = vpop.xlane.xlu0 %4126
        %v4128 = vmax.f32 %v4067, %v4069
        %4129 = vmax.xlane.f32.xlu0 %v4128
        %v4130 = vpop.xlane.xlu0 %4129
        %v4131 = vmax.f32 %v4073, %v4075
        %4132 = vmax.xlane.f32.xlu0 %v4131
        %v4133 = vpop.xlane.xlu0 %4132
        %v4134 = vmax.f32 %v4077, %v4079
        %4135 = vmax.xlane.f32.xlu0 %v4134
        %v4136 = vpop.xlane.xlu0 %4135
        %v4137 = vmax.f32 %v4083, %v4085
        %4138 = vmax.xlane.f32.xlu0 %v4137
        %v4139 = vpop.xlane.xlu0 %4138
        %v4140 = vmax.f32 %v4087, %v4089
        %4141 = vmax.xlane.f32.xlu0 %v4140
        %v4142 = vpop.xlane.xlu0 %4141
        %v4143 = vmax.f32 %v4093, %v4095
        %4144 = vmax.xlane.f32.xlu0 %v4143
        %v4145 = vpop.xlane.xlu0 %4144
        %v4146 = vmax.f32 %v4097, %v4099
        %4147 = vmax.xlane.f32.xlu0 %v4146
        %v4148 = vpop.xlane.xlu0 %4147
        %v4149 = vsub.f32 %v4023, %v4103
        %v4150 = vsub.f32 %v4025, %v4103
        %v4151 = vsub.f32 %v4027, %v4106
        %v4152 = vsub.f32 %v4029, %v4106
        %v4153 = vsub.f32 %v4033, %v4109
        %v4154 = vsub.f32 %v4035, %v4109
        %v4155 = vsub.f32 %v4037, %v4112
        %v4156 = vsub.f32 %v4039, %v4112
        %v4157 = vsub.f32 %v4043, %v4115
        %v4158 = vsub.f32 %v4045, %v4115
        %v4159 = vsub.f32 %v4047, %v4118
        %v4160 = vsub.f32 %v4049, %v4118
        %v4161 = vsub.f32 %v4053, %v4121
        %v4162 = vsub.f32 %v4055, %v4121
        %v4163 = vsub.f32 %v4057, %v4124
        %v4164 = vsub.f32 %v4059, %v4124
        %v4165 = vsub.f32 %v4063, %v4127
        %v4166 = vsub.f32 %v4065, %v4127
        %v4167 = vsub.f32 %v4067, %v4130
        %v4168 = vsub.f32 %v4069, %v4130
        %v4169 = vsub.f32 %v4073, %v4133
        %v4170 = vsub.f32 %v4075, %v4133
        %v4171 = vsub.f32 %v4077, %v4136
        %v4172 = vsub.f32 %v4079, %v4136
        %v4173 = vsub.f32 %v4083, %v4139
        %v4174 = vsub.f32 %v4085, %v4139
        %v4175 = vsub.f32 %v4087, %v4142
        %v4176 = vsub.f32 %v4089, %v4142
        %v4177 = vsub.f32 %v4093, %v4145
        %v4178 = vsub.f32 %v4095, %v4145
        %v4179 = vsub.f32 %v4097, %v4148
        %v4180 = vsub.f32 %v4099, %v4148
        %v4181 = vmul.f32 %v4149, 1.442695
        %v4182 = vpow.pop %v4181
        %v4183 = vmul.f32 %v4150, 1.442695
        %v4184 = vpow.pop %v4183
        %v4185 = vmul.f32 %v4151, 1.442695
        %v4186 = vpow.pop %v4185
        %v4187 = vmul.f32 %v4152, 1.442695
        %v4188 = vpow.pop %v4187
        %v4189 = vmul.f32 %v4153, 1.442695
        %v4190 = vpow.pop %v4189
        %v4191 = vmul.f32 %v4154, 1.442695
        %v4192 = vpow.pop %v4191
        %v4193 = vmul.f32 %v4155, 1.442695
        %v4194 = vpow.pop %v4193
        %v4195 = vmul.f32 %v4156, 1.442695
        %v4196 = vpow.pop %v4195
        %v4197 = vmul.f32 %v4157, 1.442695
        %v4198 = vpow.pop %v4197
        %v4199 = vmul.f32 %v4158, 1.442695
        %v4200 = vpow.pop %v4199
        %v4201 = vmul.f32 %v4159, 1.442695
        %v4202 = vpow.pop %v4201
        %v4203 = vmul.f32 %v4160, 1.442695
        %v4204 = vpow.pop %v4203
        %v4205 = vmul.f32 %v4161, 1.442695
        %v4206 = vpow.pop %v4205
        %v4207 = vmul.f32 %v4162, 1.442695
        %v4208 = vpow.pop %v4207
        %v4209 = vmul.f32 %v4163, 1.442695
        %v4210 = vpow.pop %v4209
        %v4211 = vmul.f32 %v4164, 1.442695
        %v4212 = vpow.pop %v4211
        %v4213 = vmul.f32 %v4165, 1.442695
        %v4214 = vpow.pop %v4213
        %v4215 = vmul.f32 %v4166, 1.442695
        %v4216 = vpow.pop %v4215
        %v4217 = vmul.f32 %v4167, 1.442695
        %v4218 = vpow.pop %v4217
        %v4219 = vmul.f32 %v4168, 1.442695
        %v4220 = vpow.pop %v4219
        %v4221 = vmul.f32 %v4169, 1.442695
        %v4222 = vpow.pop %v4221
        %v4223 = vmul.f32 %v4170, 1.442695
        %v4224 = vpow.pop %v4223
        %v4225 = vmul.f32 %v4171, 1.442695
        %v4226 = vpow.pop %v4225
        %v4227 = vmul.f32 %v4172, 1.442695
        %v4228 = vpow.pop %v4227
        %v4229 = vmul.f32 %v4173, 1.442695
        %v4230 = vpow.pop %v4229
        %v4231 = vmul.f32 %v4174, 1.442695
        %v4232 = vpow.pop %v4231
        %v4233 = vmul.f32 %v4175, 1.442695
        %v4234 = vpow.pop %v4233
        %v4235 = vmul.f32 %v4176, 1.442695
        %v4236 = vpow.pop %v4235
        %v4237 = vmul.f32 %v4177, 1.442695
        %v4238 = vpow.pop %v4237
        %v4239 = vmul.f32 %v4178, 1.442695
        %v4240 = vpow.pop %v4239
        %v4241 = vmul.f32 %v4179, 1.442695
        %v4242 = vpow.pop %v4241
        %v4243 = vmul.f32 %v4180, 1.442695
        %v4244 = vpow.pop %v4243
        %v4245 = vadd.f32 %v4182, %v4184
        %4246 = vadd.xlane.f32.xlu0 %v4245
        %v4247 = vpop.xlane.xlu0 %4246
        %v4248 = vadd.f32 %v4186, %v4188
        %4249 = vadd.xlane.f32.xlu0 %v4248
        %v4250 = vpop.xlane.xlu0 %4249
        %v4251 = vadd.f32 %v4190, %v4192
        %4252 = vadd.xlane.f32.xlu0 %v4251
        %v4253 = vpop.xlane.xlu0 %4252
        %v4254 = vadd.f32 %v4194, %v4196
        %4255 = vadd.xlane.f32.xlu0 %v4254
        %v4256 = vpop.xlane.xlu0 %4255
        %v4257 = vadd.f32 %v4198, %v4200
        %4258 = vadd.xlane.f32.xlu0 %v4257
        %v4259 = vpop.xlane.xlu0 %4258
        %v4260 = vadd.f32 %v4202, %v4204
        %4261 = vadd.xlane.f32.xlu0 %v4260
        %v4262 = vpop.xlane.xlu0 %4261
        %v4263 = vadd.f32 %v4206, %v4208
        %4264 = vadd.xlane.f32.xlu0 %v4263
        %v4265 = vpop.xlane.xlu0 %4264
        %v4266 = vadd.f32 %v4210, %v4212
        %4267 = vadd.xlane.f32.xlu0 %v4266
        %v4268 = vpop.xlane.xlu0 %4267
        %v4269 = vadd.f32 %v4214, %v4216
        %4270 = vadd.xlane.f32.xlu0 %v4269
        %v4271 = vpop.xlane.xlu0 %4270
        %v4272 = vadd.f32 %v4218, %v4220
        %4273 = vadd.xlane.f32.xlu0 %v4272
        %v4274 = vpop.xlane.xlu0 %4273
        %v4275 = vadd.f32 %v4222, %v4224
        %4276 = vadd.xlane.f32.xlu0 %v4275
        %v4277 = vpop.xlane.xlu0 %4276
        %v4278 = vadd.f32 %v4226, %v4228
        %4279 = vadd.xlane.f32.xlu0 %v4278
        %v4280 = vpop.xlane.xlu0 %4279
        %v4281 = vadd.f32 %v4230, %v4232
        %4282 = vadd.xlane.f32.xlu0 %v4281
        %v4283 = vpop.xlane.xlu0 %4282
        %v4284 = vadd.f32 %v4234, %v4236
        %4285 = vadd.xlane.f32.xlu0 %v4284
        %v4286 = vpop.xlane.xlu0 %4285
        %v4287 = vadd.f32 %v4238, %v4240
        %4288 = vadd.xlane.f32.xlu0 %v4287
        %v4289 = vpop.xlane.xlu0 %4288
        %v4290 = vadd.f32 %v4242, %v4244
        %4291 = vadd.xlane.f32.xlu0 %v4290
        %v4292 = vpop.xlane.xlu0 %4291
        %v4293 = vpack.c.bf16 %v4186, %v4182
        %v4294 = vpack.c.bf16 %v4188, %v4184
        %v4295 = vpack.c.bf16 %v4194, %v4190
        %v4296 = vpack.c.bf16 %v4196, %v4192
        %v4297 = vpack.c.bf16 %v4202, %v4198
        %v4298 = vpack.c.bf16 %v4204, %v4200
        %v4299 = vpack.c.bf16 %v4210, %v4206
        %v4300 = vpack.c.bf16 %v4212, %v4208
        %v4301 = vpack.c.bf16 %v4218, %v4214
        %v4302 = vpack.c.bf16 %v4220, %v4216
        %v4303 = vpack.c.bf16 %v4226, %v4222
        %v4304 = vpack.c.bf16 %v4228, %v4224
        %v4305 = vpack.c.bf16 %v4234, %v4230
        %v4306 = vpack.c.bf16 %v4236, %v4232
        %v4307 = vpack.c.bf16 %v4242, %v4238
        %v4308 = vpack.c.bf16 %v4244, %v4240
        %4309 = vrot.lane.b32.xlu0 %v3767, 32
        %v4310 = vpop.permute.xlu0 %4309
        %4311 = vrot.lane.b32.xlu0 %v3768, 32
        %v4312 = vpop.permute.xlu0 %4311
        %4313 = vrot.lane.b32.xlu0 %v3769, 32
        %v4314 = vpop.permute.xlu0 %4313
        %4315 = vrot.lane.b32.xlu0 %v3770, 32
        %v4316 = vpop.permute.xlu0 %4315
        %4317 = vrot.lane.b32.xlu0 %v3771, 32
        %v4318 = vpop.permute.xlu0 %4317
        %4319 = vrot.lane.b32.xlu0 %v3772, 32
        %v4320 = vpop.permute.xlu0 %4319
        %4321 = vrot.lane.b32.xlu0 %v3773, 32
        %v4322 = vpop.permute.xlu0 %4321
        %4323 = vrot.lane.b32.xlu0 %v3774, 32
        %v4324 = vpop.permute.xlu0 %4323
        %4325 = vrot.lane.b32.xlu0 %v3807, 32
        %v4326 = vpop.permute.xlu0 %4325
        %4327 = vrot.lane.b32.xlu0 %v3808, 32
        %v4328 = vpop.permute.xlu0 %4327
        %4329 = vrot.lane.b32.xlu0 %v3809, 32
        %v4330 = vpop.permute.xlu0 %4329
        %4331 = vrot.lane.b32.xlu0 %v3810, 32
        %v4332 = vpop.permute.xlu0 %4331
        %4333 = vrot.lane.b32.xlu0 %v3811, 32
        %v4334 = vpop.permute.xlu0 %4333
        %4335 = vrot.lane.b32.xlu0 %v3812, 32
        %v4336 = vpop.permute.xlu0 %4335
        %4337 = vrot.lane.b32.xlu0 %v3813, 32
        %v4338 = vpop.permute.xlu0 %4337
        %4339 = vrot.lane.b32.xlu0 %v3814, 32
        %v4340 = vpop.permute.xlu0 %4339
        %4357 = vmatprep.subr.bf16.mxu0 0
        %4358 = vmatpush1.bf16.msra.mxu0 %v4310
        %4359 = vmatprep.subr.bf16.mxu0 0
        %4360 = vmatpush1.bf16.msra.mxu0 %v4312
        %4361 = vmatprep.subr.bf16.mxu0 0
        %4362 = vmatpush1.bf16.msra.mxu0 %v4314
        %4363 = vmatprep.subr.bf16.mxu0 0
        %4364 = vmatpush1.bf16.msra.mxu0 %v4316
        %4365 = vmatprep.subr.bf16.mxu0 0
        %4366 = vmatpush1.bf16.msra.mxu0 %v4318
        %4367 = vmatprep.subr.bf16.mxu0 0
        %4368 = vmatpush1.bf16.msra.mxu0 %v4320
        %4369 = vmatprep.subr.bf16.mxu0 0
        %4370 = vmatpush1.bf16.msra.mxu0 %v4322
        %4371 = vmatprep.subr.bf16.mxu0 0
        %4372 = vmatpush1.bf16.msra.mxu0 %v4324
        %4373 = vmatprep.subr.bf16.mxu0 0
        %4374 = vmatpush1.bf16.msra.mxu0 %v4326
        %4375 = vmatprep.subr.bf16.mxu0 0
        %4376 = vmatpush1.bf16.msra.mxu0 %v4328
        %4377 = vmatprep.subr.bf16.mxu0 0
        %4378 = vmatpush1.bf16.msra.mxu0 %v4330
        %4379 = vmatprep.subr.bf16.mxu0 0
        %4380 = vmatpush1.bf16.msra.mxu0 %v4332
        %4381 = vmatprep.subr.bf16.mxu0 0
        %4382 = vmatpush1.bf16.msra.mxu0 %v4334
        %4383 = vmatprep.subr.bf16.mxu0 0
        %4384 = vmatpush1.bf16.msra.mxu0 %v4336
        %4385 = vmatprep.subr.bf16.mxu0 0
        %4386 = vmatpush1.bf16.msra.mxu0 %v4338
        %4387 = vmatprep.subr.bf16.mxu0 0
        %4388 = vmatpush1.bf16.msra.mxu0 %v4340
        %4389 = vmatprep.mubr.bf16.mxu0 %v4294
        %4390 = vmatmul.mubr.bf16.gmra.mrb[0].mxu0 %v4293
        %v4391 = vpop.f32.mrb[0].mxu0
        %v4392 = vadd.f32 0.0, %v4391
        %v4393 = vpop.f32.mrb[0].mxu0
        %v4394 = vpop.f32.mrb[0].mxu0
        %v4395 = vadd.f32 0.0, %v4394
        %v4396 = vpop.f32.mrb[0].mxu0
        %4397 = vmatprep.mubr.bf16.mxu0 %v4296
        %4398 = vmatmul.mubr.bf16.gmra.mrb[0].mxu0 %v4295
        %v4399 = vpop.f32.mrb[0].mxu0
        %v4400 = vadd.f32 0.0, %v4399
        %v4401 = vpop.f32.mrb[0].mxu0
        %v4402 = vpop.f32.mrb[0].mxu0
        %v4403 = vadd.f32 0.0, %v4402
        %v4404 = vpop.f32.mrb[0].mxu0
        %4405 = vmatprep.mubr.bf16.mxu0 %v4298
        %4406 = vmatmul.mubr.bf16.gmra.mrb[0].mxu0 %v4297
        %v4407 = vpop.f32.mrb[0].mxu0
        %v4408 = vadd.f32 0.0, %v4407
        %v4409 = vpop.f32.mrb[0].mxu0
        %v4410 = vpop.f32.mrb[0].mxu0
        %v4411 = vadd.f32 0.0, %v4410
        %v4412 = vpop.f32.mrb[0].mxu0
        %4413 = vmatprep.mubr.bf16.mxu0 %v4300
        %4414 = vmatmul.mubr.bf16.gmra.mrb[0].mxu0 %v4299
        %v4415 = vpop.f32.mrb[0].mxu0
        %v4416 = vadd.f32 0.0, %v4415
        %v4417 = vpop.f32.mrb[0].mxu0
        %v4418 = vpop.f32.mrb[0].mxu0
        %v4419 = vadd.f32 0.0, %v4418
        %v4420 = vpop.f32.mrb[0].mxu0
        %4421 = vmatprep.mubr.bf16.mxu0 %v4302
        %4422 = vmatmul.mubr.bf16.gmra.mrb[0].mxu0 %v4301
        %v4423 = vpop.f32.mrb[0].mxu0
        %v4424 = vadd.f32 0.0, %v4423
        %v4425 = vpop.f32.mrb[0].mxu0
        %v4426 = vpop.f32.mrb[0].mxu0
        %v4427 = vadd.f32 0.0, %v4426
        %v4428 = vpop.f32.mrb[0].mxu0
        %4429 = vmatprep.mubr.bf16.mxu0 %v4304
        %4430 = vmatmul.mubr.bf16.gmra.mrb[0].mxu0 %v4303
        %v4431 = vpop.f32.mrb[0].mxu0
        %v4432 = vadd.f32 0.0, %v4431
        %v4433 = vpop.f32.mrb[0].mxu0
        %v4434 = vpop.f32.mrb[0].mxu0
        %v4435 = vadd.f32 0.0, %v4434
        %v4436 = vpop.f32.mrb[0].mxu0
        %4437 = vmatprep.mubr.bf16.mxu0 %v4306
        %4438 = vmatmul.mubr.bf16.gmra.mrb[0].mxu0 %v4305
        %v4439 = vpop.f32.mrb[0].mxu0
        %v4440 = vadd.f32 0.0, %v4439
        %v4441 = vpop.f32.mrb[0].mxu0
        %v4442 = vpop.f32.mrb[0].mxu0
        %v4443 = vadd.f32 0.0, %v4442
        %v4444 = vpop.f32.mrb[0].mxu0
        %4445 = vmatprep.mubr.bf16.mxu0 %v4308
        %4446 = vmatmul.mubr.bf16.gmra.mrb[0].mxu0 %v4307
        %v4447 = vpop.f32.mrb[0].mxu0
        %v4448 = vadd.f32 0.0, %v4447
        %v4449 = vpop.f32.mrb[0].mxu0
        %v4450 = vpop.f32.mrb[0].mxu0
        %v4451 = vadd.f32 0.0, %v4450
        %v4452 = vpop.f32.mrb[0].mxu0
        %4453 = vdwg.mxu0
        %s4454 = sadd.s32 %s1357, 3
        %s4455 = sld [smem:[#allocation2 + %s4454]]
        %v4456 = vrcp.pop %v4247
        %v4457 = vrcp.pop %v4250
        %v4458 = vrcp.pop %v4253
        %v4459 = vrcp.pop %v4256
        %v4460 = vrcp.pop %v4259
        %v4461 = vrcp.pop %v4262
        %v4462 = vrcp.pop %v4265
        %v4463 = vrcp.pop %v4268
        %v4464 = vrcp.pop %v4271
        %v4465 = vrcp.pop %v4274
        %v4466 = vrcp.pop %v4277
        %v4467 = vrcp.pop %v4280
        %v4468 = vrcp.pop %v4283
        %v4469 = vrcp.pop %v4286
        %v4470 = vrcp.pop %v4289
        %v4471 = vrcp.pop %v4292
        %v4472 = vstv %s4455
        %v4473 = vmul.f32 %v4472, %v4456
        %v4474 = vmul.f32 %v4472, %v4457
        %v4475 = vmul.f32 %v4472, %v4458
        %v4476 = vmul.f32 %v4472, %v4459
        %v4477 = vmul.f32 %v4472, %v4460
        %v4478 = vmul.f32 %v4472, %v4461
        %v4479 = vmul.f32 %v4472, %v4462
        %v4480 = vmul.f32 %v4472, %v4463
        %v4481 = vmul.f32 %v4472, %v4464
        %v4482 = vmul.f32 %v4472, %v4465
        %v4483 = vmul.f32 %v4472, %v4466
        %v4484 = vmul.f32 %v4472, %v4467
        %v4485 = vmul.f32 %v4472, %v4468
        %v4486 = vmul.f32 %v4472, %v4469
        %v4487 = vmul.f32 %v4472, %v4470
        %v4488 = vmul.f32 %v4472, %v4471
        %v4489 = vmul.f32 %v4392, %v4473
        %v4490 = vmul.f32 %v4395, %v4474
        %v4491 = vmul.f32 %v4400, %v4475
        %v4492 = vmul.f32 %v4403, %v4476
        %v4493 = vmul.f32 %v4408, %v4477
        %v4494 = vmul.f32 %v4411, %v4478
        %v4495 = vmul.f32 %v4416, %v4479
        %v4496 = vmul.f32 %v4419, %v4480
        %v4497 = vmul.f32 %v4424, %v4481
        %v4498 = vmul.f32 %v4427, %v4482
        %v4499 = vmul.f32 %v4432, %v4483
        %v4500 = vmul.f32 %v4435, %v4484
        %v4501 = vmul.f32 %v4440, %v4485
        %v4502 = vmul.f32 %v4443, %v4486
        %v4503 = vmul.f32 %v4448, %v4487
        %v4504 = vmul.f32 %v4451, %v4488
        %v4505 = vpack.c.bf16 %v4490, %v4489
        %v4506 = vpack.c.bf16 %v4492, %v4491
        %v4507 = vpack.c.bf16 %v4494, %v4493
        %v4508 = vpack.c.bf16 %v4496, %v4495
        %v4509 = vpack.c.bf16 %v4498, %v4497
        %v4510 = vpack.c.bf16 %v4500, %v4499
        %v4511 = vpack.c.bf16 %v4502, %v4501
        %v4512 = vpack.c.bf16 %v4504, %v4503
        %v4521 = vunpack.c.l.b16 %v4505
        %v4522 = vunpack.c.h.b16 %v4505
        %v4523 = vunpack.c.l.b16 %v4506
        %v4524 = vunpack.c.h.b16 %v4506
        %v4525 = vunpack.c.l.b16 %v4507
        %v4526 = vunpack.c.h.b16 %v4507
        %v4527 = vunpack.c.l.b16 %v4508
        %v4528 = vunpack.c.h.b16 %v4508
        %v4529 = vunpack.c.l.b16 %v4509
        %v4530 = vunpack.c.h.b16 %v4509
        %v4531 = vunpack.c.l.b16 %v4510
        %v4532 = vunpack.c.h.b16 %v4510
        %v4533 = vunpack.c.l.b16 %v4511
        %v4534 = vunpack.c.h.b16 %v4511
        %v4535 = vunpack.c.l.b16 %v4512
        %v4536 = vunpack.c.h.b16 %v4512
        %v4537 = vpack.c.b16 %v4521, %v4521
        %v4538 = vpack.c.b16 %v4522, %v4522
        %v4539 = vpack.c.b16 %v4523, %v4523
        %v4540 = vpack.c.b16 %v4524, %v4524
        %v4541 = vpack.c.b16 %v4525, %v4525
        %v4542 = vpack.c.b16 %v4526, %v4526
        %v4543 = vpack.c.b16 %v4527, %v4527
        %v4544 = vpack.c.b16 %v4528, %v4528
        %v4545 = vpack.c.b16 %v4529, %v4529
        %v4546 = vpack.c.b16 %v4530, %v4530
        %v4547 = vpack.c.b16 %v4531, %v4531
        %v4548 = vpack.c.b16 %v4532, %v4532
        %v4549 = vpack.c.b16 %v4533, %v4533
        %v4550 = vpack.c.b16 %v4534, %v4534
        %v4551 = vpack.c.b16 %v4535, %v4535
        %v4552 = vpack.c.b16 %v4536, %v4536
        %4553 = vrot.lane.b32.xlu0 %v4537, 96
        %v4554 = vpop.permute.xlu0 %4553
        %4555 = vrot.lane.b32.xlu0 %v4538, 96
        %v4556 = vpop.permute.xlu0 %4555
        %4557 = vrot.lane.b32.xlu0 %v4539, 96
        %v4558 = vpop.permute.xlu0 %4557
        %4559 = vrot.lane.b32.xlu0 %v4540, 96
        %v4560 = vpop.permute.xlu0 %4559
        %4561 = vrot.lane.b32.xlu0 %v4541, 96
        %v4562 = vpop.permute.xlu0 %4561
        %4563 = vrot.lane.b32.xlu0 %v4542, 96
        %v4564 = vpop.permute.xlu0 %4563
        %4565 = vrot.lane.b32.xlu0 %v4543, 96
        %v4566 = vpop.permute.xlu0 %4565
        %4567 = vrot.lane.b32.xlu0 %v4544, 96
        %v4568 = vpop.permute.xlu0 %4567
        %4569 = vrot.lane.b32.xlu0 %v4545, 96
        %v4570 = vpop.permute.xlu0 %4569
        %4571 = vrot.lane.b32.xlu0 %v4546, 96
        %v4572 = vpop.permute.xlu0 %4571
        %4573 = vrot.lane.b32.xlu0 %v4547, 96
        %v4574 = vpop.permute.xlu0 %4573
        %4575 = vrot.lane.b32.xlu0 %v4548, 96
        %v4576 = vpop.permute.xlu0 %4575
        %4577 = vrot.lane.b32.xlu0 %v4549, 96
        %v4578 = vpop.permute.xlu0 %4577
        %4579 = vrot.lane.b32.xlu0 %v4550, 96
        %v4580 = vpop.permute.xlu0 %4579
        %4581 = vrot.lane.b32.xlu0 %v4551, 96
        %v4582 = vpop.permute.xlu0 %4581
        %4583 = vrot.lane.b32.xlu0 %v4552, 96
        %v4584 = vpop.permute.xlu0 %4583
        %vm4601 = vcmask 1044224
        %4602 = vst.msk [vmem:[%s546] sm:$0xf] %vm4601, %v4554
        %4603 = vst.msk [vmem:[%s546 + $0x4] sm:$0xf] %vm4601, %v4556
        %4604 = vst.msk [vmem:[%s546 + $0x8] sm:$0xf] %vm4601, %v4558
        %4605 = vst.msk [vmem:[%s546 + $0xc] sm:$0xf] %vm4601, %v4560
        %4606 = vst.msk [vmem:[%s546 + $0x10] sm:$0xf] %vm4601, %v4562
        %4607 = vst.msk [vmem:[%s546 + $0x14] sm:$0xf] %vm4601, %v4564
        %4608 = vst.msk [vmem:[%s546 + $0x18] sm:$0xf] %vm4601, %v4566
        %4609 = vst.msk [vmem:[%s546 + $0x1c] sm:$0xf] %vm4601, %v4568
        %4610 = vst.msk [vmem:[%s546 + $0x20] sm:$0xf] %vm4601, %v4570
        %4611 = vst.msk [vmem:[%s546 + $0x24] sm:$0xf] %vm4601, %v4572
        %4612 = vst.msk [vmem:[%s546 + $0x28] sm:$0xf] %vm4601, %v4574
        %4613 = vst.msk [vmem:[%s546 + $0x2c] sm:$0xf] %vm4601, %v4576
        %4614 = vst.msk [vmem:[%s546 + $0x30] sm:$0xf] %vm4601, %v4578
        %4615 = vst.msk [vmem:[%s546 + $0x34] sm:$0xf] %vm4601, %v4580
        %4616 = vst.msk [vmem:[%s546 + $0x38] sm:$0xf] %vm4601, %v4582
        %4617 = vst.msk [vmem:[%s546 + $0x3c] sm:$0xf] %vm4601, %v4584
        %s4618 = scalar_lea.vmem %s445, 64 [#allocation6]
        %v4619 = vld [vmem:[%s4618] sm:$0xf]
        %v4620 = vld [vmem:[%s4618 + $0x4] sm:$0xf]
        %v4621 = vld [vmem:[%s4618 + $0x8] sm:$0xf]
        %v4622 = vld [vmem:[%s4618 + $0xc] sm:$0xf]
        %v4623 = vld [vmem:[%s4618 + $0x10] sm:$0xf]
        %v4624 = vld [vmem:[%s4618 + $0x14] sm:$0xf]
        %v4625 = vld [vmem:[%s4618 + $0x18] sm:$0xf]
        %v4626 = vld [vmem:[%s4618 + $0x1c] sm:$0xf]
        %v4627 = vld [vmem:[%s4618 + $0x20] sm:$0xf]
        %v4628 = vld [vmem:[%s4618 + $0x24] sm:$0xf]
        %v4629 = vld [vmem:[%s4618 + $0x28] sm:$0xf]
        %v4630 = vld [vmem:[%s4618 + $0x2c] sm:$0xf]
        %v4631 = vld [vmem:[%s4618 + $0x30] sm:$0xf]
        %v4632 = vld [vmem:[%s4618 + $0x34] sm:$0xf]
        %v4633 = vld [vmem:[%s4618 + $0x38] sm:$0xf]
        %v4634 = vld [vmem:[%s4618 + $0x3c] sm:$0xf]
        %s4635 = scalar_lea.vmem %s454, 64 [#allocation7]
        %v4636 = vld [vmem:[%s4635] sm:$0xf]
        %v4637 = vld [vmem:[%s4635 + $0x4] sm:$0xf]
        %v4638 = vld [vmem:[%s4635 + $0x8] sm:$0xf]
        %v4639 = vld [vmem:[%s4635 + $0xc] sm:$0xf]
        %v4640 = vld [vmem:[%s4635 + $0x10] sm:$0xf]
        %v4641 = vld [vmem:[%s4635 + $0x14] sm:$0xf]
        %v4642 = vld [vmem:[%s4635 + $0x18] sm:$0xf]
        %v4643 = vld [vmem:[%s4635 + $0x1c] sm:$0xf]
        %v4644 = vld [vmem:[%s4635 + $0x20] sm:$0xf]
        %v4645 = vld [vmem:[%s4635 + $0x24] sm:$0xf]
        %v4646 = vld [vmem:[%s4635 + $0x28] sm:$0xf]
        %v4647 = vld [vmem:[%s4635 + $0x2c] sm:$0xf]
        %v4648 = vld [vmem:[%s4635 + $0x30] sm:$0xf]
        %v4649 = vld [vmem:[%s4635 + $0x34] sm:$0xf]
        %v4650 = vld [vmem:[%s4635 + $0x38] sm:$0xf]
        %v4651 = vld [vmem:[%s4635 + $0x3c] sm:$0xf]
        %s4652 = scalar_lea.vmem %s472, 64 [#allocation10]
        %v4653 = vld [vmem:[%s4652] sm:$0xf]
        %v4654 = vld [vmem:[%s4652 + $0x4] sm:$0xf]
        %v4655 = vld [vmem:[%s4652 + $0x8] sm:$0xf]
        %v4656 = vld [vmem:[%s4652 + $0xc] sm:$0xf]
        %v4657 = vld [vmem:[%s4652 + $0x10] sm:$0xf]
        %v4658 = vld [vmem:[%s4652 + $0x14] sm:$0xf]
        %v4659 = vld [vmem:[%s4652 + $0x18] sm:$0xf]
        %v4660 = vld [vmem:[%s4652 + $0x1c] sm:$0xf]
        %v4661 = vld [vmem:[%s4652 + $0x20] sm:$0xf]
        %v4662 = vld [vmem:[%s4652 + $0x24] sm:$0xf]
        %v4663 = vld [vmem:[%s4652 + $0x28] sm:$0xf]
        %v4664 = vld [vmem:[%s4652 + $0x2c] sm:$0xf]
        %v4665 = vld [vmem:[%s4652 + $0x30] sm:$0xf]
        %v4666 = vld [vmem:[%s4652 + $0x34] sm:$0xf]
        %v4667 = vld [vmem:[%s4652 + $0x38] sm:$0xf]
        %v4668 = vld [vmem:[%s4652 + $0x3c] sm:$0xf]
        %v4685 = vunpack.c.l.b16 %v4636
        %v4686 = vunpack.c.l.b16 %v4637
        %v4687 = vunpack.c.l.b16 %v4638
        %v4688 = vunpack.c.l.b16 %v4639
        %v4689 = vunpack.c.l.b16 %v4640
        %v4690 = vunpack.c.l.b16 %v4641
        %v4691 = vunpack.c.l.b16 %v4642
        %v4692 = vunpack.c.l.b16 %v4643
        %v4693 = vunpack.c.l.b16 %v4644
        %v4694 = vunpack.c.l.b16 %v4645
        %v4695 = vunpack.c.l.b16 %v4646
        %v4696 = vunpack.c.l.b16 %v4647
        %v4697 = vunpack.c.l.b16 %v4648
        %v4698 = vunpack.c.l.b16 %v4649
        %v4699 = vunpack.c.l.b16 %v4650
        %v4700 = vunpack.c.l.b16 %v4651
        %v4701 = vpack.c.b16 %v4686, %v4685
        %v4702 = vpack.c.b16 %v4688, %v4687
        %v4703 = vpack.c.b16 %v4690, %v4689
        %v4704 = vpack.c.b16 %v4692, %v4691
        %v4705 = vpack.c.b16 %v4694, %v4693
        %v4706 = vpack.c.b16 %v4696, %v4695
        %v4707 = vpack.c.b16 %v4698, %v4697
        %v4708 = vpack.c.b16 %v4700, %v4699
        %v4725 = vunpack.c.l.b16 %v4653
        %v4726 = vunpack.c.l.b16 %v4654
        %v4727 = vunpack.c.l.b16 %v4655
        %v4728 = vunpack.c.l.b16 %v4656
        %v4729 = vunpack.c.l.b16 %v4657
        %v4730 = vunpack.c.l.b16 %v4658
        %v4731 = vunpack.c.l.b16 %v4659
        %v4732 = vunpack.c.l.b16 %v4660
        %v4733 = vunpack.c.l.b16 %v4661
        %v4734 = vunpack.c.l.b16 %v4662
        %v4735 = vunpack.c.l.b16 %v4663
        %v4736 = vunpack.c.l.b16 %v4664
        %v4737 = vunpack.c.l.b16 %v4665
        %v4738 = vunpack.c.l.b16 %v4666
        %v4739 = vunpack.c.l.b16 %v4667
        %v4740 = vunpack.c.l.b16 %v4668
        %v4741 = vpack.c.b16 %v4726, %v4725
        %v4742 = vpack.c.b16 %v4728, %v4727
        %v4743 = vpack.c.b16 %v4730, %v4729
        %v4744 = vpack.c.b16 %v4732, %v4731
        %v4745 = vpack.c.b16 %v4734, %v4733
        %v4746 = vpack.c.b16 %v4736, %v4735
        %v4747 = vpack.c.b16 %v4738, %v4737
        %v4748 = vpack.c.b16 %v4740, %v4739
        %s4749 = scalar_lea.vmem %s463, 64 [#allocation9]
        %v4750 = vld [vmem:[%s4749] sm:$0xf]
        %v4751 = vld [vmem:[%s4749 + $0x4] sm:$0xf]
        %v4752 = vld [vmem:[%s4749 + $0x8] sm:$0xf]
        %v4753 = vld [vmem:[%s4749 + $0xc] sm:$0xf]
        %v4754 = vld [vmem:[%s4749 + $0x10] sm:$0xf]
        %v4755 = vld [vmem:[%s4749 + $0x14] sm:$0xf]
        %v4756 = vld [vmem:[%s4749 + $0x18] sm:$0xf]
        %v4757 = vld [vmem:[%s4749 + $0x1c] sm:$0xf]
        %v4758 = vld [vmem:[%s4749 + $0x20] sm:$0xf]
        %v4759 = vld [vmem:[%s4749 + $0x24] sm:$0xf]
        %v4760 = vld [vmem:[%s4749 + $0x28] sm:$0xf]
        %v4761 = vld [vmem:[%s4749 + $0x2c] sm:$0xf]
        %v4762 = vld [vmem:[%s4749 + $0x30] sm:$0xf]
        %v4763 = vld [vmem:[%s4749 + $0x34] sm:$0xf]
        %v4764 = vld [vmem:[%s4749 + $0x38] sm:$0xf]
        %v4765 = vld [vmem:[%s4749 + $0x3c] sm:$0xf]
        %s4766 = scalar_lea.vmem %s481, 64 [#allocation12]
        %v4767 = vld [vmem:[%s4766] sm:$0xf]
        %v4768 = vld [vmem:[%s4766 + $0x4] sm:$0xf]
        %v4769 = vld [vmem:[%s4766 + $0x8] sm:$0xf]
        %v4770 = vld [vmem:[%s4766 + $0xc] sm:$0xf]
        %v4771 = vld [vmem:[%s4766 + $0x10] sm:$0xf]
        %v4772 = vld [vmem:[%s4766 + $0x14] sm:$0xf]
        %v4773 = vld [vmem:[%s4766 + $0x18] sm:$0xf]
        %v4774 = vld [vmem:[%s4766 + $0x1c] sm:$0xf]
        %v4775 = vld [vmem:[%s4766 + $0x20] sm:$0xf]
        %v4776 = vld [vmem:[%s4766 + $0x24] sm:$0xf]
        %v4777 = vld [vmem:[%s4766 + $0x28] sm:$0xf]
        %v4778 = vld [vmem:[%s4766 + $0x2c] sm:$0xf]
        %v4779 = vld [vmem:[%s4766 + $0x30] sm:$0xf]
        %v4780 = vld [vmem:[%s4766 + $0x34] sm:$0xf]
        %v4781 = vld [vmem:[%s4766 + $0x38] sm:$0xf]
        %v4782 = vld [vmem:[%s4766 + $0x3c] sm:$0xf]
        %v4799 = vunpack.c.l.b16 %v4750
        %v4800 = vunpack.c.l.b16 %v4751
        %v4801 = vunpack.c.l.b16 %v4752
        %v4802 = vunpack.c.l.b16 %v4753
        %v4803 = vunpack.c.l.b16 %v4754
        %v4804 = vunpack.c.l.b16 %v4755
        %v4805 = vunpack.c.l.b16 %v4756
        %v4806 = vunpack.c.l.b16 %v4757
        %v4807 = vunpack.c.l.b16 %v4758
        %v4808 = vunpack.c.l.b16 %v4759
        %v4809 = vunpack.c.l.b16 %v4760
        %v4810 = vunpack.c.l.b16 %v4761
        %v4811 = vunpack.c.l.b16 %v4762
        %v4812 = vunpack.c.l.b16 %v4763
        %v4813 = vunpack.c.l.b16 %v4764
        %v4814 = vunpack.c.l.b16 %v4765
        %v4815 = vpack.c.b16 %v4800, %v4799
        %v4816 = vpack.c.b16 %v4802, %v4801
        %v4817 = vpack.c.b16 %v4804, %v4803
        %v4818 = vpack.c.b16 %v4806, %v4805
        %v4819 = vpack.c.b16 %v4808, %v4807
        %v4820 = vpack.c.b16 %v4810, %v4809
        %v4821 = vpack.c.b16 %v4812, %v4811
        %v4822 = vpack.c.b16 %v4814, %v4813
        %v4847 = vunpack.c.l.b16 %v4767
        %v4848 = vunpack.c.l.b16 %v4768
        %v4849 = vunpack.c.l.b16 %v4769
        %v4850 = vunpack.c.l.b16 %v4770
        %v4851 = vunpack.c.l.b16 %v4771
        %v4852 = vunpack.c.l.b16 %v4772
        %v4853 = vunpack.c.l.b16 %v4773
        %v4854 = vunpack.c.l.b16 %v4774
        %v4855 = vunpack.c.l.b16 %v4775
        %v4856 = vunpack.c.l.b16 %v4776
        %v4857 = vunpack.c.l.b16 %v4777
        %v4858 = vunpack.c.l.b16 %v4778
        %v4859 = vunpack.c.l.b16 %v4779
        %v4860 = vunpack.c.l.b16 %v4780
        %v4861 = vunpack.c.l.b16 %v4781
        %v4862 = vunpack.c.l.b16 %v4782
        %v4863 = vpack.c.b16 %v4848, %v4847
        %v4864 = vpack.c.b16 %v4850, %v4849
        %v4865 = vpack.c.b16 %v4852, %v4851
        %v4866 = vpack.c.b16 %v4854, %v4853
        %v4867 = vpack.c.b16 %v4856, %v4855
        %v4868 = vpack.c.b16 %v4858, %v4857
        %v4869 = vpack.c.b16 %v4860, %v4859
        %v4870 = vpack.c.b16 %v4862, %v4861
        %s4879 = scalar_lea.vmem %s490, 8 [#allocation13]
        %v4880 = vld [vmem:[%s4879] ss:$4 sm:$0x3]
        %v4882 = vlaneseq
        %v4883 = vshrl.u32 %v4882, 7
        %v4884 = vsub.s32 0, %v4883
        %v4885 = vrot.slane %v4880, %v4884
        %v4886 = vlaneseq
        %v4887 = vshrl.u32 %v4886, 7
        %v4888 = vsub.s32 1, %v4887
        %v4889 = vrot.slane %v4880, %v4888
        %v4908 = vunpack.c.l.b16 %v4619
        %v4909 = vunpack.c.l.b16 %v4620
        %v4910 = vunpack.c.l.b16 %v4621
        %v4911 = vunpack.c.l.b16 %v4622
        %v4912 = vunpack.c.l.b16 %v4623
        %v4913 = vunpack.c.l.b16 %v4624
        %v4914 = vunpack.c.l.b16 %v4625
        %v4915 = vunpack.c.l.b16 %v4626
        %v4916 = vunpack.c.l.b16 %v4627
        %v4917 = vunpack.c.l.b16 %v4628
        %v4918 = vunpack.c.l.b16 %v4629
        %v4919 = vunpack.c.l.b16 %v4630
        %v4920 = vunpack.c.l.b16 %v4631
        %v4921 = vunpack.c.l.b16 %v4632
        %v4922 = vunpack.c.l.b16 %v4633
        %v4923 = vunpack.c.l.b16 %v4634
        %v4924 = vpack.c.b16 %v4909, %v4908
        %v4925 = vpack.c.b16 %v4911, %v4910
        %v4926 = vpack.c.b16 %v4913, %v4912
        %v4927 = vpack.c.b16 %v4915, %v4914
        %v4928 = vpack.c.b16 %v4917, %v4916
        %v4929 = vpack.c.b16 %v4919, %v4918
        %v4930 = vpack.c.b16 %v4921, %v4920
        %v4931 = vpack.c.b16 %v4923, %v4922
        %v4933 = vsel %vm864, %v4924, 0
        %v4936 = vsel %vm864, %v4925, 0
        %v4939 = vsel %vm864, %v4926, 0
        %v4942 = vsel %vm864, %v4927, 0
        %v4945 = vsel %vm864, %v4928, 0
        %v4948 = vsel %vm864, %v4929, 0
        %v4951 = vsel %vm864, %v4930, 0
        %v4954 = vsel %vm864, %v4931, 0
        %v4957 = vsel %vm864, %v4701, 0
        %v4960 = vsel %vm864, %v4702, 0
        %v4963 = vsel %vm864, %v4703, 0
        %v4966 = vsel %vm864, %v4704, 0
        %v4969 = vsel %vm864, %v4705, 0
        %v4972 = vsel %vm864, %v4706, 0
        %v4975 = vsel %vm864, %v4707, 0
        %v4978 = vsel %vm864, %v4708, 0
        %v4981 = vsel %vm864, %v4741, 0
        %v4984 = vsel %vm864, %v4742, 0
        %v4987 = vsel %vm864, %v4743, 0
        %v4990 = vsel %vm864, %v4744, 0
        %v4993 = vsel %vm864, %v4745, 0
        %v4996 = vsel %vm864, %v4746, 0
        %v4999 = vsel %vm864, %v4747, 0
        %v5002 = vsel %vm864, %v4748, 0
        %5004 = vmatprep.subr.bf16.mxu0 0
        %5005 = vmatpush1.bf16.xpose.msra.mxu0 %v4957
        %5006 = vmatprep.subr.bf16.mxu0 0
        %5007 = vmatpush1.bf16.xpose.msra.mxu0 %v4960
        %5008 = vmatprep.subr.bf16.mxu0 0
        %5009 = vmatpush1.bf16.xpose.msra.mxu0 %v4963
        %5010 = vmatprep.subr.bf16.mxu0 0
        %5011 = vmatpush1.bf16.xpose.msra.mxu0 %v4966
        %5012 = vmatprep.subr.bf16.mxu0 0
        %5013 = vmatpush1.bf16.xpose.msra.mxu0 %v4969
        %5014 = vmatprep.subr.bf16.mxu0 0
        %5015 = vmatpush1.bf16.xpose.msra.mxu0 %v4972
        %5016 = vmatprep.subr.bf16.mxu0 0
        %5017 = vmatpush1.bf16.xpose.msra.mxu0 %v4975
        %5018 = vmatprep.subr.bf16.mxu0 0
        %5019 = vmatpush1.bf16.xpose.msra.mxu0 %v4978
        %5020 = vmatprep.subr.bf16.mxu0 0
        %5021 = vmatpush1.bf16.xpose.msra.mxu0 %v4981
        %5022 = vmatprep.subr.bf16.mxu0 0
        %5023 = vmatpush1.bf16.xpose.msra.mxu0 %v4984
        %5024 = vmatprep.subr.bf16.mxu0 0
        %5025 = vmatpush1.bf16.xpose.msra.mxu0 %v4987
        %5026 = vmatprep.subr.bf16.mxu0 0
        %5027 = vmatpush1.bf16.xpose.msra.mxu0 %v4990
        %5028 = vmatprep.subr.bf16.mxu0 0
        %5029 = vmatpush1.bf16.xpose.msra.mxu0 %v4993
        %5030 = vmatprep.subr.bf16.mxu0 0
        %5031 = vmatpush1.bf16.xpose.msra.mxu0 %v4996
        %5032 = vmatprep.subr.bf16.mxu0 0
        %5033 = vmatpush1.bf16.xpose.msra.mxu0 %v4999
        %5034 = vmatprep.subr.bf16.mxu0 0
        %5035 = vmatpush1.bf16.xpose.msra.mxu0 %v5002
        %5036 = vmatprep.mubr.bf16.mxu0 0
        %5037 = vmatmul.mubr.bf16.gmra.mrb[0].mxu0 %v4933
        %v5038 = vpop.f32.mrb[0].mxu0
        %v5039 = vadd.f32 %v4885, %v5038
        %v5040 = vpop.f32.mrb[0].mxu0
        %v5041 = vadd.f32 %v4889, %v5040
        %v5042 = vpop.f32.mrb[0].mxu0
        %v5043 = vadd.f32 %v4885, %v5042
        %v5044 = vpop.f32.mrb[0].mxu0
        %v5045 = vadd.f32 %v4889, %v5044
        %5046 = vmatprep.mubr.bf16.mxu0 0
        %5047 = vmatmul.mubr.bf16.gmra.mrb[0].mxu0 %v4936
        %v5048 = vpop.f32.mrb[0].mxu0
        %v5049 = vadd.f32 %v4885, %v5048
        %v5050 = vpop.f32.mrb[0].mxu0
        %v5051 = vadd.f32 %v4889, %v5050
        %v5052 = vpop.f32.mrb[0].mxu0
        %v5053 = vadd.f32 %v4885, %v5052
        %v5054 = vpop.f32.mrb[0].mxu0
        %v5055 = vadd.f32 %v4889, %v5054
        %5056 = vmatprep.mubr.bf16.mxu0 0
        %5057 = vmatmul.mubr.bf16.gmra.mrb[0].mxu0 %v4939
        %v5058 = vpop.f32.mrb[0].mxu0
        %v5059 = vadd.f32 %v4885, %v5058
        %v5060 = vpop.f32.mrb[0].mxu0
        %v5061 = vadd.f32 %v4889, %v5060
        %v5062 = vpop.f32.mrb[0].mxu0
        %v5063 = vadd.f32 %v4885, %v5062
        %v5064 = vpop.f32.mrb[0].mxu0
        %v5065 = vadd.f32 %v4889, %v5064
        %5066 = vmatprep.mubr.bf16.mxu0 0
        %5067 = vmatmul.mubr.bf16.gmra.mrb[0].mxu0 %v4942
        %v5068 = vpop.f32.mrb[0].mxu0
        %v5069 = vadd.f32 %v4885, %v5068
        %v5070 = vpop.f32.mrb[0].mxu0
        %v5071 = vadd.f32 %v4889, %v5070
        %v5072 = vpop.f32.mrb[0].mxu0
        %v5073 = vadd.f32 %v4885, %v5072
        %v5074 = vpop.f32.mrb[0].mxu0
        %v5075 = vadd.f32 %v4889, %v5074
        %5076 = vmatprep.mubr.bf16.mxu0 0
        %5077 = vmatmul.mubr.bf16.gmra.mrb[0].mxu0 %v4945
        %v5078 = vpop.f32.mrb[0].mxu0
        %v5079 = vadd.f32 %v4885, %v5078
        %v5080 = vpop.f32.mrb[0].mxu0
        %v5081 = vadd.f32 %v4889, %v5080
        %v5082 = vpop.f32.mrb[0].mxu0
        %v5083 = vadd.f32 %v4885, %v5082
        %v5084 = vpop.f32.mrb[0].mxu0
        %v5085 = vadd.f32 %v4889, %v5084
        %5086 = vmatprep.mubr.bf16.mxu0 0
        %5087 = vmatmul.mubr.bf16.gmra.mrb[0].mxu0 %v4948
        %v5088 = vpop.f32.mrb[0].mxu0
        %v5089 = vadd.f32 %v4885, %v5088
        %v5090 = vpop.f32.mrb[0].mxu0
        %v5091 = vadd.f32 %v4889, %v5090
        %v5092 = vpop.f32.mrb[0].mxu0
        %v5093 = vadd.f32 %v4885, %v5092
        %v5094 = vpop.f32.mrb[0].mxu0
        %v5095 = vadd.f32 %v4889, %v5094
        %5096 = vmatprep.mubr.bf16.mxu0 0
        %5097 = vmatmul.mubr.bf16.gmra.mrb[0].mxu0 %v4951
        %v5098 = vpop.f32.mrb[0].mxu0
        %v5099 = vadd.f32 %v4885, %v5098
        %v5100 = vpop.f32.mrb[0].mxu0
        %v5101 = vadd.f32 %v4889, %v5100
        %v5102 = vpop.f32.mrb[0].mxu0
        %v5103 = vadd.f32 %v4885, %v5102
        %v5104 = vpop.f32.mrb[0].mxu0
        %v5105 = vadd.f32 %v4889, %v5104
        %5106 = vmatprep.mubr.bf16.mxu0 0
        %5107 = vmatmul.mubr.bf16.gmra.mrb[0].mxu0 %v4954
        %v5108 = vpop.f32.mrb[0].mxu0
        %v5109 = vadd.f32 %v4885, %v5108
        %v5110 = vpop.f32.mrb[0].mxu0
        %v5111 = vadd.f32 %v4889, %v5110
        %v5112 = vpop.f32.mrb[0].mxu0
        %v5113 = vadd.f32 %v4885, %v5112
        %v5114 = vpop.f32.mrb[0].mxu0
        %v5115 = vadd.f32 %v4889, %v5114
        %5116 = vdwg.mxu0
        %v5117 = vmax.f32 %v5039, %v5041
        %5118 = vmax.xlane.f32.xlu0 %v5117
        %v5119 = vpop.xlane.xlu0 %5118
        %v5120 = vmax.f32 %v5043, %v5045
        %5121 = vmax.xlane.f32.xlu0 %v5120
        %v5122 = vpop.xlane.xlu0 %5121
        %v5123 = vmax.f32 %v5049, %v5051
        %5124 = vmax.xlane.f32.xlu0 %v5123
        %v5125 = vpop.xlane.xlu0 %5124
        %v5126 = vmax.f32 %v5053, %v5055
        %5127 = vmax.xlane.f32.xlu0 %v5126
        %v5128 = vpop.xlane.xlu0 %5127
        %v5129 = vmax.f32 %v5059, %v5061
        %5130 = vmax.xlane.f32.xlu0 %v5129
        %v5131 = vpop.xlane.xlu0 %5130
        %v5132 = vmax.f32 %v5063, %v5065
        %5133 = vmax.xlane.f32.xlu0 %v5132
        %v5134 = vpop.xlane.xlu0 %5133
        %v5135 = vmax.f32 %v5069, %v5071
        %5136 = vmax.xlane.f32.xlu0 %v5135
        %v5137 = vpop.xlane.xlu0 %5136
        %v5138 = vmax.f32 %v5073, %v5075
        %5139 = vmax.xlane.f32.xlu0 %v5138
        %v5140 = vpop.xlane.xlu0 %5139
        %v5141 = vmax.f32 %v5079, %v5081
        %5142 = vmax.xlane.f32.xlu0 %v5141
        %v5143 = vpop.xlane.xlu0 %5142
        %v5144 = vmax.f32 %v5083, %v5085
        %5145 = vmax.xlane.f32.xlu0 %v5144
        %v5146 = vpop.xlane.xlu0 %5145
        %v5147 = vmax.f32 %v5089, %v5091
        %5148 = vmax.xlane.f32.xlu0 %v5147
        %v5149 = vpop.xlane.xlu0 %5148
        %v5150 = vmax.f32 %v5093, %v5095
        %5151 = vmax.xlane.f32.xlu0 %v5150
        %v5152 = vpop.xlane.xlu0 %5151
        %v5153 = vmax.f32 %v5099, %v5101
        %5154 = vmax.xlane.f32.xlu0 %v5153
        %v5155 = vpop.xlane.xlu0 %5154
        %v5156 = vmax.f32 %v5103, %v5105
        %5157 = vmax.xlane.f32.xlu0 %v5156
        %v5158 = vpop.xlane.xlu0 %5157
        %v5159 = vmax.f32 %v5109, %v5111
        %5160 = vmax.xlane.f32.xlu0 %v5159
        %v5161 = vpop.xlane.xlu0 %5160
        %v5162 = vmax.f32 %v5113, %v5115
        %5163 = vmax.xlane.f32.xlu0 %v5162
        %v5164 = vpop.xlane.xlu0 %5163
        %v5165 = vsub.f32 %v5039, %v5119
        %v5166 = vsub.f32 %v5041, %v5119
        %v5167 = vsub.f32 %v5043, %v5122
        %v5168 = vsub.f32 %v5045, %v5122
        %v5169 = vsub.f32 %v5049, %v5125
        %v5170 = vsub.f32 %v5051, %v5125
        %v5171 = vsub.f32 %v5053, %v5128
        %v5172 = vsub.f32 %v5055, %v5128
        %v5173 = vsub.f32 %v5059, %v5131
        %v5174 = vsub.f32 %v5061, %v5131
        %v5175 = vsub.f32 %v5063, %v5134
        %v5176 = vsub.f32 %v5065, %v5134
        %v5177 = vsub.f32 %v5069, %v5137
        %v5178 = vsub.f32 %v5071, %v5137
        %v5179 = vsub.f32 %v5073, %v5140
        %v5180 = vsub.f32 %v5075, %v5140
        %v5181 = vsub.f32 %v5079, %v5143
        %v5182 = vsub.f32 %v5081, %v5143
        %v5183 = vsub.f32 %v5083, %v5146
        %v5184 = vsub.f32 %v5085, %v5146
        %v5185 = vsub.f32 %v5089, %v5149
        %v5186 = vsub.f32 %v5091, %v5149
        %v5187 = vsub.f32 %v5093, %v5152
        %v5188 = vsub.f32 %v5095, %v5152
        %v5189 = vsub.f32 %v5099, %v5155
        %v5190 = vsub.f32 %v5101, %v5155
        %v5191 = vsub.f32 %v5103, %v5158
        %v5192 = vsub.f32 %v5105, %v5158
        %v5193 = vsub.f32 %v5109, %v5161
        %v5194 = vsub.f32 %v5111, %v5161
        %v5195 = vsub.f32 %v5113, %v5164
        %v5196 = vsub.f32 %v5115, %v5164
        %v5197 = vmul.f32 %v5165, 1.442695
        %v5198 = vpow.pop %v5197
        %v5199 = vmul.f32 %v5166, 1.442695
        %v5200 = vpow.pop %v5199
        %v5201 = vmul.f32 %v5167, 1.442695
        %v5202 = vpow.pop %v5201
        %v5203 = vmul.f32 %v5168, 1.442695
        %v5204 = vpow.pop %v5203
        %v5205 = vmul.f32 %v5169, 1.442695
        %v5206 = vpow.pop %v5205
        %v5207 = vmul.f32 %v5170, 1.442695
        %v5208 = vpow.pop %v5207
        %v5209 = vmul.f32 %v5171, 1.442695
        %v5210 = vpow.pop %v5209
        %v5211 = vmul.f32 %v5172, 1.442695
        %v5212 = vpow.pop %v5211
        %v5213 = vmul.f32 %v5173, 1.442695
        %v5214 = vpow.pop %v5213
        %v5215 = vmul.f32 %v5174, 1.442695
        %v5216 = vpow.pop %v5215
        %v5217 = vmul.f32 %v5175, 1.442695
        %v5218 = vpow.pop %v5217
        %v5219 = vmul.f32 %v5176, 1.442695
        %v5220 = vpow.pop %v5219
        %v5221 = vmul.f32 %v5177, 1.442695
        %v5222 = vpow.pop %v5221
        %v5223 = vmul.f32 %v5178, 1.442695
        %v5224 = vpow.pop %v5223
        %v5225 = vmul.f32 %v5179, 1.442695
        %v5226 = vpow.pop %v5225
        %v5227 = vmul.f32 %v5180, 1.442695
        %v5228 = vpow.pop %v5227
        %v5229 = vmul.f32 %v5181, 1.442695
        %v5230 = vpow.pop %v5229
        %v5231 = vmul.f32 %v5182, 1.442695
        %v5232 = vpow.pop %v5231
        %v5233 = vmul.f32 %v5183, 1.442695
        %v5234 = vpow.pop %v5233
        %v5235 = vmul.f32 %v5184, 1.442695
        %v5236 = vpow.pop %v5235
        %v5237 = vmul.f32 %v5185, 1.442695
        %v5238 = vpow.pop %v5237
        %v5239 = vmul.f32 %v5186, 1.442695
        %v5240 = vpow.pop %v5239
        %v5241 = vmul.f32 %v5187, 1.442695
        %v5242 = vpow.pop %v5241
        %v5243 = vmul.f32 %v5188, 1.442695
        %v5244 = vpow.pop %v5243
        %v5245 = vmul.f32 %v5189, 1.442695
        %v5246 = vpow.pop %v5245
        %v5247 = vmul.f32 %v5190, 1.442695
        %v5248 = vpow.pop %v5247
        %v5249 = vmul.f32 %v5191, 1.442695
        %v5250 = vpow.pop %v5249
        %v5251 = vmul.f32 %v5192, 1.442695
        %v5252 = vpow.pop %v5251
        %v5253 = vmul.f32 %v5193, 1.442695
        %v5254 = vpow.pop %v5253
        %v5255 = vmul.f32 %v5194, 1.442695
        %v5256 = vpow.pop %v5255
        %v5257 = vmul.f32 %v5195, 1.442695
        %v5258 = vpow.pop %v5257
        %v5259 = vmul.f32 %v5196, 1.442695
        %v5260 = vpow.pop %v5259
        %v5261 = vadd.f32 %v5198, %v5200
        %5262 = vadd.xlane.f32.xlu0 %v5261
        %v5263 = vpop.xlane.xlu0 %5262
        %v5264 = vadd.f32 %v5202, %v5204
        %5265 = vadd.xlane.f32.xlu0 %v5264
        %v5266 = vpop.xlane.xlu0 %5265
        %v5267 = vadd.f32 %v5206, %v5208
        %5268 = vadd.xlane.f32.xlu0 %v5267
        %v5269 = vpop.xlane.xlu0 %5268
        %v5270 = vadd.f32 %v5210, %v5212
        %5271 = vadd.xlane.f32.xlu0 %v5270
        %v5272 = vpop.xlane.xlu0 %5271
        %v5273 = vadd.f32 %v5214, %v5216
        %5274 = vadd.xlane.f32.xlu0 %v5273
        %v5275 = vpop.xlane.xlu0 %5274
        %v5276 = vadd.f32 %v5218, %v5220
        %5277 = vadd.xlane.f32.xlu0 %v5276
        %v5278 = vpop.xlane.xlu0 %5277
        %v5279 = vadd.f32 %v5222, %v5224
        %5280 = vadd.xlane.f32.xlu0 %v5279
        %v5281 = vpop.xlane.xlu0 %5280
        %v5282 = vadd.f32 %v5226, %v5228
        %5283 = vadd.xlane.f32.xlu0 %v5282
        %v5284 = vpop.xlane.xlu0 %5283
        %v5285 = vadd.f32 %v5230, %v5232
        %5286 = vadd.xlane.f32.xlu0 %v5285
        %v5287 = vpop.xlane.xlu0 %5286
        %v5288 = vadd.f32 %v5234, %v5236
        %5289 = vadd.xlane.f32.xlu0 %v5288
        %v5290 = vpop.xlane.xlu0 %5289
        %v5291 = vadd.f32 %v5238, %v5240
        %5292 = vadd.xlane.f32.xlu0 %v5291
        %v5293 = vpop.xlane.xlu0 %5292
        %v5294 = vadd.f32 %v5242, %v5244
        %5295 = vadd.xlane.f32.xlu0 %v5294
        %v5296 = vpop.xlane.xlu0 %5295
        %v5297 = vadd.f32 %v5246, %v5248
        %5298 = vadd.xlane.f32.xlu0 %v5297
        %v5299 = vpop.xlane.xlu0 %5298
        %v5300 = vadd.f32 %v5250, %v5252
        %5301 = vadd.xlane.f32.xlu0 %v5300
        %v5302 = vpop.xlane.xlu0 %5301
        %v5303 = vadd.f32 %v5254, %v5256
        %5304 = vadd.xlane.f32.xlu0 %v5303
        %v5305 = vpop.xlane.xlu0 %5304
        %v5306 = vadd.f32 %v5258, %v5260
        %5307 = vadd.xlane.f32.xlu0 %v5306
        %v5308 = vpop.xlane.xlu0 %5307
        %v5309 = vpack.c.bf16 %v5202, %v5198
        %v5310 = vpack.c.bf16 %v5204, %v5200
        %v5311 = vpack.c.bf16 %v5210, %v5206
        %v5312 = vpack.c.bf16 %v5212, %v5208
        %v5313 = vpack.c.bf16 %v5218, %v5214
        %v5314 = vpack.c.bf16 %v5220, %v5216
        %v5315 = vpack.c.bf16 %v5226, %v5222
        %v5316 = vpack.c.bf16 %v5228, %v5224
        %v5317 = vpack.c.bf16 %v5234, %v5230
        %v5318 = vpack.c.bf16 %v5236, %v5232
        %v5319 = vpack.c.bf16 %v5242, %v5238
        %v5320 = vpack.c.bf16 %v5244, %v5240
        %v5321 = vpack.c.bf16 %v5250, %v5246
        %v5322 = vpack.c.bf16 %v5252, %v5248
        %v5323 = vpack.c.bf16 %v5258, %v5254
        %v5324 = vpack.c.bf16 %v5260, %v5256
        %5325 = vmatprep.subr.bf16.mxu0 0
        %5326 = vmatpush1.bf16.msra.mxu0 %v4815
        %5327 = vmatprep.subr.bf16.mxu0 0
        %5328 = vmatpush1.bf16.msra.mxu0 %v4816
        %5329 = vmatprep.subr.bf16.mxu0 0
        %5330 = vmatpush1.bf16.msra.mxu0 %v4817
        %5331 = vmatprep.subr.bf16.mxu0 0
        %5332 = vmatpush1.bf16.msra.mxu0 %v4818
        %5333 = vmatprep.subr.bf16.mxu0 0
        %5334 = vmatpush1.bf16.msra.mxu0 %v4819
        %5335 = vmatprep.subr.bf16.mxu0 0
        %5336 = vmatpush1.bf16.msra.mxu0 %v4820
        %5337 = vmatprep.subr.bf16.mxu0 0
        %5338 = vmatpush1.bf16.msra.mxu0 %v4821
        %5339 = vmatprep.subr.bf16.mxu0 0
        %5340 = vmatpush1.bf16.msra.mxu0 %v4822
        %5341 = vmatprep.subr.bf16.mxu0 0
        %5342 = vmatpush1.bf16.msra.mxu0 %v4863
        %5343 = vmatprep.subr.bf16.mxu0 0
        %5344 = vmatpush1.bf16.msra.mxu0 %v4864
        %5345 = vmatprep.subr.bf16.mxu0 0
        %5346 = vmatpush1.bf16.msra.mxu0 %v4865
        %5347 = vmatprep.subr.bf16.mxu0 0
        %5348 = vmatpush1.bf16.msra.mxu0 %v4866
        %5349 = vmatprep.subr.bf16.mxu0 0
        %5350 = vmatpush1.bf16.msra.mxu0 %v4867
        %5351 = vmatprep.subr.bf16.mxu0 0
        %5352 = vmatpush1.bf16.msra.mxu0 %v4868
        %5353 = vmatprep.subr.bf16.mxu0 0
        %5354 = vmatpush1.bf16.msra.mxu0 %v4869
        %5355 = vmatprep.subr.bf16.mxu0 0
        %5356 = vmatpush1.bf16.msra.mxu0 %v4870
        %5357 = vmatprep.mubr.bf16.mxu0 %v5310
        %5358 = vmatmul.mubr.bf16.gmra.mrb[0].mxu0 %v5309
        %v5359 = vpop.f32.mrb[0].mxu0
        %v5360 = vadd.f32 0.0, %v5359
        %v5361 = vpop.f32.mrb[0].mxu0
        %v5362 = vpop.f32.mrb[0].mxu0
        %v5363 = vadd.f32 0.0, %v5362
        %v5364 = vpop.f32.mrb[0].mxu0
        %5365 = vmatprep.mubr.bf16.mxu0 %v5312
        %5366 = vmatmul.mubr.bf16.gmra.mrb[0].mxu0 %v5311
        %v5367 = vpop.f32.mrb[0].mxu0
        %v5368 = vadd.f32 0.0, %v5367
        %v5369 = vpop.f32.mrb[0].mxu0
        %v5370 = vpop.f32.mrb[0].mxu0
        %v5371 = vadd.f32 0.0, %v5370
        %v5372 = vpop.f32.mrb[0].mxu0
        %5373 = vmatprep.mubr.bf16.mxu0 %v5314
        %5374 = vmatmul.mubr.bf16.gmra.mrb[0].mxu0 %v5313
        %v5375 = vpop.f32.mrb[0].mxu0
        %v5376 = vadd.f32 0.0, %v5375
        %v5377 = vpop.f32.mrb[0].mxu0
        %v5378 = vpop.f32.mrb[0].mxu0
        %v5379 = vadd.f32 0.0, %v5378
        %v5380 = vpop.f32.mrb[0].mxu0
        %5381 = vmatprep.mubr.bf16.mxu0 %v5316
        %5382 = vmatmul.mubr.bf16.gmra.mrb[0].mxu0 %v5315
        %v5383 = vpop.f32.mrb[0].mxu0
        %v5384 = vadd.f32 0.0, %v5383
        %v5385 = vpop.f32.mrb[0].mxu0
        %v5386 = vpop.f32.mrb[0].mxu0
        %v5387 = vadd.f32 0.0, %v5386
        %v5388 = vpop.f32.mrb[0].mxu0
        %5389 = vmatprep.mubr.bf16.mxu0 %v5318
        %5390 = vmatmul.mubr.bf16.gmra.mrb[0].mxu0 %v5317
        %v5391 = vpop.f32.mrb[0].mxu0
        %v5392 = vadd.f32 0.0, %v5391
        %v5393 = vpop.f32.mrb[0].mxu0
        %v5394 = vpop.f32.mrb[0].mxu0
        %v5395 = vadd.f32 0.0, %v5394
        %v5396 = vpop.f32.mrb[0].mxu0
        %5397 = vmatprep.mubr.bf16.mxu0 %v5320
        %5398 = vmatmul.mubr.bf16.gmra.mrb[0].mxu0 %v5319
        %v5399 = vpop.f32.mrb[0].mxu0
        %v5400 = vadd.f32 0.0, %v5399
        %v5401 = vpop.f32.mrb[0].mxu0
        %v5402 = vpop.f32.mrb[0].mxu0
        %v5403 = vadd.f32 0.0, %v5402
        %v5404 = vpop.f32.mrb[0].mxu0
        %5405 = vmatprep.mubr.bf16.mxu0 %v5322
        %5406 = vmatmul.mubr.bf16.gmra.mrb[0].mxu0 %v5321
        %v5407 = vpop.f32.mrb[0].mxu0
        %v5408 = vadd.f32 0.0, %v5407
        %v5409 = vpop.f32.mrb[0].mxu0
        %v5410 = vpop.f32.mrb[0].mxu0
        %v5411 = vadd.f32 0.0, %v5410
        %v5412 = vpop.f32.mrb[0].mxu0
        %5413 = vmatprep.mubr.bf16.mxu0 %v5324
        %5414 = vmatmul.mubr.bf16.gmra.mrb[0].mxu0 %v5323
        %v5415 = vpop.f32.mrb[0].mxu0
        %v5416 = vadd.f32 0.0, %v5415
        %v5417 = vpop.f32.mrb[0].mxu0
        %v5418 = vpop.f32.mrb[0].mxu0
        %v5419 = vadd.f32 0.0, %v5418
        %v5420 = vpop.f32.mrb[0].mxu0
        %5421 = vdwg.mxu0
        %s5422 = sadd.s32 %s555, 1
        %s5423 = smul.u32 %s5422, 4
        %s5424 = sadd.s32 %s1355, %s5423
        %s5425 = sld [smem:[#allocation2 + %s5424]]
        %v5426 = vrcp.pop %v5263
        %v5427 = vrcp.pop %v5266
        %v5428 = vrcp.pop %v5269
        %v5429 = vrcp.pop %v5272
        %v5430 = vrcp.pop %v5275
        %v5431 = vrcp.pop %v5278
        %v5432 = vrcp.pop %v5281
        %v5433 = vrcp.pop %v5284
        %v5434 = vrcp.pop %v5287
        %v5435 = vrcp.pop %v5290
        %v5436 = vrcp.pop %v5293
        %v5437 = vrcp.pop %v5296
        %v5438 = vrcp.pop %v5299
        %v5439 = vrcp.pop %v5302
        %v5440 = vrcp.pop %v5305
        %v5441 = vrcp.pop %v5308
        %v5442 = vstv %s5425
        %v5443 = vmul.f32 %v5442, %v5426
        %v5444 = vmul.f32 %v5442, %v5427
        %v5445 = vmul.f32 %v5442, %v5428
        %v5446 = vmul.f32 %v5442, %v5429
        %v5447 = vmul.f32 %v5442, %v5430
        %v5448 = vmul.f32 %v5442, %v5431
        %v5449 = vmul.f32 %v5442, %v5432
        %v5450 = vmul.f32 %v5442, %v5433
        %v5451 = vmul.f32 %v5442, %v5434
        %v5452 = vmul.f32 %v5442, %v5435
        %v5453 = vmul.f32 %v5442, %v5436
        %v5454 = vmul.f32 %v5442, %v5437
        %v5455 = vmul.f32 %v5442, %v5438
        %v5456 = vmul.f32 %v5442, %v5439
        %v5457 = vmul.f32 %v5442, %v5440
        %v5458 = vmul.f32 %v5442, %v5441
        %v5459 = vmul.f32 %v5360, %v5443
        %v5460 = vmul.f32 %v5363, %v5444
        %v5461 = vmul.f32 %v5368, %v5445
        %v5462 = vmul.f32 %v5371, %v5446
        %v5463 = vmul.f32 %v5376, %v5447
        %v5464 = vmul.f32 %v5379, %v5448
        %v5465 = vmul.f32 %v5384, %v5449
        %v5466 = vmul.f32 %v5387, %v5450
        %v5467 = vmul.f32 %v5392, %v5451
        %v5468 = vmul.f32 %v5395, %v5452
        %v5469 = vmul.f32 %v5400, %v5453
        %v5470 = vmul.f32 %v5403, %v5454
        %v5471 = vmul.f32 %v5408, %v5455
        %v5472 = vmul.f32 %v5411, %v5456
        %v5473 = vmul.f32 %v5416, %v5457
        %v5474 = vmul.f32 %v5419, %v5458
        %v5475 = vpack.c.bf16 %v5460, %v5459
        %v5476 = vpack.c.bf16 %v5462, %v5461
        %v5477 = vpack.c.bf16 %v5464, %v5463
        %v5478 = vpack.c.bf16 %v5466, %v5465
        %v5479 = vpack.c.bf16 %v5468, %v5467
        %v5480 = vpack.c.bf16 %v5470, %v5469
        %v5481 = vpack.c.bf16 %v5472, %v5471
        %v5482 = vpack.c.bf16 %v5474, %v5473
        %v5491 = vunpack.c.l.b16 %v5475
        %v5492 = vunpack.c.h.b16 %v5475
        %v5493 = vunpack.c.l.b16 %v5476
        %v5494 = vunpack.c.h.b16 %v5476
        %v5495 = vunpack.c.l.b16 %v5477
        %v5496 = vunpack.c.h.b16 %v5477
        %v5497 = vunpack.c.l.b16 %v5478
        %v5498 = vunpack.c.h.b16 %v5478
        %v5499 = vunpack.c.l.b16 %v5479
        %v5500 = vunpack.c.h.b16 %v5479
        %v5501 = vunpack.c.l.b16 %v5480
        %v5502 = vunpack.c.h.b16 %v5480
        %v5503 = vunpack.c.l.b16 %v5481
        %v5504 = vunpack.c.h.b16 %v5481
        %v5505 = vunpack.c.l.b16 %v5482
        %v5506 = vunpack.c.h.b16 %v5482
        %v5507 = vpack.c.b16 %v5491, %v5491
        %v5508 = vpack.c.b16 %v5492, %v5492
        %v5509 = vpack.c.b16 %v5493, %v5493
        %v5510 = vpack.c.b16 %v5494, %v5494
        %v5511 = vpack.c.b16 %v5495, %v5495
        %v5512 = vpack.c.b16 %v5496, %v5496
        %v5513 = vpack.c.b16 %v5497, %v5497
        %v5514 = vpack.c.b16 %v5498, %v5498
        %v5515 = vpack.c.b16 %v5499, %v5499
        %v5516 = vpack.c.b16 %v5500, %v5500
        %v5517 = vpack.c.b16 %v5501, %v5501
        %v5518 = vpack.c.b16 %v5502, %v5502
        %v5519 = vpack.c.b16 %v5503, %v5503
        %v5520 = vpack.c.b16 %v5504, %v5504
        %v5521 = vpack.c.b16 %v5505, %v5505
        %v5522 = vpack.c.b16 %v5506, %v5506
        %s5539 = scalar_lea.vmem %s546, 64 [#allocation15]
        %5540 = vst.msk [vmem:[%s5539] sm:$0xf] %vm1472, %v5507
        %5541 = vst.msk [vmem:[%s5539 + $0x4] sm:$0xf] %vm1472, %v5508
        %5542 = vst.msk [vmem:[%s5539 + $0x8] sm:$0xf] %vm1472, %v5509
        %5543 = vst.msk [vmem:[%s5539 + $0xc] sm:$0xf] %vm1472, %v5510
        %5544 = vst.msk [vmem:[%s5539 + $0x10] sm:$0xf] %vm1472, %v5511
        %5545 = vst.msk [vmem:[%s5539 + $0x14] sm:$0xf] %vm1472, %v5512
        %5546 = vst.msk [vmem:[%s5539 + $0x18] sm:$0xf] %vm1472, %v5513
        %5547 = vst.msk [vmem:[%s5539 + $0x1c] sm:$0xf] %vm1472, %v5514
        %5548 = vst.msk [vmem:[%s5539 + $0x20] sm:$0xf] %vm1472, %v5515
        %5549 = vst.msk [vmem:[%s5539 + $0x24] sm:$0xf] %vm1472, %v5516
        %5550 = vst.msk [vmem:[%s5539 + $0x28] sm:$0xf] %vm1472, %v5517
        %5551 = vst.msk [vmem:[%s5539 + $0x2c] sm:$0xf] %vm1472, %v5518
        %5552 = vst.msk [vmem:[%s5539 + $0x30] sm:$0xf] %vm1472, %v5519
        %5553 = vst.msk [vmem:[%s5539 + $0x34] sm:$0xf] %vm1472, %v5520
        %5554 = vst.msk [vmem:[%s5539 + $0x38] sm:$0xf] %vm1472, %v5521
        %5555 = vst.msk [vmem:[%s5539 + $0x3c] sm:$0xf] %vm1472, %v5522
        %v5556 = vld [vmem:[%s4618] sm:$0xf]
        %v5557 = vld [vmem:[%s4618 + $0x4] sm:$0xf]
        %v5558 = vld [vmem:[%s4618 + $0x8] sm:$0xf]
        %v5559 = vld [vmem:[%s4618 + $0xc] sm:$0xf]
        %v5560 = vld [vmem:[%s4618 + $0x10] sm:$0xf]
        %v5561 = vld [vmem:[%s4618 + $0x14] sm:$0xf]
        %v5562 = vld [vmem:[%s4618 + $0x18] sm:$0xf]
        %v5563 = vld [vmem:[%s4618 + $0x1c] sm:$0xf]
        %v5564 = vld [vmem:[%s4618 + $0x20] sm:$0xf]
        %v5565 = vld [vmem:[%s4618 + $0x24] sm:$0xf]
        %v5566 = vld [vmem:[%s4618 + $0x28] sm:$0xf]
        %v5567 = vld [vmem:[%s4618 + $0x2c] sm:$0xf]
        %v5568 = vld [vmem:[%s4618 + $0x30] sm:$0xf]
        %v5569 = vld [vmem:[%s4618 + $0x34] sm:$0xf]
        %v5570 = vld [vmem:[%s4618 + $0x38] sm:$0xf]
        %v5571 = vld [vmem:[%s4618 + $0x3c] sm:$0xf]
        %v5572 = vld [vmem:[%s4635] sm:$0xf]
        %v5573 = vld [vmem:[%s4635 + $0x4] sm:$0xf]
        %v5574 = vld [vmem:[%s4635 + $0x8] sm:$0xf]
        %v5575 = vld [vmem:[%s4635 + $0xc] sm:$0xf]
        %v5576 = vld [vmem:[%s4635 + $0x10] sm:$0xf]
        %v5577 = vld [vmem:[%s4635 + $0x14] sm:$0xf]
        %v5578 = vld [vmem:[%s4635 + $0x18] sm:$0xf]
        %v5579 = vld [vmem:[%s4635 + $0x1c] sm:$0xf]
        %v5580 = vld [vmem:[%s4635 + $0x20] sm:$0xf]
        %v5581 = vld [vmem:[%s4635 + $0x24] sm:$0xf]
        %v5582 = vld [vmem:[%s4635 + $0x28] sm:$0xf]
        %v5583 = vld [vmem:[%s4635 + $0x2c] sm:$0xf]
        %v5584 = vld [vmem:[%s4635 + $0x30] sm:$0xf]
        %v5585 = vld [vmem:[%s4635 + $0x34] sm:$0xf]
        %v5586 = vld [vmem:[%s4635 + $0x38] sm:$0xf]
        %v5587 = vld [vmem:[%s4635 + $0x3c] sm:$0xf]
        %v5588 = vld [vmem:[%s4652] sm:$0xf]
        %v5589 = vld [vmem:[%s4652 + $0x4] sm:$0xf]
        %v5590 = vld [vmem:[%s4652 + $0x8] sm:$0xf]
        %v5591 = vld [vmem:[%s4652 + $0xc] sm:$0xf]
        %v5592 = vld [vmem:[%s4652 + $0x10] sm:$0xf]
        %v5593 = vld [vmem:[%s4652 + $0x14] sm:$0xf]
        %v5594 = vld [vmem:[%s4652 + $0x18] sm:$0xf]
        %v5595 = vld [vmem:[%s4652 + $0x1c] sm:$0xf]
        %v5596 = vld [vmem:[%s4652 + $0x20] sm:$0xf]
        %v5597 = vld [vmem:[%s4652 + $0x24] sm:$0xf]
        %v5598 = vld [vmem:[%s4652 + $0x28] sm:$0xf]
        %v5599 = vld [vmem:[%s4652 + $0x2c] sm:$0xf]
        %v5600 = vld [vmem:[%s4652 + $0x30] sm:$0xf]
        %v5601 = vld [vmem:[%s4652 + $0x34] sm:$0xf]
        %v5602 = vld [vmem:[%s4652 + $0x38] sm:$0xf]
        %v5603 = vld [vmem:[%s4652 + $0x3c] sm:$0xf]
        %v5620 = vunpack.c.l.b16 %v5572
        %v5621 = vunpack.c.l.b16 %v5573
        %v5622 = vunpack.c.l.b16 %v5574
        %v5623 = vunpack.c.l.b16 %v5575
        %v5624 = vunpack.c.l.b16 %v5576
        %v5625 = vunpack.c.l.b16 %v5577
        %v5626 = vunpack.c.l.b16 %v5578
        %v5627 = vunpack.c.l.b16 %v5579
        %v5628 = vunpack.c.l.b16 %v5580
        %v5629 = vunpack.c.l.b16 %v5581
        %v5630 = vunpack.c.l.b16 %v5582
        %v5631 = vunpack.c.l.b16 %v5583
        %v5632 = vunpack.c.l.b16 %v5584
        %v5633 = vunpack.c.l.b16 %v5585
        %v5634 = vunpack.c.l.b16 %v5586
        %v5635 = vunpack.c.l.b16 %v5587
        %v5636 = vpack.c.b16 %v5621, %v5620
        %v5637 = vpack.c.b16 %v5623, %v5622
        %v5638 = vpack.c.b16 %v5625, %v5624
        %v5639 = vpack.c.b16 %v5627, %v5626
        %v5640 = vpack.c.b16 %v5629, %v5628
        %v5641 = vpack.c.b16 %v5631, %v5630
        %v5642 = vpack.c.b16 %v5633, %v5632
        %v5643 = vpack.c.b16 %v5635, %v5634
        %v5660 = vunpack.c.l.b16 %v5588
        %v5661 = vunpack.c.l.b16 %v5589
        %v5662 = vunpack.c.l.b16 %v5590
        %v5663 = vunpack.c.l.b16 %v5591
        %v5664 = vunpack.c.l.b16 %v5592
        %v5665 = vunpack.c.l.b16 %v5593
        %v5666 = vunpack.c.l.b16 %v5594
        %v5667 = vunpack.c.l.b16 %v5595
        %v5668 = vunpack.c.l.b16 %v5596
        %v5669 = vunpack.c.l.b16 %v5597
        %v5670 = vunpack.c.l.b16 %v5598
        %v5671 = vunpack.c.l.b16 %v5599
        %v5672 = vunpack.c.l.b16 %v5600
        %v5673 = vunpack.c.l.b16 %v5601
        %v5674 = vunpack.c.l.b16 %v5602
        %v5675 = vunpack.c.l.b16 %v5603
        %v5676 = vpack.c.b16 %v5661, %v5660
        %v5677 = vpack.c.b16 %v5663, %v5662
        %v5678 = vpack.c.b16 %v5665, %v5664
        %v5679 = vpack.c.b16 %v5667, %v5666
        %v5680 = vpack.c.b16 %v5669, %v5668
        %v5681 = vpack.c.b16 %v5671, %v5670
        %v5682 = vpack.c.b16 %v5673, %v5672
        %v5683 = vpack.c.b16 %v5675, %v5674
        %v5684 = vld [vmem:[%s4749] sm:$0xf]
        %v5685 = vld [vmem:[%s4749 + $0x4] sm:$0xf]
        %v5686 = vld [vmem:[%s4749 + $0x8] sm:$0xf]
        %v5687 = vld [vmem:[%s4749 + $0xc] sm:$0xf]
        %v5688 = vld [vmem:[%s4749 + $0x10] sm:$0xf]
        %v5689 = vld [vmem:[%s4749 + $0x14] sm:$0xf]
        %v5690 = vld [vmem:[%s4749 + $0x18] sm:$0xf]
        %v5691 = vld [vmem:[%s4749 + $0x1c] sm:$0xf]
        %v5692 = vld [vmem:[%s4749 + $0x20] sm:$0xf]
        %v5693 = vld [vmem:[%s4749 + $0x24] sm:$0xf]
        %v5694 = vld [vmem:[%s4749 + $0x28] sm:$0xf]
        %v5695 = vld [vmem:[%s4749 + $0x2c] sm:$0xf]
        %v5696 = vld [vmem:[%s4749 + $0x30] sm:$0xf]
        %v5697 = vld [vmem:[%s4749 + $0x34] sm:$0xf]
        %v5698 = vld [vmem:[%s4749 + $0x38] sm:$0xf]
        %v5699 = vld [vmem:[%s4749 + $0x3c] sm:$0xf]
        %v5700 = vld [vmem:[%s4766] sm:$0xf]
        %v5701 = vld [vmem:[%s4766 + $0x4] sm:$0xf]
        %v5702 = vld [vmem:[%s4766 + $0x8] sm:$0xf]
        %v5703 = vld [vmem:[%s4766 + $0xc] sm:$0xf]
        %v5704 = vld [vmem:[%s4766 + $0x10] sm:$0xf]
        %v5705 = vld [vmem:[%s4766 + $0x14] sm:$0xf]
        %v5706 = vld [vmem:[%s4766 + $0x18] sm:$0xf]
        %v5707 = vld [vmem:[%s4766 + $0x1c] sm:$0xf]
        %v5708 = vld [vmem:[%s4766 + $0x20] sm:$0xf]
        %v5709 = vld [vmem:[%s4766 + $0x24] sm:$0xf]
        %v5710 = vld [vmem:[%s4766 + $0x28] sm:$0xf]
        %v5711 = vld [vmem:[%s4766 + $0x2c] sm:$0xf]
        %v5712 = vld [vmem:[%s4766 + $0x30] sm:$0xf]
        %v5713 = vld [vmem:[%s4766 + $0x34] sm:$0xf]
        %v5714 = vld [vmem:[%s4766 + $0x38] sm:$0xf]
        %v5715 = vld [vmem:[%s4766 + $0x3c] sm:$0xf]
        %v5732 = vunpack.c.l.b16 %v5684
        %v5733 = vunpack.c.l.b16 %v5685
        %v5734 = vunpack.c.l.b16 %v5686
        %v5735 = vunpack.c.l.b16 %v5687
        %v5736 = vunpack.c.l.b16 %v5688
        %v5737 = vunpack.c.l.b16 %v5689
        %v5738 = vunpack.c.l.b16 %v5690
        %v5739 = vunpack.c.l.b16 %v5691
        %v5740 = vunpack.c.l.b16 %v5692
        %v5741 = vunpack.c.l.b16 %v5693
        %v5742 = vunpack.c.l.b16 %v5694
        %v5743 = vunpack.c.l.b16 %v5695
        %v5744 = vunpack.c.l.b16 %v5696
        %v5745 = vunpack.c.l.b16 %v5697
        %v5746 = vunpack.c.l.b16 %v5698
        %v5747 = vunpack.c.l.b16 %v5699
        %v5748 = vpack.c.b16 %v5733, %v5732
        %v5749 = vpack.c.b16 %v5735, %v5734
        %v5750 = vpack.c.b16 %v5737, %v5736
        %v5751 = vpack.c.b16 %v5739, %v5738
        %v5752 = vpack.c.b16 %v5741, %v5740
        %v5753 = vpack.c.b16 %v5743, %v5742
        %v5754 = vpack.c.b16 %v5745, %v5744
        %v5755 = vpack.c.b16 %v5747, %v5746
        %v5772 = vunpack.c.l.b16 %v5700
        %v5773 = vunpack.c.l.b16 %v5701
        %v5774 = vunpack.c.l.b16 %v5702
        %v5775 = vunpack.c.l.b16 %v5703
        %v5776 = vunpack.c.l.b16 %v5704
        %v5777 = vunpack.c.l.b16 %v5705
        %v5778 = vunpack.c.l.b16 %v5706
        %v5779 = vunpack.c.l.b16 %v5707
        %v5780 = vunpack.c.l.b16 %v5708
        %v5781 = vunpack.c.l.b16 %v5709
        %v5782 = vunpack.c.l.b16 %v5710
        %v5783 = vunpack.c.l.b16 %v5711
        %v5784 = vunpack.c.l.b16 %v5712
        %v5785 = vunpack.c.l.b16 %v5713
        %v5786 = vunpack.c.l.b16 %v5714
        %v5787 = vunpack.c.l.b16 %v5715
        %v5788 = vpack.c.b16 %v5773, %v5772
        %v5789 = vpack.c.b16 %v5775, %v5774
        %v5790 = vpack.c.b16 %v5777, %v5776
        %v5791 = vpack.c.b16 %v5779, %v5778
        %v5792 = vpack.c.b16 %v5781, %v5780
        %v5793 = vpack.c.b16 %v5783, %v5782
        %v5794 = vpack.c.b16 %v5785, %v5784
        %v5795 = vpack.c.b16 %v5787, %v5786
        %s5796 = scalar_lea.vmem %s4879, 1 [#allocation13]
        %v5797 = vld [vmem:[%s5796] ss:$4 sm:$0x3]
        %v5799 = vlaneseq
        %v5800 = vshrl.u32 %v5799, 7
        %v5801 = vsub.s32 0, %v5800
        %v5802 = vrot.slane %v5797, %v5801
        %v5803 = vlaneseq
        %v5804 = vshrl.u32 %v5803, 7
        %v5805 = vsub.s32 1, %v5804
        %v5806 = vrot.slane %v5797, %v5805
        %v5825 = vunpack.c.l.b16 %v5556
        %v5826 = vunpack.c.l.b16 %v5557
        %v5827 = vunpack.c.l.b16 %v5558
        %v5828 = vunpack.c.l.b16 %v5559
        %v5829 = vunpack.c.l.b16 %v5560
        %v5830 = vunpack.c.l.b16 %v5561
        %v5831 = vunpack.c.l.b16 %v5562
        %v5832 = vunpack.c.l.b16 %v5563
        %v5833 = vunpack.c.l.b16 %v5564
        %v5834 = vunpack.c.l.b16 %v5565
        %v5835 = vunpack.c.l.b16 %v5566
        %v5836 = vunpack.c.l.b16 %v5567
        %v5837 = vunpack.c.l.b16 %v5568
        %v5838 = vunpack.c.l.b16 %v5569
        %v5839 = vunpack.c.l.b16 %v5570
        %v5840 = vunpack.c.l.b16 %v5571
        %v5841 = vpack.c.b16 %v5826, %v5825
        %v5842 = vpack.c.b16 %v5828, %v5827
        %v5843 = vpack.c.b16 %v5830, %v5829
        %v5844 = vpack.c.b16 %v5832, %v5831
        %v5845 = vpack.c.b16 %v5834, %v5833
        %v5846 = vpack.c.b16 %v5836, %v5835
        %v5847 = vpack.c.b16 %v5838, %v5837
        %v5848 = vpack.c.b16 %v5840, %v5839
        %5849 = vrot.lane.b32.xlu0 %v5841, 96
        %v5850 = vpop.permute.xlu0 %5849
        %5851 = vrot.lane.b32.xlu0 %v5842, 96
        %v5852 = vpop.permute.xlu0 %5851
        %5853 = vrot.lane.b32.xlu0 %v5843, 96
        %v5854 = vpop.permute.xlu0 %5853
        %5855 = vrot.lane.b32.xlu0 %v5844, 96
        %v5856 = vpop.permute.xlu0 %5855
        %5857 = vrot.lane.b32.xlu0 %v5845, 96
        %v5858 = vpop.permute.xlu0 %5857
        %5859 = vrot.lane.b32.xlu0 %v5846, 96
        %v5860 = vpop.permute.xlu0 %5859
        %5861 = vrot.lane.b32.xlu0 %v5847, 96
        %v5862 = vpop.permute.xlu0 %5861
        %5863 = vrot.lane.b32.xlu0 %v5848, 96
        %v5864 = vpop.permute.xlu0 %5863
        %5865 = vrot.lane.b32.xlu0 %v5636, 96
        %v5866 = vpop.permute.xlu0 %5865
        %5867 = vrot.lane.b32.xlu0 %v5637, 96
        %v5868 = vpop.permute.xlu0 %5867
        %5869 = vrot.lane.b32.xlu0 %v5638, 96
        %v5870 = vpop.permute.xlu0 %5869
        %5871 = vrot.lane.b32.xlu0 %v5639, 96
        %v5872 = vpop.permute.xlu0 %5871
        %5873 = vrot.lane.b32.xlu0 %v5640, 96
        %v5874 = vpop.permute.xlu0 %5873
        %5875 = vrot.lane.b32.xlu0 %v5641, 96
        %v5876 = vpop.permute.xlu0 %5875
        %5877 = vrot.lane.b32.xlu0 %v5642, 96
        %v5878 = vpop.permute.xlu0 %5877
        %5879 = vrot.lane.b32.xlu0 %v5643, 96
        %v5880 = vpop.permute.xlu0 %5879
        %5881 = vrot.lane.b32.xlu0 %v5676, 96
        %v5882 = vpop.permute.xlu0 %5881
        %5883 = vrot.lane.b32.xlu0 %v5677, 96
        %v5884 = vpop.permute.xlu0 %5883
        %5885 = vrot.lane.b32.xlu0 %v5678, 96
        %v5886 = vpop.permute.xlu0 %5885
        %5887 = vrot.lane.b32.xlu0 %v5679, 96
        %v5888 = vpop.permute.xlu0 %5887
        %5889 = vrot.lane.b32.xlu0 %v5680, 96
        %v5890 = vpop.permute.xlu0 %5889
        %5891 = vrot.lane.b32.xlu0 %v5681, 96
        %v5892 = vpop.permute.xlu0 %5891
        %5893 = vrot.lane.b32.xlu0 %v5682, 96
        %v5894 = vpop.permute.xlu0 %5893
        %5895 = vrot.lane.b32.xlu0 %v5683, 96
        %v5896 = vpop.permute.xlu0 %5895
        %v5898 = vsel %vm864, %v5850, 0
        %v5901 = vsel %vm864, %v5852, 0
        %v5904 = vsel %vm864, %v5854, 0
        %v5907 = vsel %vm864, %v5856, 0
        %v5910 = vsel %vm864, %v5858, 0
        %v5913 = vsel %vm864, %v5860, 0
        %v5916 = vsel %vm864, %v5862, 0
        %v5919 = vsel %vm864, %v5864, 0
        %v5922 = vsel %vm864, %v5866, 0
        %v5925 = vsel %vm864, %v5868, 0
        %v5928 = vsel %vm864, %v5870, 0
        %v5931 = vsel %vm864, %v5872, 0
        %v5934 = vsel %vm864, %v5874, 0
        %v5937 = vsel %vm864, %v5876, 0
        %v5940 = vsel %vm864, %v5878, 0
        %v5943 = vsel %vm864, %v5880, 0
        %v5946 = vsel %vm864, %v5882, 0
        %v5949 = vsel %vm864, %v5884, 0
        %v5952 = vsel %vm864, %v5886, 0
        %v5955 = vsel %vm864, %v5888, 0
        %v5958 = vsel %vm864, %v5890, 0
        %v5961 = vsel %vm864, %v5892, 0
        %v5964 = vsel %vm864, %v5894, 0
        %v5967 = vsel %vm864, %v5896, 0
        %5969 = vmatprep.subr.bf16.mxu0 0
        %5970 = vmatpush1.bf16.xpose.msra.mxu0 %v5922
        %5971 = vmatprep.subr.bf16.mxu0 0
        %5972 = vmatpush1.bf16.xpose.msra.mxu0 %v5925
        %5973 = vmatprep.subr.bf16.mxu0 0
        %5974 = vmatpush1.bf16.xpose.msra.mxu0 %v5928
        %5975 = vmatprep.subr.bf16.mxu0 0
        %5976 = vmatpush1.bf16.xpose.msra.mxu0 %v5931
        %5977 = vmatprep.subr.bf16.mxu0 0
        %5978 = vmatpush1.bf16.xpose.msra.mxu0 %v5934
        %5979 = vmatprep.subr.bf16.mxu0 0
        %5980 = vmatpush1.bf16.xpose.msra.mxu0 %v5937
        %5981 = vmatprep.subr.bf16.mxu0 0
        %5982 = vmatpush1.bf16.xpose.msra.mxu0 %v5940
        %5983 = vmatprep.subr.bf16.mxu0 0
        %5984 = vmatpush1.bf16.xpose.msra.mxu0 %v5943
        %5985 = vmatprep.subr.bf16.mxu0 0
        %5986 = vmatpush1.bf16.xpose.msra.mxu0 %v5946
        %5987 = vmatprep.subr.bf16.mxu0 0
        %5988 = vmatpush1.bf16.xpose.msra.mxu0 %v5949
        %5989 = vmatprep.subr.bf16.mxu0 0
        %5990 = vmatpush1.bf16.xpose.msra.mxu0 %v5952
        %5991 = vmatprep.subr.bf16.mxu0 0
        %5992 = vmatpush1.bf16.xpose.msra.mxu0 %v5955
        %5993 = vmatprep.subr.bf16.mxu0 0
        %5994 = vmatpush1.bf16.xpose.msra.mxu0 %v5958
        %5995 = vmatprep.subr.bf16.mxu0 0
        %5996 = vmatpush1.bf16.xpose.msra.mxu0 %v5961
        %5997 = vmatprep.subr.bf16.mxu0 0
        %5998 = vmatpush1.bf16.xpose.msra.mxu0 %v5964
        %5999 = vmatprep.subr.bf16.mxu0 0
        %6000 = vmatpush1.bf16.xpose.msra.mxu0 %v5967
        %6001 = vmatprep.mubr.bf16.mxu0 0
        %6002 = vmatmul.mubr.bf16.gmra.mrb[0].mxu0 %v5898
        %v6003 = vpop.f32.mrb[0].mxu0
        %v6004 = vadd.f32 %v5802, %v6003
        %v6005 = vpop.f32.mrb[0].mxu0
        %v6006 = vadd.f32 %v5806, %v6005
        %v6007 = vpop.f32.mrb[0].mxu0
        %v6008 = vadd.f32 %v5802, %v6007
        %v6009 = vpop.f32.mrb[0].mxu0
        %v6010 = vadd.f32 %v5806, %v6009
        %6011 = vmatprep.mubr.bf16.mxu0 0
        %6012 = vmatmul.mubr.bf16.gmra.mrb[0].mxu0 %v5901
        %v6013 = vpop.f32.mrb[0].mxu0
        %v6014 = vadd.f32 %v5802, %v6013
        %v6015 = vpop.f32.mrb[0].mxu0
        %v6016 = vadd.f32 %v5806, %v6015
        %v6017 = vpop.f32.mrb[0].mxu0
        %v6018 = vadd.f32 %v5802, %v6017
        %v6019 = vpop.f32.mrb[0].mxu0
        %v6020 = vadd.f32 %v5806, %v6019
        %6021 = vmatprep.mubr.bf16.mxu0 0
        %6022 = vmatmul.mubr.bf16.gmra.mrb[0].mxu0 %v5904
        %v6023 = vpop.f32.mrb[0].mxu0
        %v6024 = vadd.f32 %v5802, %v6023
        %v6025 = vpop.f32.mrb[0].mxu0
        %v6026 = vadd.f32 %v5806, %v6025
        %v6027 = vpop.f32.mrb[0].mxu0
        %v6028 = vadd.f32 %v5802, %v6027
        %v6029 = vpop.f32.mrb[0].mxu0
        %v6030 = vadd.f32 %v5806, %v6029
        %6031 = vmatprep.mubr.bf16.mxu0 0
        %6032 = vmatmul.mubr.bf16.gmra.mrb[0].mxu0 %v5907
        %v6033 = vpop.f32.mrb[0].mxu0
        %v6034 = vadd.f32 %v5802, %v6033
        %v6035 = vpop.f32.mrb[0].mxu0
        %v6036 = vadd.f32 %v5806, %v6035
        %v6037 = vpop.f32.mrb[0].mxu0
        %v6038 = vadd.f32 %v5802, %v6037
        %v6039 = vpop.f32.mrb[0].mxu0
        %v6040 = vadd.f32 %v5806, %v6039
        %6041 = vmatprep.mubr.bf16.mxu0 0
        %6042 = vmatmul.mubr.bf16.gmra.mrb[0].mxu0 %v5910
        %v6043 = vpop.f32.mrb[0].mxu0
        %v6044 = vadd.f32 %v5802, %v6043
        %v6045 = vpop.f32.mrb[0].mxu0
        %v6046 = vadd.f32 %v5806, %v6045
        %v6047 = vpop.f32.mrb[0].mxu0
        %v6048 = vadd.f32 %v5802, %v6047
        %v6049 = vpop.f32.mrb[0].mxu0
        %v6050 = vadd.f32 %v5806, %v6049
        %6051 = vmatprep.mubr.bf16.mxu0 0
        %6052 = vmatmul.mubr.bf16.gmra.mrb[0].mxu0 %v5913
        %v6053 = vpop.f32.mrb[0].mxu0
        %v6054 = vadd.f32 %v5802, %v6053
        %v6055 = vpop.f32.mrb[0].mxu0
        %v6056 = vadd.f32 %v5806, %v6055
        %v6057 = vpop.f32.mrb[0].mxu0
        %v6058 = vadd.f32 %v5802, %v6057
        %v6059 = vpop.f32.mrb[0].mxu0
        %v6060 = vadd.f32 %v5806, %v6059
        %6061 = vmatprep.mubr.bf16.mxu0 0
        %6062 = vmatmul.mubr.bf16.gmra.mrb[0].mxu0 %v5916
        %v6063 = vpop.f32.mrb[0].mxu0
        %v6064 = vadd.f32 %v5802, %v6063
        %v6065 = vpop.f32.mrb[0].mxu0
        %v6066 = vadd.f32 %v5806, %v6065
        %v6067 = vpop.f32.mrb[0].mxu0
        %v6068 = vadd.f32 %v5802, %v6067
        %v6069 = vpop.f32.mrb[0].mxu0
        %v6070 = vadd.f32 %v5806, %v6069
        %6071 = vmatprep.mubr.bf16.mxu0 0
        %6072 = vmatmul.mubr.bf16.gmra.mrb[0].mxu0 %v5919
        %v6073 = vpop.f32.mrb[0].mxu0
        %v6074 = vadd.f32 %v5802, %v6073
        %v6075 = vpop.f32.mrb[0].mxu0
        %v6076 = vadd.f32 %v5806, %v6075
        %v6077 = vpop.f32.mrb[0].mxu0
        %v6078 = vadd.f32 %v5802, %v6077
        %v6079 = vpop.f32.mrb[0].mxu0
        %v6080 = vadd.f32 %v5806, %v6079
        %6081 = vdwg.mxu0
        %v6082 = vmax.f32 %v6004, %v6006
        %6083 = vmax.xlane.f32.xlu0 %v6082
        %v6084 = vpop.xlane.xlu0 %6083
        %v6085 = vmax.f32 %v6008, %v6010
        %6086 = vmax.xlane.f32.xlu0 %v6085
        %v6087 = vpop.xlane.xlu0 %6086
        %v6088 = vmax.f32 %v6014, %v6016
        %6089 = vmax.xlane.f32.xlu0 %v6088
        %v6090 = vpop.xlane.xlu0 %6089
        %v6091 = vmax.f32 %v6018, %v6020
        %6092 = vmax.xlane.f32.xlu0 %v6091
        %v6093 = vpop.xlane.xlu0 %6092
        %v6094 = vmax.f32 %v6024, %v6026
        %6095 = vmax.xlane.f32.xlu0 %v6094
        %v6096 = vpop.xlane.xlu0 %6095
        %v6097 = vmax.f32 %v6028, %v6030
        %6098 = vmax.xlane.f32.xlu0 %v6097
        %v6099 = vpop.xlane.xlu0 %6098
        %v6100 = vmax.f32 %v6034, %v6036
        %6101 = vmax.xlane.f32.xlu0 %v6100
        %v6102 = vpop.xlane.xlu0 %6101
        %v6103 = vmax.f32 %v6038, %v6040
        %6104 = vmax.xlane.f32.xlu0 %v6103
        %v6105 = vpop.xlane.xlu0 %6104
        %v6106 = vmax.f32 %v6044, %v6046
        %6107 = vmax.xlane.f32.xlu0 %v6106
        %v6108 = vpop.xlane.xlu0 %6107
        %v6109 = vmax.f32 %v6048, %v6050
        %6110 = vmax.xlane.f32.xlu0 %v6109
        %v6111 = vpop.xlane.xlu0 %6110
        %v6112 = vmax.f32 %v6054, %v6056
        %6113 = vmax.xlane.f32.xlu0 %v6112
        %v6114 = vpop.xlane.xlu0 %6113
        %v6115 = vmax.f32 %v6058, %v6060
        %6116 = vmax.xlane.f32.xlu0 %v6115
        %v6117 = vpop.xlane.xlu0 %6116
        %v6118 = vmax.f32 %v6064, %v6066
        %6119 = vmax.xlane.f32.xlu0 %v6118
        %v6120 = vpop.xlane.xlu0 %6119
        %v6121 = vmax.f32 %v6068, %v6070
        %6122 = vmax.xlane.f32.xlu0 %v6121
        %v6123 = vpop.xlane.xlu0 %6122
        %v6124 = vmax.f32 %v6074, %v6076
        %6125 = vmax.xlane.f32.xlu0 %v6124
        %v6126 = vpop.xlane.xlu0 %6125
        %v6127 = vmax.f32 %v6078, %v6080
        %6128 = vmax.xlane.f32.xlu0 %v6127
        %v6129 = vpop.xlane.xlu0 %6128
        %v6130 = vsub.f32 %v6004, %v6084
        %v6131 = vsub.f32 %v6006, %v6084
        %v6132 = vsub.f32 %v6008, %v6087
        %v6133 = vsub.f32 %v6010, %v6087
        %v6134 = vsub.f32 %v6014, %v6090
        %v6135 = vsub.f32 %v6016, %v6090
        %v6136 = vsub.f32 %v6018, %v6093
        %v6137 = vsub.f32 %v6020, %v6093
        %v6138 = vsub.f32 %v6024, %v6096
        %v6139 = vsub.f32 %v6026, %v6096
        %v6140 = vsub.f32 %v6028, %v6099
        %v6141 = vsub.f32 %v6030, %v6099
        %v6142 = vsub.f32 %v6034, %v6102
        %v6143 = vsub.f32 %v6036, %v6102
        %v6144 = vsub.f32 %v6038, %v6105
        %v6145 = vsub.f32 %v6040, %v6105
        %v6146 = vsub.f32 %v6044, %v6108
        %v6147 = vsub.f32 %v6046, %v6108
        %v6148 = vsub.f32 %v6048, %v6111
        %v6149 = vsub.f32 %v6050, %v6111
        %v6150 = vsub.f32 %v6054, %v6114
        %v6151 = vsub.f32 %v6056, %v6114
        %v6152 = vsub.f32 %v6058, %v6117
        %v6153 = vsub.f32 %v6060, %v6117
        %v6154 = vsub.f32 %v6064, %v6120
        %v6155 = vsub.f32 %v6066, %v6120
        %v6156 = vsub.f32 %v6068, %v6123
        %v6157 = vsub.f32 %v6070, %v6123
        %v6158 = vsub.f32 %v6074, %v6126
        %v6159 = vsub.f32 %v6076, %v6126
        %v6160 = vsub.f32 %v6078, %v6129
        %v6161 = vsub.f32 %v6080, %v6129
        %v6162 = vmul.f32 %v6130, 1.442695
        %v6163 = vpow.pop %v6162
        %v6164 = vmul.f32 %v6131, 1.442695
        %v6165 = vpow.pop %v6164
        %v6166 = vmul.f32 %v6132, 1.442695
        %v6167 = vpow.pop %v6166
        %v6168 = vmul.f32 %v6133, 1.442695
        %v6169 = vpow.pop %v6168
        %v6170 = vmul.f32 %v6134, 1.442695
        %v6171 = vpow.pop %v6170
        %v6172 = vmul.f32 %v6135, 1.442695
        %v6173 = vpow.pop %v6172
        %v6174 = vmul.f32 %v6136, 1.442695
        %v6175 = vpow.pop %v6174
        %v6176 = vmul.f32 %v6137, 1.442695
        %v6177 = vpow.pop %v6176
        %v6178 = vmul.f32 %v6138, 1.442695
        %v6179 = vpow.pop %v6178
        %v6180 = vmul.f32 %v6139, 1.442695
        %v6181 = vpow.pop %v6180
        %v6182 = vmul.f32 %v6140, 1.442695
        %v6183 = vpow.pop %v6182
        %v6184 = vmul.f32 %v6141, 1.442695
        %v6185 = vpow.pop %v6184
        %v6186 = vmul.f32 %v6142, 1.442695
        %v6187 = vpow.pop %v6186
        %v6188 = vmul.f32 %v6143, 1.442695
        %v6189 = vpow.pop %v6188
        %v6190 = vmul.f32 %v6144, 1.442695
        %v6191 = vpow.pop %v6190
        %v6192 = vmul.f32 %v6145, 1.442695
        %v6193 = vpow.pop %v6192
        %v6194 = vmul.f32 %v6146, 1.442695
        %v6195 = vpow.pop %v6194
        %v6196 = vmul.f32 %v6147, 1.442695
        %v6197 = vpow.pop %v6196
        %v6198 = vmul.f32 %v6148, 1.442695
        %v6199 = vpow.pop %v6198
        %v6200 = vmul.f32 %v6149, 1.442695
        %v6201 = vpow.pop %v6200
        %v6202 = vmul.f32 %v6150, 1.442695
        %v6203 = vpow.pop %v6202
        %v6204 = vmul.f32 %v6151, 1.442695
        %v6205 = vpow.pop %v6204
        %v6206 = vmul.f32 %v6152, 1.442695
        %v6207 = vpow.pop %v6206
        %v6208 = vmul.f32 %v6153, 1.442695
        %v6209 = vpow.pop %v6208
        %v6210 = vmul.f32 %v6154, 1.442695
        %v6211 = vpow.pop %v6210
        %v6212 = vmul.f32 %v6155, 1.442695
        %v6213 = vpow.pop %v6212
        %v6214 = vmul.f32 %v6156, 1.442695
        %v6215 = vpow.pop %v6214
        %v6216 = vmul.f32 %v6157, 1.442695
        %v6217 = vpow.pop %v6216
        %v6218 = vmul.f32 %v6158, 1.442695
        %v6219 = vpow.pop %v6218
        %v6220 = vmul.f32 %v6159, 1.442695
        %v6221 = vpow.pop %v6220
        %v6222 = vmul.f32 %v6160, 1.442695
        %v6223 = vpow.pop %v6222
        %v6224 = vmul.f32 %v6161, 1.442695
        %v6225 = vpow.pop %v6224
        %v6226 = vadd.f32 %v6163, %v6165
        %6227 = vadd.xlane.f32.xlu0 %v6226
        %v6228 = vpop.xlane.xlu0 %6227
        %v6229 = vadd.f32 %v6167, %v6169
        %6230 = vadd.xlane.f32.xlu0 %v6229
        %v6231 = vpop.xlane.xlu0 %6230
        %v6232 = vadd.f32 %v6171, %v6173
        %6233 = vadd.xlane.f32.xlu0 %v6232
        %v6234 = vpop.xlane.xlu0 %6233
        %v6235 = vadd.f32 %v6175, %v6177
        %6236 = vadd.xlane.f32.xlu0 %v6235
        %v6237 = vpop.xlane.xlu0 %6236
        %v6238 = vadd.f32 %v6179, %v6181
        %6239 = vadd.xlane.f32.xlu0 %v6238
        %v6240 = vpop.xlane.xlu0 %6239
        %v6241 = vadd.f32 %v6183, %v6185
        %6242 = vadd.xlane.f32.xlu0 %v6241
        %v6243 = vpop.xlane.xlu0 %6242
        %v6244 = vadd.f32 %v6187, %v6189
        %6245 = vadd.xlane.f32.xlu0 %v6244
        %v6246 = vpop.xlane.xlu0 %6245
        %v6247 = vadd.f32 %v6191, %v6193
        %6248 = vadd.xlane.f32.xlu0 %v6247
        %v6249 = vpop.xlane.xlu0 %6248
        %v6250 = vadd.f32 %v6195, %v6197
        %6251 = vadd.xlane.f32.xlu0 %v6250
        %v6252 = vpop.xlane.xlu0 %6251
        %v6253 = vadd.f32 %v6199, %v6201
        %6254 = vadd.xlane.f32.xlu0 %v6253
        %v6255 = vpop.xlane.xlu0 %6254
        %v6256 = vadd.f32 %v6203, %v6205
        %6257 = vadd.xlane.f32.xlu0 %v6256
        %v6258 = vpop.xlane.xlu0 %6257
        %v6259 = vadd.f32 %v6207, %v6209
        %6260 = vadd.xlane.f32.xlu0 %v6259
        %v6261 = vpop.xlane.xlu0 %6260
        %v6262 = vadd.f32 %v6211, %v6213
        %6263 = vadd.xlane.f32.xlu0 %v6262
        %v6264 = vpop.xlane.xlu0 %6263
        %v6265 = vadd.f32 %v6215, %v6217
        %6266 = vadd.xlane.f32.xlu0 %v6265
        %v6267 = vpop.xlane.xlu0 %6266
        %v6268 = vadd.f32 %v6219, %v6221
        %6269 = vadd.xlane.f32.xlu0 %v6268
        %v6270 = vpop.xlane.xlu0 %6269
        %v6271 = vadd.f32 %v6223, %v6225
        %6272 = vadd.xlane.f32.xlu0 %v6271
        %v6273 = vpop.xlane.xlu0 %6272
        %v6274 = vpack.c.bf16 %v6167, %v6163
        %v6275 = vpack.c.bf16 %v6169, %v6165
        %v6276 = vpack.c.bf16 %v6175, %v6171
        %v6277 = vpack.c.bf16 %v6177, %v6173
        %v6278 = vpack.c.bf16 %v6183, %v6179
        %v6279 = vpack.c.bf16 %v6185, %v6181
        %v6280 = vpack.c.bf16 %v6191, %v6187
        %v6281 = vpack.c.bf16 %v6193, %v6189
        %v6282 = vpack.c.bf16 %v6199, %v6195
        %v6283 = vpack.c.bf16 %v6201, %v6197
        %v6284 = vpack.c.bf16 %v6207, %v6203
        %v6285 = vpack.c.bf16 %v6209, %v6205
        %v6286 = vpack.c.bf16 %v6215, %v6211
        %v6287 = vpack.c.bf16 %v6217, %v6213
        %v6288 = vpack.c.bf16 %v6223, %v6219
        %v6289 = vpack.c.bf16 %v6225, %v6221
        %6290 = vrot.lane.b32.xlu0 %v5748, 96
        %v6291 = vpop.permute.xlu0 %6290
        %6292 = vrot.lane.b32.xlu0 %v5749, 96
        %v6293 = vpop.permute.xlu0 %6292
        %6294 = vrot.lane.b32.xlu0 %v5750, 96
        %v6295 = vpop.permute.xlu0 %6294
        %6296 = vrot.lane.b32.xlu0 %v5751, 96
        %v6297 = vpop.permute.xlu0 %6296
        %6298 = vrot.lane.b32.xlu0 %v5752, 96
        %v6299 = vpop.permute.xlu0 %6298
        %6300 = vrot.lane.b32.xlu0 %v5753, 96
        %v6301 = vpop.permute.xlu0 %6300
        %6302 = vrot.lane.b32.xlu0 %v5754, 96
        %v6303 = vpop.permute.xlu0 %6302
        %6304 = vrot.lane.b32.xlu0 %v5755, 96
        %v6305 = vpop.permute.xlu0 %6304
        %6306 = vrot.lane.b32.xlu0 %v5788, 96
        %v6307 = vpop.permute.xlu0 %6306
        %6308 = vrot.lane.b32.xlu0 %v5789, 96
        %v6309 = vpop.permute.xlu0 %6308
        %6310 = vrot.lane.b32.xlu0 %v5790, 96
        %v6311 = vpop.permute.xlu0 %6310
        %6312 = vrot.lane.b32.xlu0 %v5791, 96
        %v6313 = vpop.permute.xlu0 %6312
        %6314 = vrot.lane.b32.xlu0 %v5792, 96
        %v6315 = vpop.permute.xlu0 %6314
        %6316 = vrot.lane.b32.xlu0 %v5793, 96
        %v6317 = vpop.permute.xlu0 %6316
        %6318 = vrot.lane.b32.xlu0 %v5794, 96
        %v6319 = vpop.permute.xlu0 %6318
        %6320 = vrot.lane.b32.xlu0 %v5795, 96
        %v6321 = vpop.permute.xlu0 %6320
        %6338 = vmatprep.subr.bf16.mxu0 0
        %6339 = vmatpush1.bf16.msra.mxu0 %v6291
        %6340 = vmatprep.subr.bf16.mxu0 0
        %6341 = vmatpush1.bf16.msra.mxu0 %v6293
        %6342 = vmatprep.subr.bf16.mxu0 0
        %6343 = vmatpush1.bf16.msra.mxu0 %v6295
        %6344 = vmatprep.subr.bf16.mxu0 0
        %6345 = vmatpush1.bf16.msra.mxu0 %v6297
        %6346 = vmatprep.subr.bf16.mxu0 0
        %6347 = vmatpush1.bf16.msra.mxu0 %v6299
        %6348 = vmatprep.subr.bf16.mxu0 0
        %6349 = vmatpush1.bf16.msra.mxu0 %v6301
        %6350 = vmatprep.subr.bf16.mxu0 0
        %6351 = vmatpush1.bf16.msra.mxu0 %v6303
        %6352 = vmatprep.subr.bf16.mxu0 0
        %6353 = vmatpush1.bf16.msra.mxu0 %v6305
        %6354 = vmatprep.subr.bf16.mxu0 0
        %6355 = vmatpush1.bf16.msra.mxu0 %v6307
        %6356 = vmatprep.subr.bf16.mxu0 0
        %6357 = vmatpush1.bf16.msra.mxu0 %v6309
        %6358 = vmatprep.subr.bf16.mxu0 0
        %6359 = vmatpush1.bf16.msra.mxu0 %v6311
        %6360 = vmatprep.subr.bf16.mxu0 0
        %6361 = vmatpush1.bf16.msra.mxu0 %v6313
        %6362 = vmatprep.subr.bf16.mxu0 0
        %6363 = vmatpush1.bf16.msra.mxu0 %v6315
        %6364 = vmatprep.subr.bf16.mxu0 0
        %6365 = vmatpush1.bf16.msra.mxu0 %v6317
        %6366 = vmatprep.subr.bf16.mxu0 0
        %6367 = vmatpush1.bf16.msra.mxu0 %v6319
        %6368 = vmatprep.subr.bf16.mxu0 0
        %6369 = vmatpush1.bf16.msra.mxu0 %v6321
        %6370 = vmatprep.mubr.bf16.mxu0 %v6275
        %6371 = vmatmul.mubr.bf16.gmra.mrb[0].mxu0 %v6274
        %v6372 = vpop.f32.mrb[0].mxu0
        %v6373 = vadd.f32 0.0, %v6372
        %v6374 = vpop.f32.mrb[0].mxu0
        %v6375 = vpop.f32.mrb[0].mxu0
        %v6376 = vadd.f32 0.0, %v6375
        %v6377 = vpop.f32.mrb[0].mxu0
        %6378 = vmatprep.mubr.bf16.mxu0 %v6277
        %6379 = vmatmul.mubr.bf16.gmra.mrb[0].mxu0 %v6276
        %v6380 = vpop.f32.mrb[0].mxu0
        %v6381 = vadd.f32 0.0, %v6380
        %v6382 = vpop.f32.mrb[0].mxu0
        %v6383 = vpop.f32.mrb[0].mxu0
        %v6384 = vadd.f32 0.0, %v6383
        %v6385 = vpop.f32.mrb[0].mxu0
        %6386 = vmatprep.mubr.bf16.mxu0 %v6279
        %6387 = vmatmul.mubr.bf16.gmra.mrb[0].mxu0 %v6278
        %v6388 = vpop.f32.mrb[0].mxu0
        %v6389 = vadd.f32 0.0, %v6388
        %v6390 = vpop.f32.mrb[0].mxu0
        %v6391 = vpop.f32.mrb[0].mxu0
        %v6392 = vadd.f32 0.0, %v6391
        %v6393 = vpop.f32.mrb[0].mxu0
        %6394 = vmatprep.mubr.bf16.mxu0 %v6281
        %6395 = vmatmul.mubr.bf16.gmra.mrb[0].mxu0 %v6280
        %v6396 = vpop.f32.mrb[0].mxu0
        %v6397 = vadd.f32 0.0, %v6396
        %v6398 = vpop.f32.mrb[0].mxu0
        %v6399 = vpop.f32.mrb[0].mxu0
        %v6400 = vadd.f32 0.0, %v6399
        %v6401 = vpop.f32.mrb[0].mxu0
        %6402 = vmatprep.mubr.bf16.mxu0 %v6283
        %6403 = vmatmul.mubr.bf16.gmra.mrb[0].mxu0 %v6282
        %v6404 = vpop.f32.mrb[0].mxu0
        %v6405 = vadd.f32 0.0, %v6404
        %v6406 = vpop.f32.mrb[0].mxu0
        %v6407 = vpop.f32.mrb[0].mxu0
        %v6408 = vadd.f32 0.0, %v6407
        %v6409 = vpop.f32.mrb[0].mxu0
        %6410 = vmatprep.mubr.bf16.mxu0 %v6285
        %6411 = vmatmul.mubr.bf16.gmra.mrb[0].mxu0 %v6284
        %v6412 = vpop.f32.mrb[0].mxu0
        %v6413 = vadd.f32 0.0, %v6412
        %v6414 = vpop.f32.mrb[0].mxu0
        %v6415 = vpop.f32.mrb[0].mxu0
        %v6416 = vadd.f32 0.0, %v6415
        %v6417 = vpop.f32.mrb[0].mxu0
        %6418 = vmatprep.mubr.bf16.mxu0 %v6287
        %6419 = vmatmul.mubr.bf16.gmra.mrb[0].mxu0 %v6286
        %v6420 = vpop.f32.mrb[0].mxu0
        %v6421 = vadd.f32 0.0, %v6420
        %v6422 = vpop.f32.mrb[0].mxu0
        %v6423 = vpop.f32.mrb[0].mxu0
        %v6424 = vadd.f32 0.0, %v6423
        %v6425 = vpop.f32.mrb[0].mxu0
        %6426 = vmatprep.mubr.bf16.mxu0 %v6289
        %6427 = vmatmul.mubr.bf16.gmra.mrb[0].mxu0 %v6288
        %v6428 = vpop.f32.mrb[0].mxu0
        %v6429 = vadd.f32 0.0, %v6428
        %v6430 = vpop.f32.mrb[0].mxu0
        %v6431 = vpop.f32.mrb[0].mxu0
        %v6432 = vadd.f32 0.0, %v6431
        %v6433 = vpop.f32.mrb[0].mxu0
        %6434 = vdwg.mxu0
        %s6435 = sadd.s32 %s5424, 1
        %s6436 = sld [smem:[#allocation2 + %s6435]]
        %v6437 = vrcp.pop %v6228
        %v6438 = vrcp.pop %v6231
        %v6439 = vrcp.pop %v6234
        %v6440 = vrcp.pop %v6237
        %v6441 = vrcp.pop %v6240
        %v6442 = vrcp.pop %v6243
        %v6443 = vrcp.pop %v6246
        %v6444 = vrcp.pop %v6249
        %v6445 = vrcp.pop %v6252
        %v6446 = vrcp.pop %v6255
        %v6447 = vrcp.pop %v6258
        %v6448 = vrcp.pop %v6261
        %v6449 = vrcp.pop %v6264
        %v6450 = vrcp.pop %v6267
        %v6451 = vrcp.pop %v6270
        %v6452 = vrcp.pop %v6273
        %v6453 = vstv %s6436
        %v6454 = vmul.f32 %v6453, %v6437
        %v6455 = vmul.f32 %v6453, %v6438
        %v6456 = vmul.f32 %v6453, %v6439
        %v6457 = vmul.f32 %v6453, %v6440
        %v6458 = vmul.f32 %v6453, %v6441
        %v6459 = vmul.f32 %v6453, %v6442
        %v6460 = vmul.f32 %v6453, %v6443
        %v6461 = vmul.f32 %v6453, %v6444
        %v6462 = vmul.f32 %v6453, %v6445
        %v6463 = vmul.f32 %v6453, %v6446
        %v6464 = vmul.f32 %v6453, %v6447
        %v6465 = vmul.f32 %v6453, %v6448
        %v6466 = vmul.f32 %v6453, %v6449
        %v6467 = vmul.f32 %v6453, %v6450
        %v6468 = vmul.f32 %v6453, %v6451
        %v6469 = vmul.f32 %v6453, %v6452
        %v6470 = vmul.f32 %v6373, %v6454
        %v6471 = vmul.f32 %v6376, %v6455
        %v6472 = vmul.f32 %v6381, %v6456
        %v6473 = vmul.f32 %v6384, %v6457
        %v6474 = vmul.f32 %v6389, %v6458
        %v6475 = vmul.f32 %v6392, %v6459
        %v6476 = vmul.f32 %v6397, %v6460
        %v6477 = vmul.f32 %v6400, %v6461
        %v6478 = vmul.f32 %v6405, %v6462
        %v6479 = vmul.f32 %v6408, %v6463
        %v6480 = vmul.f32 %v6413, %v6464
        %v6481 = vmul.f32 %v6416, %v6465
        %v6482 = vmul.f32 %v6421, %v6466
        %v6483 = vmul.f32 %v6424, %v6467
        %v6484 = vmul.f32 %v6429, %v6468
        %v6485 = vmul.f32 %v6432, %v6469
        %v6486 = vpack.c.bf16 %v6471, %v6470
        %v6487 = vpack.c.bf16 %v6473, %v6472
        %v6488 = vpack.c.bf16 %v6475, %v6474
        %v6489 = vpack.c.bf16 %v6477, %v6476
        %v6490 = vpack.c.bf16 %v6479, %v6478
        %v6491 = vpack.c.bf16 %v6481, %v6480
        %v6492 = vpack.c.bf16 %v6483, %v6482
        %v6493 = vpack.c.bf16 %v6485, %v6484
        %v6502 = vunpack.c.l.b16 %v6486
        %v6503 = vunpack.c.h.b16 %v6486
        %v6504 = vunpack.c.l.b16 %v6487
        %v6505 = vunpack.c.h.b16 %v6487
        %v6506 = vunpack.c.l.b16 %v6488
        %v6507 = vunpack.c.h.b16 %v6488
        %v6508 = vunpack.c.l.b16 %v6489
        %v6509 = vunpack.c.h.b16 %v6489
        %v6510 = vunpack.c.l.b16 %v6490
        %v6511 = vunpack.c.h.b16 %v6490
        %v6512 = vunpack.c.l.b16 %v6491
        %v6513 = vunpack.c.h.b16 %v6491
        %v6514 = vunpack.c.l.b16 %v6492
        %v6515 = vunpack.c.h.b16 %v6492
        %v6516 = vunpack.c.l.b16 %v6493
        %v6517 = vunpack.c.h.b16 %v6493
        %v6518 = vpack.c.b16 %v6502, %v6502
        %v6519 = vpack.c.b16 %v6503, %v6503
        %v6520 = vpack.c.b16 %v6504, %v6504
        %v6521 = vpack.c.b16 %v6505, %v6505
        %v6522 = vpack.c.b16 %v6506, %v6506
        %v6523 = vpack.c.b16 %v6507, %v6507
        %v6524 = vpack.c.b16 %v6508, %v6508
        %v6525 = vpack.c.b16 %v6509, %v6509
        %v6526 = vpack.c.b16 %v6510, %v6510
        %v6527 = vpack.c.b16 %v6511, %v6511
        %v6528 = vpack.c.b16 %v6512, %v6512
        %v6529 = vpack.c.b16 %v6513, %v6513
        %v6530 = vpack.c.b16 %v6514, %v6514
        %v6531 = vpack.c.b16 %v6515, %v6515
        %v6532 = vpack.c.b16 %v6516, %v6516
        %v6533 = vpack.c.b16 %v6517, %v6517
        %6534 = vrot.lane.b32.xlu0 %v6518, 32
        %v6535 = vpop.permute.xlu0 %6534
        %6536 = vrot.lane.b32.xlu0 %v6519, 32
        %v6537 = vpop.permute.xlu0 %6536
        %6538 = vrot.lane.b32.xlu0 %v6520, 32
        %v6539 = vpop.permute.xlu0 %6538
        %6540 = vrot.lane.b32.xlu0 %v6521, 32
        %v6541 = vpop.permute.xlu0 %6540
        %6542 = vrot.lane.b32.xlu0 %v6522, 32
        %v6543 = vpop.permute.xlu0 %6542
        %6544 = vrot.lane.b32.xlu0 %v6523, 32
        %v6545 = vpop.permute.xlu0 %6544
        %6546 = vrot.lane.b32.xlu0 %v6524, 32
        %v6547 = vpop.permute.xlu0 %6546
        %6548 = vrot.lane.b32.xlu0 %v6525, 32
        %v6549 = vpop.permute.xlu0 %6548
        %6550 = vrot.lane.b32.xlu0 %v6526, 32
        %v6551 = vpop.permute.xlu0 %6550
        %6552 = vrot.lane.b32.xlu0 %v6527, 32
        %v6553 = vpop.permute.xlu0 %6552
        %6554 = vrot.lane.b32.xlu0 %v6528, 32
        %v6555 = vpop.permute.xlu0 %6554
        %6556 = vrot.lane.b32.xlu0 %v6529, 32
        %v6557 = vpop.permute.xlu0 %6556
        %6558 = vrot.lane.b32.xlu0 %v6530, 32
        %v6559 = vpop.permute.xlu0 %6558
        %6560 = vrot.lane.b32.xlu0 %v6531, 32
        %v6561 = vpop.permute.xlu0 %6560
        %6562 = vrot.lane.b32.xlu0 %v6532, 32
        %v6563 = vpop.permute.xlu0 %6562
        %6564 = vrot.lane.b32.xlu0 %v6533, 32
        %v6565 = vpop.permute.xlu0 %6564
        %6582 = vst.msk [vmem:[%s5539] sm:$0xf] %vm2515, %v6535
        %6583 = vst.msk [vmem:[%s5539 + $0x4] sm:$0xf] %vm2515, %v6537
        %6584 = vst.msk [vmem:[%s5539 + $0x8] sm:$0xf] %vm2515, %v6539
        %6585 = vst.msk [vmem:[%s5539 + $0xc] sm:$0xf] %vm2515, %v6541
        %6586 = vst.msk [vmem:[%s5539 + $0x10] sm:$0xf] %vm2515, %v6543
        %6587 = vst.msk [vmem:[%s5539 + $0x14] sm:$0xf] %vm2515, %v6545
        %6588 = vst.msk [vmem:[%s5539 + $0x18] sm:$0xf] %vm2515, %v6547
        %6589 = vst.msk [vmem:[%s5539 + $0x1c] sm:$0xf] %vm2515, %v6549
        %6590 = vst.msk [vmem:[%s5539 + $0x20] sm:$0xf] %vm2515, %v6551
        %6591 = vst.msk [vmem:[%s5539 + $0x24] sm:$0xf] %vm2515, %v6553
        %6592 = vst.msk [vmem:[%s5539 + $0x28] sm:$0xf] %vm2515, %v6555
        %6593 = vst.msk [vmem:[%s5539 + $0x2c] sm:$0xf] %vm2515, %v6557
        %6594 = vst.msk [vmem:[%s5539 + $0x30] sm:$0xf] %vm2515, %v6559
        %6595 = vst.msk [vmem:[%s5539 + $0x34] sm:$0xf] %vm2515, %v6561
        %6596 = vst.msk [vmem:[%s5539 + $0x38] sm:$0xf] %vm2515, %v6563
        %6597 = vst.msk [vmem:[%s5539 + $0x3c] sm:$0xf] %vm2515, %v6565
        %v6598 = vld [vmem:[%s4618] sm:$0xf]
        %v6599 = vld [vmem:[%s4618 + $0x4] sm:$0xf]
        %v6600 = vld [vmem:[%s4618 + $0x8] sm:$0xf]
        %v6601 = vld [vmem:[%s4618 + $0xc] sm:$0xf]
        %v6602 = vld [vmem:[%s4618 + $0x10] sm:$0xf]
        %v6603 = vld [vmem:[%s4618 + $0x14] sm:$0xf]
        %v6604 = vld [vmem:[%s4618 + $0x18] sm:$0xf]
        %v6605 = vld [vmem:[%s4618 + $0x1c] sm:$0xf]
        %v6606 = vld [vmem:[%s4618 + $0x20] sm:$0xf]
        %v6607 = vld [vmem:[%s4618 + $0x24] sm:$0xf]
        %v6608 = vld [vmem:[%s4618 + $0x28] sm:$0xf]
        %v6609 = vld [vmem:[%s4618 + $0x2c] sm:$0xf]
        %v6610 = vld [vmem:[%s4618 + $0x30] sm:$0xf]
        %v6611 = vld [vmem:[%s4618 + $0x34] sm:$0xf]
        %v6612 = vld [vmem:[%s4618 + $0x38] sm:$0xf]
        %v6613 = vld [vmem:[%s4618 + $0x3c] sm:$0xf]
        %v6614 = vld [vmem:[%s4635] sm:$0xf]
        %v6615 = vld [vmem:[%s4635 + $0x4] sm:$0xf]
        %v6616 = vld [vmem:[%s4635 + $0x8] sm:$0xf]
        %v6617 = vld [vmem:[%s4635 + $0xc] sm:$0xf]
        %v6618 = vld [vmem:[%s4635 + $0x10] sm:$0xf]
        %v6619 = vld [vmem:[%s4635 + $0x14] sm:$0xf]
        %v6620 = vld [vmem:[%s4635 + $0x18] sm:$0xf]
        %v6621 = vld [vmem:[%s4635 + $0x1c] sm:$0xf]
        %v6622 = vld [vmem:[%s4635 + $0x20] sm:$0xf]
        %v6623 = vld [vmem:[%s4635 + $0x24] sm:$0xf]
        %v6624 = vld [vmem:[%s4635 + $0x28] sm:$0xf]
        %v6625 = vld [vmem:[%s4635 + $0x2c] sm:$0xf]
        %v6626 = vld [vmem:[%s4635 + $0x30] sm:$0xf]
        %v6627 = vld [vmem:[%s4635 + $0x34] sm:$0xf]
        %v6628 = vld [vmem:[%s4635 + $0x38] sm:$0xf]
        %v6629 = vld [vmem:[%s4635 + $0x3c] sm:$0xf]
        %v6630 = vld [vmem:[%s4652] sm:$0xf]
        %v6631 = vld [vmem:[%s4652 + $0x4] sm:$0xf]
        %v6632 = vld [vmem:[%s4652 + $0x8] sm:$0xf]
        %v6633 = vld [vmem:[%s4652 + $0xc] sm:$0xf]
        %v6634 = vld [vmem:[%s4652 + $0x10] sm:$0xf]
        %v6635 = vld [vmem:[%s4652 + $0x14] sm:$0xf]
        %v6636 = vld [vmem:[%s4652 + $0x18] sm:$0xf]
        %v6637 = vld [vmem:[%s4652 + $0x1c] sm:$0xf]
        %v6638 = vld [vmem:[%s4652 + $0x20] sm:$0xf]
        %v6639 = vld [vmem:[%s4652 + $0x24] sm:$0xf]
        %v6640 = vld [vmem:[%s4652 + $0x28] sm:$0xf]
        %v6641 = vld [vmem:[%s4652 + $0x2c] sm:$0xf]
        %v6642 = vld [vmem:[%s4652 + $0x30] sm:$0xf]
        %v6643 = vld [vmem:[%s4652 + $0x34] sm:$0xf]
        %v6644 = vld [vmem:[%s4652 + $0x38] sm:$0xf]
        %v6645 = vld [vmem:[%s4652 + $0x3c] sm:$0xf]
        %v6662 = vunpack.c.l.b16 %v6614
        %v6663 = vunpack.c.l.b16 %v6615
        %v6664 = vunpack.c.l.b16 %v6616
        %v6665 = vunpack.c.l.b16 %v6617
        %v6666 = vunpack.c.l.b16 %v6618
        %v6667 = vunpack.c.l.b16 %v6619
        %v6668 = vunpack.c.l.b16 %v6620
        %v6669 = vunpack.c.l.b16 %v6621
        %v6670 = vunpack.c.l.b16 %v6622
        %v6671 = vunpack.c.l.b16 %v6623
        %v6672 = vunpack.c.l.b16 %v6624
        %v6673 = vunpack.c.l.b16 %v6625
        %v6674 = vunpack.c.l.b16 %v6626
        %v6675 = vunpack.c.l.b16 %v6627
        %v6676 = vunpack.c.l.b16 %v6628
        %v6677 = vunpack.c.l.b16 %v6629
        %v6678 = vpack.c.b16 %v6663, %v6662
        %v6679 = vpack.c.b16 %v6665, %v6664
        %v6680 = vpack.c.b16 %v6667, %v6666
        %v6681 = vpack.c.b16 %v6669, %v6668
        %v6682 = vpack.c.b16 %v6671, %v6670
        %v6683 = vpack.c.b16 %v6673, %v6672
        %v6684 = vpack.c.b16 %v6675, %v6674
        %v6685 = vpack.c.b16 %v6677, %v6676
        %v6702 = vunpack.c.l.b16 %v6630
        %v6703 = vunpack.c.l.b16 %v6631
        %v6704 = vunpack.c.l.b16 %v6632
        %v6705 = vunpack.c.l.b16 %v6633
        %v6706 = vunpack.c.l.b16 %v6634
        %v6707 = vunpack.c.l.b16 %v6635
        %v6708 = vunpack.c.l.b16 %v6636
        %v6709 = vunpack.c.l.b16 %v6637
        %v6710 = vunpack.c.l.b16 %v6638
        %v6711 = vunpack.c.l.b16 %v6639
        %v6712 = vunpack.c.l.b16 %v6640
        %v6713 = vunpack.c.l.b16 %v6641
        %v6714 = vunpack.c.l.b16 %v6642
        %v6715 = vunpack.c.l.b16 %v6643
        %v6716 = vunpack.c.l.b16 %v6644
        %v6717 = vunpack.c.l.b16 %v6645
        %v6718 = vpack.c.b16 %v6703, %v6702
        %v6719 = vpack.c.b16 %v6705, %v6704
        %v6720 = vpack.c.b16 %v6707, %v6706
        %v6721 = vpack.c.b16 %v6709, %v6708
        %v6722 = vpack.c.b16 %v6711, %v6710
        %v6723 = vpack.c.b16 %v6713, %v6712
        %v6724 = vpack.c.b16 %v6715, %v6714
        %v6725 = vpack.c.b16 %v6717, %v6716
        %v6726 = vld [vmem:[%s4749] sm:$0xf]
        %v6727 = vld [vmem:[%s4749 + $0x4] sm:$0xf]
        %v6728 = vld [vmem:[%s4749 + $0x8] sm:$0xf]
        %v6729 = vld [vmem:[%s4749 + $0xc] sm:$0xf]
        %v6730 = vld [vmem:[%s4749 + $0x10] sm:$0xf]
        %v6731 = vld [vmem:[%s4749 + $0x14] sm:$0xf]
        %v6732 = vld [vmem:[%s4749 + $0x18] sm:$0xf]
        %v6733 = vld [vmem:[%s4749 + $0x1c] sm:$0xf]
        %v6734 = vld [vmem:[%s4749 + $0x20] sm:$0xf]
        %v6735 = vld [vmem:[%s4749 + $0x24] sm:$0xf]
        %v6736 = vld [vmem:[%s4749 + $0x28] sm:$0xf]
        %v6737 = vld [vmem:[%s4749 + $0x2c] sm:$0xf]
        %v6738 = vld [vmem:[%s4749 + $0x30] sm:$0xf]
        %v6739 = vld [vmem:[%s4749 + $0x34] sm:$0xf]
        %v6740 = vld [vmem:[%s4749 + $0x38] sm:$0xf]
        %v6741 = vld [vmem:[%s4749 + $0x3c] sm:$0xf]
        %v6742 = vld [vmem:[%s4766] sm:$0xf]
        %v6743 = vld [vmem:[%s4766 + $0x4] sm:$0xf]
        %v6744 = vld [vmem:[%s4766 + $0x8] sm:$0xf]
        %v6745 = vld [vmem:[%s4766 + $0xc] sm:$0xf]
        %v6746 = vld [vmem:[%s4766 + $0x10] sm:$0xf]
        %v6747 = vld [vmem:[%s4766 + $0x14] sm:$0xf]
        %v6748 = vld [vmem:[%s4766 + $0x18] sm:$0xf]
        %v6749 = vld [vmem:[%s4766 + $0x1c] sm:$0xf]
        %v6750 = vld [vmem:[%s4766 + $0x20] sm:$0xf]
        %v6751 = vld [vmem:[%s4766 + $0x24] sm:$0xf]
        %v6752 = vld [vmem:[%s4766 + $0x28] sm:$0xf]
        %v6753 = vld [vmem:[%s4766 + $0x2c] sm:$0xf]
        %v6754 = vld [vmem:[%s4766 + $0x30] sm:$0xf]
        %v6755 = vld [vmem:[%s4766 + $0x34] sm:$0xf]
        %v6756 = vld [vmem:[%s4766 + $0x38] sm:$0xf]
        %v6757 = vld [vmem:[%s4766 + $0x3c] sm:$0xf]
        %v6774 = vunpack.c.l.b16 %v6726
        %v6775 = vunpack.c.l.b16 %v6727
        %v6776 = vunpack.c.l.b16 %v6728
        %v6777 = vunpack.c.l.b16 %v6729
        %v6778 = vunpack.c.l.b16 %v6730
        %v6779 = vunpack.c.l.b16 %v6731
        %v6780 = vunpack.c.l.b16 %v6732
        %v6781 = vunpack.c.l.b16 %v6733
        %v6782 = vunpack.c.l.b16 %v6734
        %v6783 = vunpack.c.l.b16 %v6735
        %v6784 = vunpack.c.l.b16 %v6736
        %v6785 = vunpack.c.l.b16 %v6737
        %v6786 = vunpack.c.l.b16 %v6738
        %v6787 = vunpack.c.l.b16 %v6739
        %v6788 = vunpack.c.l.b16 %v6740
        %v6789 = vunpack.c.l.b16 %v6741
        %v6790 = vpack.c.b16 %v6775, %v6774
        %v6791 = vpack.c.b16 %v6777, %v6776
        %v6792 = vpack.c.b16 %v6779, %v6778
        %v6793 = vpack.c.b16 %v6781, %v6780
        %v6794 = vpack.c.b16 %v6783, %v6782
        %v6795 = vpack.c.b16 %v6785, %v6784
        %v6796 = vpack.c.b16 %v6787, %v6786
        %v6797 = vpack.c.b16 %v6789, %v6788
        %v6814 = vunpack.c.l.b16 %v6742
        %v6815 = vunpack.c.l.b16 %v6743
        %v6816 = vunpack.c.l.b16 %v6744
        %v6817 = vunpack.c.l.b16 %v6745
        %v6818 = vunpack.c.l.b16 %v6746
        %v6819 = vunpack.c.l.b16 %v6747
        %v6820 = vunpack.c.l.b16 %v6748
        %v6821 = vunpack.c.l.b16 %v6749
        %v6822 = vunpack.c.l.b16 %v6750
        %v6823 = vunpack.c.l.b16 %v6751
        %v6824 = vunpack.c.l.b16 %v6752
        %v6825 = vunpack.c.l.b16 %v6753
        %v6826 = vunpack.c.l.b16 %v6754
        %v6827 = vunpack.c.l.b16 %v6755
        %v6828 = vunpack.c.l.b16 %v6756
        %v6829 = vunpack.c.l.b16 %v6757
        %v6830 = vpack.c.b16 %v6815, %v6814
        %v6831 = vpack.c.b16 %v6817, %v6816
        %v6832 = vpack.c.b16 %v6819, %v6818
        %v6833 = vpack.c.b16 %v6821, %v6820
        %v6834 = vpack.c.b16 %v6823, %v6822
        %v6835 = vpack.c.b16 %v6825, %v6824
        %v6836 = vpack.c.b16 %v6827, %v6826
        %v6837 = vpack.c.b16 %v6829, %v6828
        %s6838 = scalar_lea.vmem %s4879, 2 [#allocation13]
        %v6839 = vld [vmem:[%s6838] ss:$4 sm:$0x3]
        %v6841 = vlaneseq
        %v6842 = vshrl.u32 %v6841, 7
        %v6843 = vsub.s32 0, %v6842
        %v6844 = vrot.slane %v6839, %v6843
        %v6845 = vlaneseq
        %v6846 = vshrl.u32 %v6845, 7
        %v6847 = vsub.s32 1, %v6846
        %v6848 = vrot.slane %v6839, %v6847
        %v6867 = vunpack.c.l.b16 %v6598
        %v6868 = vunpack.c.l.b16 %v6599
        %v6869 = vunpack.c.l.b16 %v6600
        %v6870 = vunpack.c.l.b16 %v6601
        %v6871 = vunpack.c.l.b16 %v6602
        %v6872 = vunpack.c.l.b16 %v6603
        %v6873 = vunpack.c.l.b16 %v6604
        %v6874 = vunpack.c.l.b16 %v6605
        %v6875 = vunpack.c.l.b16 %v6606
        %v6876 = vunpack.c.l.b16 %v6607
        %v6877 = vunpack.c.l.b16 %v6608
        %v6878 = vunpack.c.l.b16 %v6609
        %v6879 = vunpack.c.l.b16 %v6610
        %v6880 = vunpack.c.l.b16 %v6611
        %v6881 = vunpack.c.l.b16 %v6612
        %v6882 = vunpack.c.l.b16 %v6613
        %v6883 = vpack.c.b16 %v6868, %v6867
        %v6884 = vpack.c.b16 %v6870, %v6869
        %v6885 = vpack.c.b16 %v6872, %v6871
        %v6886 = vpack.c.b16 %v6874, %v6873
        %v6887 = vpack.c.b16 %v6876, %v6875
        %v6888 = vpack.c.b16 %v6878, %v6877
        %v6889 = vpack.c.b16 %v6880, %v6879
        %v6890 = vpack.c.b16 %v6882, %v6881
        %6891 = vrot.lane.b32.xlu0 %v6883, 64
        %v6892 = vpop.permute.xlu0 %6891
        %6893 = vrot.lane.b32.xlu0 %v6884, 64
        %v6894 = vpop.permute.xlu0 %6893
        %6895 = vrot.lane.b32.xlu0 %v6885, 64
        %v6896 = vpop.permute.xlu0 %6895
        %6897 = vrot.lane.b32.xlu0 %v6886, 64
        %v6898 = vpop.permute.xlu0 %6897
        %6899 = vrot.lane.b32.xlu0 %v6887, 64
        %v6900 = vpop.permute.xlu0 %6899
        %6901 = vrot.lane.b32.xlu0 %v6888, 64
        %v6902 = vpop.permute.xlu0 %6901
        %6903 = vrot.lane.b32.xlu0 %v6889, 64
        %v6904 = vpop.permute.xlu0 %6903
        %6905 = vrot.lane.b32.xlu0 %v6890, 64
        %v6906 = vpop.permute.xlu0 %6905
        %6907 = vrot.lane.b32.xlu0 %v6678, 64
        %v6908 = vpop.permute.xlu0 %6907
        %6909 = vrot.lane.b32.xlu0 %v6679, 64
        %v6910 = vpop.permute.xlu0 %6909
        %6911 = vrot.lane.b32.xlu0 %v6680, 64
        %v6912 = vpop.permute.xlu0 %6911
        %6913 = vrot.lane.b32.xlu0 %v6681, 64
        %v6914 = vpop.permute.xlu0 %6913
        %6915 = vrot.lane.b32.xlu0 %v6682, 64
        %v6916 = vpop.permute.xlu0 %6915
        %6917 = vrot.lane.b32.xlu0 %v6683, 64
        %v6918 = vpop.permute.xlu0 %6917
        %6919 = vrot.lane.b32.xlu0 %v6684, 64
        %v6920 = vpop.permute.xlu0 %6919
        %6921 = vrot.lane.b32.xlu0 %v6685, 64
        %v6922 = vpop.permute.xlu0 %6921
        %6923 = vrot.lane.b32.xlu0 %v6718, 64
        %v6924 = vpop.permute.xlu0 %6923
        %6925 = vrot.lane.b32.xlu0 %v6719, 64
        %v6926 = vpop.permute.xlu0 %6925
        %6927 = vrot.lane.b32.xlu0 %v6720, 64
        %v6928 = vpop.permute.xlu0 %6927
        %6929 = vrot.lane.b32.xlu0 %v6721, 64
        %v6930 = vpop.permute.xlu0 %6929
        %6931 = vrot.lane.b32.xlu0 %v6722, 64
        %v6932 = vpop.permute.xlu0 %6931
        %6933 = vrot.lane.b32.xlu0 %v6723, 64
        %v6934 = vpop.permute.xlu0 %6933
        %6935 = vrot.lane.b32.xlu0 %v6724, 64
        %v6936 = vpop.permute.xlu0 %6935
        %6937 = vrot.lane.b32.xlu0 %v6725, 64
        %v6938 = vpop.permute.xlu0 %6937
        %v6940 = vsel %vm864, %v6892, 0
        %v6943 = vsel %vm864, %v6894, 0
        %v6946 = vsel %vm864, %v6896, 0
        %v6949 = vsel %vm864, %v6898, 0
        %v6952 = vsel %vm864, %v6900, 0
        %v6955 = vsel %vm864, %v6902, 0
        %v6958 = vsel %vm864, %v6904, 0
        %v6961 = vsel %vm864, %v6906, 0
        %v6964 = vsel %vm864, %v6908, 0
        %v6967 = vsel %vm864, %v6910, 0
        %v6970 = vsel %vm864, %v6912, 0
        %v6973 = vsel %vm864, %v6914, 0
        %v6976 = vsel %vm864, %v6916, 0
        %v6979 = vsel %vm864, %v6918, 0
        %v6982 = vsel %vm864, %v6920, 0
        %v6985 = vsel %vm864, %v6922, 0
        %v6988 = vsel %vm864, %v6924, 0
        %v6991 = vsel %vm864, %v6926, 0
        %v6994 = vsel %vm864, %v6928, 0
        %v6997 = vsel %vm864, %v6930, 0
        %v7000 = vsel %vm864, %v6932, 0
        %v7003 = vsel %vm864, %v6934, 0
        %v7006 = vsel %vm864, %v6936, 0
        %v7009 = vsel %vm864, %v6938, 0
        %7011 = vmatprep.subr.bf16.mxu0 0
        %7012 = vmatpush1.bf16.xpose.msra.mxu0 %v6964
        %7013 = vmatprep.subr.bf16.mxu0 0
        %7014 = vmatpush1.bf16.xpose.msra.mxu0 %v6967
        %7015 = vmatprep.subr.bf16.mxu0 0
        %7016 = vmatpush1.bf16.xpose.msra.mxu0 %v6970
        %7017 = vmatprep.subr.bf16.mxu0 0
        %7018 = vmatpush1.bf16.xpose.msra.mxu0 %v6973
        %7019 = vmatprep.subr.bf16.mxu0 0
        %7020 = vmatpush1.bf16.xpose.msra.mxu0 %v6976
        %7021 = vmatprep.subr.bf16.mxu0 0
        %7022 = vmatpush1.bf16.xpose.msra.mxu0 %v6979
        %7023 = vmatprep.subr.bf16.mxu0 0
        %7024 = vmatpush1.bf16.xpose.msra.mxu0 %v6982
        %7025 = vmatprep.subr.bf16.mxu0 0
        %7026 = vmatpush1.bf16.xpose.msra.mxu0 %v6985
        %7027 = vmatprep.subr.bf16.mxu0 0
        %7028 = vmatpush1.bf16.xpose.msra.mxu0 %v6988
        %7029 = vmatprep.subr.bf16.mxu0 0
        %7030 = vmatpush1.bf16.xpose.msra.mxu0 %v6991
        %7031 = vmatprep.subr.bf16.mxu0 0
        %7032 = vmatpush1.bf16.xpose.msra.mxu0 %v6994
        %7033 = vmatprep.subr.bf16.mxu0 0
        %7034 = vmatpush1.bf16.xpose.msra.mxu0 %v6997
        %7035 = vmatprep.subr.bf16.mxu0 0
        %7036 = vmatpush1.bf16.xpose.msra.mxu0 %v7000
        %7037 = vmatprep.subr.bf16.mxu0 0
        %7038 = vmatpush1.bf16.xpose.msra.mxu0 %v7003
        %7039 = vmatprep.subr.bf16.mxu0 0
        %7040 = vmatpush1.bf16.xpose.msra.mxu0 %v7006
        %7041 = vmatprep.subr.bf16.mxu0 0
        %7042 = vmatpush1.bf16.xpose.msra.mxu0 %v7009
        %7043 = vmatprep.mubr.bf16.mxu0 0
        %7044 = vmatmul.mubr.bf16.gmra.mrb[0].mxu0 %v6940
        %v7045 = vpop.f32.mrb[0].mxu0
        %v7046 = vadd.f32 %v6844, %v7045
        %v7047 = vpop.f32.mrb[0].mxu0
        %v7048 = vadd.f32 %v6848, %v7047
        %v7049 = vpop.f32.mrb[0].mxu0
        %v7050 = vadd.f32 %v6844, %v7049
        %v7051 = vpop.f32.mrb[0].mxu0
        %v7052 = vadd.f32 %v6848, %v7051
        %7053 = vmatprep.mubr.bf16.mxu0 0
        %7054 = vmatmul.mubr.bf16.gmra.mrb[0].mxu0 %v6943
        %v7055 = vpop.f32.mrb[0].mxu0
        %v7056 = vadd.f32 %v6844, %v7055
        %v7057 = vpop.f32.mrb[0].mxu0
        %v7058 = vadd.f32 %v6848, %v7057
        %v7059 = vpop.f32.mrb[0].mxu0
        %v7060 = vadd.f32 %v6844, %v7059
        %v7061 = vpop.f32.mrb[0].mxu0
        %v7062 = vadd.f32 %v6848, %v7061
        %7063 = vmatprep.mubr.bf16.mxu0 0
        %7064 = vmatmul.mubr.bf16.gmra.mrb[0].mxu0 %v6946
        %v7065 = vpop.f32.mrb[0].mxu0
        %v7066 = vadd.f32 %v6844, %v7065
        %v7067 = vpop.f32.mrb[0].mxu0
        %v7068 = vadd.f32 %v6848, %v7067
        %v7069 = vpop.f32.mrb[0].mxu0
        %v7070 = vadd.f32 %v6844, %v7069
        %v7071 = vpop.f32.mrb[0].mxu0
        %v7072 = vadd.f32 %v6848, %v7071
        %7073 = vmatprep.mubr.bf16.mxu0 0
        %7074 = vmatmul.mubr.bf16.gmra.mrb[0].mxu0 %v6949
        %v7075 = vpop.f32.mrb[0].mxu0
        %v7076 = vadd.f32 %v6844, %v7075
        %v7077 = vpop.f32.mrb[0].mxu0
        %v7078 = vadd.f32 %v6848, %v7077
        %v7079 = vpop.f32.mrb[0].mxu0
        %v7080 = vadd.f32 %v6844, %v7079
        %v7081 = vpop.f32.mrb[0].mxu0
        %v7082 = vadd.f32 %v6848, %v7081
        %7083 = vmatprep.mubr.bf16.mxu0 0
        %7084 = vmatmul.mubr.bf16.gmra.mrb[0].mxu0 %v6952
        %v7085 = vpop.f32.mrb[0].mxu0
        %v7086 = vadd.f32 %v6844, %v7085
        %v7087 = vpop.f32.mrb[0].mxu0
        %v7088 = vadd.f32 %v6848, %v7087
        %v7089 = vpop.f32.mrb[0].mxu0
        %v7090 = vadd.f32 %v6844, %v7089
        %v7091 = vpop.f32.mrb[0].mxu0
        %v7092 = vadd.f32 %v6848, %v7091
        %7093 = vmatprep.mubr.bf16.mxu0 0
        %7094 = vmatmul.mubr.bf16.gmra.mrb[0].mxu0 %v6955
        %v7095 = vpop.f32.mrb[0].mxu0
        %v7096 = vadd.f32 %v6844, %v7095
        %v7097 = vpop.f32.mrb[0].mxu0
        %v7098 = vadd.f32 %v6848, %v7097
        %v7099 = vpop.f32.mrb[0].mxu0
        %v7100 = vadd.f32 %v6844, %v7099
        %v7101 = vpop.f32.mrb[0].mxu0
        %v7102 = vadd.f32 %v6848, %v7101
        %7103 = vmatprep.mubr.bf16.mxu0 0
        %7104 = vmatmul.mubr.bf16.gmra.mrb[0].mxu0 %v6958
        %v7105 = vpop.f32.mrb[0].mxu0
        %v7106 = vadd.f32 %v6844, %v7105
        %v7107 = vpop.f32.mrb[0].mxu0
        %v7108 = vadd.f32 %v6848, %v7107
        %v7109 = vpop.f32.mrb[0].mxu0
        %v7110 = vadd.f32 %v6844, %v7109
        %v7111 = vpop.f32.mrb[0].mxu0
        %v7112 = vadd.f32 %v6848, %v7111
        %7113 = vmatprep.mubr.bf16.mxu0 0
        %7114 = vmatmul.mubr.bf16.gmra.mrb[0].mxu0 %v6961
        %v7115 = vpop.f32.mrb[0].mxu0
        %v7116 = vadd.f32 %v6844, %v7115
        %v7117 = vpop.f32.mrb[0].mxu0
        %v7118 = vadd.f32 %v6848, %v7117
        %v7119 = vpop.f32.mrb[0].mxu0
        %v7120 = vadd.f32 %v6844, %v7119
        %v7121 = vpop.f32.mrb[0].mxu0
        %v7122 = vadd.f32 %v6848, %v7121
        %7123 = vdwg.mxu0
        %v7124 = vmax.f32 %v7046, %v7048
        %7125 = vmax.xlane.f32.xlu0 %v7124
        %v7126 = vpop.xlane.xlu0 %7125
        %v7127 = vmax.f32 %v7050, %v7052
        %7128 = vmax.xlane.f32.xlu0 %v7127
        %v7129 = vpop.xlane.xlu0 %7128
        %v7130 = vmax.f32 %v7056, %v7058
        %7131 = vmax.xlane.f32.xlu0 %v7130
        %v7132 = vpop.xlane.xlu0 %7131
        %v7133 = vmax.f32 %v7060, %v7062
        %7134 = vmax.xlane.f32.xlu0 %v7133
        %v7135 = vpop.xlane.xlu0 %7134
        %v7136 = vmax.f32 %v7066, %v7068
        %7137 = vmax.xlane.f32.xlu0 %v7136
        %v7138 = vpop.xlane.xlu0 %7137
        %v7139 = vmax.f32 %v7070, %v7072
        %7140 = vmax.xlane.f32.xlu0 %v7139
        %v7141 = vpop.xlane.xlu0 %7140
        %v7142 = vmax.f32 %v7076, %v7078
        %7143 = vmax.xlane.f32.xlu0 %v7142
        %v7144 = vpop.xlane.xlu0 %7143
        %v7145 = vmax.f32 %v7080, %v7082
        %7146 = vmax.xlane.f32.xlu0 %v7145
        %v7147 = vpop.xlane.xlu0 %7146
        %v7148 = vmax.f32 %v7086, %v7088
        %7149 = vmax.xlane.f32.xlu0 %v7148
        %v7150 = vpop.xlane.xlu0 %7149
        %v7151 = vmax.f32 %v7090, %v7092
        %7152 = vmax.xlane.f32.xlu0 %v7151
        %v7153 = vpop.xlane.xlu0 %7152
        %v7154 = vmax.f32 %v7096, %v7098
        %7155 = vmax.xlane.f32.xlu0 %v7154
        %v7156 = vpop.xlane.xlu0 %7155
        %v7157 = vmax.f32 %v7100, %v7102
        %7158 = vmax.xlane.f32.xlu0 %v7157
        %v7159 = vpop.xlane.xlu0 %7158
        %v7160 = vmax.f32 %v7106, %v7108
        %7161 = vmax.xlane.f32.xlu0 %v7160
        %v7162 = vpop.xlane.xlu0 %7161
        %v7163 = vmax.f32 %v7110, %v7112
        %7164 = vmax.xlane.f32.xlu0 %v7163
        %v7165 = vpop.xlane.xlu0 %7164
        %v7166 = vmax.f32 %v7116, %v7118
        %7167 = vmax.xlane.f32.xlu0 %v7166
        %v7168 = vpop.xlane.xlu0 %7167
        %v7169 = vmax.f32 %v7120, %v7122
        %7170 = vmax.xlane.f32.xlu0 %v7169
        %v7171 = vpop.xlane.xlu0 %7170
        %v7172 = vsub.f32 %v7046, %v7126
        %v7173 = vsub.f32 %v7048, %v7126
        %v7174 = vsub.f32 %v7050, %v7129
        %v7175 = vsub.f32 %v7052, %v7129
        %v7176 = vsub.f32 %v7056, %v7132
        %v7177 = vsub.f32 %v7058, %v7132
        %v7178 = vsub.f32 %v7060, %v7135
        %v7179 = vsub.f32 %v7062, %v7135
        %v7180 = vsub.f32 %v7066, %v7138
        %v7181 = vsub.f32 %v7068, %v7138
        %v7182 = vsub.f32 %v7070, %v7141
        %v7183 = vsub.f32 %v7072, %v7141
        %v7184 = vsub.f32 %v7076, %v7144
        %v7185 = vsub.f32 %v7078, %v7144
        %v7186 = vsub.f32 %v7080, %v7147
        %v7187 = vsub.f32 %v7082, %v7147
        %v7188 = vsub.f32 %v7086, %v7150
        %v7189 = vsub.f32 %v7088, %v7150
        %v7190 = vsub.f32 %v7090, %v7153
        %v7191 = vsub.f32 %v7092, %v7153
        %v7192 = vsub.f32 %v7096, %v7156
        %v7193 = vsub.f32 %v7098, %v7156
        %v7194 = vsub.f32 %v7100, %v7159
        %v7195 = vsub.f32 %v7102, %v7159
        %v7196 = vsub.f32 %v7106, %v7162
        %v7197 = vsub.f32 %v7108, %v7162
        %v7198 = vsub.f32 %v7110, %v7165
        %v7199 = vsub.f32 %v7112, %v7165
        %v7200 = vsub.f32 %v7116, %v7168
        %v7201 = vsub.f32 %v7118, %v7168
        %v7202 = vsub.f32 %v7120, %v7171
        %v7203 = vsub.f32 %v7122, %v7171
        %v7204 = vmul.f32 %v7172, 1.442695
        %v7205 = vpow.pop %v7204
        %v7206 = vmul.f32 %v7173, 1.442695
        %v7207 = vpow.pop %v7206
        %v7208 = vmul.f32 %v7174, 1.442695
        %v7209 = vpow.pop %v7208
        %v7210 = vmul.f32 %v7175, 1.442695
        %v7211 = vpow.pop %v7210
        %v7212 = vmul.f32 %v7176, 1.442695
        %v7213 = vpow.pop %v7212
        %v7214 = vmul.f32 %v7177, 1.442695
        %v7215 = vpow.pop %v7214
        %v7216 = vmul.f32 %v7178, 1.442695
        %v7217 = vpow.pop %v7216
        %v7218 = vmul.f32 %v7179, 1.442695
        %v7219 = vpow.pop %v7218
        %v7220 = vmul.f32 %v7180, 1.442695
        %v7221 = vpow.pop %v7220
        %v7222 = vmul.f32 %v7181, 1.442695
        %v7223 = vpow.pop %v7222
        %v7224 = vmul.f32 %v7182, 1.442695
        %v7225 = vpow.pop %v7224
        %v7226 = vmul.f32 %v7183, 1.442695
        %v7227 = vpow.pop %v7226
        %v7228 = vmul.f32 %v7184, 1.442695
        %v7229 = vpow.pop %v7228
        %v7230 = vmul.f32 %v7185, 1.442695
        %v7231 = vpow.pop %v7230
        %v7232 = vmul.f32 %v7186, 1.442695
        %v7233 = vpow.pop %v7232
        %v7234 = vmul.f32 %v7187, 1.442695
        %v7235 = vpow.pop %v7234
        %v7236 = vmul.f32 %v7188, 1.442695
        %v7237 = vpow.pop %v7236
        %v7238 = vmul.f32 %v7189, 1.442695
        %v7239 = vpow.pop %v7238
        %v7240 = vmul.f32 %v7190, 1.442695
        %v7241 = vpow.pop %v7240
        %v7242 = vmul.f32 %v7191, 1.442695
        %v7243 = vpow.pop %v7242
        %v7244 = vmul.f32 %v7192, 1.442695
        %v7245 = vpow.pop %v7244
        %v7246 = vmul.f32 %v7193, 1.442695
        %v7247 = vpow.pop %v7246
        %v7248 = vmul.f32 %v7194, 1.442695
        %v7249 = vpow.pop %v7248
        %v7250 = vmul.f32 %v7195, 1.442695
        %v7251 = vpow.pop %v7250
        %v7252 = vmul.f32 %v7196, 1.442695
        %v7253 = vpow.pop %v7252
        %v7254 = vmul.f32 %v7197, 1.442695
        %v7255 = vpow.pop %v7254
        %v7256 = vmul.f32 %v7198, 1.442695
        %v7257 = vpow.pop %v7256
        %v7258 = vmul.f32 %v7199, 1.442695
        %v7259 = vpow.pop %v7258
        %v7260 = vmul.f32 %v7200, 1.442695
        %v7261 = vpow.pop %v7260
        %v7262 = vmul.f32 %v7201, 1.442695
        %v7263 = vpow.pop %v7262
        %v7264 = vmul.f32 %v7202, 1.442695
        %v7265 = vpow.pop %v7264
        %v7266 = vmul.f32 %v7203, 1.442695
        %v7267 = vpow.pop %v7266
        %v7268 = vadd.f32 %v7205, %v7207
        %7269 = vadd.xlane.f32.xlu0 %v7268
        %v7270 = vpop.xlane.xlu0 %7269
        %v7271 = vadd.f32 %v7209, %v7211
        %7272 = vadd.xlane.f32.xlu0 %v7271
        %v7273 = vpop.xlane.xlu0 %7272
        %v7274 = vadd.f32 %v7213, %v7215
        %7275 = vadd.xlane.f32.xlu0 %v7274
        %v7276 = vpop.xlane.xlu0 %7275
        %v7277 = vadd.f32 %v7217, %v7219
        %7278 = vadd.xlane.f32.xlu0 %v7277
        %v7279 = vpop.xlane.xlu0 %7278
        %v7280 = vadd.f32 %v7221, %v7223
        %7281 = vadd.xlane.f32.xlu0 %v7280
        %v7282 = vpop.xlane.xlu0 %7281
        %v7283 = vadd.f32 %v7225, %v7227
        %7284 = vadd.xlane.f32.xlu0 %v7283
        %v7285 = vpop.xlane.xlu0 %7284
        %v7286 = vadd.f32 %v7229, %v7231
        %7287 = vadd.xlane.f32.xlu0 %v7286
        %v7288 = vpop.xlane.xlu0 %7287
        %v7289 = vadd.f32 %v7233, %v7235
        %7290 = vadd.xlane.f32.xlu0 %v7289
        %v7291 = vpop.xlane.xlu0 %7290
        %v7292 = vadd.f32 %v7237, %v7239
        %7293 = vadd.xlane.f32.xlu0 %v7292
        %v7294 = vpop.xlane.xlu0 %7293
        %v7295 = vadd.f32 %v7241, %v7243
        %7296 = vadd.xlane.f32.xlu0 %v7295
        %v7297 = vpop.xlane.xlu0 %7296
        %v7298 = vadd.f32 %v7245, %v7247
        %7299 = vadd.xlane.f32.xlu0 %v7298
        %v7300 = vpop.xlane.xlu0 %7299
        %v7301 = vadd.f32 %v7249, %v7251
        %7302 = vadd.xlane.f32.xlu0 %v7301
        %v7303 = vpop.xlane.xlu0 %7302
        %v7304 = vadd.f32 %v7253, %v7255
        %7305 = vadd.xlane.f32.xlu0 %v7304
        %v7306 = vpop.xlane.xlu0 %7305
        %v7307 = vadd.f32 %v7257, %v7259
        %7308 = vadd.xlane.f32.xlu0 %v7307
        %v7309 = vpop.xlane.xlu0 %7308
        %v7310 = vadd.f32 %v7261, %v7263
        %7311 = vadd.xlane.f32.xlu0 %v7310
        %v7312 = vpop.xlane.xlu0 %7311
        %v7313 = vadd.f32 %v7265, %v7267
        %7314 = vadd.xlane.f32.xlu0 %v7313
        %v7315 = vpop.xlane.xlu0 %7314
        %v7316 = vpack.c.bf16 %v7209, %v7205
        %v7317 = vpack.c.bf16 %v7211, %v7207
        %v7318 = vpack.c.bf16 %v7217, %v7213
        %v7319 = vpack.c.bf16 %v7219, %v7215
        %v7320 = vpack.c.bf16 %v7225, %v7221
        %v7321 = vpack.c.bf16 %v7227, %v7223
        %v7322 = vpack.c.bf16 %v7233, %v7229
        %v7323 = vpack.c.bf16 %v7235, %v7231
        %v7324 = vpack.c.bf16 %v7241, %v7237
        %v7325 = vpack.c.bf16 %v7243, %v7239
        %v7326 = vpack.c.bf16 %v7249, %v7245
        %v7327 = vpack.c.bf16 %v7251, %v7247
        %v7328 = vpack.c.bf16 %v7257, %v7253
        %v7329 = vpack.c.bf16 %v7259, %v7255
        %v7330 = vpack.c.bf16 %v7265, %v7261
        %v7331 = vpack.c.bf16 %v7267, %v7263
        %7332 = vrot.lane.b32.xlu0 %v6790, 64
        %v7333 = vpop.permute.xlu0 %7332
        %7334 = vrot.lane.b32.xlu0 %v6791, 64
        %v7335 = vpop.permute.xlu0 %7334
        %7336 = vrot.lane.b32.xlu0 %v6792, 64
        %v7337 = vpop.permute.xlu0 %7336
        %7338 = vrot.lane.b32.xlu0 %v6793, 64
        %v7339 = vpop.permute.xlu0 %7338
        %7340 = vrot.lane.b32.xlu0 %v6794, 64
        %v7341 = vpop.permute.xlu0 %7340
        %7342 = vrot.lane.b32.xlu0 %v6795, 64
        %v7343 = vpop.permute.xlu0 %7342
        %7344 = vrot.lane.b32.xlu0 %v6796, 64
        %v7345 = vpop.permute.xlu0 %7344
        %7346 = vrot.lane.b32.xlu0 %v6797, 64
        %v7347 = vpop.permute.xlu0 %7346
        %7348 = vrot.lane.b32.xlu0 %v6830, 64
        %v7349 = vpop.permute.xlu0 %7348
        %7350 = vrot.lane.b32.xlu0 %v6831, 64
        %v7351 = vpop.permute.xlu0 %7350
        %7352 = vrot.lane.b32.xlu0 %v6832, 64
        %v7353 = vpop.permute.xlu0 %7352
        %7354 = vrot.lane.b32.xlu0 %v6833, 64
        %v7355 = vpop.permute.xlu0 %7354
        %7356 = vrot.lane.b32.xlu0 %v6834, 64
        %v7357 = vpop.permute.xlu0 %7356
        %7358 = vrot.lane.b32.xlu0 %v6835, 64
        %v7359 = vpop.permute.xlu0 %7358
        %7360 = vrot.lane.b32.xlu0 %v6836, 64
        %v7361 = vpop.permute.xlu0 %7360
        %7362 = vrot.lane.b32.xlu0 %v6837, 64
        %v7363 = vpop.permute.xlu0 %7362
        %7380 = vmatprep.subr.bf16.mxu0 0
        %7381 = vmatpush1.bf16.msra.mxu0 %v7333
        %7382 = vmatprep.subr.bf16.mxu0 0
        %7383 = vmatpush1.bf16.msra.mxu0 %v7335
        %7384 = vmatprep.subr.bf16.mxu0 0
        %7385 = vmatpush1.bf16.msra.mxu0 %v7337
        %7386 = vmatprep.subr.bf16.mxu0 0
        %7387 = vmatpush1.bf16.msra.mxu0 %v7339
        %7388 = vmatprep.subr.bf16.mxu0 0
        %7389 = vmatpush1.bf16.msra.mxu0 %v7341
        %7390 = vmatprep.subr.bf16.mxu0 0
        %7391 = vmatpush1.bf16.msra.mxu0 %v7343
        %7392 = vmatprep.subr.bf16.mxu0 0
        %7393 = vmatpush1.bf16.msra.mxu0 %v7345
        %7394 = vmatprep.subr.bf16.mxu0 0
        %7395 = vmatpush1.bf16.msra.mxu0 %v7347
        %7396 = vmatprep.subr.bf16.mxu0 0
        %7397 = vmatpush1.bf16.msra.mxu0 %v7349
        %7398 = vmatprep.subr.bf16.mxu0 0
        %7399 = vmatpush1.bf16.msra.mxu0 %v7351
        %7400 = vmatprep.subr.bf16.mxu0 0
        %7401 = vmatpush1.bf16.msra.mxu0 %v7353
        %7402 = vmatprep.subr.bf16.mxu0 0
        %7403 = vmatpush1.bf16.msra.mxu0 %v7355
        %7404 = vmatprep.subr.bf16.mxu0 0
        %7405 = vmatpush1.bf16.msra.mxu0 %v7357
        %7406 = vmatprep.subr.bf16.mxu0 0
        %7407 = vmatpush1.bf16.msra.mxu0 %v7359
        %7408 = vmatprep.subr.bf16.mxu0 0
        %7409 = vmatpush1.bf16.msra.mxu0 %v7361
        %7410 = vmatprep.subr.bf16.mxu0 0
        %7411 = vmatpush1.bf16.msra.mxu0 %v7363
        %7412 = vmatprep.mubr.bf16.mxu0 %v7317
        %7413 = vmatmul.mubr.bf16.gmra.mrb[0].mxu0 %v7316
        %v7414 = vpop.f32.mrb[0].mxu0
        %v7415 = vadd.f32 0.0, %v7414
        %v7416 = vpop.f32.mrb[0].mxu0
        %v7417 = vpop.f32.mrb[0].mxu0
        %v7418 = vadd.f32 0.0, %v7417
        %v7419 = vpop.f32.mrb[0].mxu0
        %7420 = vmatprep.mubr.bf16.mxu0 %v7319
        %7421 = vmatmul.mubr.bf16.gmra.mrb[0].mxu0 %v7318
        %v7422 = vpop.f32.mrb[0].mxu0
        %v7423 = vadd.f32 0.0, %v7422
        %v7424 = vpop.f32.mrb[0].mxu0
        %v7425 = vpop.f32.mrb[0].mxu0
        %v7426 = vadd.f32 0.0, %v7425
        %v7427 = vpop.f32.mrb[0].mxu0
        %7428 = vmatprep.mubr.bf16.mxu0 %v7321
        %7429 = vmatmul.mubr.bf16.gmra.mrb[0].mxu0 %v7320
        %v7430 = vpop.f32.mrb[0].mxu0
        %v7431 = vadd.f32 0.0, %v7430
        %v7432 = vpop.f32.mrb[0].mxu0
        %v7433 = vpop.f32.mrb[0].mxu0
        %v7434 = vadd.f32 0.0, %v7433
        %v7435 = vpop.f32.mrb[0].mxu0
        %7436 = vmatprep.mubr.bf16.mxu0 %v7323
        %7437 = vmatmul.mubr.bf16.gmra.mrb[0].mxu0 %v7322
        %v7438 = vpop.f32.mrb[0].mxu0
        %v7439 = vadd.f32 0.0, %v7438
        %v7440 = vpop.f32.mrb[0].mxu0
        %v7441 = vpop.f32.mrb[0].mxu0
        %v7442 = vadd.f32 0.0, %v7441
        %v7443 = vpop.f32.mrb[0].mxu0
        %7444 = vmatprep.mubr.bf16.mxu0 %v7325
        %7445 = vmatmul.mubr.bf16.gmra.mrb[0].mxu0 %v7324
        %v7446 = vpop.f32.mrb[0].mxu0
        %v7447 = vadd.f32 0.0, %v7446
        %v7448 = vpop.f32.mrb[0].mxu0
        %v7449 = vpop.f32.mrb[0].mxu0
        %v7450 = vadd.f32 0.0, %v7449
        %v7451 = vpop.f32.mrb[0].mxu0
        %7452 = vmatprep.mubr.bf16.mxu0 %v7327
        %7453 = vmatmul.mubr.bf16.gmra.mrb[0].mxu0 %v7326
        %v7454 = vpop.f32.mrb[0].mxu0
        %v7455 = vadd.f32 0.0, %v7454
        %v7456 = vpop.f32.mrb[0].mxu0
        %v7457 = vpop.f32.mrb[0].mxu0
        %v7458 = vadd.f32 0.0, %v7457
        %v7459 = vpop.f32.mrb[0].mxu0
        %7460 = vmatprep.mubr.bf16.mxu0 %v7329
        %7461 = vmatmul.mubr.bf16.gmra.mrb[0].mxu0 %v7328
        %v7462 = vpop.f32.mrb[0].mxu0
        %v7463 = vadd.f32 0.0, %v7462
        %v7464 = vpop.f32.mrb[0].mxu0
        %v7465 = vpop.f32.mrb[0].mxu0
        %v7466 = vadd.f32 0.0, %v7465
        %v7467 = vpop.f32.mrb[0].mxu0
        %7468 = vmatprep.mubr.bf16.mxu0 %v7331
        %7469 = vmatmul.mubr.bf16.gmra.mrb[0].mxu0 %v7330
        %v7470 = vpop.f32.mrb[0].mxu0
        %v7471 = vadd.f32 0.0, %v7470
        %v7472 = vpop.f32.mrb[0].mxu0
        %v7473 = vpop.f32.mrb[0].mxu0
        %v7474 = vadd.f32 0.0, %v7473
        %v7475 = vpop.f32.mrb[0].mxu0
        %7476 = vdwg.mxu0
        %s7477 = sadd.s32 %s5424, 2
        %s7478 = sld [smem:[#allocation2 + %s7477]]
        %v7479 = vrcp.pop %v7270
        %v7480 = vrcp.pop %v7273
        %v7481 = vrcp.pop %v7276
        %v7482 = vrcp.pop %v7279
        %v7483 = vrcp.pop %v7282
        %v7484 = vrcp.pop %v7285
        %v7485 = vrcp.pop %v7288
        %v7486 = vrcp.pop %v7291
        %v7487 = vrcp.pop %v7294
        %v7488 = vrcp.pop %v7297
        %v7489 = vrcp.pop %v7300
        %v7490 = vrcp.pop %v7303
        %v7491 = vrcp.pop %v7306
        %v7492 = vrcp.pop %v7309
        %v7493 = vrcp.pop %v7312
        %v7494 = vrcp.pop %v7315
        %v7495 = vstv %s7478
        %v7496 = vmul.f32 %v7495, %v7479
        %v7497 = vmul.f32 %v7495, %v7480
        %v7498 = vmul.f32 %v7495, %v7481
        %v7499 = vmul.f32 %v7495, %v7482
        %v7500 = vmul.f32 %v7495, %v7483
        %v7501 = vmul.f32 %v7495, %v7484
        %v7502 = vmul.f32 %v7495, %v7485
        %v7503 = vmul.f32 %v7495, %v7486
        %v7504 = vmul.f32 %v7495, %v7487
        %v7505 = vmul.f32 %v7495, %v7488
        %v7506 = vmul.f32 %v7495, %v7489
        %v7507 = vmul.f32 %v7495, %v7490
        %v7508 = vmul.f32 %v7495, %v7491
        %v7509 = vmul.f32 %v7495, %v7492
        %v7510 = vmul.f32 %v7495, %v7493
        %v7511 = vmul.f32 %v7495, %v7494
        %v7512 = vmul.f32 %v7415, %v7496
        %v7513 = vmul.f32 %v7418, %v7497
        %v7514 = vmul.f32 %v7423, %v7498
        %v7515 = vmul.f32 %v7426, %v7499
        %v7516 = vmul.f32 %v7431, %v7500
        %v7517 = vmul.f32 %v7434, %v7501
        %v7518 = vmul.f32 %v7439, %v7502
        %v7519 = vmul.f32 %v7442, %v7503
        %v7520 = vmul.f32 %v7447, %v7504
        %v7521 = vmul.f32 %v7450, %v7505
        %v7522 = vmul.f32 %v7455, %v7506
        %v7523 = vmul.f32 %v7458, %v7507
        %v7524 = vmul.f32 %v7463, %v7508
        %v7525 = vmul.f32 %v7466, %v7509
        %v7526 = vmul.f32 %v7471, %v7510
        %v7527 = vmul.f32 %v7474, %v7511
        %v7528 = vpack.c.bf16 %v7513, %v7512
        %v7529 = vpack.c.bf16 %v7515, %v7514
        %v7530 = vpack.c.bf16 %v7517, %v7516
        %v7531 = vpack.c.bf16 %v7519, %v7518
        %v7532 = vpack.c.bf16 %v7521, %v7520
        %v7533 = vpack.c.bf16 %v7523, %v7522
        %v7534 = vpack.c.bf16 %v7525, %v7524
        %v7535 = vpack.c.bf16 %v7527, %v7526
        %v7544 = vunpack.c.l.b16 %v7528
        %v7545 = vunpack.c.h.b16 %v7528
        %v7546 = vunpack.c.l.b16 %v7529
        %v7547 = vunpack.c.h.b16 %v7529
        %v7548 = vunpack.c.l.b16 %v7530
        %v7549 = vunpack.c.h.b16 %v7530
        %v7550 = vunpack.c.l.b16 %v7531
        %v7551 = vunpack.c.h.b16 %v7531
        %v7552 = vunpack.c.l.b16 %v7532
        %v7553 = vunpack.c.h.b16 %v7532
        %v7554 = vunpack.c.l.b16 %v7533
        %v7555 = vunpack.c.h.b16 %v7533
        %v7556 = vunpack.c.l.b16 %v7534
        %v7557 = vunpack.c.h.b16 %v7534
        %v7558 = vunpack.c.l.b16 %v7535
        %v7559 = vunpack.c.h.b16 %v7535
        %v7560 = vpack.c.b16 %v7544, %v7544
        %v7561 = vpack.c.b16 %v7545, %v7545
        %v7562 = vpack.c.b16 %v7546, %v7546
        %v7563 = vpack.c.b16 %v7547, %v7547
        %v7564 = vpack.c.b16 %v7548, %v7548
        %v7565 = vpack.c.b16 %v7549, %v7549
        %v7566 = vpack.c.b16 %v7550, %v7550
        %v7567 = vpack.c.b16 %v7551, %v7551
        %v7568 = vpack.c.b16 %v7552, %v7552
        %v7569 = vpack.c.b16 %v7553, %v7553
        %v7570 = vpack.c.b16 %v7554, %v7554
        %v7571 = vpack.c.b16 %v7555, %v7555
        %v7572 = vpack.c.b16 %v7556, %v7556
        %v7573 = vpack.c.b16 %v7557, %v7557
        %v7574 = vpack.c.b16 %v7558, %v7558
        %v7575 = vpack.c.b16 %v7559, %v7559
        %7576 = vrot.lane.b32.xlu0 %v7560, 64
        %v7577 = vpop.permute.xlu0 %7576
        %7578 = vrot.lane.b32.xlu0 %v7561, 64
        %v7579 = vpop.permute.xlu0 %7578
        %7580 = vrot.lane.b32.xlu0 %v7562, 64
        %v7581 = vpop.permute.xlu0 %7580
        %7582 = vrot.lane.b32.xlu0 %v7563, 64
        %v7583 = vpop.permute.xlu0 %7582
        %7584 = vrot.lane.b32.xlu0 %v7564, 64
        %v7585 = vpop.permute.xlu0 %7584
        %7586 = vrot.lane.b32.xlu0 %v7565, 64
        %v7587 = vpop.permute.xlu0 %7586
        %7588 = vrot.lane.b32.xlu0 %v7566, 64
        %v7589 = vpop.permute.xlu0 %7588
        %7590 = vrot.lane.b32.xlu0 %v7567, 64
        %v7591 = vpop.permute.xlu0 %7590
        %7592 = vrot.lane.b32.xlu0 %v7568, 64
        %v7593 = vpop.permute.xlu0 %7592
        %7594 = vrot.lane.b32.xlu0 %v7569, 64
        %v7595 = vpop.permute.xlu0 %7594
        %7596 = vrot.lane.b32.xlu0 %v7570, 64
        %v7597 = vpop.permute.xlu0 %7596
        %7598 = vrot.lane.b32.xlu0 %v7571, 64
        %v7599 = vpop.permute.xlu0 %7598
        %7600 = vrot.lane.b32.xlu0 %v7572, 64
        %v7601 = vpop.permute.xlu0 %7600
        %7602 = vrot.lane.b32.xlu0 %v7573, 64
        %v7603 = vpop.permute.xlu0 %7602
        %7604 = vrot.lane.b32.xlu0 %v7574, 64
        %v7605 = vpop.permute.xlu0 %7604
        %7606 = vrot.lane.b32.xlu0 %v7575, 64
        %v7607 = vpop.permute.xlu0 %7606
        %7624 = vst.msk [vmem:[%s5539] sm:$0xf] %vm3558, %v7577
        %7625 = vst.msk [vmem:[%s5539 + $0x4] sm:$0xf] %vm3558, %v7579
        %7626 = vst.msk [vmem:[%s5539 + $0x8] sm:$0xf] %vm3558, %v7581
        %7627 = vst.msk [vmem:[%s5539 + $0xc] sm:$0xf] %vm3558, %v7583
        %7628 = vst.msk [vmem:[%s5539 + $0x10] sm:$0xf] %vm3558, %v7585
        %7629 = vst.msk [vmem:[%s5539 + $0x14] sm:$0xf] %vm3558, %v7587
        %7630 = vst.msk [vmem:[%s5539 + $0x18] sm:$0xf] %vm3558, %v7589
        %7631 = vst.msk [vmem:[%s5539 + $0x1c] sm:$0xf] %vm3558, %v7591
        %7632 = vst.msk [vmem:[%s5539 + $0x20] sm:$0xf] %vm3558, %v7593
        %7633 = vst.msk [vmem:[%s5539 + $0x24] sm:$0xf] %vm3558, %v7595
        %7634 = vst.msk [vmem:[%s5539 + $0x28] sm:$0xf] %vm3558, %v7597
        %7635 = vst.msk [vmem:[%s5539 + $0x2c] sm:$0xf] %vm3558, %v7599
        %7636 = vst.msk [vmem:[%s5539 + $0x30] sm:$0xf] %vm3558, %v7601
        %7637 = vst.msk [vmem:[%s5539 + $0x34] sm:$0xf] %vm3558, %v7603
        %7638 = vst.msk [vmem:[%s5539 + $0x38] sm:$0xf] %vm3558, %v7605
        %7639 = vst.msk [vmem:[%s5539 + $0x3c] sm:$0xf] %vm3558, %v7607
        %v7640 = vld [vmem:[%s4618] sm:$0xf]
        %v7641 = vld [vmem:[%s4618 + $0x4] sm:$0xf]
        %v7642 = vld [vmem:[%s4618 + $0x8] sm:$0xf]
        %v7643 = vld [vmem:[%s4618 + $0xc] sm:$0xf]
        %v7644 = vld [vmem:[%s4618 + $0x10] sm:$0xf]
        %v7645 = vld [vmem:[%s4618 + $0x14] sm:$0xf]
        %v7646 = vld [vmem:[%s4618 + $0x18] sm:$0xf]
        %v7647 = vld [vmem:[%s4618 + $0x1c] sm:$0xf]
        %v7648 = vld [vmem:[%s4618 + $0x20] sm:$0xf]
        %v7649 = vld [vmem:[%s4618 + $0x24] sm:$0xf]
        %v7650 = vld [vmem:[%s4618 + $0x28] sm:$0xf]
        %v7651 = vld [vmem:[%s4618 + $0x2c] sm:$0xf]
        %v7652 = vld [vmem:[%s4618 + $0x30] sm:$0xf]
        %v7653 = vld [vmem:[%s4618 + $0x34] sm:$0xf]
        %v7654 = vld [vmem:[%s4618 + $0x38] sm:$0xf]
        %v7655 = vld [vmem:[%s4618 + $0x3c] sm:$0xf]
        %v7656 = vld [vmem:[%s4635] sm:$0xf]
        %v7657 = vld [vmem:[%s4635 + $0x4] sm:$0xf]
        %v7658 = vld [vmem:[%s4635 + $0x8] sm:$0xf]
        %v7659 = vld [vmem:[%s4635 + $0xc] sm:$0xf]
        %v7660 = vld [vmem:[%s4635 + $0x10] sm:$0xf]
        %v7661 = vld [vmem:[%s4635 + $0x14] sm:$0xf]
        %v7662 = vld [vmem:[%s4635 + $0x18] sm:$0xf]
        %v7663 = vld [vmem:[%s4635 + $0x1c] sm:$0xf]
        %v7664 = vld [vmem:[%s4635 + $0x20] sm:$0xf]
        %v7665 = vld [vmem:[%s4635 + $0x24] sm:$0xf]
        %v7666 = vld [vmem:[%s4635 + $0x28] sm:$0xf]
        %v7667 = vld [vmem:[%s4635 + $0x2c] sm:$0xf]
        %v7668 = vld [vmem:[%s4635 + $0x30] sm:$0xf]
        %v7669 = vld [vmem:[%s4635 + $0x34] sm:$0xf]
        %v7670 = vld [vmem:[%s4635 + $0x38] sm:$0xf]
        %v7671 = vld [vmem:[%s4635 + $0x3c] sm:$0xf]
        %v7672 = vld [vmem:[%s4652] sm:$0xf]
        %v7673 = vld [vmem:[%s4652 + $0x4] sm:$0xf]
        %v7674 = vld [vmem:[%s4652 + $0x8] sm:$0xf]
        %v7675 = vld [vmem:[%s4652 + $0xc] sm:$0xf]
        %v7676 = vld [vmem:[%s4652 + $0x10] sm:$0xf]
        %v7677 = vld [vmem:[%s4652 + $0x14] sm:$0xf]
        %v7678 = vld [vmem:[%s4652 + $0x18] sm:$0xf]
        %v7679 = vld [vmem:[%s4652 + $0x1c] sm:$0xf]
        %v7680 = vld [vmem:[%s4652 + $0x20] sm:$0xf]
        %v7681 = vld [vmem:[%s4652 + $0x24] sm:$0xf]
        %v7682 = vld [vmem:[%s4652 + $0x28] sm:$0xf]
        %v7683 = vld [vmem:[%s4652 + $0x2c] sm:$0xf]
        %v7684 = vld [vmem:[%s4652 + $0x30] sm:$0xf]
        %v7685 = vld [vmem:[%s4652 + $0x34] sm:$0xf]
        %v7686 = vld [vmem:[%s4652 + $0x38] sm:$0xf]
        %v7687 = vld [vmem:[%s4652 + $0x3c] sm:$0xf]
        %v7704 = vunpack.c.l.b16 %v7656
        %v7705 = vunpack.c.l.b16 %v7657
        %v7706 = vunpack.c.l.b16 %v7658
        %v7707 = vunpack.c.l.b16 %v7659
        %v7708 = vunpack.c.l.b16 %v7660
        %v7709 = vunpack.c.l.b16 %v7661
        %v7710 = vunpack.c.l.b16 %v7662
        %v7711 = vunpack.c.l.b16 %v7663
        %v7712 = vunpack.c.l.b16 %v7664
        %v7713 = vunpack.c.l.b16 %v7665
        %v7714 = vunpack.c.l.b16 %v7666
        %v7715 = vunpack.c.l.b16 %v7667
        %v7716 = vunpack.c.l.b16 %v7668
        %v7717 = vunpack.c.l.b16 %v7669
        %v7718 = vunpack.c.l.b16 %v7670
        %v7719 = vunpack.c.l.b16 %v7671
        %v7720 = vpack.c.b16 %v7705, %v7704
        %v7721 = vpack.c.b16 %v7707, %v7706
        %v7722 = vpack.c.b16 %v7709, %v7708
        %v7723 = vpack.c.b16 %v7711, %v7710
        %v7724 = vpack.c.b16 %v7713, %v7712
        %v7725 = vpack.c.b16 %v7715, %v7714
        %v7726 = vpack.c.b16 %v7717, %v7716
        %v7727 = vpack.c.b16 %v7719, %v7718
        %v7744 = vunpack.c.l.b16 %v7672
        %v7745 = vunpack.c.l.b16 %v7673
        %v7746 = vunpack.c.l.b16 %v7674
        %v7747 = vunpack.c.l.b16 %v7675
        %v7748 = vunpack.c.l.b16 %v7676
        %v7749 = vunpack.c.l.b16 %v7677
        %v7750 = vunpack.c.l.b16 %v7678
        %v7751 = vunpack.c.l.b16 %v7679
        %v7752 = vunpack.c.l.b16 %v7680
        %v7753 = vunpack.c.l.b16 %v7681
        %v7754 = vunpack.c.l.b16 %v7682
        %v7755 = vunpack.c.l.b16 %v7683
        %v7756 = vunpack.c.l.b16 %v7684
        %v7757 = vunpack.c.l.b16 %v7685
        %v7758 = vunpack.c.l.b16 %v7686
        %v7759 = vunpack.c.l.b16 %v7687
        %v7760 = vpack.c.b16 %v7745, %v7744
        %v7761 = vpack.c.b16 %v7747, %v7746
        %v7762 = vpack.c.b16 %v7749, %v7748
        %v7763 = vpack.c.b16 %v7751, %v7750
        %v7764 = vpack.c.b16 %v7753, %v7752
        %v7765 = vpack.c.b16 %v7755, %v7754
        %v7766 = vpack.c.b16 %v7757, %v7756
        %v7767 = vpack.c.b16 %v7759, %v7758
        %v7768 = vld [vmem:[%s4749] sm:$0xf]
        %v7769 = vld [vmem:[%s4749 + $0x4] sm:$0xf]
        %v7770 = vld [vmem:[%s4749 + $0x8] sm:$0xf]
        %v7771 = vld [vmem:[%s4749 + $0xc] sm:$0xf]
        %v7772 = vld [vmem:[%s4749 + $0x10] sm:$0xf]
        %v7773 = vld [vmem:[%s4749 + $0x14] sm:$0xf]
        %v7774 = vld [vmem:[%s4749 + $0x18] sm:$0xf]
        %v7775 = vld [vmem:[%s4749 + $0x1c] sm:$0xf]
        %v7776 = vld [vmem:[%s4749 + $0x20] sm:$0xf]
        %v7777 = vld [vmem:[%s4749 + $0x24] sm:$0xf]
        %v7778 = vld [vmem:[%s4749 + $0x28] sm:$0xf]
        %v7779 = vld [vmem:[%s4749 + $0x2c] sm:$0xf]
        %v7780 = vld [vmem:[%s4749 + $0x30] sm:$0xf]
        %v7781 = vld [vmem:[%s4749 + $0x34] sm:$0xf]
        %v7782 = vld [vmem:[%s4749 + $0x38] sm:$0xf]
        %v7783 = vld [vmem:[%s4749 + $0x3c] sm:$0xf]
        %v7784 = vld [vmem:[%s4766] sm:$0xf]
        %v7785 = vld [vmem:[%s4766 + $0x4] sm:$0xf]
        %v7786 = vld [vmem:[%s4766 + $0x8] sm:$0xf]
        %v7787 = vld [vmem:[%s4766 + $0xc] sm:$0xf]
        %v7788 = vld [vmem:[%s4766 + $0x10] sm:$0xf]
        %v7789 = vld [vmem:[%s4766 + $0x14] sm:$0xf]
        %v7790 = vld [vmem:[%s4766 + $0x18] sm:$0xf]
        %v7791 = vld [vmem:[%s4766 + $0x1c] sm:$0xf]
        %v7792 = vld [vmem:[%s4766 + $0x20] sm:$0xf]
        %v7793 = vld [vmem:[%s4766 + $0x24] sm:$0xf]
        %v7794 = vld [vmem:[%s4766 + $0x28] sm:$0xf]
        %v7795 = vld [vmem:[%s4766 + $0x2c] sm:$0xf]
        %v7796 = vld [vmem:[%s4766 + $0x30] sm:$0xf]
        %v7797 = vld [vmem:[%s4766 + $0x34] sm:$0xf]
        %v7798 = vld [vmem:[%s4766 + $0x38] sm:$0xf]
        %v7799 = vld [vmem:[%s4766 + $0x3c] sm:$0xf]
        %v7816 = vunpack.c.l.b16 %v7768
        %v7817 = vunpack.c.l.b16 %v7769
        %v7818 = vunpack.c.l.b16 %v7770
        %v7819 = vunpack.c.l.b16 %v7771
        %v7820 = vunpack.c.l.b16 %v7772
        %v7821 = vunpack.c.l.b16 %v7773
        %v7822 = vunpack.c.l.b16 %v7774
        %v7823 = vunpack.c.l.b16 %v7775
        %v7824 = vunpack.c.l.b16 %v7776
        %v7825 = vunpack.c.l.b16 %v7777
        %v7826 = vunpack.c.l.b16 %v7778
        %v7827 = vunpack.c.l.b16 %v7779
        %v7828 = vunpack.c.l.b16 %v7780
        %v7829 = vunpack.c.l.b16 %v7781
        %v7830 = vunpack.c.l.b16 %v7782
        %v7831 = vunpack.c.l.b16 %v7783
        %v7832 = vpack.c.b16 %v7817, %v7816
        %v7833 = vpack.c.b16 %v7819, %v7818
        %v7834 = vpack.c.b16 %v7821, %v7820
        %v7835 = vpack.c.b16 %v7823, %v7822
        %v7836 = vpack.c.b16 %v7825, %v7824
        %v7837 = vpack.c.b16 %v7827, %v7826
        %v7838 = vpack.c.b16 %v7829, %v7828
        %v7839 = vpack.c.b16 %v7831, %v7830
        %v7856 = vunpack.c.l.b16 %v7784
        %v7857 = vunpack.c.l.b16 %v7785
        %v7858 = vunpack.c.l.b16 %v7786
        %v7859 = vunpack.c.l.b16 %v7787
        %v7860 = vunpack.c.l.b16 %v7788
        %v7861 = vunpack.c.l.b16 %v7789
        %v7862 = vunpack.c.l.b16 %v7790
        %v7863 = vunpack.c.l.b16 %v7791
        %v7864 = vunpack.c.l.b16 %v7792
        %v7865 = vunpack.c.l.b16 %v7793
        %v7866 = vunpack.c.l.b16 %v7794
        %v7867 = vunpack.c.l.b16 %v7795
        %v7868 = vunpack.c.l.b16 %v7796
        %v7869 = vunpack.c.l.b16 %v7797
        %v7870 = vunpack.c.l.b16 %v7798
        %v7871 = vunpack.c.l.b16 %v7799
        %v7872 = vpack.c.b16 %v7857, %v7856
        %v7873 = vpack.c.b16 %v7859, %v7858
        %v7874 = vpack.c.b16 %v7861, %v7860
        %v7875 = vpack.c.b16 %v7863, %v7862
        %v7876 = vpack.c.b16 %v7865, %v7864
        %v7877 = vpack.c.b16 %v7867, %v7866
        %v7878 = vpack.c.b16 %v7869, %v7868
        %v7879 = vpack.c.b16 %v7871, %v7870
        %s7880 = scalar_lea.vmem %s4879, 3 [#allocation13]
        %v7881 = vld [vmem:[%s7880] ss:$4 sm:$0x3]
        %v7883 = vlaneseq
        %v7884 = vshrl.u32 %v7883, 7
        %v7885 = vsub.s32 0, %v7884
        %v7886 = vrot.slane %v7881, %v7885
        %v7887 = vlaneseq
        %v7888 = vshrl.u32 %v7887, 7
        %v7889 = vsub.s32 1, %v7888
        %v7890 = vrot.slane %v7881, %v7889
        %v7909 = vunpack.c.l.b16 %v7640
        %v7910 = vunpack.c.l.b16 %v7641
        %v7911 = vunpack.c.l.b16 %v7642
        %v7912 = vunpack.c.l.b16 %v7643
        %v7913 = vunpack.c.l.b16 %v7644
        %v7914 = vunpack.c.l.b16 %v7645
        %v7915 = vunpack.c.l.b16 %v7646
        %v7916 = vunpack.c.l.b16 %v7647
        %v7917 = vunpack.c.l.b16 %v7648
        %v7918 = vunpack.c.l.b16 %v7649
        %v7919 = vunpack.c.l.b16 %v7650
        %v7920 = vunpack.c.l.b16 %v7651
        %v7921 = vunpack.c.l.b16 %v7652
        %v7922 = vunpack.c.l.b16 %v7653
        %v7923 = vunpack.c.l.b16 %v7654
        %v7924 = vunpack.c.l.b16 %v7655
        %v7925 = vpack.c.b16 %v7910, %v7909
        %v7926 = vpack.c.b16 %v7912, %v7911
        %v7927 = vpack.c.b16 %v7914, %v7913
        %v7928 = vpack.c.b16 %v7916, %v7915
        %v7929 = vpack.c.b16 %v7918, %v7917
        %v7930 = vpack.c.b16 %v7920, %v7919
        %v7931 = vpack.c.b16 %v7922, %v7921
        %v7932 = vpack.c.b16 %v7924, %v7923
        %7933 = vrot.lane.b32.xlu0 %v7925, 32
        %v7934 = vpop.permute.xlu0 %7933
        %7935 = vrot.lane.b32.xlu0 %v7926, 32
        %v7936 = vpop.permute.xlu0 %7935
        %7937 = vrot.lane.b32.xlu0 %v7927, 32
        %v7938 = vpop.permute.xlu0 %7937
        %7939 = vrot.lane.b32.xlu0 %v7928, 32
        %v7940 = vpop.permute.xlu0 %7939
        %7941 = vrot.lane.b32.xlu0 %v7929, 32
        %v7942 = vpop.permute.xlu0 %7941
        %7943 = vrot.lane.b32.xlu0 %v7930, 32
        %v7944 = vpop.permute.xlu0 %7943
        %7945 = vrot.lane.b32.xlu0 %v7931, 32
        %v7946 = vpop.permute.xlu0 %7945
        %7947 = vrot.lane.b32.xlu0 %v7932, 32
        %v7948 = vpop.permute.xlu0 %7947
        %7949 = vrot.lane.b32.xlu0 %v7720, 32
        %v7950 = vpop.permute.xlu0 %7949
        %7951 = vrot.lane.b32.xlu0 %v7721, 32
        %v7952 = vpop.permute.xlu0 %7951
        %7953 = vrot.lane.b32.xlu0 %v7722, 32
        %v7954 = vpop.permute.xlu0 %7953
        %7955 = vrot.lane.b32.xlu0 %v7723, 32
        %v7956 = vpop.permute.xlu0 %7955
        %7957 = vrot.lane.b32.xlu0 %v7724, 32
        %v7958 = vpop.permute.xlu0 %7957
        %7959 = vrot.lane.b32.xlu0 %v7725, 32
        %v7960 = vpop.permute.xlu0 %7959
        %7961 = vrot.lane.b32.xlu0 %v7726, 32
        %v7962 = vpop.permute.xlu0 %7961
        %7963 = vrot.lane.b32.xlu0 %v7727, 32
        %v7964 = vpop.permute.xlu0 %7963
        %7965 = vrot.lane.b32.xlu0 %v7760, 32
        %v7966 = vpop.permute.xlu0 %7965
        %7967 = vrot.lane.b32.xlu0 %v7761, 32
        %v7968 = vpop.permute.xlu0 %7967
        %7969 = vrot.lane.b32.xlu0 %v7762, 32
        %v7970 = vpop.permute.xlu0 %7969
        %7971 = vrot.lane.b32.xlu0 %v7763, 32
        %v7972 = vpop.permute.xlu0 %7971
        %7973 = vrot.lane.b32.xlu0 %v7764, 32
        %v7974 = vpop.permute.xlu0 %7973
        %7975 = vrot.lane.b32.xlu0 %v7765, 32
        %v7976 = vpop.permute.xlu0 %7975
        %7977 = vrot.lane.b32.xlu0 %v7766, 32
        %v7978 = vpop.permute.xlu0 %7977
        %7979 = vrot.lane.b32.xlu0 %v7767, 32
        %v7980 = vpop.permute.xlu0 %7979
        %v7982 = vsel %vm864, %v7934, 0
        %v7985 = vsel %vm864, %v7936, 0
        %v7988 = vsel %vm864, %v7938, 0
        %v7991 = vsel %vm864, %v7940, 0
        %v7994 = vsel %vm864, %v7942, 0
        %v7997 = vsel %vm864, %v7944, 0
        %v8000 = vsel %vm864, %v7946, 0
        %v8003 = vsel %vm864, %v7948, 0
        %v8006 = vsel %vm864, %v7950, 0
        %v8009 = vsel %vm864, %v7952, 0
        %v8012 = vsel %vm864, %v7954, 0
        %v8015 = vsel %vm864, %v7956, 0
        %v8018 = vsel %vm864, %v7958, 0
        %v8021 = vsel %vm864, %v7960, 0
        %v8024 = vsel %vm864, %v7962, 0
        %v8027 = vsel %vm864, %v7964, 0
        %v8030 = vsel %vm864, %v7966, 0
        %v8033 = vsel %vm864, %v7968, 0
        %v8036 = vsel %vm864, %v7970, 0
        %v8039 = vsel %vm864, %v7972, 0
        %v8042 = vsel %vm864, %v7974, 0
        %v8045 = vsel %vm864, %v7976, 0
        %v8048 = vsel %vm864, %v7978, 0
        %v8051 = vsel %vm864, %v7980, 0
        %8053 = vmatprep.subr.bf16.mxu0 0
        %8054 = vmatpush1.bf16.xpose.msra.mxu0 %v8006
        %8055 = vmatprep.subr.bf16.mxu0 0
        %8056 = vmatpush1.bf16.xpose.msra.mxu0 %v8009
        %8057 = vmatprep.subr.bf16.mxu0 0
        %8058 = vmatpush1.bf16.xpose.msra.mxu0 %v8012
        %8059 = vmatprep.subr.bf16.mxu0 0
        %8060 = vmatpush1.bf16.xpose.msra.mxu0 %v8015
        %8061 = vmatprep.subr.bf16.mxu0 0
        %8062 = vmatpush1.bf16.xpose.msra.mxu0 %v8018
        %8063 = vmatprep.subr.bf16.mxu0 0
        %8064 = vmatpush1.bf16.xpose.msra.mxu0 %v8021
        %8065 = vmatprep.subr.bf16.mxu0 0
        %8066 = vmatpush1.bf16.xpose.msra.mxu0 %v8024
        %8067 = vmatprep.subr.bf16.mxu0 0
        %8068 = vmatpush1.bf16.xpose.msra.mxu0 %v8027
        %8069 = vmatprep.subr.bf16.mxu0 0
        %8070 = vmatpush1.bf16.xpose.msra.mxu0 %v8030
        %8071 = vmatprep.subr.bf16.mxu0 0
        %8072 = vmatpush1.bf16.xpose.msra.mxu0 %v8033
        %8073 = vmatprep.subr.bf16.mxu0 0
        %8074 = vmatpush1.bf16.xpose.msra.mxu0 %v8036
        %8075 = vmatprep.subr.bf16.mxu0 0
        %8076 = vmatpush1.bf16.xpose.msra.mxu0 %v8039
        %8077 = vmatprep.subr.bf16.mxu0 0
        %8078 = vmatpush1.bf16.xpose.msra.mxu0 %v8042
        %8079 = vmatprep.subr.bf16.mxu0 0
        %8080 = vmatpush1.bf16.xpose.msra.mxu0 %v8045
        %8081 = vmatprep.subr.bf16.mxu0 0
        %8082 = vmatpush1.bf16.xpose.msra.mxu0 %v8048
        %8083 = vmatprep.subr.bf16.mxu0 0
        %8084 = vmatpush1.bf16.xpose.msra.mxu0 %v8051
        %8085 = vmatprep.mubr.bf16.mxu0 0
        %8086 = vmatmul.mubr.bf16.gmra.mrb[0].mxu0 %v7982
        %v8087 = vpop.f32.mrb[0].mxu0
        %v8088 = vadd.f32 %v7886, %v8087
        %v8089 = vpop.f32.mrb[0].mxu0
        %v8090 = vadd.f32 %v7890, %v8089
        %v8091 = vpop.f32.mrb[0].mxu0
        %v8092 = vadd.f32 %v7886, %v8091
        %v8093 = vpop.f32.mrb[0].mxu0
        %v8094 = vadd.f32 %v7890, %v8093
        %8095 = vmatprep.mubr.bf16.mxu0 0
        %8096 = vmatmul.mubr.bf16.gmra.mrb[0].mxu0 %v7985
        %v8097 = vpop.f32.mrb[0].mxu0
        %v8098 = vadd.f32 %v7886, %v8097
        %v8099 = vpop.f32.mrb[0].mxu0
        %v8100 = vadd.f32 %v7890, %v8099
        %v8101 = vpop.f32.mrb[0].mxu0
        %v8102 = vadd.f32 %v7886, %v8101
        %v8103 = vpop.f32.mrb[0].mxu0
        %v8104 = vadd.f32 %v7890, %v8103
        %8105 = vmatprep.mubr.bf16.mxu0 0
        %8106 = vmatmul.mubr.bf16.gmra.mrb[0].mxu0 %v7988
        %v8107 = vpop.f32.mrb[0].mxu0
        %v8108 = vadd.f32 %v7886, %v8107
        %v8109 = vpop.f32.mrb[0].mxu0
        %v8110 = vadd.f32 %v7890, %v8109
        %v8111 = vpop.f32.mrb[0].mxu0
        %v8112 = vadd.f32 %v7886, %v8111
        %v8113 = vpop.f32.mrb[0].mxu0
        %v8114 = vadd.f32 %v7890, %v8113
        %8115 = vmatprep.mubr.bf16.mxu0 0
        %8116 = vmatmul.mubr.bf16.gmra.mrb[0].mxu0 %v7991
        %v8117 = vpop.f32.mrb[0].mxu0
        %v8118 = vadd.f32 %v7886, %v8117
        %v8119 = vpop.f32.mrb[0].mxu0
        %v8120 = vadd.f32 %v7890, %v8119
        %v8121 = vpop.f32.mrb[0].mxu0
        %v8122 = vadd.f32 %v7886, %v8121
        %v8123 = vpop.f32.mrb[0].mxu0
        %v8124 = vadd.f32 %v7890, %v8123
        %8125 = vmatprep.mubr.bf16.mxu0 0
        %8126 = vmatmul.mubr.bf16.gmra.mrb[0].mxu0 %v7994
        %v8127 = vpop.f32.mrb[0].mxu0
        %v8128 = vadd.f32 %v7886, %v8127
        %v8129 = vpop.f32.mrb[0].mxu0
        %v8130 = vadd.f32 %v7890, %v8129
        %v8131 = vpop.f32.mrb[0].mxu0
        %v8132 = vadd.f32 %v7886, %v8131
        %v8133 = vpop.f32.mrb[0].mxu0
        %v8134 = vadd.f32 %v7890, %v8133
        %8135 = vmatprep.mubr.bf16.mxu0 0
        %8136 = vmatmul.mubr.bf16.gmra.mrb[0].mxu0 %v7997
        %v8137 = vpop.f32.mrb[0].mxu0
        %v8138 = vadd.f32 %v7886, %v8137
        %v8139 = vpop.f32.mrb[0].mxu0
        %v8140 = vadd.f32 %v7890, %v8139
        %v8141 = vpop.f32.mrb[0].mxu0
        %v8142 = vadd.f32 %v7886, %v8141
        %v8143 = vpop.f32.mrb[0].mxu0
        %v8144 = vadd.f32 %v7890, %v8143
        %8145 = vmatprep.mubr.bf16.mxu0 0
        %8146 = vmatmul.mubr.bf16.gmra.mrb[0].mxu0 %v8000
        %v8147 = vpop.f32.mrb[0].mxu0
        %v8148 = vadd.f32 %v7886, %v8147
        %v8149 = vpop.f32.mrb[0].mxu0
        %v8150 = vadd.f32 %v7890, %v8149
        %v8151 = vpop.f32.mrb[0].mxu0
        %v8152 = vadd.f32 %v7886, %v8151
        %v8153 = vpop.f32.mrb[0].mxu0
        %v8154 = vadd.f32 %v7890, %v8153
        %8155 = vmatprep.mubr.bf16.mxu0 0
        %8156 = vmatmul.mubr.bf16.gmra.mrb[0].mxu0 %v8003
        %v8157 = vpop.f32.mrb[0].mxu0
        %v8158 = vadd.f32 %v7886, %v8157
        %v8159 = vpop.f32.mrb[0].mxu0
        %v8160 = vadd.f32 %v7890, %v8159
        %v8161 = vpop.f32.mrb[0].mxu0
        %v8162 = vadd.f32 %v7886, %v8161
        %v8163 = vpop.f32.mrb[0].mxu0
        %v8164 = vadd.f32 %v7890, %v8163
        %8165 = vdwg.mxu0
        %v8166 = vmax.f32 %v8088, %v8090
        %8167 = vmax.xlane.f32.xlu0 %v8166
        %v8168 = vpop.xlane.xlu0 %8167
        %v8169 = vmax.f32 %v8092, %v8094
        %8170 = vmax.xlane.f32.xlu0 %v8169
        %v8171 = vpop.xlane.xlu0 %8170
        %v8172 = vmax.f32 %v8098, %v8100
        %8173 = vmax.xlane.f32.xlu0 %v8172
        %v8174 = vpop.xlane.xlu0 %8173
        %v8175 = vmax.f32 %v8102, %v8104
        %8176 = vmax.xlane.f32.xlu0 %v8175
        %v8177 = vpop.xlane.xlu0 %8176
        %v8178 = vmax.f32 %v8108, %v8110
        %8179 = vmax.xlane.f32.xlu0 %v8178
        %v8180 = vpop.xlane.xlu0 %8179
        %v8181 = vmax.f32 %v8112, %v8114
        %8182 = vmax.xlane.f32.xlu0 %v8181
        %v8183 = vpop.xlane.xlu0 %8182
        %v8184 = vmax.f32 %v8118, %v8120
        %8185 = vmax.xlane.f32.xlu0 %v8184
        %v8186 = vpop.xlane.xlu0 %8185
        %v8187 = vmax.f32 %v8122, %v8124
        %8188 = vmax.xlane.f32.xlu0 %v8187
        %v8189 = vpop.xlane.xlu0 %8188
        %v8190 = vmax.f32 %v8128, %v8130
        %8191 = vmax.xlane.f32.xlu0 %v8190
        %v8192 = vpop.xlane.xlu0 %8191
        %v8193 = vmax.f32 %v8132, %v8134
        %8194 = vmax.xlane.f32.xlu0 %v8193
        %v8195 = vpop.xlane.xlu0 %8194
        %v8196 = vmax.f32 %v8138, %v8140
        %8197 = vmax.xlane.f32.xlu0 %v8196
        %v8198 = vpop.xlane.xlu0 %8197
        %v8199 = vmax.f32 %v8142, %v8144
        %8200 = vmax.xlane.f32.xlu0 %v8199
        %v8201 = vpop.xlane.xlu0 %8200
        %v8202 = vmax.f32 %v8148, %v8150
        %8203 = vmax.xlane.f32.xlu0 %v8202
        %v8204 = vpop.xlane.xlu0 %8203
        %v8205 = vmax.f32 %v8152, %v8154
        %8206 = vmax.xlane.f32.xlu0 %v8205
        %v8207 = vpop.xlane.xlu0 %8206
        %v8208 = vmax.f32 %v8158, %v8160
        %8209 = vmax.xlane.f32.xlu0 %v8208
        %v8210 = vpop.xlane.xlu0 %8209
        %v8211 = vmax.f32 %v8162, %v8164
        %8212 = vmax.xlane.f32.xlu0 %v8211
        %v8213 = vpop.xlane.xlu0 %8212
        %v8214 = vsub.f32 %v8088, %v8168
        %v8215 = vsub.f32 %v8090, %v8168
        %v8216 = vsub.f32 %v8092, %v8171
        %v8217 = vsub.f32 %v8094, %v8171
        %v8218 = vsub.f32 %v8098, %v8174
        %v8219 = vsub.f32 %v8100, %v8174
        %v8220 = vsub.f32 %v8102, %v8177
        %v8221 = vsub.f32 %v8104, %v8177
        %v8222 = vsub.f32 %v8108, %v8180
        %v8223 = vsub.f32 %v8110, %v8180
        %v8224 = vsub.f32 %v8112, %v8183
        %v8225 = vsub.f32 %v8114, %v8183
        %v8226 = vsub.f32 %v8118, %v8186
        %v8227 = vsub.f32 %v8120, %v8186
        %v8228 = vsub.f32 %v8122, %v8189
        %v8229 = vsub.f32 %v8124, %v8189
        %v8230 = vsub.f32 %v8128, %v8192
        %v8231 = vsub.f32 %v8130, %v8192
        %v8232 = vsub.f32 %v8132, %v8195
        %v8233 = vsub.f32 %v8134, %v8195
        %v8234 = vsub.f32 %v8138, %v8198
        %v8235 = vsub.f32 %v8140, %v8198
        %v8236 = vsub.f32 %v8142, %v8201
        %v8237 = vsub.f32 %v8144, %v8201
        %v8238 = vsub.f32 %v8148, %v8204
        %v8239 = vsub.f32 %v8150, %v8204
        %v8240 = vsub.f32 %v8152, %v8207
        %v8241 = vsub.f32 %v8154, %v8207
        %v8242 = vsub.f32 %v8158, %v8210
        %v8243 = vsub.f32 %v8160, %v8210
        %v8244 = vsub.f32 %v8162, %v8213
        %v8245 = vsub.f32 %v8164, %v8213
        %v8246 = vmul.f32 %v8214, 1.442695
        %v8247 = vpow.pop %v8246
        %v8248 = vmul.f32 %v8215, 1.442695
        %v8249 = vpow.pop %v8248
        %v8250 = vmul.f32 %v8216, 1.442695
        %v8251 = vpow.pop %v8250
        %v8252 = vmul.f32 %v8217, 1.442695
        %v8253 = vpow.pop %v8252
        %v8254 = vmul.f32 %v8218, 1.442695
        %v8255 = vpow.pop %v8254
        %v8256 = vmul.f32 %v8219, 1.442695
        %v8257 = vpow.pop %v8256
        %v8258 = vmul.f32 %v8220, 1.442695
        %v8259 = vpow.pop %v8258
        %v8260 = vmul.f32 %v8221, 1.442695
        %v8261 = vpow.pop %v8260
        %v8262 = vmul.f32 %v8222, 1.442695
        %v8263 = vpow.pop %v8262
        %v8264 = vmul.f32 %v8223, 1.442695
        %v8265 = vpow.pop %v8264
        %v8266 = vmul.f32 %v8224, 1.442695
        %v8267 = vpow.pop %v8266
        %v8268 = vmul.f32 %v8225, 1.442695
        %v8269 = vpow.pop %v8268
        %v8270 = vmul.f32 %v8226, 1.442695
        %v8271 = vpow.pop %v8270
        %v8272 = vmul.f32 %v8227, 1.442695
        %v8273 = vpow.pop %v8272
        %v8274 = vmul.f32 %v8228, 1.442695
        %v8275 = vpow.pop %v8274
        %v8276 = vmul.f32 %v8229, 1.442695
        %v8277 = vpow.pop %v8276
        %v8278 = vmul.f32 %v8230, 1.442695
        %v8279 = vpow.pop %v8278
        %v8280 = vmul.f32 %v8231, 1.442695
        %v8281 = vpow.pop %v8280
        %v8282 = vmul.f32 %v8232, 1.442695
        %v8283 = vpow.pop %v8282
        %v8284 = vmul.f32 %v8233, 1.442695
        %v8285 = vpow.pop %v8284
        %v8286 = vmul.f32 %v8234, 1.442695
        %v8287 = vpow.pop %v8286
        %v8288 = vmul.f32 %v8235, 1.442695
        %v8289 = vpow.pop %v8288
        %v8290 = vmul.f32 %v8236, 1.442695
        %v8291 = vpow.pop %v8290
        %v8292 = vmul.f32 %v8237, 1.442695
        %v8293 = vpow.pop %v8292
        %v8294 = vmul.f32 %v8238, 1.442695
        %v8295 = vpow.pop %v8294
        %v8296 = vmul.f32 %v8239, 1.442695
        %v8297 = vpow.pop %v8296
        %v8298 = vmul.f32 %v8240, 1.442695
        %v8299 = vpow.pop %v8298
        %v8300 = vmul.f32 %v8241, 1.442695
        %v8301 = vpow.pop %v8300
        %v8302 = vmul.f32 %v8242, 1.442695
        %v8303 = vpow.pop %v8302
        %v8304 = vmul.f32 %v8243, 1.442695
        %v8305 = vpow.pop %v8304
        %v8306 = vmul.f32 %v8244, 1.442695
        %v8307 = vpow.pop %v8306
        %v8308 = vmul.f32 %v8245, 1.442695
        %v8309 = vpow.pop %v8308
        %v8310 = vadd.f32 %v8247, %v8249
        %8311 = vadd.xlane.f32.xlu0 %v8310
        %v8312 = vpop.xlane.xlu0 %8311
        %v8313 = vadd.f32 %v8251, %v8253
        %8314 = vadd.xlane.f32.xlu0 %v8313
        %v8315 = vpop.xlane.xlu0 %8314
        %v8316 = vadd.f32 %v8255, %v8257
        %8317 = vadd.xlane.f32.xlu0 %v8316
        %v8318 = vpop.xlane.xlu0 %8317
        %v8319 = vadd.f32 %v8259, %v8261
        %8320 = vadd.xlane.f32.xlu0 %v8319
        %v8321 = vpop.xlane.xlu0 %8320
        %v8322 = vadd.f32 %v8263, %v8265
        %8323 = vadd.xlane.f32.xlu0 %v8322
        %v8324 = vpop.xlane.xlu0 %8323
        %v8325 = vadd.f32 %v8267, %v8269
        %8326 = vadd.xlane.f32.xlu0 %v8325
        %v8327 = vpop.xlane.xlu0 %8326
        %v8328 = vadd.f32 %v8271, %v8273
        %8329 = vadd.xlane.f32.xlu0 %v8328
        %v8330 = vpop.xlane.xlu0 %8329
        %v8331 = vadd.f32 %v8275, %v8277
        %8332 = vadd.xlane.f32.xlu0 %v8331
        %v8333 = vpop.xlane.xlu0 %8332
        %v8334 = vadd.f32 %v8279, %v8281
        %8335 = vadd.xlane.f32.xlu0 %v8334
        %v8336 = vpop.xlane.xlu0 %8335
        %v8337 = vadd.f32 %v8283, %v8285
        %8338 = vadd.xlane.f32.xlu0 %v8337
        %v8339 = vpop.xlane.xlu0 %8338
        %v8340 = vadd.f32 %v8287, %v8289
        %8341 = vadd.xlane.f32.xlu0 %v8340
        %v8342 = vpop.xlane.xlu0 %8341
        %v8343 = vadd.f32 %v8291, %v8293
        %8344 = vadd.xlane.f32.xlu0 %v8343
        %v8345 = vpop.xlane.xlu0 %8344
        %v8346 = vadd.f32 %v8295, %v8297
        %8347 = vadd.xlane.f32.xlu0 %v8346
        %v8348 = vpop.xlane.xlu0 %8347
        %v8349 = vadd.f32 %v8299, %v8301
        %8350 = vadd.xlane.f32.xlu0 %v8349
        %v8351 = vpop.xlane.xlu0 %8350
        %v8352 = vadd.f32 %v8303, %v8305
        %8353 = vadd.xlane.f32.xlu0 %v8352
        %v8354 = vpop.xlane.xlu0 %8353
        %v8355 = vadd.f32 %v8307, %v8309
        %8356 = vadd.xlane.f32.xlu0 %v8355
        %v8357 = vpop.xlane.xlu0 %8356
        %v8358 = vpack.c.bf16 %v8251, %v8247
        %v8359 = vpack.c.bf16 %v8253, %v8249
        %v8360 = vpack.c.bf16 %v8259, %v8255
        %v8361 = vpack.c.bf16 %v8261, %v8257
        %v8362 = vpack.c.bf16 %v8267, %v8263
        %v8363 = vpack.c.bf16 %v8269, %v8265
        %v8364 = vpack.c.bf16 %v8275, %v8271
        %v8365 = vpack.c.bf16 %v8277, %v8273
        %v8366 = vpack.c.bf16 %v8283, %v8279
        %v8367 = vpack.c.bf16 %v8285, %v8281
        %v8368 = vpack.c.bf16 %v8291, %v8287
        %v8369 = vpack.c.bf16 %v8293, %v8289
        %v8370 = vpack.c.bf16 %v8299, %v8295
        %v8371 = vpack.c.bf16 %v8301, %v8297
        %v8372 = vpack.c.bf16 %v8307, %v8303
        %v8373 = vpack.c.bf16 %v8309, %v8305
        %8374 = vrot.lane.b32.xlu0 %v7832, 32
        %v8375 = vpop.permute.xlu0 %8374
        %8376 = vrot.lane.b32.xlu0 %v7833, 32
        %v8377 = vpop.permute.xlu0 %8376
        %8378 = vrot.lane.b32.xlu0 %v7834, 32
        %v8379 = vpop.permute.xlu0 %8378
        %8380 = vrot.lane.b32.xlu0 %v7835, 32
        %v8381 = vpop.permute.xlu0 %8380
        %8382 = vrot.lane.b32.xlu0 %v7836, 32
        %v8383 = vpop.permute.xlu0 %8382
        %8384 = vrot.lane.b32.xlu0 %v7837, 32
        %v8385 = vpop.permute.xlu0 %8384
        %8386 = vrot.lane.b32.xlu0 %v7838, 32
        %v8387 = vpop.permute.xlu0 %8386
        %8388 = vrot.lane.b32.xlu0 %v7839, 32
        %v8389 = vpop.permute.xlu0 %8388
        %8390 = vrot.lane.b32.xlu0 %v7872, 32
        %v8391 = vpop.permute.xlu0 %8390
        %8392 = vrot.lane.b32.xlu0 %v7873, 32
        %v8393 = vpop.permute.xlu0 %8392
        %8394 = vrot.lane.b32.xlu0 %v7874, 32
        %v8395 = vpop.permute.xlu0 %8394
        %8396 = vrot.lane.b32.xlu0 %v7875, 32
        %v8397 = vpop.permute.xlu0 %8396
        %8398 = vrot.lane.b32.xlu0 %v7876, 32
        %v8399 = vpop.permute.xlu0 %8398
        %8400 = vrot.lane.b32.xlu0 %v7877, 32
        %v8401 = vpop.permute.xlu0 %8400
        %8402 = vrot.lane.b32.xlu0 %v7878, 32
        %v8403 = vpop.permute.xlu0 %8402
        %8404 = vrot.lane.b32.xlu0 %v7879, 32
        %v8405 = vpop.permute.xlu0 %8404
        %8422 = vmatprep.subr.bf16.mxu0 0
        %8423 = vmatpush1.bf16.msra.mxu0 %v8375
        %8424 = vmatprep.subr.bf16.mxu0 0
        %8425 = vmatpush1.bf16.msra.mxu0 %v8377
        %8426 = vmatprep.subr.bf16.mxu0 0
        %8427 = vmatpush1.bf16.msra.mxu0 %v8379
        %8428 = vmatprep.subr.bf16.mxu0 0
        %8429 = vmatpush1.bf16.msra.mxu0 %v8381
        %8430 = vmatprep.subr.bf16.mxu0 0
        %8431 = vmatpush1.bf16.msra.mxu0 %v8383
        %8432 = vmatprep.subr.bf16.mxu0 0
        %8433 = vmatpush1.bf16.msra.mxu0 %v8385
        %8434 = vmatprep.subr.bf16.mxu0 0
        %8435 = vmatpush1.bf16.msra.mxu0 %v8387
        %8436 = vmatprep.subr.bf16.mxu0 0
        %8437 = vmatpush1.bf16.msra.mxu0 %v8389
        %8438 = vmatprep.subr.bf16.mxu0 0
        %8439 = vmatpush1.bf16.msra.mxu0 %v8391
        %8440 = vmatprep.subr.bf16.mxu0 0
        %8441 = vmatpush1.bf16.msra.mxu0 %v8393
        %8442 = vmatprep.subr.bf16.mxu0 0
        %8443 = vmatpush1.bf16.msra.mxu0 %v8395
        %8444 = vmatprep.subr.bf16.mxu0 0
        %8445 = vmatpush1.bf16.msra.mxu0 %v8397
        %8446 = vmatprep.subr.bf16.mxu0 0
        %8447 = vmatpush1.bf16.msra.mxu0 %v8399
        %8448 = vmatprep.subr.bf16.mxu0 0
        %8449 = vmatpush1.bf16.msra.mxu0 %v8401
        %8450 = vmatprep.subr.bf16.mxu0 0
        %8451 = vmatpush1.bf16.msra.mxu0 %v8403
        %8452 = vmatprep.subr.bf16.mxu0 0
        %8453 = vmatpush1.bf16.msra.mxu0 %v8405
        %8454 = vmatprep.mubr.bf16.mxu0 %v8359
        %8455 = vmatmul.mubr.bf16.gmra.mrb[0].mxu0 %v8358
        %v8456 = vpop.f32.mrb[0].mxu0
        %v8457 = vadd.f32 0.0, %v8456
        %v8458 = vpop.f32.mrb[0].mxu0
        %v8459 = vpop.f32.mrb[0].mxu0
        %v8460 = vadd.f32 0.0, %v8459
        %v8461 = vpop.f32.mrb[0].mxu0
        %8462 = vmatprep.mubr.bf16.mxu0 %v8361
        %8463 = vmatmul.mubr.bf16.gmra.mrb[0].mxu0 %v8360
        %v8464 = vpop.f32.mrb[0].mxu0
        %v8465 = vadd.f32 0.0, %v8464
        %v8466 = vpop.f32.mrb[0].mxu0
        %v8467 = vpop.f32.mrb[0].mxu0
        %v8468 = vadd.f32 0.0, %v8467
        %v8469 = vpop.f32.mrb[0].mxu0
        %8470 = vmatprep.mubr.bf16.mxu0 %v8363
        %8471 = vmatmul.mubr.bf16.gmra.mrb[0].mxu0 %v8362
        %v8472 = vpop.f32.mrb[0].mxu0
        %v8473 = vadd.f32 0.0, %v8472
        %v8474 = vpop.f32.mrb[0].mxu0
        %v8475 = vpop.f32.mrb[0].mxu0
        %v8476 = vadd.f32 0.0, %v8475
        %v8477 = vpop.f32.mrb[0].mxu0
        %8478 = vmatprep.mubr.bf16.mxu0 %v8365
        %8479 = vmatmul.mubr.bf16.gmra.mrb[0].mxu0 %v8364
        %v8480 = vpop.f32.mrb[0].mxu0
        %v8481 = vadd.f32 0.0, %v8480
        %v8482 = vpop.f32.mrb[0].mxu0
        %v8483 = vpop.f32.mrb[0].mxu0
        %v8484 = vadd.f32 0.0, %v8483
        %v8485 = vpop.f32.mrb[0].mxu0
        %8486 = vmatprep.mubr.bf16.mxu0 %v8367
        %8487 = vmatmul.mubr.bf16.gmra.mrb[0].mxu0 %v8366
        %v8488 = vpop.f32.mrb[0].mxu0
        %v8489 = vadd.f32 0.0, %v8488
        %v8490 = vpop.f32.mrb[0].mxu0
        %v8491 = vpop.f32.mrb[0].mxu0
        %v8492 = vadd.f32 0.0, %v8491
        %v8493 = vpop.f32.mrb[0].mxu0
        %8494 = vmatprep.mubr.bf16.mxu0 %v8369
        %8495 = vmatmul.mubr.bf16.gmra.mrb[0].mxu0 %v8368
        %v8496 = vpop.f32.mrb[0].mxu0
        %v8497 = vadd.f32 0.0, %v8496
        %v8498 = vpop.f32.mrb[0].mxu0
        %v8499 = vpop.f32.mrb[0].mxu0
        %v8500 = vadd.f32 0.0, %v8499
        %v8501 = vpop.f32.mrb[0].mxu0
        %8502 = vmatprep.mubr.bf16.mxu0 %v8371
        %8503 = vmatmul.mubr.bf16.gmra.mrb[0].mxu0 %v8370
        %v8504 = vpop.f32.mrb[0].mxu0
        %v8505 = vadd.f32 0.0, %v8504
        %v8506 = vpop.f32.mrb[0].mxu0
        %v8507 = vpop.f32.mrb[0].mxu0
        %v8508 = vadd.f32 0.0, %v8507
        %v8509 = vpop.f32.mrb[0].mxu0
        %8510 = vmatprep.mubr.bf16.mxu0 %v8373
        %8511 = vmatmul.mubr.bf16.gmra.mrb[0].mxu0 %v8372
        %v8512 = vpop.f32.mrb[0].mxu0
        %v8513 = vadd.f32 0.0, %v8512
        %v8514 = vpop.f32.mrb[0].mxu0
        %v8515 = vpop.f32.mrb[0].mxu0
        %v8516 = vadd.f32 0.0, %v8515
        %v8517 = vpop.f32.mrb[0].mxu0
        %8518 = vdwg.mxu0
        %s8519 = sadd.s32 %s5424, 3
        %s8520 = sld [smem:[#allocation2 + %s8519]]
        %v8521 = vrcp.pop %v8312
        %v8522 = vrcp.pop %v8315
        %v8523 = vrcp.pop %v8318
        %v8524 = vrcp.pop %v8321
        %v8525 = vrcp.pop %v8324
        %v8526 = vrcp.pop %v8327
        %v8527 = vrcp.pop %v8330
        %v8528 = vrcp.pop %v8333
        %v8529 = vrcp.pop %v8336
        %v8530 = vrcp.pop %v8339
        %v8531 = vrcp.pop %v8342
        %v8532 = vrcp.pop %v8345
        %v8533 = vrcp.pop %v8348
        %v8534 = vrcp.pop %v8351
        %v8535 = vrcp.pop %v8354
        %v8536 = vrcp.pop %v8357
        %v8537 = vstv %s8520
        %v8538 = vmul.f32 %v8537, %v8521
        %v8539 = vmul.f32 %v8537, %v8522
        %v8540 = vmul.f32 %v8537, %v8523
        %v8541 = vmul.f32 %v8537, %v8524
        %v8542 = vmul.f32 %v8537, %v8525
        %v8543 = vmul.f32 %v8537, %v8526
        %v8544 = vmul.f32 %v8537, %v8527
        %v8545 = vmul.f32 %v8537, %v8528
        %v8546 = vmul.f32 %v8537, %v8529
        %v8547 = vmul.f32 %v8537, %v8530
        %v8548 = vmul.f32 %v8537, %v8531
        %v8549 = vmul.f32 %v8537, %v8532
        %v8550 = vmul.f32 %v8537, %v8533
        %v8551 = vmul.f32 %v8537, %v8534
        %v8552 = vmul.f32 %v8537, %v8535
        %v8553 = vmul.f32 %v8537, %v8536
        %v8554 = vmul.f32 %v8457, %v8538
        %v8555 = vmul.f32 %v8460, %v8539
        %v8556 = vmul.f32 %v8465, %v8540
        %v8557 = vmul.f32 %v8468, %v8541
        %v8558 = vmul.f32 %v8473, %v8542
        %v8559 = vmul.f32 %v8476, %v8543
        %v8560 = vmul.f32 %v8481, %v8544
        %v8561 = vmul.f32 %v8484, %v8545
        %v8562 = vmul.f32 %v8489, %v8546
        %v8563 = vmul.f32 %v8492, %v8547
        %v8564 = vmul.f32 %v8497, %v8548
        %v8565 = vmul.f32 %v8500, %v8549
        %v8566 = vmul.f32 %v8505, %v8550
        %v8567 = vmul.f32 %v8508, %v8551
        %v8568 = vmul.f32 %v8513, %v8552
        %v8569 = vmul.f32 %v8516, %v8553
        %v8570 = vpack.c.bf16 %v8555, %v8554
        %v8571 = vpack.c.bf16 %v8557, %v8556
        %v8572 = vpack.c.bf16 %v8559, %v8558
        %v8573 = vpack.c.bf16 %v8561, %v8560
        %v8574 = vpack.c.bf16 %v8563, %v8562
        %v8575 = vpack.c.bf16 %v8565, %v8564
        %v8576 = vpack.c.bf16 %v8567, %v8566
        %v8577 = vpack.c.bf16 %v8569, %v8568
        %v8586 = vunpack.c.l.b16 %v8570
        %v8587 = vunpack.c.h.b16 %v8570
        %v8588 = vunpack.c.l.b16 %v8571
        %v8589 = vunpack.c.h.b16 %v8571
        %v8590 = vunpack.c.l.b16 %v8572
        %v8591 = vunpack.c.h.b16 %v8572
        %v8592 = vunpack.c.l.b16 %v8573
        %v8593 = vunpack.c.h.b16 %v8573
        %v8594 = vunpack.c.l.b16 %v8574
        %v8595 = vunpack.c.h.b16 %v8574
        %v8596 = vunpack.c.l.b16 %v8575
        %v8597 = vunpack.c.h.b16 %v8575
        %v8598 = vunpack.c.l.b16 %v8576
        %v8599 = vunpack.c.h.b16 %v8576
        %v8600 = vunpack.c.l.b16 %v8577
        %v8601 = vunpack.c.h.b16 %v8577
        %v8602 = vpack.c.b16 %v8586, %v8586
        %v8603 = vpack.c.b16 %v8587, %v8587
        %v8604 = vpack.c.b16 %v8588, %v8588
        %v8605 = vpack.c.b16 %v8589, %v8589
        %v8606 = vpack.c.b16 %v8590, %v8590
        %v8607 = vpack.c.b16 %v8591, %v8591
        %v8608 = vpack.c.b16 %v8592, %v8592
        %v8609 = vpack.c.b16 %v8593, %v8593
        %v8610 = vpack.c.b16 %v8594, %v8594
        %v8611 = vpack.c.b16 %v8595, %v8595
        %v8612 = vpack.c.b16 %v8596, %v8596
        %v8613 = vpack.c.b16 %v8597, %v8597
        %v8614 = vpack.c.b16 %v8598, %v8598
        %v8615 = vpack.c.b16 %v8599, %v8599
        %v8616 = vpack.c.b16 %v8600, %v8600
        %v8617 = vpack.c.b16 %v8601, %v8601
        %8618 = vrot.lane.b32.xlu0 %v8602, 96
        %v8619 = vpop.permute.xlu0 %8618
        %8620 = vrot.lane.b32.xlu0 %v8603, 96
        %v8621 = vpop.permute.xlu0 %8620
        %8622 = vrot.lane.b32.xlu0 %v8604, 96
        %v8623 = vpop.permute.xlu0 %8622
        %8624 = vrot.lane.b32.xlu0 %v8605, 96
        %v8625 = vpop.permute.xlu0 %8624
        %8626 = vrot.lane.b32.xlu0 %v8606, 96
        %v8627 = vpop.permute.xlu0 %8626
        %8628 = vrot.lane.b32.xlu0 %v8607, 96
        %v8629 = vpop.permute.xlu0 %8628
        %8630 = vrot.lane.b32.xlu0 %v8608, 96
        %v8631 = vpop.permute.xlu0 %8630
        %8632 = vrot.lane.b32.xlu0 %v8609, 96
        %v8633 = vpop.permute.xlu0 %8632
        %8634 = vrot.lane.b32.xlu0 %v8610, 96
        %v8635 = vpop.permute.xlu0 %8634
        %8636 = vrot.lane.b32.xlu0 %v8611, 96
        %v8637 = vpop.permute.xlu0 %8636
        %8638 = vrot.lane.b32.xlu0 %v8612, 96
        %v8639 = vpop.permute.xlu0 %8638
        %8640 = vrot.lane.b32.xlu0 %v8613, 96
        %v8641 = vpop.permute.xlu0 %8640
        %8642 = vrot.lane.b32.xlu0 %v8614, 96
        %v8643 = vpop.permute.xlu0 %8642
        %8644 = vrot.lane.b32.xlu0 %v8615, 96
        %v8645 = vpop.permute.xlu0 %8644
        %8646 = vrot.lane.b32.xlu0 %v8616, 96
        %v8647 = vpop.permute.xlu0 %8646
        %8648 = vrot.lane.b32.xlu0 %v8617, 96
        %v8649 = vpop.permute.xlu0 %8648
        %8666 = vst.msk [vmem:[%s5539] sm:$0xf] %vm4601, %v8619
        %8667 = vst.msk [vmem:[%s5539 + $0x4] sm:$0xf] %vm4601, %v8621
        %8668 = vst.msk [vmem:[%s5539 + $0x8] sm:$0xf] %vm4601, %v8623
        %8669 = vst.msk [vmem:[%s5539 + $0xc] sm:$0xf] %vm4601, %v8625
        %8670 = vst.msk [vmem:[%s5539 + $0x10] sm:$0xf] %vm4601, %v8627
        %8671 = vst.msk [vmem:[%s5539 + $0x14] sm:$0xf] %vm4601, %v8629
        %8672 = vst.msk [vmem:[%s5539 + $0x18] sm:$0xf] %vm4601, %v8631
        %8673 = vst.msk [vmem:[%s5539 + $0x1c] sm:$0xf] %vm4601, %v8633
        %8674 = vst.msk [vmem:[%s5539 + $0x20] sm:$0xf] %vm4601, %v8635
        %8675 = vst.msk [vmem:[%s5539 + $0x24] sm:$0xf] %vm4601, %v8637
        %8676 = vst.msk [vmem:[%s5539 + $0x28] sm:$0xf] %vm4601, %v8639
        %8677 = vst.msk [vmem:[%s5539 + $0x2c] sm:$0xf] %vm4601, %v8641
        %8678 = vst.msk [vmem:[%s5539 + $0x30] sm:$0xf] %vm4601, %v8643
        %8679 = vst.msk [vmem:[%s5539 + $0x34] sm:$0xf] %vm4601, %v8645
        %8680 = vst.msk [vmem:[%s5539 + $0x38] sm:$0xf] %vm4601, %v8647
        %8681 = vst.msk [vmem:[%s5539 + $0x3c] sm:$0xf] %vm4601, %v8649
        %s8682 = sand.u32 %s245, 1
        %s8683 = scalar_lea.sflag [#allocation4], %s8682
        %s8684 = sand.u32 %s245, 1
        %s8685 = smul.addr %s8684, 128
        %s8686 = scalar_lea.vmem [#allocation15], %s8685
        // Predicated region
        $region77: #{tpu_custom_call.1} parent=47 // pred_check
          %p8687 = pneg %p255
        $region78: #{tpu_custom_call.1} parent=47 // pred_check_branch
          %8689 = sbr.rel (%p8687) target = $region80
        $region79: #{tpu_custom_call.1} parent=47 // pred_region
          %s8690 = smul.u32 2, %s39
          %s8692 = ssub.s32 2048, 2048
          %8693 = vsyncadd %s8683, %s8692
          %s8694 = smul.addr %s8690, 16
          %s8695 = smul.addr %s38, 32
          %s8696 = sadd.s32 %s8694, %s8695
          %s8697 = smul.addr %s8696, 64
          %s8698 = scalar_lea.hbm %s7, %s8697
          %s8699 = sshll.u32 %s8686, 4
          %s8700 = int_to_ptr.vmem [resolvable:$true] %s8699
          %8705 = dma.vmem_to_hbm [thread:$0]  %s8700, 2048, %s8698, %s8683, 64, 64, 4
        $region80: #{tpu_custom_call.1} parent=47 // pred_fallthru
          _
      $region48: #{tpu_custom_call.1} parent=5 // pred_fallthru
        _
      %p8706 = scmp.le.s32.totalorder 2, %s29
      // Predicated region
      $region81: #{tpu_custom_call.1} parent=5 // pred_check
        %p8707 = pneg %p8706
      $region82: #{tpu_custom_call.1} parent=5 // pred_check_branch
        %8709 = sbr.rel (%p8707) target = $region84
      $region83: #{tpu_custom_call.1} parent=5 // pred_region
        %s8710 = ssub.s32 %s29, 2
        // Predicated region
        $region85: #{tpu_custom_call.1} parent=83 // pred_check
          %p8711 = pneg %p261
        $region86: #{tpu_custom_call.1} parent=83 // pred_check_branch
          %8713 = sbr.rel (%p8711) target = $region88
        $region87: #{tpu_custom_call.1} parent=83 // pred_region
          %s8714 = sand.u32 %s246, 1
          %s8715 = scalar_lea.sflag [#allocation4], %s8714
          %s8716 = sand.u32 %s246, 1
          %s8717 = smul.addr %s8716, 128
          %s8718 = scalar_lea.vmem [#allocation15], %s8717
          %8719 = dma.done %s8715, 2048
        $region88: #{tpu_custom_call.1} parent=83 // pred_fallthru
          _
      $region84: #{tpu_custom_call.1} parent=5 // pred_fallthru
        _
    $region6: #{tpu_custom_call.1} parent=1 // loop_footer
      %s33 = sadd.s32 1, %s29
    $region7: #{tpu_custom_call.1} parent=1 // loop_footer_branch
      %28 = sbr.rel target = $region3
    $region8: #{tpu_custom_call.1} parent=1 // loop_exit
      _
    %8720 = vsyncpa [#allocation3], 1
    %s8721 = scalar_lea.sflag [#allocation3], 1
    %8722 = vsyncpa %s8721, 1
    %8723 = vsyncpa [#allocation8], 1
    %s8724 = scalar_lea.sflag [#allocation8], 1
    %8725 = vsyncpa %s8724, 1
    %8726 = vsyncpa [#allocation11], 1
    %s8727 = scalar_lea.sflag [#allocation11], 1
    %8728 = vsyncpa %s8727, 1
    %8729 = vsyncpa [#allocation14], 1
    %s8730 = scalar_lea.sflag [#allocation14], 1
    %8731 = vsyncpa %s8730, 1
    %8732 = vsyncpa [#allocation4], 1
    %s8733 = scalar_lea.sflag [#allocation4], 1
    %8734 = vsyncpa %s8733, 1
    %8735 = vsyncpa [#allocation5], 1
    %s8736 = scalar_lea.sflag [#allocation5], 1
    %8737 = vsyncpa %s8736, 1

</llo_original>
